<compile_context>
chip_gen: v7x
topology: tpu7x:2x2x1
jax: 0.10.0
libtpu: 0.0.40
codegen_flags: <defaults>
</compile_context>

<pallas_src>
import jax
import jax.numpy as jnp
from jax.experimental import pallas as pl
from jax.experimental.pallas import tpu as pltpu

EPS = 1e-5
LANE = 128                    # pad every channel dim up to a multiple of this
MAX_M_TILE = 1024             # rows of flattened N*H*W per grid step (review: 512-1024)
MAX_BLOCK_BYTES = 4 << 20     # per-array VMEM block budget used to cap the M tile
MXU_DTYPE = jnp.bfloat16      # MXU operand dtype (f32 accumulation kept everywhere)
ACT_DTYPE = jnp.bfloat16      # dtype of inter-kernel HBM activation slabs (halves traffic)


def _default_vmem_limit():
    """Generation-aware scoped-VMEM budget (~96 MiB on v5e/v6e, ~48 MiB on v7x)."""
    cap = 64 << 20
    try:
        cap = int(getattr(pltpu.get_tpu_info(), "vmem_capacity_bytes", cap))
    except Exception:
        pass
    return int(min(max(cap - max(cap // 4, 16 << 20), 32 << 20), 100 << 20))


VMEM_LIMIT = _default_vmem_limit()


# ----------------------------- small helpers --------------------------------

def _round_up(v, m):
    return ((v + m - 1) // m) * m


def _pick_tile(m, row_bytes):
    """Largest M tile that divides m, is a multiple of 16 (bf16 sublane packing) and
    fits the per-array VMEM block budget.  Small m -> one full block."""
    cap = min(MAX_M_TILE, max(16, (MAX_BLOCK_BYTES // max(row_bytes, 4)) // 16 * 16))
    if m <= cap:
        return m
    best = 0
    d = 16
    while d <= cap:
        if m % d == 0:
            best = d
        d += 16
    if best == 0:
        # TODO(synk): pathological M (not a multiple of 16) at large sizes falls back
        # to a single block; would need zero-row padding + stat masking to tile.
        return m
    return best


def _cparams(sem):
    return pltpu.CompilerParams(dimension_semantics=sem,
                                vmem_limit_bytes=VMEM_LIMIT)


def _pad1(v, c):
    return jnp.pad(v.astype(jnp.float32), (0, c - v.shape[0]))


def _pad2(w, r, c):
    return jnp.pad(w.astype(jnp.float32),
                   ((0, r - w.shape[0]), (0, c - w.shape[1])))


def _pad_w2(w, pp):
    return jnp.pad(w.astype(jnp.float32),
                   ((0, 0), (0, 0), (0, pp - w.shape[2]), (0, pp - w.shape[3])))


def _bn_fold(s, q, count, gamma_p, beta_p):
    """Per-tile partial (sum, sumsq) -> per-channel (scale, shift) for training BN."""
    # TODO(synk): for very large M, switch to a Chan-style pairwise merge of the
    # per-tile partials to avoid E[x^2]-E[x]^2 cancellation.
    s = jnp.sum(s.astype(jnp.float32).reshape(-1, s.shape[-1]), axis=0)
    q = jnp.sum(q.astype(jnp.float32).reshape(-1, q.shape[-1]), axis=0)
    mean = s / count
    var = jnp.maximum(q / count - mean * mean, 0.0)      # biased variance
    scale = gamma_p / jnp.sqrt(var + EPS)
    shift = beta_p - mean * scale
    return jnp.stack([scale, shift], axis=0)             # (2, C) f32


# ----------------------------- Pallas kernels -------------------------------

def _stats_kernel(x_ref, s_ref, q_ref):
    # Per-tile partial channel sums (parallel grid; reduced on host in _bn_fold).
    x = x_ref[...].astype(jnp.float32)
    s_ref[...] = jnp.sum(x, axis=0, keepdims=True)[None]
    q_ref[...] = jnp.sum(x * x, axis=0, keepdims=True)[None]


def _affine_mm_kernel(x_ref, ss_ref, w_ref, o_ref, s_ref, q_ref):
    # o = relu(x*scale + shift) @ w   (bf16 slab out, f32 partial stats).
    ss = ss_ref[...]
    a = jnp.maximum(x_ref[...].astype(jnp.float32) * ss[0:1, :] + ss[1:2, :], 0.0)
    o = jnp.dot(a.astype(MXU_DTYPE), w_ref[...], preferred_element_type=jnp.float32)
    o_ref[...] = o.astype(o_ref.dtype)
    s_ref[...] = jnp.sum(o, axis=0, keepdims=True)[None]
    q_ref[...] = jnp.sum(o * o, axis=0, keepdims=True)[None]


def _affine_mm2_kernel(x_ref, ss_ref, w1_ref, wsc_ref,
                       h1_ref, sc_ref, s1_ref, q1_ref, ssc_ref, qsc_ref):
    # pre = relu(bn1(x)); h1 = pre @ w1; scut = pre @ wsc; partial stats for both.
    ss = ss_ref[...]
    a = jnp.maximum(x_ref[...].astype(jnp.float32) * ss[0:1, :] + ss[1:2, :], 0.0)
    am = a.astype(MXU_DTYPE)
    h1 = jnp.dot(am, w1_ref[...], preferred_element_type=jnp.float32)
    sc = jnp.dot(am, wsc_ref[...], preferred_element_type=jnp.float32)
    h1_ref[...] = h1.astype(h1_ref.dtype)
    sc_ref[...] = sc.astype(sc_ref.dtype)
    s1_ref[...] = jnp.sum(h1, axis=0, keepdims=True)[None]
    q1_ref[...] = jnp.sum(h1 * h1, axis=0, keepdims=True)[None]
    ssc_ref[...] = jnp.sum(sc, axis=0, keepdims=True)[None]
    qsc_ref[...] = jnp.sum(sc * sc, axis=0, keepdims=True)[None]


def _make_conv3x3_kernel(h, w, pp):
    hw = h * w
    kpp = 3 * pp

    def kernel(h1_ref, ss2_ref, w2c_ref, h2_ref, s2_ref, q2_ref, pad_ref):
        # Halo scratch persists across grid steps: zero it once; the interior is
        # fully rewritten every step so the 1-wide border stays zero.
        @pl.when(pl.program_id(0) == 0)
        def _():
            pad_ref[...] = jnp.zeros_like(pad_ref)

        ss = ss2_ref[...]
        a = jnp.maximum(h1_ref[...].astype(jnp.float32) * ss[0:1, :] + ss[1:2, :], 0.0)
        pad_ref[1:h + 1, 1:w + 1, :] = a.reshape(h, w, pp)

        # 3 fused-K matmuls (K = 3*pp, one per kh) instead of 9; accumulate in a
        # local f32 value and write the output block exactly once.
        acc = None
        for kh in range(3):
            band = pad_ref[kh:kh + h, :, :]
            win = jnp.concatenate(
                [band[:, 0:w, :], band[:, 1:w + 1, :], band[:, 2:w + 2, :]],
                axis=-1).reshape(hw, kpp)
            part = jnp.dot(win.astype(MXU_DTYPE), w2c_ref[kh],
                           preferred_element_type=jnp.float32)
            acc = part if acc is None else acc + part

        h2_ref[...] = acc.astype(h2_ref.dtype)
        s2_ref[...] = jnp.sum(acc, axis=0, keepdims=True)[None]
        q2_ref[...] = jnp.sum(acc * acc, axis=0, keepdims=True)[None]

    return kernel


def _fused3_res_kernel(h2_ref, ss3_ref, w3_ref, res_ref, ssr_ref, o_ref):
    # out = relu(bn3(h2)) @ w3 + bn_sc(shortcut)
    ss3 = ss3_ref[...]
    a3 = jnp.maximum(h2_ref[...].astype(jnp.float32) * ss3[0:1, :] + ss3[1:2, :], 0.0)
    h3 = jnp.dot(a3.astype(MXU_DTYPE), w3_ref[...], preferred_element_type=jnp.float32)
    ssr = ssr_ref[...]
    o_ref[...] = (h3 + res_ref[...].astype(jnp.float32) * ssr[0:1, :]
                  + ssr[1:2, :]).astype(o_ref.dtype)


def _fused3_id_kernel(h2_ref, ss3_ref, w3_ref, x_ref, ss1_ref, o_ref):
    # Identity shortcut: recompute pre = relu(bn1(x)) on the VPU instead of
    # round-tripping it through HBM (review item).
    ss3 = ss3_ref[...]
    a3 = jnp.maximum(h2_ref[...].astype(jnp.float32) * ss3[0:1, :] + ss3[1:2, :], 0.0)
    h3 = jnp.dot(a3.astype(MXU_DTYPE), w3_ref[...], preferred_element_type=jnp.float32)
    ss1 = ss1_ref[...]
    pre = jnp.maximum(x_ref[...].astype(jnp.float32) * ss1[0:1, :] + ss1[1:2, :], 0.0)
    o_ref[...] = (h3 + pre).astype(o_ref.dtype)


# ------------------------------- wrappers ------------------------------------

def _channel_stats(x2d, mb):
    m, c = x2d.shape
    t = m // mb
    return pl.pallas_call(
        _stats_kernel,
        grid=(t,),
        in_specs=[pl.BlockSpec((mb, c), lambda i: (i, 0))],
        out_specs=(pl.BlockSpec((1, 1, c), lambda i: (i, 0, 0)),
                   pl.BlockSpec((1, 1, c), lambda i: (i, 0, 0))),
        out_shape=(jax.ShapeDtypeStruct((t, 1, c), jnp.float32),
                   jax.ShapeDtypeStruct((t, 1, c), jnp.float32)),
        compiler_params=_cparams(("parallel",)),
    )(x2d)


def _affine_mm(x2d, ss, wp, mb):
    m, cp = x2d.shape
    op = wp.shape[1]
    t = m // mb
    return pl.pallas_call(
        _affine_mm_kernel,
        grid=(t,),
        in_specs=[pl.BlockSpec((mb, cp), lambda i: (i, 0)),
                  pl.BlockSpec((2, cp), lambda i: (0, 0)),
                  pl.BlockSpec((cp, op), lambda i: (0, 0))],
        out_specs=(pl.BlockSpec((mb, op), lambda i: (i, 0)),
                   pl.BlockSpec((1, 1, op), lambda i: (i, 0, 0)),
                   pl.BlockSpec((1, 1, op), lambda i: (i, 0, 0))),
        out_shape=(jax.ShapeDtypeStruct((m, op), ACT_DTYPE),
                   jax.ShapeDtypeStruct((t, 1, op), jnp.float32),
                   jax.ShapeDtypeStruct((t, 1, op), jnp.float32)),
        compiler_params=_cparams(("parallel",)),
    )(x2d, ss, wp)


def _affine_mm2(x2d, ss, w1p, wscp, mb):
    m, cp = x2d.shape
    pp = w1p.shape[1]
    op = wscp.shape[1]
    t = m // mb
    return pl.pallas_call(
        _affine_mm2_kernel,
        grid=(t,),
        in_specs=[pl.BlockSpec((mb, cp), lambda i: (i, 0)),
                  pl.BlockSpec((2, cp), lambda i: (0, 0)),
                  pl.BlockSpec((cp, pp), lambda i: (0, 0)),
                  pl.BlockSpec((cp, op), lambda i: (0, 0))],
        out_specs=(pl.BlockSpec((mb, pp), lambda i: (i, 0)),
                   pl.BlockSpec((mb, op), lambda i: (i, 0)),
                   pl.BlockSpec((1, 1, pp), lambda i: (i, 0, 0)),
                   pl.BlockSpec((1, 1, pp), lambda i: (i, 0, 0)),
                   pl.BlockSpec((1, 1, op), lambda i: (i, 0, 0)),
                   pl.BlockSpec((1, 1, op), lambda i: (i, 0, 0))),
        out_shape=(jax.ShapeDtypeStruct((m, pp), ACT_DTYPE),
                   jax.ShapeDtypeStruct((m, op), ACT_DTYPE),
                   jax.ShapeDtypeStruct((t, 1, pp), jnp.float32),
                   jax.ShapeDtypeStruct((t, 1, pp), jnp.float32),
                   jax.ShapeDtypeStruct((t, 1, op), jnp.float32),
                   jax.ShapeDtypeStruct((t, 1, op), jnp.float32)),
        compiler_params=_cparams(("parallel",)),
    )(x2d, ss, w1p, wscp)


def _conv3x3(h1_2d, ss2, w2c, n, h, w):
    pp = ss2.shape[1]
    hw = h * w
    w_scr = _round_up(w + 2, 8)          # sublane-pad the scratch width
    kern = _make_conv3x3_kernel(h, w, pp)
    # TODO(synk): row-band tiling with a 1-row halo (caps VMEM independent of H on
    # v7x) and folding stride into the window slices are left as follow-ups.
    return pl.pallas_call(
        kern,
        grid=(n,),
        in_specs=[pl.BlockSpec((hw, pp), lambda i: (i, 0)),
                  pl.BlockSpec((2, pp), lambda i: (0, 0)),
                  pl.BlockSpec((3, 3 * pp, pp), lambda i: (0, 0, 0))],
        out_specs=(pl.BlockSpec((hw, pp), lambda i: (i, 0)),
                   pl.BlockSpec((1, 1, pp), lambda i: (i, 0, 0)),
                   pl.BlockSpec((1, 1, pp), lambda i: (i, 0, 0))),
        out_shape=(jax.ShapeDtypeStruct((n * hw, pp), ACT_DTYPE),
                   jax.ShapeDtypeStruct((n, 1, pp), jnp.float32),
                   jax.ShapeDtypeStruct((n, 1, pp), jnp.float32)),
        scratch_shapes=[pltpu.VMEM((h + 2, w_scr, pp), jnp.float32)],
        compiler_params=_cparams(("arbitrary",)),   # scratch halo zeroed at step 0
    )(h1_2d, ss2, w2c)


def _fused3_res(h2_2d, ss3, w3p, res2d, ssr, mb):
    m2, pp = h2_2d.shape
    op = w3p.shape[1]
    return pl.pallas_call(
        _fused3_res_kernel,
        grid=(m2 // mb,),
        in_specs=[pl.BlockSpec((mb, pp), lambda i: (i, 0)),
                  pl.BlockSpec((2, pp), lambda i: (0, 0)),
                  pl.BlockSpec((pp, op), lambda i: (0, 0)),
                  pl.BlockSpec((mb, op), lambda i: (i, 0)),
                  pl.BlockSpec((2, op), lambda i: (0, 0))],
        out_specs=pl.BlockSpec((mb, op), lambda i: (i, 0)),
        out_shape=jax.ShapeDtypeStruct((m2, op), jnp.float32),
        compiler_params=_cparams(("parallel",)),
    )(h2_2d, ss3, w3p, res2d, ssr)


def _fused3_id(h2_2d, ss3, w3p, x2d, ss1, mb):
    m2, pp = h2_2d.shape
    op = w3p.shape[1]
    return pl.pallas_call(
        _fused3_id_kernel,
        grid=(m2 // mb,),
        in_specs=[pl.BlockSpec((mb, pp), lambda i: (i, 0)),
                  pl.BlockSpec((2, pp), lambda i: (0, 0)),
                  pl.BlockSpec((pp, op), lambda i: (0, 0)),
                  pl.BlockSpec((mb, op), lambda i: (i, 0)),
                  pl.BlockSpec((2, op), lambda i: (0, 0))],
        out_specs=pl.BlockSpec((mb, op), lambda i: (i, 0)),
        out_shape=jax.ShapeDtypeStruct((m2, op), jnp.float32),
        compiler_params=_cparams(("parallel",)),
    )(h2_2d, ss3, w3p, x2d, ss1)


# ----------------------------- module forward --------------------------------

def preact_bottleneck_small(x_nchw, params, stride=1):
    """Forward pass matching PreActBottleneckSmall.forward (training-mode BN)."""
    x = jnp.transpose(x_nchw, (0, 2, 3, 1)).astype(jnp.float32)     # NCHW -> NHWC
    n, h, w, cin = x.shape
    planes = params["w1"].shape[1]
    cout = 4 * planes
    has_sc = (stride != 1) or (cin != cout)

    cp = _round_up(cin, LANE)
    pp = _round_up(planes, LANE)
    op = _round_up(cout, LANE)

    # pad params once; zero gamma/beta/weights in padded channels keep them zero.
    w1p = _pad2(params["w1"], cp, pp).astype(MXU_DTYPE)
    w3p = _pad2(params["w3"], pp, op).astype(MXU_DTYPE)
    w2c = _pad_w2(params["w2"], pp).reshape(3, 3 * pp, pp).astype(MXU_DTYPE)
    g1p, b1p = _pad1(params["g1"], cp), _pad1(params["b1"], cp)
    g2p, b2p = _pad1(params["g2"], pp), _pad1(params["b2"], pp)
    g3p, b3p = _pad1(params["g3"], pp), _pad1(params["b3"], pp)
    wscp = _pad2(params["wsc"], cp, op).astype(MXU_DTYPE) if has_sc else None

    m = n * h * w
    x2d = jnp.pad(x.reshape(m, cin), ((0, 0), (0, cp - cin)))
    row_bytes = 4 * max(cp, pp, op)
    mb = _pick_tile(m, row_bytes)

    # 1) bn1 statistics (the only unavoidable extra pass over x)
    s1, q1 = _channel_stats(x2d, mb)
    ss1 = _bn_fold(s1, q1, m, g1p, b1p)

    # 2) relu(bn1) -> conv1 (1x1) [+ fused shortcut 1x1], bn2 (+bn_sc) partial stats
    scut = None
    ssc = qsc = None
    if has_sc and stride == 1:
        h1, scut, s1h, q1h, ssc, qsc = _affine_mm2(x2d, ss1, w1p, wscp, mb)
    else:
        h1, s1h, q1h = _affine_mm(x2d, ss1, w1p, mb)
    ss2 = _bn_fold(s1h, q1h, m, g2p, b2p)

    # 3) relu(bn2) -> conv2 (3x3, pad=1), bn3 stats
    h2_2d, s2h, q2h = _conv3x3(h1, ss2, w2c, n, h, w)
    if stride != 1:
        # TODO(synk): fold the stride into the conv kernel's window slices instead of
        # computing at stride 1 and down-sampling on the host.
        h2_4d = h2_2d.reshape(n, h, w, pp)[:, ::stride, ::stride, :]
        ho, wo = h2_4d.shape[1], h2_4d.shape[2]
        m2 = n * ho * wo
        h2_2d = h2_4d.reshape(m2, pp)
        mb2 = _pick_tile(m2, row_bytes)
        s2h, q2h = _channel_stats(h2_2d, mb2)        # stats of the strided output
    else:
        ho, wo, m2, mb2 = h, w, m, mb
    ss3 = _bn_fold(s2h, q2h, m2, g3p, b3p)

    # 4) residual operand + relu(bn3) -> conv3 (1x1) + residual add
    if has_sc:
        gscp, bscp = _pad1(params["gsc"], op), _pad1(params["bsc"], op)
        if stride != 1:
            # shortcut = bn_sc(conv1x1(relu(bn1(x)), stride)): bn1+relu are
            # elementwise, so operate on the spatially strided x directly.
            xs = x[:, ::stride, ::stride, :]
            xs2d = jnp.pad(xs.reshape(m2, cin), ((0, 0), (0, cp - cin)))
            scut, ssc, qsc = _affine_mm(xs2d, ss1, wscp, mb2)
        ssr = _bn_fold(ssc, qsc, m2, gscp, bscp)
        out2d = _fused3_res(h2_2d, ss3, w3p, scut, ssr, mb2)
    else:
        # identity shortcut (cin == cout): recompute relu(bn1(x)) inside the kernel.
        out2d = _fused3_id(h2_2d, ss3, w3p, x2d, ss1, mb2)

    out = out2d[:, :cout].reshape(n, ho, wo, cout)
    return jnp.transpose(out, (0, 3, 1, 2))            # back to NCHW


# --------------------------- pure-JAX reference ------------------------------

def _bn_train_ref(x, gamma, beta):
    mean = jnp.mean(x, axis=(0, 1, 2))
    var = jnp.var(x, axis=(0, 1, 2))
    return (x - mean) / jnp.sqrt(var + EPS) * gamma + beta


def reference(x_nchw, params, stride=1):
    x = jnp.transpose(x_nchw, (0, 2, 3, 1)).astype(jnp.float32)
    dn = ("NHWC", "HWIO", "NHWC")
    hp = jax.lax.Precision.HIGHEST

    def conv1x1(a, w, s):
        return jax.lax.conv_general_dilated(
            a, w.reshape(1, 1, w.shape[0], w.shape[1]), (s, s),
            [(0, 0), (0, 0)], dimension_numbers=dn, precision=hp)

    pre = jax.nn.relu(_bn_train_ref(x, params["g1"], params["b1"]))
    h1 = conv1x1(pre, params["w1"], 1)
    a2 = jax.nn.relu(_bn_train_ref(h1, params["g2"], params["b2"]))
    h2 = jax.lax.conv_general_dilated(
        a2, params["w2"], (stride, stride), [(1, 1), (1, 1)],
        dimension_numbers=dn, precision=hp)
    a3 = jax.nn.relu(_bn_train_ref(h2, params["g3"], params["b3"]))
    h3 = conv1x1(a3, params["w3"], 1)

    cin = x.shape[-1]
    cout = 4 * params["w1"].shape[1]
    if stride != 1 or cin != cout:
        scut = conv1x1(pre, params["wsc"], stride)
        scut = _bn_train_ref(scut, params["gsc"], params["bsc"])
    else:
        scut = pre
    out = h3 + scut
    return jnp.transpose(out, (0, 3, 1, 2))


# --------------------------------- main ---------------------------------------

if __name__ == "__main__":
    key = jax.random.PRNGKey(0)
    N, Cin, H, W = 2, 4, 16, 16
    planes, stride = 4, 1
    Cout = 4 * planes

    ks = jax.random.split(key, 13)
    f32 = jnp.float32
    params = {
        "g1": 1.0 + 0.1 * jax.random.normal(ks[0], (Cin,), f32),
        "b1": 0.1 * jax.random.normal(ks[1], (Cin,), f32),
        "w1": 0.2 * jax.random.normal(ks[2], (Cin, planes), f32),
        "g2": 1.0 + 0.1 * jax.random.normal(ks[3], (planes,), f32),
        "b2": 0.1 * jax.random.normal(ks[4], (planes,), f32),
        "w2": 0.2 * jax.random.normal(ks[5], (3, 3, planes, planes), f32),
        "g3": 1.0 + 0.1 * jax.random.normal(ks[6], (planes,), f32),
        "b3": 0.1 * jax.random.normal(ks[7], (planes,), f32),
        "w3": 0.2 * jax.random.normal(ks[8], (planes, Cout), f32),
        "wsc": 0.2 * jax.random.normal(ks[9], (Cin, Cout), f32),
        "gsc": 1.0 + 0.1 * jax.random.normal(ks[10], (Cout,), f32),
        "bsc": 0.1 * jax.random.normal(ks[11], (Cout,), f32),
    }
    x = jax.random.normal(ks[12], (N, Cin, H, W), f32)

    fwd = jax.jit(lambda xx, prm: preact_bottleneck_small(xx, prm, stride))
    out = jax.block_until_ready(fwd(x, params))

    assert out.shape == (N, Cout, H // stride, W // stride), out.shape

    ref = reference(x, params, stride)
    err = float(jnp.max(jnp.abs(out - ref)))
    scale = float(jnp.max(jnp.abs(ref)))
    tol = 5e-2 * max(1.0, scale)          # bf16 slabs / MXU operands -> relative check
    if err > tol:
        raise AssertionError(f"mismatch vs reference, max abs err = {err} (tol {tol})")

    print("KERNEL_OK")
</pallas_src>

<mosaic_0001>
module attributes {stable_mosaic.version = 11 : i64} {
  func.func @_stats_kernel(%arg0: i32, %arg1: memref<512x128xf32, #tpu.memory_space<vmem>>, %arg2: memref<1x1x128xf32, #tpu.memory_space<vmem>>, %arg3: memref<1x1x128xf32, #tpu.memory_space<vmem>>) attributes {dimension_semantics = [#tpu.dimension_semantics<parallel>], iteration_bounds = array<i64: 1>, scalar_prefetch = 0 : i64, scratch_operands = 0 : i64, tpu.core_type = #tpu.core_type<tc>, window_params = [{transform_indices = @transform_0, window_bounds = array<i64: 512, 128>}, {transform_indices = @transform_1, window_bounds = array<i64: 1, 1, 128>}, {transform_indices = @transform_2, window_bounds = array<i64: 1, 1, 128>}]} {
    %c0 = arith.constant 0 : index
    %c0_0 = arith.constant 0 : index
    %0 = vector.load %arg1[%c0, %c0_0] : memref<512x128xf32, #tpu.memory_space<vmem>>, vector<512x128xf32>
    %cst = arith.constant dense<0.000000e+00> : vector<128xf32>
    %1 = vector.multi_reduction <add>, %0, %cst [0] : vector<512x128xf32> to vector<128xf32>
    %2 = vector.shape_cast %1 : vector<128xf32> to vector<1x128xf32>
    %3 = vector.shape_cast %2 : vector<1x128xf32> to vector<1x1x128xf32>
    %c0_1 = arith.constant 0 : index
    %c0_2 = arith.constant 0 : index
    %c0_3 = arith.constant 0 : index
    %4 = vector.load %arg2[%c0_1, %c0_2, %c0_3] : memref<1x1x128xf32, #tpu.memory_space<vmem>>, vector<1x1x128xf32>
    tpu.vector_store %arg2[%c0_1, %c0_2, %c0_3], %3 {strides = array<i32>} : memref<1x1x128xf32, #tpu.memory_space<vmem>>, vector<1x1x128xf32>,
    %5 = arith.mulf %0, %0 : vector<512x128xf32>
    %cst_4 = arith.constant dense<0.000000e+00> : vector<128xf32>
    %6 = vector.multi_reduction <add>, %5, %cst_4 [0] : vector<512x128xf32> to vector<128xf32>
    %7 = vector.shape_cast %6 : vector<128xf32> to vector<1x128xf32>
    %8 = vector.shape_cast %7 : vector<1x128xf32> to vector<1x1x128xf32>
    %c0_5 = arith.constant 0 : index
    %c0_6 = arith.constant 0 : index
    %c0_7 = arith.constant 0 : index
    %9 = vector.load %arg3[%c0_5, %c0_6, %c0_7] : memref<1x1x128xf32, #tpu.memory_space<vmem>>, vector<1x1x128xf32>
    tpu.vector_store %arg3[%c0_5, %c0_6, %c0_7], %8 {strides = array<i32>} : memref<1x1x128xf32, #tpu.memory_space<vmem>>, vector<1x1x128xf32>,
    return
  }
  func.func @transform_0(%arg0: i32) -> (i32, i32) {
    %c0_i32 = arith.constant 0 : i32
    %c0_i32_0 = arith.constant 0 : i32
    return %arg0, %c0_i32 : i32, i32
  }
  func.func @transform_1(%arg0: i32) -> (i32, i32, i32) {
    %c0_i32 = arith.constant 0 : i32
    %c0_i32_0 = arith.constant 0 : i32
    %c0_i32_1 = arith.constant 0 : i32
    return %arg0, %c0_i32, %c0_i32_0 : i32, i32, i32
  }
  func.func @transform_2(%arg0: i32) -> (i32, i32, i32) {
    %c0_i32 = arith.constant 0 : i32
    %c0_i32_0 = arith.constant 0 : i32
    %c0_i32_1 = arith.constant 0 : i32
    return %arg0, %c0_i32, %c0_i32_0 : i32, i32, i32
  }
}

module attributes {stable_mosaic.version = 11 : i64} {
  func.func @kernel(%arg0: i32, %arg1: memref<256x128xbf16, #tpu.memory_space<vmem>>, %arg2: memref<2x128xf32, #tpu.memory_space<vmem>>, %arg3: memref<3x384x128xbf16, #tpu.memory_space<vmem>>, %arg4: memref<256x128xbf16, #tpu.memory_space<vmem>>, %arg5: memref<1x1x128xf32, #tpu.memory_space<vmem>>, %arg6: memref<1x1x128xf32, #tpu.memory_space<vmem>>, %arg7: memref<18x24x128xf32, #tpu.memory_space<vmem>>) attributes {dimension_semantics = [#tpu.dimension_semantics<arbitrary>], iteration_bounds = array<i64: 2>, scalar_prefetch = 0 : i64, scratch_operands = 1 : i64, tpu.core_type = #tpu.core_type<tc>, window_params = [{transform_indices = @transform_0, window_bounds = array<i64: 256, 128>}, {pipeline_mode = #tpu.pipeline_mode<synchronous>, transform_indices = @transform_1, window_bounds = array<i64: 2, 128>}, {pipeline_mode = #tpu.pipeline_mode<synchronous>, transform_indices = @transform_2, window_bounds = array<i64: 3, 384, 128>}, {transform_indices = @transform_3, window_bounds = array<i64: 256, 128>}, {transform_indices = @transform_4, window_bounds = array<i64: 1, 1, 128>}, {transform_indices = @transform_5, window_bounds = array<i64: 1, 1, 128>}]} {
    %c0_i32 = arith.constant 0 : i32
    %0 = arith.cmpi eq, %arg0, %c0_i32 : i32
    %1 = arith.extui %0 : i1 to i32
    %c0_i32_0 = arith.constant 0 : i32
    %2 = arith.cmpi ne, %1, %c0_i32_0 : i32
    scf.if %2 {
      %cst_36 = arith.constant 0.000000e+00 : f32
      %59 = vector.broadcast %cst_36 : f32 to vector<18x24x128xf32>
      %c0_37 = arith.constant 0 : index
      %c0_38 = arith.constant 0 : index
      %c0_39 = arith.constant 0 : index
      %60 = vector.load %arg7[%c0_37, %c0_38, %c0_39] : memref<18x24x128xf32, #tpu.memory_space<vmem>>, vector<18x24x128xf32>
      tpu.vector_store %arg7[%c0_37, %c0_38, %c0_39], %59 {strides = array<i32>} : memref<18x24x128xf32, #tpu.memory_space<vmem>>, vector<18x24x128xf32>,
    } else {
    }
    %c0 = arith.constant 0 : index
    %c0_1 = arith.constant 0 : index
    %3 = vector.load %arg2[%c0, %c0_1] : memref<2x128xf32, #tpu.memory_space<vmem>>, vector<2x128xf32>
    %c0_2 = arith.constant 0 : index
    %c0_3 = arith.constant 0 : index
    %4 = vector.load %arg1[%c0_2, %c0_3] : memref<256x128xbf16, #tpu.memory_space<vmem>>, vector<256x128xbf16>
    %5 = arith.extf %4 : vector<256x128xbf16> to vector<256x128xf32>
    %6 = vector.extract_strided_slice %3 {offsets = [0, 0], sizes = [1, 128], strides = [1, 1]} : vector<2x128xf32> to vector<1x128xf32>
    %7 = vector.broadcast %6 : vector<1x128xf32> to vector<256x128xf32>
    %8 = arith.mulf %5, %7 : vector<256x128xf32>
    %9 = vector.extract_strided_slice %3 {offsets = [1, 0], sizes = [1, 128], strides = [1, 1]} : vector<2x128xf32> to vector<1x128xf32>
    %10 = vector.broadcast %9 : vector<1x128xf32> to vector<256x128xf32>
    %11 = arith.addf %8, %10 : vector<256x128xf32>
    %cst = arith.constant 0.000000e+00 : f32
    %12 = vector.broadcast %cst : f32 to vector<256x128xf32>
    %13 = arith.maximumf %11, %12 : vector<256x128xf32>
    %14 = vector.shape_cast %13 : vector<256x128xf32> to vector<16x16x128xf32>
    %c1 = arith.constant 1 : index
    %c1_4 = arith.constant 1 : index
    %c0_5 = arith.constant 0 : index
    %15 = vector.load %arg7[%c1, %c1_4, %c0_5] : memref<18x24x128xf32, #tpu.memory_space<vmem>>, vector<16x16x128xf32>
    tpu.vector_store %arg7[%c1, %c1_4, %c0_5], %14 {strides = array<i32>} : memref<18x24x128xf32, #tpu.memory_space<vmem>>, vector<16x16x128xf32>,
    %c0_6 = arith.constant 0 : index
    %c0_7 = arith.constant 0 : index
    %c0_8 = arith.constant 0 : index
    %16 = vector.load %arg7[%c0_6, %c0_7, %c0_8] : memref<18x24x128xf32, #tpu.memory_space<vmem>>, vector<16x24x128xf32>
    %17 = vector.extract_strided_slice %16 {offsets = [0, 0, 0], sizes = [16, 16, 128], strides = [1, 1, 1]} : vector<16x24x128xf32> to vector<16x16x128xf32>
    %18 = vector.extract_strided_slice %16 {offsets = [0, 1, 0], sizes = [16, 16, 128], strides = [1, 1, 1]} : vector<16x24x128xf32> to vector<16x16x128xf32>
    %19 = vector.extract_strided_slice %16 {offsets = [0, 2, 0], sizes = [16, 16, 128], strides = [1, 1, 1]} : vector<16x24x128xf32> to vector<16x16x128xf32>
    %20 = tpu.concatenate %17, %18, %19 in 2 : vector<16x16x128xf32>, vector<16x16x128xf32>, vector<16x16x128xf32> -> vector<16x16x384xf32>
    %21 = vector.shape_cast %20 : vector<16x16x384xf32> to vector<256x384xf32>
    %22 = arith.truncf %21 : vector<256x384xf32> to vector<256x384xbf16>
    %c0_9 = arith.constant 0 : index
    %c0_10 = arith.constant 0 : index
    %c0_11 = arith.constant 0 : index
    %23 = vector.load %arg3[%c0_9, %c0_10, %c0_11] : memref<3x384x128xbf16, #tpu.memory_space<vmem>>, vector<1x384x128xbf16>
    %24 = vector.shape_cast %23 : vector<1x384x128xbf16> to vector<384x128xbf16>
    %cst_12 = arith.constant dense<0.000000e+00> : vector<256x128xf32>
    %25 = tpu.matmul %22, %24, %cst_12 {dimension_numbers = #tpu.dot_dimension_numbers<[1], [0], [0], [1], [0, 0, 1, 1], [], []>} : vector<256x384xbf16>, vector<384x128xbf16>, vector<256x128xf32> -> vector<256x128xf32>
    %c1_13 = arith.constant 1 : index
    %c0_14 = arith.constant 0 : index
    %c0_15 = arith.constant 0 : index
    %26 = vector.load %arg7[%c1_13, %c0_14, %c0_15] : memref<18x24x128xf32, #tpu.memory_space<vmem>>, vector<16x24x128xf32>
    %27 = vector.extract_strided_slice %26 {offsets = [0, 0, 0], sizes = [16, 16, 128], strides = [1, 1, 1]} : vector<16x24x128xf32> to vector<16x16x128xf32>
    %28 = vector.extract_strided_slice %26 {offsets = [0, 1, 0], sizes = [16, 16, 128], strides = [1, 1, 1]} : vector<16x24x128xf32> to vector<16x16x128xf32>
    %29 = vector.extract_strided_slice %26 {offsets = [0, 2, 0], sizes = [16, 16, 128], strides = [1, 1, 1]} : vector<16x24x128xf32> to vector<16x16x128xf32>
    %30 = tpu.concatenate %27, %28, %29 in 2 : vector<16x16x128xf32>, vector<16x16x128xf32>, vector<16x16x128xf32> -> vector<16x16x384xf32>
    %31 = vector.shape_cast %30 : vector<16x16x384xf32> to vector<256x384xf32>
    %32 = arith.truncf %31 : vector<256x384xf32> to vector<256x384xbf16>
    %c1_16 = arith.constant 1 : index
    %c0_17 = arith.constant 0 : index
    %c0_18 = arith.constant 0 : index
    %33 = vector.load %arg3[%c1_16, %c0_17, %c0_18] : memref<3x384x128xbf16, #tpu.memory_space<vmem>>, vector<1x384x128xbf16>
    %34 = vector.shape_cast %33 : vector<1x384x128xbf16> to vector<384x128xbf16>
    %cst_19 = arith.constant dense<0.000000e+00> : vector<256x128xf32>
    %35 = tpu.matmul %32, %34, %cst_19 {dimension_numbers = #tpu.dot_dimension_numbers<[1], [0], [0], [1], [0, 0, 1, 1], [], []>} : vector<256x384xbf16>, vector<384x128xbf16>, vector<256x128xf32> -> vector<256x128xf32>
    %36 = arith.addf %25, %35 : vector<256x128xf32>
    %c2 = arith.constant 2 : index
    %c0_20 = arith.constant 0 : index
    %c0_21 = arith.constant 0 : index
    %37 = vector.load %arg7[%c2, %c0_20, %c0_21] : memref<18x24x128xf32, #tpu.memory_space<vmem>>, vector<16x24x128xf32>
    %38 = vector.extract_strided_slice %37 {offsets = [0, 0, 0], sizes = [16, 16, 128], strides = [1, 1, 1]} : vector<16x24x128xf32> to vector<16x16x128xf32>
    %39 = vector.extract_strided_slice %37 {offsets = [0, 1, 0], sizes = [16, 16, 128], strides = [1, 1, 1]} : vector<16x24x128xf32> to vector<16x16x128xf32>
    %40 = vector.extract_strided_slice %37 {offsets = [0, 2, 0], sizes = [16, 16, 128], strides = [1, 1, 1]} : vector<16x24x128xf32> to vector<16x16x128xf32>
    %41 = tpu.concatenate %38, %39, %40 in 2 : vector<16x16x128xf32>, vector<16x16x128xf32>, vector<16x16x128xf32> -> vector<16x16x384xf32>
    %42 = vector.shape_cast %41 : vector<16x16x384xf32> to vector<256x384xf32>
    %43 = arith.truncf %42 : vector<256x384xf32> to vector<256x384xbf16>
    %c2_22 = arith.constant 2 : index
    %c0_23 = arith.constant 0 : index
    %c0_24 = arith.constant 0 : index
    %44 = vector.load %arg3[%c2_22, %c0_23, %c0_24] : memref<3x384x128xbf16, #tpu.memory_space<vmem>>, vector<1x384x128xbf16>
    %45 = vector.shape_cast %44 : vector<1x384x128xbf16> to vector<384x128xbf16>
    %cst_25 = arith.constant dense<0.000000e+00> : vector<256x128xf32>
    %46 = tpu.matmul %43, %45, %cst_25 {dimension_numbers = #tpu.dot_dimension_numbers<[1], [0], [0], [1], [0, 0, 1, 1], [], []>} : vector<256x384xbf16>, vector<384x128xbf16>, vector<256x128xf32> -> vector<256x128xf32>
    %47 = arith.addf %36, %46 : vector<256x128xf32>
    %48 = arith.truncf %47 : vector<256x128xf32> to vector<256x128xbf16>
    %c0_26 = arith.constant 0 : index
    %c0_27 = arith.constant 0 : index
    %49 = vector.load %arg4[%c0_26, %c0_27] : memref<256x128xbf16, #tpu.memory_space<vmem>>, vector<256x128xbf16>
    tpu.vector_store %arg4[%c0_26, %c0_27], %48 {strides = array<i32>} : memref<256x128xbf16, #tpu.memory_space<vmem>>, vector<256x128xbf16>,
    %cst_28 = arith.constant dense<0.000000e+00> : vector<128xf32>
    %50 = vector.multi_reduction <add>, %47, %cst_28 [0] : vector<256x128xf32> to vector<128xf32>
    %51 = vector.shape_cast %50 : vector<128xf32> to vector<1x128xf32>
    %52 = vector.shape_cast %51 : vector<1x128xf32> to vector<1x1x128xf32>
    %c0_29 = arith.constant 0 : index
    %c0_30 = arith.constant 0 : index
    %c0_31 = arith.constant 0 : index
    %53 = vector.load %arg5[%c0_29, %c0_30, %c0_31] : memref<1x1x128xf32, #tpu.memory_space<vmem>>, vector<1x1x128xf32>
    tpu.vector_store %arg5[%c0_29, %c0_30, %c0_31], %52 {strides = array<i32>} : memref<1x1x128xf32, #tpu.memory_space<vmem>>, vector<1x1x128xf32>,
    %54 = arith.mulf %47, %47 : vector<256x128xf32>
    %cst_32 = arith.constant dense<0.000000e+00> : vector<128xf32>
    %55 = vector.multi_reduction <add>, %54, %cst_32 [0] : vector<256x128xf32> to vector<128xf32>
    %56 = vector.shape_cast %55 : vector<128xf32> to vector<1x128xf32>
    %57 = vector.shape_cast %56 : vector<1x128xf32> to vector<1x1x128xf32>
    %c0_33 = arith.constant 0 : index
    %c0_34 = arith.constant 0 : index
    %c0_35 = arith.constant 0 : index
    %58 = vector.load %arg6[%c0_33, %c0_34, %c0_35] : memref<1x1x128xf32, #tpu.memory_space<vmem>>, vector<1x1x128xf32>
    tpu.vector_store %arg6[%c0_33, %c0_34, %c0_35], %57 {strides = array<i32>} : memref<1x1x128xf32, #tpu.memory_space<vmem>>, vector<1x1x128xf32>,
    return
  }
  func.func @transform_0(%arg0: i32) -> (i32, i32) {
    %c0_i32 = arith.constant 0 : i32
    %c0_i32_0 = arith.constant 0 : i32
    return %arg0, %c0_i32 : i32, i32
  }
  func.func @transform_1(%arg0: i32) -> (i32, i32) {
    %c0_i32 = arith.constant 0 : i32
    %c0_i32_0 = arith.constant 0 : i32
    %c0_i32_1 = arith.constant 0 : i32
    return %c0_i32, %c0_i32_0 : i32, i32
  }
  func.func @transform_2(%arg0: i32) -> (i32, i32, i32) {
    %c0_i32 = arith.constant 0 : i32
    %c0_i32_0 = arith.constant 0 : i32
    %c0_i32_1 = arith.constant 0 : i32
    %c0_i32_2 = arith.constant 0 : i32
    return %c0_i32, %c0_i32_0, %c0_i32_1 : i32, i32, i32
  }
  func.func @transform_3(%arg0: i32) -> (i32, i32) {
    %c0_i32 = arith.constant 0 : i32
    %c0_i32_0 = arith.constant 0 : i32
    return %arg0, %c0_i32 : i32, i32
  }
  func.func @transform_4(%arg0: i32) -> (i32, i32, i32) {
    %c0_i32 = arith.constant 0 : i32
    %c0_i32_0 = arith.constant 0 : i32
    %c0_i32_1 = arith.constant 0 : i32
    return %arg0, %c0_i32, %c0_i32_0 : i32, i32, i32
  }
  func.func @transform_5(%arg0: i32) -> (i32, i32, i32) {
    %c0_i32 = arith.constant 0 : i32
    %c0_i32_0 = arith.constant 0 : i32
    %c0_i32_1 = arith.constant 0 : i32
    return %arg0, %c0_i32, %c0_i32_0 : i32, i32, i32
  }
}

module attributes {stable_mosaic.version = 11 : i64} {
  func.func @_affine_mm2_kernel(%arg0: i32, %arg1: memref<512x128xf32, #tpu.memory_space<vmem>>, %arg2: memref<2x128xf32, #tpu.memory_space<vmem>>, %arg3: memref<128x128xbf16, #tpu.memory_space<vmem>>, %arg4: memref<128x128xbf16, #tpu.memory_space<vmem>>, %arg5: memref<512x128xbf16, #tpu.memory_space<vmem>>, %arg6: memref<512x128xbf16, #tpu.memory_space<vmem>>, %arg7: memref<1x1x128xf32, #tpu.memory_space<vmem>>, %arg8: memref<1x1x128xf32, #tpu.memory_space<vmem>>, %arg9: memref<1x1x128xf32, #tpu.memory_space<vmem>>, %arg10: memref<1x1x128xf32, #tpu.memory_space<vmem>>) attributes {dimension_semantics = [#tpu.dimension_semantics<parallel>], iteration_bounds = array<i64: 1>, scalar_prefetch = 0 : i64, scratch_operands = 0 : i64, tpu.core_type = #tpu.core_type<tc>, window_params = [{transform_indices = @transform_0, window_bounds = array<i64: 512, 128>}, {pipeline_mode = #tpu.pipeline_mode<synchronous>, transform_indices = @transform_1, window_bounds = array<i64: 2, 128>}, {pipeline_mode = #tpu.pipeline_mode<synchronous>, transform_indices = @transform_2, window_bounds = array<i64: 128, 128>}, {pipeline_mode = #tpu.pipeline_mode<synchronous>, transform_indices = @transform_3, window_bounds = array<i64: 128, 128>}, {transform_indices = @transform_4, window_bounds = array<i64: 512, 128>}, {transform_indices = @transform_5, window_bounds = array<i64: 512, 128>}, {transform_indices = @transform_6, window_bounds = array<i64: 1, 1, 128>}, {transform_indices = @transform_7, window_bounds = array<i64: 1, 1, 128>}, {transform_indices = @transform_8, window_bounds = array<i64: 1, 1, 128>}, {transform_indices = @transform_9, window_bounds = array<i64: 1, 1, 128>}]} {
    %c0 = arith.constant 0 : index
    %c0_0 = arith.constant 0 : index
    %0 = vector.load %arg2[%c0, %c0_0] : memref<2x128xf32, #tpu.memory_space<vmem>>, vector<2x128xf32>
    %c0_1 = arith.constant 0 : index
    %c0_2 = arith.constant 0 : index
    %1 = vector.load %arg1[%c0_1, %c0_2] : memref<512x128xf32, #tpu.memory_space<vmem>>, vector<512x128xf32>
    %2 = vector.extract_strided_slice %0 {offsets = [0, 0], sizes = [1, 128], strides = [1, 1]} : vector<2x128xf32> to vector<1x128xf32>
    %3 = vector.broadcast %2 : vector<1x128xf32> to vector<512x128xf32>
    %4 = arith.mulf %1, %3 : vector<512x128xf32>
    %5 = vector.extract_strided_slice %0 {offsets = [1, 0], sizes = [1, 128], strides = [1, 1]} : vector<2x128xf32> to vector<1x128xf32>
    %6 = vector.broadcast %5 : vector<1x128xf32> to vector<512x128xf32>
    %7 = arith.addf %4, %6 : vector<512x128xf32>
    %cst = arith.constant 0.000000e+00 : f32
    %8 = vector.broadcast %cst : f32 to vector<512x128xf32>
    %9 = arith.maximumf %7, %8 : vector<512x128xf32>
    %10 = arith.truncf %9 : vector<512x128xf32> to vector<512x128xbf16>
    %c0_3 = arith.constant 0 : index
    %c0_4 = arith.constant 0 : index
    %11 = vector.load %arg3[%c0_3, %c0_4] : memref<128x128xbf16, #tpu.memory_space<vmem>>, vector<128x128xbf16>
    %cst_5 = arith.constant dense<0.000000e+00> : vector<512x128xf32>
    %12 = tpu.matmul %10, %11, %cst_5 {dimension_numbers = #tpu.dot_dimension_numbers<[1], [0], [0], [1], [0, 0, 1, 1], [], []>} : vector<512x128xbf16>, vector<128x128xbf16>, vector<512x128xf32> -> vector<512x128xf32>
    %c0_6 = arith.constant 0 : index
    %c0_7 = arith.constant 0 : index
    %13 = vector.load %arg4[%c0_6, %c0_7] : memref<128x128xbf16, #tpu.memory_space<vmem>>, vector<128x128xbf16>
    %cst_8 = arith.constant dense<0.000000e+00> : vector<512x128xf32>
    %14 = tpu.matmul %10, %13, %cst_8 {dimension_numbers = #tpu.dot_dimension_numbers<[1], [0], [0], [1], [0, 0, 1, 1], [], []>} : vector<512x128xbf16>, vector<128x128xbf16>, vector<512x128xf32> -> vector<512x128xf32>
    %15 = arith.truncf %12 : vector<512x128xf32> to vector<512x128xbf16>
    %c0_9 = arith.constant 0 : index
    %c0_10 = arith.constant 0 : index
    %16 = vector.load %arg5[%c0_9, %c0_10] : memref<512x128xbf16, #tpu.memory_space<vmem>>, vector<512x128xbf16>
    tpu.vector_store %arg5[%c0_9, %c0_10], %15 {strides = array<i32>} : memref<512x128xbf16, #tpu.memory_space<vmem>>, vector<512x128xbf16>,
    %17 = arith.truncf %14 : vector<512x128xf32> to vector<512x128xbf16>
    %c0_11 = arith.constant 0 : index
    %c0_12 = arith.constant 0 : index
    %18 = vector.load %arg6[%c0_11, %c0_12] : memref<512x128xbf16, #tpu.memory_space<vmem>>, vector<512x128xbf16>
    tpu.vector_store %arg6[%c0_11, %c0_12], %17 {strides = array<i32>} : memref<512x128xbf16, #tpu.memory_space<vmem>>, vector<512x128xbf16>,
    %cst_13 = arith.constant dense<0.000000e+00> : vector<128xf32>
    %19 = vector.multi_reduction <add>, %12, %cst_13 [0] : vector<512x128xf32> to vector<128xf32>
    %20 = vector.shape_cast %19 : vector<128xf32> to vector<1x128xf32>
    %21 = vector.shape_cast %20 : vector<1x128xf32> to vector<1x1x128xf32>
    %c0_14 = arith.constant 0 : index
    %c0_15 = arith.constant 0 : index
    %c0_16 = arith.constant 0 : index
    %22 = vector.load %arg7[%c0_14, %c0_15, %c0_16] : memref<1x1x128xf32, #tpu.memory_space<vmem>>, vector<1x1x128xf32>
    tpu.vector_store %arg7[%c0_14, %c0_15, %c0_16], %21 {strides = array<i32>} : memref<1x1x128xf32, #tpu.memory_space<vmem>>, vector<1x1x128xf32>,
    %23 = arith.mulf %12, %12 : vector<512x128xf32>
    %cst_17 = arith.constant dense<0.000000e+00> : vector<128xf32>
    %24 = vector.multi_reduction <add>, %23, %cst_17 [0] : vector<512x128xf32> to vector<128xf32>
    %25 = vector.shape_cast %24 : vector<128xf32> to vector<1x128xf32>
    %26 = vector.shape_cast %25 : vector<1x128xf32> to vector<1x1x128xf32>
    %c0_18 = arith.constant 0 : index
    %c0_19 = arith.constant 0 : index
    %c0_20 = arith.constant 0 : index
    %27 = vector.load %arg8[%c0_18, %c0_19, %c0_20] : memref<1x1x128xf32, #tpu.memory_space<vmem>>, vector<1x1x128xf32>
    tpu.vector_store %arg8[%c0_18, %c0_19, %c0_20], %26 {strides = array<i32>} : memref<1x1x128xf32, #tpu.memory_space<vmem>>, vector<1x1x128xf32>,
    %cst_21 = arith.constant dense<0.000000e+00> : vector<128xf32>
    %28 = vector.multi_reduction <add>, %14, %cst_21 [0] : vector<512x128xf32> to vector<128xf32>
    %29 = vector.shape_cast %28 : vector<128xf32> to vector<1x128xf32>
    %30 = vector.shape_cast %29 : vector<1x128xf32> to vector<1x1x128xf32>
    %c0_22 = arith.constant 0 : index
    %c0_23 = arith.constant 0 : index
    %c0_24 = arith.constant 0 : index
    %31 = vector.load %arg9[%c0_22, %c0_23, %c0_24] : memref<1x1x128xf32, #tpu.memory_space<vmem>>, vector<1x1x128xf32>
    tpu.vector_store %arg9[%c0_22, %c0_23, %c0_24], %30 {strides = array<i32>} : memref<1x1x128xf32, #tpu.memory_space<vmem>>, vector<1x1x128xf32>,
    %32 = arith.mulf %14, %14 : vector<512x128xf32>
    %cst_25 = arith.constant dense<0.000000e+00> : vector<128xf32>
    %33 = vector.multi_reduction <add>, %32, %cst_25 [0] : vector<512x128xf32> to vector<128xf32>
    %34 = vector.shape_cast %33 : vector<128xf32> to vector<1x128xf32>
    %35 = vector.shape_cast %34 : vector<1x128xf32> to vector<1x1x128xf32>
    %c0_26 = arith.constant 0 : index
    %c0_27 = arith.constant 0 : index
    %c0_28 = arith.constant 0 : index
    %36 = vector.load %arg10[%c0_26, %c0_27, %c0_28] : memref<1x1x128xf32, #tpu.memory_space<vmem>>, vector<1x1x128xf32>
    tpu.vector_store %arg10[%c0_26, %c0_27, %c0_28], %35 {strides = array<i32>} : memref<1x1x128xf32, #tpu.memory_space<vmem>>, vector<1x1x128xf32>,
    return
  }
  func.func @transform_0(%arg0: i32) -> (i32, i32) {
    %c0_i32 = arith.constant 0 : i32
    %c0_i32_0 = arith.constant 0 : i32
    return %arg0, %c0_i32 : i32, i32
  }
  func.func @transform_1(%arg0: i32) -> (i32, i32) {
    %c0_i32 = arith.constant 0 : i32
    %c0_i32_0 = arith.constant 0 : i32
    %c0_i32_1 = arith.constant 0 : i32
    return %c0_i32, %c0_i32_0 : i32, i32
  }
  func.func @transform_2(%arg0: i32) -> (i32, i32) {
    %c0_i32 = arith.constant 0 : i32
    %c0_i32_0 = arith.constant 0 : i32
    %c0_i32_1 = arith.constant 0 : i32
    return %c0_i32, %c0_i32_0 : i32, i32
  }
  func.func @transform_3(%arg0: i32) -> (i32, i32) {
    %c0_i32 = arith.constant 0 : i32
    %c0_i32_0 = arith.constant 0 : i32
    %c0_i32_1 = arith.constant 0 : i32
    return %c0_i32, %c0_i32_0 : i32, i32
  }
  func.func @transform_4(%arg0: i32) -> (i32, i32) {
    %c0_i32 = arith.constant 0 : i32
    %c0_i32_0 = arith.constant 0 : i32
    return %arg0, %c0_i32 : i32, i32
  }
  func.func @transform_5(%arg0: i32) -> (i32, i32) {
    %c0_i32 = arith.constant 0 : i32
    %c0_i32_0 = arith.constant 0 : i32
    return %arg0, %c0_i32 : i32, i32
  }
  func.func @transform_6(%arg0: i32) -> (i32, i32, i32) {
    %c0_i32 = arith.constant 0 : i32
    %c0_i32_0 = arith.constant 0 : i32
    %c0_i32_1 = arith.constant 0 : i32
    return %arg0, %c0_i32, %c0_i32_0 : i32, i32, i32
  }
  func.func @transform_7(%arg0: i32) -> (i32, i32, i32) {
    %c0_i32 = arith.constant 0 : i32
    %c0_i32_0 = arith.constant 0 : i32
    %c0_i32_1 = arith.constant 0 : i32
    return %arg0, %c0_i32, %c0_i32_0 : i32, i32, i32
  }
  func.func @transform_8(%arg0: i32) -> (i32, i32, i32) {
    %c0_i32 = arith.constant 0 : i32
    %c0_i32_0 = arith.constant 0 : i32
    %c0_i32_1 = arith.constant 0 : i32
    return %arg0, %c0_i32, %c0_i32_0 : i32, i32, i32
  }
  func.func @transform_9(%arg0: i32) -> (i32, i32, i32) {
    %c0_i32 = arith.constant 0 : i32
    %c0_i32_0 = arith.constant 0 : i32
    %c0_i32_1 = arith.constant 0 : i32
    return %arg0, %c0_i32, %c0_i32_0 : i32, i32, i32
  }
}

module attributes {stable_mosaic.version = 11 : i64} {
  func.func @_fused3_res_kernel(%arg0: i32, %arg1: memref<512x128xbf16, #tpu.memory_space<vmem>>, %arg2: memref<2x128xf32, #tpu.memory_space<vmem>>, %arg3: memref<128x128xbf16, #tpu.memory_space<vmem>>, %arg4: memref<512x128xbf16, #tpu.memory_space<vmem>>, %arg5: memref<2x128xf32, #tpu.memory_space<vmem>>, %arg6: memref<512x128xf32, #tpu.memory_space<vmem>>) attributes {dimension_semantics = [#tpu.dimension_semantics<parallel>], iteration_bounds = array<i64: 1>, scalar_prefetch = 0 : i64, scratch_operands = 0 : i64, tpu.core_type = #tpu.core_type<tc>, window_params = [{transform_indices = @transform_0, window_bounds = array<i64: 512, 128>}, {pipeline_mode = #tpu.pipeline_mode<synchronous>, transform_indices = @transform_1, window_bounds = array<i64: 2, 128>}, {pipeline_mode = #tpu.pipeline_mode<synchronous>, transform_indices = @transform_2, window_bounds = array<i64: 128, 128>}, {transform_indices = @transform_3, window_bounds = array<i64: 512, 128>}, {pipeline_mode = #tpu.pipeline_mode<synchronous>, transform_indices = @transform_4, window_bounds = array<i64: 2, 128>}, {transform_indices = @transform_5, window_bounds = array<i64: 512, 128>}]} {
    %c0 = arith.constant 0 : index
    %c0_0 = arith.constant 0 : index
    %0 = vector.load %arg2[%c0, %c0_0] : memref<2x128xf32, #tpu.memory_space<vmem>>, vector<2x128xf32>
    %c0_1 = arith.constant 0 : index
    %c0_2 = arith.constant 0 : index
    %1 = vector.load %arg1[%c0_1, %c0_2] : memref<512x128xbf16, #tpu.memory_space<vmem>>, vector<512x128xbf16>
    %2 = arith.extf %1 : vector<512x128xbf16> to vector<512x128xf32>
    %3 = vector.extract_strided_slice %0 {offsets = [0, 0], sizes = [1, 128], strides = [1, 1]} : vector<2x128xf32> to vector<1x128xf32>
    %4 = vector.broadcast %3 : vector<1x128xf32> to vector<512x128xf32>
    %5 = arith.mulf %2, %4 : vector<512x128xf32>
    %6 = vector.extract_strided_slice %0 {offsets = [1, 0], sizes = [1, 128], strides = [1, 1]} : vector<2x128xf32> to vector<1x128xf32>
    %7 = vector.broadcast %6 : vector<1x128xf32> to vector<512x128xf32>
    %8 = arith.addf %5, %7 : vector<512x128xf32>
    %cst = arith.constant 0.000000e+00 : f32
    %9 = vector.broadcast %cst : f32 to vector<512x128xf32>
    %10 = arith.maximumf %8, %9 : vector<512x128xf32>
    %11 = arith.truncf %10 : vector<512x128xf32> to vector<512x128xbf16>
    %c0_3 = arith.constant 0 : index
    %c0_4 = arith.constant 0 : index
    %12 = vector.load %arg3[%c0_3, %c0_4] : memref<128x128xbf16, #tpu.memory_space<vmem>>, vector<128x128xbf16>
    %cst_5 = arith.constant dense<0.000000e+00> : vector<512x128xf32>
    %13 = tpu.matmul %11, %12, %cst_5 {dimension_numbers = #tpu.dot_dimension_numbers<[1], [0], [0], [1], [0, 0, 1, 1], [], []>} : vector<512x128xbf16>, vector<128x128xbf16>, vector<512x128xf32> -> vector<512x128xf32>
    %c0_6 = arith.constant 0 : index
    %c0_7 = arith.constant 0 : index
    %14 = vector.load %arg5[%c0_6, %c0_7] : memref<2x128xf32, #tpu.memory_space<vmem>>, vector<2x128xf32>
    %c0_8 = arith.constant 0 : index
    %c0_9 = arith.constant 0 : index
    %15 = vector.load %arg4[%c0_8, %c0_9] : memref<512x128xbf16, #tpu.memory_space<vmem>>, vector<512x128xbf16>
    %16 = arith.extf %15 : vector<512x128xbf16> to vector<512x128xf32>
    %17 = vector.extract_strided_slice %14 {offsets = [0, 0], sizes = [1, 128], strides = [1, 1]} : vector<2x128xf32> to vector<1x128xf32>
    %18 = vector.broadcast %17 : vector<1x128xf32> to vector<512x128xf32>
    %19 = arith.mulf %16, %18 : vector<512x128xf32>
    %20 = arith.addf %13, %19 : vector<512x128xf32>
    %21 = vector.extract_strided_slice %14 {offsets = [1, 0], sizes = [1, 128], strides = [1, 1]} : vector<2x128xf32> to vector<1x128xf32>
    %22 = vector.broadcast %21 : vector<1x128xf32> to vector<512x128xf32>
    %23 = arith.addf %20, %22 : vector<512x128xf32>
    %c0_10 = arith.constant 0 : index
    %c0_11 = arith.constant 0 : index
    %24 = vector.load %arg6[%c0_10, %c0_11] : memref<512x128xf32, #tpu.memory_space<vmem>>, vector<512x128xf32>
    tpu.vector_store %arg6[%c0_10, %c0_11], %23 {strides = array<i32>} : memref<512x128xf32, #tpu.memory_space<vmem>>, vector<512x128xf32>,
    return
  }
  func.func @transform_0(%arg0: i32) -> (i32, i32) {
    %c0_i32 = arith.constant 0 : i32
    %c0_i32_0 = arith.constant 0 : i32
    return %arg0, %c0_i32 : i32, i32
  }
  func.func @transform_1(%arg0: i32) -> (i32, i32) {
    %c0_i32 = arith.constant 0 : i32
    %c0_i32_0 = arith.constant 0 : i32
    %c0_i32_1 = arith.constant 0 : i32
    return %c0_i32, %c0_i32_0 : i32, i32
  }
  func.func @transform_2(%arg0: i32) -> (i32, i32) {
    %c0_i32 = arith.constant 0 : i32
    %c0_i32_0 = arith.constant 0 : i32
    %c0_i32_1 = arith.constant 0 : i32
    return %c0_i32, %c0_i32_0 : i32, i32
  }
  func.func @transform_3(%arg0: i32) -> (i32, i32) {
    %c0_i32 = arith.constant 0 : i32
    %c0_i32_0 = arith.constant 0 : i32
    return %arg0, %c0_i32 : i32, i32
  }
  func.func @transform_4(%arg0: i32) -> (i32, i32) {
    %c0_i32 = arith.constant 0 : i32
    %c0_i32_0 = arith.constant 0 : i32
    %c0_i32_1 = arith.constant 0 : i32
    return %c0_i32, %c0_i32_0 : i32, i32
  }
  func.func @transform_5(%arg0: i32) -> (i32, i32) {
    %c0_i32 = arith.constant 0 : i32
    %c0_i32_0 = arith.constant 0 : i32
    return %arg0, %c0_i32 : i32, i32
  }
}

</mosaic_0001>

<llo_original>
// kernel: _lambda_.4
$region0: #{_lambda_.4}
  #allocation0 [shape = 'u32[]', space=smem, size = 0x4, offset = 0x4, fixed_abs, tag = 'smem constant byte address 0x4 - core index']
  #allocation1 [shape = 'u32[144,128]{1,0:T(1,128)}', space=vmem, size = 0x12000, scoped, tag = 'internal scratch']
  %s0 = inlined_call_operand.vmem [shape: f32[512,128], index: 0, kind: input, shape index: {}]
  %s1 = inlined_call_operand.vmem [shape: f32[1,1,128], index: 1, kind: output, shape index: {0}]
  %s2 = inlined_call_operand.vmem [shape: f32[1,1,128], index: 2, kind: output, shape index: {1}]
  %3 = xla_tuple %s1, %s2
  %s4 = sld [smem:[#allocation0]]
  $region22: #{_lambda_.4} parent=0
    _
  %s6 = ssub.s32 1, %s4
  %s7 = scalar_select 0, %s6, %s4
  // Predicated region
  $region2: #{_lambda_.4} parent=0 // pred_check
    _
  $region3: #{_lambda_.4} parent=0 // pred_check_branch
    %9 = sbr.rel (0) target = $region5
  $region4: #{_lambda_.4} parent=0 // pred_region
    _
  $region5: #{_lambda_.4} parent=0 // pred_fallthru
    _
  %v10 = vld [vmem:[%s0] sm:$0xff]
  %v11 = vld [vmem:[%s0 + $0x8] sm:$0xff]
  %v12 = vld [vmem:[%s0 + $0x10] sm:$0xff]
  %v13 = vld [vmem:[%s0 + $0x18] sm:$0xff]
  %v14 = vld [vmem:[%s0 + $0x20] sm:$0xff]
  %v15 = vld [vmem:[%s0 + $0x28] sm:$0xff]
  %v16 = vld [vmem:[%s0 + $0x30] sm:$0xff]
  %v17 = vld [vmem:[%s0 + $0x38] sm:$0xff]
  %v18 = vld [vmem:[%s0 + $0x40] sm:$0xff]
  %v19 = vld [vmem:[%s0 + $0x48] sm:$0xff]
  %v20 = vld [vmem:[%s0 + $0x50] sm:$0xff]
  %v21 = vld [vmem:[%s0 + $0x58] sm:$0xff]
  %v22 = vld [vmem:[%s0 + $0x60] sm:$0xff]
  %v23 = vld [vmem:[%s0 + $0x68] sm:$0xff]
  %v24 = vld [vmem:[%s0 + $0x70] sm:$0xff]
  %v25 = vld [vmem:[%s0 + $0x78] sm:$0xff]
  %v26 = vld [vmem:[%s0 + $0x80] sm:$0xff]
  %v27 = vld [vmem:[%s0 + $0x88] sm:$0xff]
  %v28 = vld [vmem:[%s0 + $0x90] sm:$0xff]
  %v29 = vld [vmem:[%s0 + $0x98] sm:$0xff]
  %v30 = vld [vmem:[%s0 + $0xa0] sm:$0xff]
  %v31 = vld [vmem:[%s0 + $0xa8] sm:$0xff]
  %v32 = vld [vmem:[%s0 + $0xb0] sm:$0xff]
  %v33 = vld [vmem:[%s0 + $0xb8] sm:$0xff]
  %v34 = vld [vmem:[%s0 + $0xc0] sm:$0xff]
  %v35 = vld [vmem:[%s0 + $0xc8] sm:$0xff]
  %v36 = vld [vmem:[%s0 + $0xd0] sm:$0xff]
  %v37 = vld [vmem:[%s0 + $0xd8] sm:$0xff]
  %v38 = vld [vmem:[%s0 + $0xe0] sm:$0xff]
  %v39 = vld [vmem:[%s0 + $0xe8] sm:$0xff]
  %v40 = vld [vmem:[%s0 + $0xf0] sm:$0xff]
  %v41 = vld [vmem:[%s0 + $0xf8] sm:$0xff]
  %v42 = vld [vmem:[%s0 + $0x100] sm:$0xff]
  %v43 = vld [vmem:[%s0 + $0x108] sm:$0xff]
  %v44 = vld [vmem:[%s0 + $0x110] sm:$0xff]
  %v45 = vld [vmem:[%s0 + $0x118] sm:$0xff]
  %v46 = vld [vmem:[%s0 + $0x120] sm:$0xff]
  %v47 = vld [vmem:[%s0 + $0x128] sm:$0xff]
  %v48 = vld [vmem:[%s0 + $0x130] sm:$0xff]
  %v49 = vld [vmem:[%s0 + $0x138] sm:$0xff]
  %v50 = vld [vmem:[%s0 + $0x140] sm:$0xff]
  %v51 = vld [vmem:[%s0 + $0x148] sm:$0xff]
  %v52 = vld [vmem:[%s0 + $0x150] sm:$0xff]
  %v53 = vld [vmem:[%s0 + $0x158] sm:$0xff]
  %v54 = vld [vmem:[%s0 + $0x160] sm:$0xff]
  %v55 = vld [vmem:[%s0 + $0x168] sm:$0xff]
  %v56 = vld [vmem:[%s0 + $0x170] sm:$0xff]
  %v57 = vld [vmem:[%s0 + $0x178] sm:$0xff]
  %v58 = vld [vmem:[%s0 + $0x180] sm:$0xff]
  %v59 = vld [vmem:[%s0 + $0x188] sm:$0xff]
  %v60 = vld [vmem:[%s0 + $0x190] sm:$0xff]
  %v61 = vld [vmem:[%s0 + $0x198] sm:$0xff]
  %v62 = vld [vmem:[%s0 + $0x1a0] sm:$0xff]
  %v63 = vld [vmem:[%s0 + $0x1a8] sm:$0xff]
  %v64 = vld [vmem:[%s0 + $0x1b0] sm:$0xff]
  %v65 = vld [vmem:[%s0 + $0x1b8] sm:$0xff]
  %v66 = vld [vmem:[%s0 + $0x1c0] sm:$0xff]
  %v67 = vld [vmem:[%s0 + $0x1c8] sm:$0xff]
  %v68 = vld [vmem:[%s0 + $0x1d0] sm:$0xff]
  %v69 = vld [vmem:[%s0 + $0x1d8] sm:$0xff]
  %v70 = vld [vmem:[%s0 + $0x1e0] sm:$0xff]
  %v71 = vld [vmem:[%s0 + $0x1e8] sm:$0xff]
  %v72 = vld [vmem:[%s0 + $0x1f0] sm:$0xff]
  %v73 = vld [vmem:[%s0 + $0x1f8] sm:$0xff]
  %v74 = vadd.f32 %v10, %v11
  %v75 = vadd.f32 %v74, %v12
  %v76 = vadd.f32 %v75, %v13
  %v77 = vadd.f32 %v76, %v14
  %v78 = vadd.f32 %v77, %v15
  %v79 = vadd.f32 %v78, %v16
  %v80 = vadd.f32 %v79, %v17
  %v81 = vadd.f32 %v80, %v18
  %v82 = vadd.f32 %v81, %v19
  %v83 = vadd.f32 %v82, %v20
  %v84 = vadd.f32 %v83, %v21
  %v85 = vadd.f32 %v84, %v22
  %v86 = vadd.f32 %v85, %v23
  %v87 = vadd.f32 %v86, %v24
  %v88 = vadd.f32 %v87, %v25
  %v89 = vadd.f32 %v88, %v26
  %v90 = vadd.f32 %v89, %v27
  %v91 = vadd.f32 %v90, %v28
  %v92 = vadd.f32 %v91, %v29
  %v93 = vadd.f32 %v92, %v30
  %v94 = vadd.f32 %v93, %v31
  %v95 = vadd.f32 %v94, %v32
  %v96 = vadd.f32 %v95, %v33
  %v97 = vadd.f32 %v96, %v34
  %v98 = vadd.f32 %v97, %v35
  %v99 = vadd.f32 %v98, %v36
  %v100 = vadd.f32 %v99, %v37
  %v101 = vadd.f32 %v100, %v38
  %v102 = vadd.f32 %v101, %v39
  %v103 = vadd.f32 %v102, %v40
  %v104 = vadd.f32 %v103, %v41
  %v105 = vadd.f32 %v104, %v42
  %v106 = vadd.f32 %v105, %v43
  %v107 = vadd.f32 %v106, %v44
  %v108 = vadd.f32 %v107, %v45
  %v109 = vadd.f32 %v108, %v46
  %v110 = vadd.f32 %v109, %v47
  %v111 = vadd.f32 %v110, %v48
  %v112 = vadd.f32 %v111, %v49
  %v113 = vadd.f32 %v112, %v50
  %v114 = vadd.f32 %v113, %v51
  %v115 = vadd.f32 %v114, %v52
  %v116 = vadd.f32 %v115, %v53
  %v117 = vadd.f32 %v116, %v54
  %v118 = vadd.f32 %v117, %v55
  %v119 = vadd.f32 %v118, %v56
  %v120 = vadd.f32 %v119, %v57
  %v121 = vadd.f32 %v120, %v58
  %v122 = vadd.f32 %v121, %v59
  %v123 = vadd.f32 %v122, %v60
  %v124 = vadd.f32 %v123, %v61
  %v125 = vadd.f32 %v124, %v62
  %v126 = vadd.f32 %v125, %v63
  %v127 = vadd.f32 %v126, %v64
  %v128 = vadd.f32 %v127, %v65
  %v129 = vadd.f32 %v128, %v66
  %v130 = vadd.f32 %v129, %v67
  %v131 = vadd.f32 %v130, %v68
  %v132 = vadd.f32 %v131, %v69
  %v133 = vadd.f32 %v132, %v70
  %v134 = vadd.f32 %v133, %v71
  %v135 = vadd.f32 %v134, %v72
  %v136 = vadd.f32 %v135, %v73
  %v137 = vrot.slane %v136, 4
  %v138 = vadd.f32 %v136, %v137
  %v139 = vrot.slane %v138, 2
  %v140 = vadd.f32 %v138, %v139
  %v141 = vrot.slane %v140, 1
  %v142 = vadd.f32 %v140, %v141
  %143 = vst [vmem:[%s1] sm:$0x1] %v142
  %v144 = vmul.f32 %v10, %v10
  %v145 = vmul.f32 %v11, %v11
  %v146 = vmul.f32 %v12, %v12
  %v147 = vmul.f32 %v13, %v13
  %v148 = vmul.f32 %v14, %v14
  %v149 = vmul.f32 %v15, %v15
  %v150 = vmul.f32 %v16, %v16
  %v151 = vmul.f32 %v17, %v17
  %v152 = vmul.f32 %v18, %v18
  %v153 = vmul.f32 %v19, %v19
  %v154 = vmul.f32 %v20, %v20
  %v155 = vmul.f32 %v21, %v21
  %v156 = vmul.f32 %v22, %v22
  %v157 = vmul.f32 %v23, %v23
  %v158 = vmul.f32 %v24, %v24
  %v159 = vmul.f32 %v25, %v25
  %v160 = vmul.f32 %v26, %v26
  %v161 = vmul.f32 %v27, %v27
  %v162 = vmul.f32 %v28, %v28
  %v163 = vmul.f32 %v29, %v29
  %v164 = vmul.f32 %v30, %v30
  %v165 = vmul.f32 %v31, %v31
  %v166 = vmul.f32 %v32, %v32
  %v167 = vmul.f32 %v33, %v33
  %v168 = vmul.f32 %v34, %v34
  %v169 = vmul.f32 %v35, %v35
  %v170 = vmul.f32 %v36, %v36
  %v171 = vmul.f32 %v37, %v37
  %v172 = vmul.f32 %v38, %v38
  %v173 = vmul.f32 %v39, %v39
  %v174 = vmul.f32 %v40, %v40
  %v175 = vmul.f32 %v41, %v41
  %v176 = vmul.f32 %v42, %v42
  %v177 = vmul.f32 %v43, %v43
  %v178 = vmul.f32 %v44, %v44
  %v179 = vmul.f32 %v45, %v45
  %v180 = vmul.f32 %v46, %v46
  %v181 = vmul.f32 %v47, %v47
  %v182 = vmul.f32 %v48, %v48
  %v183 = vmul.f32 %v49, %v49
  %v184 = vmul.f32 %v50, %v50
  %v185 = vmul.f32 %v51, %v51
  %v186 = vmul.f32 %v52, %v52
  %v187 = vmul.f32 %v53, %v53
  %v188 = vmul.f32 %v54, %v54
  %v189 = vmul.f32 %v55, %v55
  %v190 = vmul.f32 %v56, %v56
  %v191 = vmul.f32 %v57, %v57
  %v192 = vmul.f32 %v58, %v58
  %v193 = vmul.f32 %v59, %v59
  %v194 = vmul.f32 %v60, %v60
  %v195 = vmul.f32 %v61, %v61
  %v196 = vmul.f32 %v62, %v62
  %v197 = vmul.f32 %v63, %v63
  %v198 = vmul.f32 %v64, %v64
  %v199 = vmul.f32 %v65, %v65
  %v200 = vmul.f32 %v66, %v66
  %v201 = vmul.f32 %v67, %v67
  %v202 = vmul.f32 %v68, %v68
  %v203 = vmul.f32 %v69, %v69
  %v204 = vmul.f32 %v70, %v70
  %v205 = vmul.f32 %v71, %v71
  %v206 = vmul.f32 %v72, %v72
  %v207 = vmul.f32 %v73, %v73
  %v208 = vadd.f32 %v144, %v145
  %v209 = vadd.f32 %v208, %v146
  %v210 = vadd.f32 %v209, %v147
  %v211 = vadd.f32 %v210, %v148
  %v212 = vadd.f32 %v211, %v149
  %v213 = vadd.f32 %v212, %v150
  %v214 = vadd.f32 %v213, %v151
  %v215 = vadd.f32 %v214, %v152
  %v216 = vadd.f32 %v215, %v153
  %v217 = vadd.f32 %v216, %v154
  %v218 = vadd.f32 %v217, %v155
  %v219 = vadd.f32 %v218, %v156
  %v220 = vadd.f32 %v219, %v157
  %v221 = vadd.f32 %v220, %v158
  %v222 = vadd.f32 %v221, %v159
  %v223 = vadd.f32 %v222, %v160
  %v224 = vadd.f32 %v223, %v161
  %v225 = vadd.f32 %v224, %v162
  %v226 = vadd.f32 %v225, %v163
  %v227 = vadd.f32 %v226, %v164
  %v228 = vadd.f32 %v227, %v165
  %v229 = vadd.f32 %v228, %v166
  %v230 = vadd.f32 %v229, %v167
  %v231 = vadd.f32 %v230, %v168
  %v232 = vadd.f32 %v231, %v169
  %v233 = vadd.f32 %v232, %v170
  %v234 = vadd.f32 %v233, %v171
  %v235 = vadd.f32 %v234, %v172
  %v236 = vadd.f32 %v235, %v173
  %v237 = vadd.f32 %v236, %v174
  %v238 = vadd.f32 %v237, %v175
  %v239 = vadd.f32 %v238, %v176
  %v240 = vadd.f32 %v239, %v177
  %v241 = vadd.f32 %v240, %v178
  %v242 = vadd.f32 %v241, %v179
  %v243 = vadd.f32 %v242, %v180
  %v244 = vadd.f32 %v243, %v181
  %v245 = vadd.f32 %v244, %v182
  %v246 = vadd.f32 %v245, %v183
  %v247 = vadd.f32 %v246, %v184
  %v248 = vadd.f32 %v247, %v185
  %v249 = vadd.f32 %v248, %v186
  %v250 = vadd.f32 %v249, %v187
  %v251 = vadd.f32 %v250, %v188
  %v252 = vadd.f32 %v251, %v189
  %v253 = vadd.f32 %v252, %v190
  %v254 = vadd.f32 %v253, %v191
  %v255 = vadd.f32 %v254, %v192
  %v256 = vadd.f32 %v255, %v193
  %v257 = vadd.f32 %v256, %v194
  %v258 = vadd.f32 %v257, %v195
  %v259 = vadd.f32 %v258, %v196
  %v260 = vadd.f32 %v259, %v197
  %v261 = vadd.f32 %v260, %v198
  %v262 = vadd.f32 %v261, %v199
  %v263 = vadd.f32 %v262, %v200
  %v264 = vadd.f32 %v263, %v201
  %v265 = vadd.f32 %v264, %v202
  %v266 = vadd.f32 %v265, %v203
  %v267 = vadd.f32 %v266, %v204
  %v268 = vadd.f32 %v267, %v205
  %v269 = vadd.f32 %v268, %v206
  %v270 = vadd.f32 %v269, %v207
  %v271 = vrot.slane %v270, 4
  %v272 = vadd.f32 %v270, %v271
  %v273 = vrot.slane %v272, 2
  %v274 = vadd.f32 %v272, %v273
  %v275 = vrot.slane %v274, 1
  %v276 = vadd.f32 %v274, %v275
  %277 = vst [vmem:[%s2] sm:$0x1] %v276
  // Predicated region
  $region6: #{_lambda_.4} parent=0 // pred_check
    _
  $region7: #{_lambda_.4} parent=0 // pred_check_branch
    %279 = sbr.rel (0) target = $region9
  $region8: #{_lambda_.4} parent=0 // pred_region
    _
  $region9: #{_lambda_.4} parent=0 // pred_fallthru
    _
  // Predicated region
  $region10: #{_lambda_.4} parent=0 // pred_check
    _
  $region11: #{_lambda_.4} parent=0 // pred_check_branch
    %281 = sbr.rel (0) target = $region13
  $region12: #{_lambda_.4} parent=0 // pred_region
    _
  $region13: #{_lambda_.4} parent=0 // pred_fallthru
    _
  // Predicated region
  $region14: #{_lambda_.4} parent=0 // pred_check
    _
  $region15: #{_lambda_.4} parent=0 // pred_check_branch
    %283 = sbr.rel (0) target = $region17
  $region16: #{_lambda_.4} parent=0 // pred_region
    _
  $region17: #{_lambda_.4} parent=0 // pred_fallthru
    _
  // Predicated region
  $region18: #{_lambda_.4} parent=0 // pred_check
    _
  $region19: #{_lambda_.4} parent=0 // pred_check_branch
    %285 = sbr.rel (0) target = $region21
  $region20: #{_lambda_.4} parent=0 // pred_region
    _
  $region21: #{_lambda_.4} parent=0 // pred_fallthru
    _

// kernel: _lambda_.7
$region0: #{_lambda_.7}
  #allocation0 [shape = 'u32[]', space=smem, size = 0x4, offset = 0x4, fixed_abs, tag = 'smem constant byte address 0x4 - core index']
  #allocation1 [shape = 'u32[144,128]{1,0:T(1,128)}', space=vmem, size = 0x12000, scoped, tag = 'internal scratch']
  %s0 = inlined_call_operand.vmem [shape: bf16[512,128], index: 0, kind: input, shape index: {}]
  %s1 = inlined_call_operand.vmem [shape: f32[2,128], index: 1, kind: input, shape index: {}]
  %s2 = inlined_call_operand.vmem [shape: bf16[128,128], index: 2, kind: input, shape index: {}]
  %s3 = inlined_call_operand.vmem [shape: bf16[512,128], index: 3, kind: input, shape index: {}]
  %s4 = inlined_call_operand.vmem [shape: f32[2,128], index: 4, kind: input, shape index: {}]
  %s5 = inlined_call_operand.vmem [shape: f32[512,128], index: 5, kind: output, shape index: {}]
  %s6 = sld [smem:[#allocation0]]
  $region30: #{_lambda_.7} parent=0
    _
  %s8 = ssub.s32 1, %s6
  %s9 = scalar_select 0, %s8, %s6
  // Predicated region
  $region2: #{_lambda_.7} parent=0 // pred_check
    _
  $region3: #{_lambda_.7} parent=0 // pred_check_branch
    %11 = sbr.rel (0) target = $region5
  $region4: #{_lambda_.7} parent=0 // pred_region
    _
  $region5: #{_lambda_.7} parent=0 // pred_fallthru
    _
  // Predicated region
  $region6: #{_lambda_.7} parent=0 // pred_check
    _
  $region7: #{_lambda_.7} parent=0 // pred_check_branch
    %13 = sbr.rel (0) target = $region9
  $region8: #{_lambda_.7} parent=0 // pred_region
    _
  $region9: #{_lambda_.7} parent=0 // pred_fallthru
    _
  // Predicated region
  $region10: #{_lambda_.7} parent=0 // pred_check
    _
  $region11: #{_lambda_.7} parent=0 // pred_check_branch
    %15 = sbr.rel (0) target = $region13
  $region12: #{_lambda_.7} parent=0 // pred_region
    _
  $region13: #{_lambda_.7} parent=0 // pred_fallthru
    _
  // Predicated region
  $region14: #{_lambda_.7} parent=0 // pred_check
    _
  $region15: #{_lambda_.7} parent=0 // pred_check_branch
    %17 = sbr.rel (0) target = $region17
  $region16: #{_lambda_.7} parent=0 // pred_region
    _
  $region17: #{_lambda_.7} parent=0 // pred_fallthru
    _
  // Predicated region
  $region18: #{_lambda_.7} parent=0 // pred_check
    _
  $region19: #{_lambda_.7} parent=0 // pred_check_branch
    %19 = sbr.rel (0) target = $region21
  $region20: #{_lambda_.7} parent=0 // pred_region
    _
  $region21: #{_lambda_.7} parent=0 // pred_fallthru
    _
  %v21 = vld [vmem:[%s1] sm:$0x3]
  %v22 = vld [vmem:[%s0] sm:$0xf]
  %v23 = vld [vmem:[%s0 + $0x4] sm:$0xf]
  %v24 = vld [vmem:[%s0 + $0x8] sm:$0xf]
  %v25 = vld [vmem:[%s0 + $0xc] sm:$0xf]
  %v26 = vld [vmem:[%s0 + $0x10] sm:$0xf]
  %v27 = vld [vmem:[%s0 + $0x14] sm:$0xf]
  %v28 = vld [vmem:[%s0 + $0x18] sm:$0xf]
  %v29 = vld [vmem:[%s0 + $0x1c] sm:$0xf]
  %v30 = vld [vmem:[%s0 + $0x20] sm:$0xf]
  %v31 = vld [vmem:[%s0 + $0x24] sm:$0xf]
  %v32 = vld [vmem:[%s0 + $0x28] sm:$0xf]
  %v33 = vld [vmem:[%s0 + $0x2c] sm:$0xf]
  %v34 = vld [vmem:[%s0 + $0x30] sm:$0xf]
  %v35 = vld [vmem:[%s0 + $0x34] sm:$0xf]
  %v36 = vld [vmem:[%s0 + $0x38] sm:$0xf]
  %v37 = vld [vmem:[%s0 + $0x3c] sm:$0xf]
  %v38 = vld [vmem:[%s0 + $0x40] sm:$0xf]
  %v39 = vld [vmem:[%s0 + $0x44] sm:$0xf]
  %v40 = vld [vmem:[%s0 + $0x48] sm:$0xf]
  %v41 = vld [vmem:[%s0 + $0x4c] sm:$0xf]
  %v42 = vld [vmem:[%s0 + $0x50] sm:$0xf]
  %v43 = vld [vmem:[%s0 + $0x54] sm:$0xf]
  %v44 = vld [vmem:[%s0 + $0x58] sm:$0xf]
  %v45 = vld [vmem:[%s0 + $0x5c] sm:$0xf]
  %v46 = vld [vmem:[%s0 + $0x60] sm:$0xf]
  %v47 = vld [vmem:[%s0 + $0x64] sm:$0xf]
  %v48 = vld [vmem:[%s0 + $0x68] sm:$0xf]
  %v49 = vld [vmem:[%s0 + $0x6c] sm:$0xf]
  %v50 = vld [vmem:[%s0 + $0x70] sm:$0xf]
  %v51 = vld [vmem:[%s0 + $0x74] sm:$0xf]
  %v52 = vld [vmem:[%s0 + $0x78] sm:$0xf]
  %v53 = vld [vmem:[%s0 + $0x7c] sm:$0xf]
  %v54 = vld [vmem:[%s0 + $0x80] sm:$0xf]
  %v55 = vld [vmem:[%s0 + $0x84] sm:$0xf]
  %v56 = vld [vmem:[%s0 + $0x88] sm:$0xf]
  %v57 = vld [vmem:[%s0 + $0x8c] sm:$0xf]
  %v58 = vld [vmem:[%s0 + $0x90] sm:$0xf]
  %v59 = vld [vmem:[%s0 + $0x94] sm:$0xf]
  %v60 = vld [vmem:[%s0 + $0x98] sm:$0xf]
  %v61 = vld [vmem:[%s0 + $0x9c] sm:$0xf]
  %v62 = vld [vmem:[%s0 + $0xa0] sm:$0xf]
  %v63 = vld [vmem:[%s0 + $0xa4] sm:$0xf]
  %v64 = vld [vmem:[%s0 + $0xa8] sm:$0xf]
  %v65 = vld [vmem:[%s0 + $0xac] sm:$0xf]
  %v66 = vld [vmem:[%s0 + $0xb0] sm:$0xf]
  %v67 = vld [vmem:[%s0 + $0xb4] sm:$0xf]
  %v68 = vld [vmem:[%s0 + $0xb8] sm:$0xf]
  %v69 = vld [vmem:[%s0 + $0xbc] sm:$0xf]
  %v70 = vld [vmem:[%s0 + $0xc0] sm:$0xf]
  %v71 = vld [vmem:[%s0 + $0xc4] sm:$0xf]
  %v72 = vld [vmem:[%s0 + $0xc8] sm:$0xf]
  %v73 = vld [vmem:[%s0 + $0xcc] sm:$0xf]
  %v74 = vld [vmem:[%s0 + $0xd0] sm:$0xf]
  %v75 = vld [vmem:[%s0 + $0xd4] sm:$0xf]
  %v76 = vld [vmem:[%s0 + $0xd8] sm:$0xf]
  %v77 = vld [vmem:[%s0 + $0xdc] sm:$0xf]
  %v78 = vld [vmem:[%s0 + $0xe0] sm:$0xf]
  %v79 = vld [vmem:[%s0 + $0xe4] sm:$0xf]
  %v80 = vld [vmem:[%s0 + $0xe8] sm:$0xf]
  %v81 = vld [vmem:[%s0 + $0xec] sm:$0xf]
  %v82 = vld [vmem:[%s0 + $0xf0] sm:$0xf]
  %v83 = vld [vmem:[%s0 + $0xf4] sm:$0xf]
  %v84 = vld [vmem:[%s0 + $0xf8] sm:$0xf]
  %v85 = vld [vmem:[%s0 + $0xfc] sm:$0xf]
  %v86 = vunpack.c.l.bf16 %v22
  %v87 = vunpack.c.l.bf16 %v23
  %v88 = vunpack.c.l.bf16 %v24
  %v89 = vunpack.c.l.bf16 %v25
  %v90 = vunpack.c.l.bf16 %v26
  %v91 = vunpack.c.l.bf16 %v27
  %v92 = vunpack.c.l.bf16 %v28
  %v93 = vunpack.c.l.bf16 %v29
  %v94 = vunpack.c.l.bf16 %v30
  %v95 = vunpack.c.l.bf16 %v31
  %v96 = vunpack.c.l.bf16 %v32
  %v97 = vunpack.c.l.bf16 %v33
  %v98 = vunpack.c.l.bf16 %v34
  %v99 = vunpack.c.l.bf16 %v35
  %v100 = vunpack.c.l.bf16 %v36
  %v101 = vunpack.c.l.bf16 %v37
  %v102 = vunpack.c.l.bf16 %v38
  %v103 = vunpack.c.l.bf16 %v39
  %v104 = vunpack.c.l.bf16 %v40
  %v105 = vunpack.c.l.bf16 %v41
  %v106 = vunpack.c.l.bf16 %v42
  %v107 = vunpack.c.l.bf16 %v43
  %v108 = vunpack.c.l.bf16 %v44
  %v109 = vunpack.c.l.bf16 %v45
  %v110 = vunpack.c.l.bf16 %v46
  %v111 = vunpack.c.l.bf16 %v47
  %v112 = vunpack.c.l.bf16 %v48
  %v113 = vunpack.c.l.bf16 %v49
  %v114 = vunpack.c.l.bf16 %v50
  %v115 = vunpack.c.l.bf16 %v51
  %v116 = vunpack.c.l.bf16 %v52
  %v117 = vunpack.c.l.bf16 %v53
  %v118 = vunpack.c.l.bf16 %v54
  %v119 = vunpack.c.l.bf16 %v55
  %v120 = vunpack.c.l.bf16 %v56
  %v121 = vunpack.c.l.bf16 %v57
  %v122 = vunpack.c.l.bf16 %v58
  %v123 = vunpack.c.l.bf16 %v59
  %v124 = vunpack.c.l.bf16 %v60
  %v125 = vunpack.c.l.bf16 %v61
  %v126 = vunpack.c.l.bf16 %v62
  %v127 = vunpack.c.l.bf16 %v63
  %v128 = vunpack.c.l.bf16 %v64
  %v129 = vunpack.c.l.bf16 %v65
  %v130 = vunpack.c.l.bf16 %v66
  %v131 = vunpack.c.l.bf16 %v67
  %v132 = vunpack.c.l.bf16 %v68
  %v133 = vunpack.c.l.bf16 %v69
  %v134 = vunpack.c.l.bf16 %v70
  %v135 = vunpack.c.l.bf16 %v71
  %v136 = vunpack.c.l.bf16 %v72
  %v137 = vunpack.c.l.bf16 %v73
  %v138 = vunpack.c.l.bf16 %v74
  %v139 = vunpack.c.l.bf16 %v75
  %v140 = vunpack.c.l.bf16 %v76
  %v141 = vunpack.c.l.bf16 %v77
  %v142 = vunpack.c.l.bf16 %v78
  %v143 = vunpack.c.l.bf16 %v79
  %v144 = vunpack.c.l.bf16 %v80
  %v145 = vunpack.c.l.bf16 %v81
  %v146 = vunpack.c.l.bf16 %v82
  %v147 = vunpack.c.l.bf16 %v83
  %v148 = vunpack.c.l.bf16 %v84
  %v149 = vunpack.c.l.bf16 %v85
  %v150 = vlaneseq
  %v151 = vshrl.u32 %v150, 7
  %v152 = vsub.s32 0, %v151
  %v153 = vrot.slane %v21, %v152
  %v154 = vmul.f32 %v86, %v153
  %v155 = vmul.f32 %v87, %v153
  %v156 = vmul.f32 %v88, %v153
  %v157 = vmul.f32 %v89, %v153
  %v158 = vmul.f32 %v90, %v153
  %v159 = vmul.f32 %v91, %v153
  %v160 = vmul.f32 %v92, %v153
  %v161 = vmul.f32 %v93, %v153
  %v162 = vmul.f32 %v94, %v153
  %v163 = vmul.f32 %v95, %v153
  %v164 = vmul.f32 %v96, %v153
  %v165 = vmul.f32 %v97, %v153
  %v166 = vmul.f32 %v98, %v153
  %v167 = vmul.f32 %v99, %v153
  %v168 = vmul.f32 %v100, %v153
  %v169 = vmul.f32 %v101, %v153
  %v170 = vmul.f32 %v102, %v153
  %v171 = vmul.f32 %v103, %v153
  %v172 = vmul.f32 %v104, %v153
  %v173 = vmul.f32 %v105, %v153
  %v174 = vmul.f32 %v106, %v153
  %v175 = vmul.f32 %v107, %v153
  %v176 = vmul.f32 %v108, %v153
  %v177 = vmul.f32 %v109, %v153
  %v178 = vmul.f32 %v110, %v153
  %v179 = vmul.f32 %v111, %v153
  %v180 = vmul.f32 %v112, %v153
  %v181 = vmul.f32 %v113, %v153
  %v182 = vmul.f32 %v114, %v153
  %v183 = vmul.f32 %v115, %v153
  %v184 = vmul.f32 %v116, %v153
  %v185 = vmul.f32 %v117, %v153
  %v186 = vmul.f32 %v118, %v153
  %v187 = vmul.f32 %v119, %v153
  %v188 = vmul.f32 %v120, %v153
  %v189 = vmul.f32 %v121, %v153
  %v190 = vmul.f32 %v122, %v153
  %v191 = vmul.f32 %v123, %v153
  %v192 = vmul.f32 %v124, %v153
  %v193 = vmul.f32 %v125, %v153
  %v194 = vmul.f32 %v126, %v153
  %v195 = vmul.f32 %v127, %v153
  %v196 = vmul.f32 %v128, %v153
  %v197 = vmul.f32 %v129, %v153
  %v198 = vmul.f32 %v130, %v153
  %v199 = vmul.f32 %v131, %v153
  %v200 = vmul.f32 %v132, %v153
  %v201 = vmul.f32 %v133, %v153
  %v202 = vmul.f32 %v134, %v153
  %v203 = vmul.f32 %v135, %v153
  %v204 = vmul.f32 %v136, %v153
  %v205 = vmul.f32 %v137, %v153
  %v206 = vmul.f32 %v138, %v153
  %v207 = vmul.f32 %v139, %v153
  %v208 = vmul.f32 %v140, %v153
  %v209 = vmul.f32 %v141, %v153
  %v210 = vmul.f32 %v142, %v153
  %v211 = vmul.f32 %v143, %v153
  %v212 = vmul.f32 %v144, %v153
  %v213 = vmul.f32 %v145, %v153
  %v214 = vmul.f32 %v146, %v153
  %v215 = vmul.f32 %v147, %v153
  %v216 = vmul.f32 %v148, %v153
  %v217 = vmul.f32 %v149, %v153
  %v218 = vlaneseq
  %v219 = vshrl.u32 %v218, 7
  %v220 = vsub.s32 1, %v219
  %v221 = vrot.slane %v21, %v220
  %v222 = vadd.f32 %v154, %v221
  %v223 = vadd.f32 %v155, %v221
  %v224 = vadd.f32 %v156, %v221
  %v225 = vadd.f32 %v157, %v221
  %v226 = vadd.f32 %v158, %v221
  %v227 = vadd.f32 %v159, %v221
  %v228 = vadd.f32 %v160, %v221
  %v229 = vadd.f32 %v161, %v221
  %v230 = vadd.f32 %v162, %v221
  %v231 = vadd.f32 %v163, %v221
  %v232 = vadd.f32 %v164, %v221
  %v233 = vadd.f32 %v165, %v221
  %v234 = vadd.f32 %v166, %v221
  %v235 = vadd.f32 %v167, %v221
  %v236 = vadd.f32 %v168, %v221
  %v237 = vadd.f32 %v169, %v221
  %v238 = vadd.f32 %v170, %v221
  %v239 = vadd.f32 %v171, %v221
  %v240 = vadd.f32 %v172, %v221
  %v241 = vadd.f32 %v173, %v221
  %v242 = vadd.f32 %v174, %v221
  %v243 = vadd.f32 %v175, %v221
  %v244 = vadd.f32 %v176, %v221
  %v245 = vadd.f32 %v177, %v221
  %v246 = vadd.f32 %v178, %v221
  %v247 = vadd.f32 %v179, %v221
  %v248 = vadd.f32 %v180, %v221
  %v249 = vadd.f32 %v181, %v221
  %v250 = vadd.f32 %v182, %v221
  %v251 = vadd.f32 %v183, %v221
  %v252 = vadd.f32 %v184, %v221
  %v253 = vadd.f32 %v185, %v221
  %v254 = vadd.f32 %v186, %v221
  %v255 = vadd.f32 %v187, %v221
  %v256 = vadd.f32 %v188, %v221
  %v257 = vadd.f32 %v189, %v221
  %v258 = vadd.f32 %v190, %v221
  %v259 = vadd.f32 %v191, %v221
  %v260 = vadd.f32 %v192, %v221
  %v261 = vadd.f32 %v193, %v221
  %v262 = vadd.f32 %v194, %v221
  %v263 = vadd.f32 %v195, %v221
  %v264 = vadd.f32 %v196, %v221
  %v265 = vadd.f32 %v197, %v221
  %v266 = vadd.f32 %v198, %v221
  %v267 = vadd.f32 %v199, %v221
  %v268 = vadd.f32 %v200, %v221
  %v269 = vadd.f32 %v201, %v221
  %v270 = vadd.f32 %v202, %v221
  %v271 = vadd.f32 %v203, %v221
  %v272 = vadd.f32 %v204, %v221
  %v273 = vadd.f32 %v205, %v221
  %v274 = vadd.f32 %v206, %v221
  %v275 = vadd.f32 %v207, %v221
  %v276 = vadd.f32 %v208, %v221
  %v277 = vadd.f32 %v209, %v221
  %v278 = vadd.f32 %v210, %v221
  %v279 = vadd.f32 %v211, %v221
  %v280 = vadd.f32 %v212, %v221
  %v281 = vadd.f32 %v213, %v221
  %v282 = vadd.f32 %v214, %v221
  %v283 = vadd.f32 %v215, %v221
  %v284 = vadd.f32 %v216, %v221
  %v285 = vadd.f32 %v217, %v221
  %v286 = vmax.f32 %v222, 0.0
  %v287 = vmax.f32 %v223, 0.0
  %v288 = vmax.f32 %v224, 0.0
  %v289 = vmax.f32 %v225, 0.0
  %v290 = vmax.f32 %v226, 0.0
  %v291 = vmax.f32 %v227, 0.0
  %v292 = vmax.f32 %v228, 0.0
  %v293 = vmax.f32 %v229, 0.0
  %v294 = vmax.f32 %v230, 0.0
  %v295 = vmax.f32 %v231, 0.0
  %v296 = vmax.f32 %v232, 0.0
  %v297 = vmax.f32 %v233, 0.0
  %v298 = vmax.f32 %v234, 0.0
  %v299 = vmax.f32 %v235, 0.0
  %v300 = vmax.f32 %v236, 0.0
  %v301 = vmax.f32 %v237, 0.0
  %v302 = vmax.f32 %v238, 0.0
  %v303 = vmax.f32 %v239, 0.0
  %v304 = vmax.f32 %v240, 0.0
  %v305 = vmax.f32 %v241, 0.0
  %v306 = vmax.f32 %v242, 0.0
  %v307 = vmax.f32 %v243, 0.0
  %v308 = vmax.f32 %v244, 0.0
  %v309 = vmax.f32 %v245, 0.0
  %v310 = vmax.f32 %v246, 0.0
  %v311 = vmax.f32 %v247, 0.0
  %v312 = vmax.f32 %v248, 0.0
  %v313 = vmax.f32 %v249, 0.0
  %v314 = vmax.f32 %v250, 0.0
  %v315 = vmax.f32 %v251, 0.0
  %v316 = vmax.f32 %v252, 0.0
  %v317 = vmax.f32 %v253, 0.0
  %v318 = vmax.f32 %v254, 0.0
  %v319 = vmax.f32 %v255, 0.0
  %v320 = vmax.f32 %v256, 0.0
  %v321 = vmax.f32 %v257, 0.0
  %v322 = vmax.f32 %v258, 0.0
  %v323 = vmax.f32 %v259, 0.0
  %v324 = vmax.f32 %v260, 0.0
  %v325 = vmax.f32 %v261, 0.0
  %v326 = vmax.f32 %v262, 0.0
  %v327 = vmax.f32 %v263, 0.0
  %v328 = vmax.f32 %v264, 0.0
  %v329 = vmax.f32 %v265, 0.0
  %v330 = vmax.f32 %v266, 0.0
  %v331 = vmax.f32 %v267, 0.0
  %v332 = vmax.f32 %v268, 0.0
  %v333 = vmax.f32 %v269, 0.0
  %v334 = vmax.f32 %v270, 0.0
  %v335 = vmax.f32 %v271, 0.0
  %v336 = vmax.f32 %v272, 0.0
  %v337 = vmax.f32 %v273, 0.0
  %v338 = vmax.f32 %v274, 0.0
  %v339 = vmax.f32 %v275, 0.0
  %v340 = vmax.f32 %v276, 0.0
  %v341 = vmax.f32 %v277, 0.0
  %v342 = vmax.f32 %v278, 0.0
  %v343 = vmax.f32 %v279, 0.0
  %v344 = vmax.f32 %v280, 0.0
  %v345 = vmax.f32 %v281, 0.0
  %v346 = vmax.f32 %v282, 0.0
  %v347 = vmax.f32 %v283, 0.0
  %v348 = vmax.f32 %v284, 0.0
  %v349 = vmax.f32 %v285, 0.0
  %v350 = vpack.c.bf16 %v287, %v286
  %v351 = vpack.c.bf16 %v289, %v288
  %v352 = vpack.c.bf16 %v291, %v290
  %v353 = vpack.c.bf16 %v293, %v292
  %v354 = vpack.c.bf16 %v295, %v294
  %v355 = vpack.c.bf16 %v297, %v296
  %v356 = vpack.c.bf16 %v299, %v298
  %v357 = vpack.c.bf16 %v301, %v300
  %v358 = vpack.c.bf16 %v303, %v302
  %v359 = vpack.c.bf16 %v305, %v304
  %v360 = vpack.c.bf16 %v307, %v306
  %v361 = vpack.c.bf16 %v309, %v308
  %v362 = vpack.c.bf16 %v311, %v310
  %v363 = vpack.c.bf16 %v313, %v312
  %v364 = vpack.c.bf16 %v315, %v314
  %v365 = vpack.c.bf16 %v317, %v316
  %v366 = vpack.c.bf16 %v319, %v318
  %v367 = vpack.c.bf16 %v321, %v320
  %v368 = vpack.c.bf16 %v323, %v322
  %v369 = vpack.c.bf16 %v325, %v324
  %v370 = vpack.c.bf16 %v327, %v326
  %v371 = vpack.c.bf16 %v329, %v328
  %v372 = vpack.c.bf16 %v331, %v330
  %v373 = vpack.c.bf16 %v333, %v332
  %v374 = vpack.c.bf16 %v335, %v334
  %v375 = vpack.c.bf16 %v337, %v336
  %v376 = vpack.c.bf16 %v339, %v338
  %v377 = vpack.c.bf16 %v341, %v340
  %v378 = vpack.c.bf16 %v343, %v342
  %v379 = vpack.c.bf16 %v345, %v344
  %v380 = vpack.c.bf16 %v347, %v346
  %v381 = vpack.c.bf16 %v349, %v348
  %v382 = vld [vmem:[%s2] sm:$0xf]
  %v383 = vld [vmem:[%s2 + $0x4] sm:$0xf]
  %v384 = vld [vmem:[%s2 + $0x8] sm:$0xf]
  %v385 = vld [vmem:[%s2 + $0xc] sm:$0xf]
  %v386 = vld [vmem:[%s2 + $0x10] sm:$0xf]
  %v387 = vld [vmem:[%s2 + $0x14] sm:$0xf]
  %v388 = vld [vmem:[%s2 + $0x18] sm:$0xf]
  %v389 = vld [vmem:[%s2 + $0x1c] sm:$0xf]
  %v390 = vld [vmem:[%s2 + $0x20] sm:$0xf]
  %v391 = vld [vmem:[%s2 + $0x24] sm:$0xf]
  %v392 = vld [vmem:[%s2 + $0x28] sm:$0xf]
  %v393 = vld [vmem:[%s2 + $0x2c] sm:$0xf]
  %v394 = vld [vmem:[%s2 + $0x30] sm:$0xf]
  %v395 = vld [vmem:[%s2 + $0x34] sm:$0xf]
  %v396 = vld [vmem:[%s2 + $0x38] sm:$0xf]
  %v397 = vld [vmem:[%s2 + $0x3c] sm:$0xf]
  %v398 = vld [vmem:[%s4] sm:$0x3]
  %v399 = vld [vmem:[%s3] sm:$0xf]
  %v400 = vld [vmem:[%s3 + $0x4] sm:$0xf]
  %v401 = vld [vmem:[%s3 + $0x8] sm:$0xf]
  %v402 = vld [vmem:[%s3 + $0xc] sm:$0xf]
  %v403 = vld [vmem:[%s3 + $0x10] sm:$0xf]
  %v404 = vld [vmem:[%s3 + $0x14] sm:$0xf]
  %v405 = vld [vmem:[%s3 + $0x18] sm:$0xf]
  %v406 = vld [vmem:[%s3 + $0x1c] sm:$0xf]
  %v407 = vld [vmem:[%s3 + $0x20] sm:$0xf]
  %v408 = vld [vmem:[%s3 + $0x24] sm:$0xf]
  %v409 = vld [vmem:[%s3 + $0x28] sm:$0xf]
  %v410 = vld [vmem:[%s3 + $0x2c] sm:$0xf]
  %v411 = vld [vmem:[%s3 + $0x30] sm:$0xf]
  %v412 = vld [vmem:[%s3 + $0x34] sm:$0xf]
  %v413 = vld [vmem:[%s3 + $0x38] sm:$0xf]
  %v414 = vld [vmem:[%s3 + $0x3c] sm:$0xf]
  %v415 = vld [vmem:[%s3 + $0x40] sm:$0xf]
  %v416 = vld [vmem:[%s3 + $0x44] sm:$0xf]
  %v417 = vld [vmem:[%s3 + $0x48] sm:$0xf]
  %v418 = vld [vmem:[%s3 + $0x4c] sm:$0xf]
  %v419 = vld [vmem:[%s3 + $0x50] sm:$0xf]
  %v420 = vld [vmem:[%s3 + $0x54] sm:$0xf]
  %v421 = vld [vmem:[%s3 + $0x58] sm:$0xf]
  %v422 = vld [vmem:[%s3 + $0x5c] sm:$0xf]
  %v423 = vld [vmem:[%s3 + $0x60] sm:$0xf]
  %v424 = vld [vmem:[%s3 + $0x64] sm:$0xf]
  %v425 = vld [vmem:[%s3 + $0x68] sm:$0xf]
  %v426 = vld [vmem:[%s3 + $0x6c] sm:$0xf]
  %v427 = vld [vmem:[%s3 + $0x70] sm:$0xf]
  %v428 = vld [vmem:[%s3 + $0x74] sm:$0xf]
  %v429 = vld [vmem:[%s3 + $0x78] sm:$0xf]
  %v430 = vld [vmem:[%s3 + $0x7c] sm:$0xf]
  %v431 = vld [vmem:[%s3 + $0x80] sm:$0xf]
  %v432 = vld [vmem:[%s3 + $0x84] sm:$0xf]
  %v433 = vld [vmem:[%s3 + $0x88] sm:$0xf]
  %v434 = vld [vmem:[%s3 + $0x8c] sm:$0xf]
  %v435 = vld [vmem:[%s3 + $0x90] sm:$0xf]
  %v436 = vld [vmem:[%s3 + $0x94] sm:$0xf]
  %v437 = vld [vmem:[%s3 + $0x98] sm:$0xf]
  %v438 = vld [vmem:[%s3 + $0x9c] sm:$0xf]
  %v439 = vld [vmem:[%s3 + $0xa0] sm:$0xf]
  %v440 = vld [vmem:[%s3 + $0xa4] sm:$0xf]
  %v441 = vld [vmem:[%s3 + $0xa8] sm:$0xf]
  %v442 = vld [vmem:[%s3 + $0xac] sm:$0xf]
  %v443 = vld [vmem:[%s3 + $0xb0] sm:$0xf]
  %v444 = vld [vmem:[%s3 + $0xb4] sm:$0xf]
  %v445 = vld [vmem:[%s3 + $0xb8] sm:$0xf]
  %v446 = vld [vmem:[%s3 + $0xbc] sm:$0xf]
  %v447 = vld [vmem:[%s3 + $0xc0] sm:$0xf]
  %v448 = vld [vmem:[%s3 + $0xc4] sm:$0xf]
  %v449 = vld [vmem:[%s3 + $0xc8] sm:$0xf]
  %v450 = vld [vmem:[%s3 + $0xcc] sm:$0xf]
  %v451 = vld [vmem:[%s3 + $0xd0] sm:$0xf]
  %v452 = vld [vmem:[%s3 + $0xd4] sm:$0xf]
  %v453 = vld [vmem:[%s3 + $0xd8] sm:$0xf]
  %v454 = vld [vmem:[%s3 + $0xdc] sm:$0xf]
  %v455 = vld [vmem:[%s3 + $0xe0] sm:$0xf]
  %v456 = vld [vmem:[%s3 + $0xe4] sm:$0xf]
  %v457 = vld [vmem:[%s3 + $0xe8] sm:$0xf]
  %v458 = vld [vmem:[%s3 + $0xec] sm:$0xf]
  %v459 = vld [vmem:[%s3 + $0xf0] sm:$0xf]
  %v460 = vld [vmem:[%s3 + $0xf4] sm:$0xf]
  %v461 = vld [vmem:[%s3 + $0xf8] sm:$0xf]
  %v462 = vld [vmem:[%s3 + $0xfc] sm:$0xf]
  %v463 = vunpack.c.l.bf16 %v399
  %v464 = vunpack.c.l.bf16 %v400
  %v465 = vunpack.c.l.bf16 %v401
  %v466 = vunpack.c.l.bf16 %v402
  %v467 = vunpack.c.l.bf16 %v403
  %v468 = vunpack.c.l.bf16 %v404
  %v469 = vunpack.c.l.bf16 %v405
  %v470 = vunpack.c.l.bf16 %v406
  %v471 = vunpack.c.l.bf16 %v407
  %v472 = vunpack.c.l.bf16 %v408
  %v473 = vunpack.c.l.bf16 %v409
  %v474 = vunpack.c.l.bf16 %v410
  %v475 = vunpack.c.l.bf16 %v411
  %v476 = vunpack.c.l.bf16 %v412
  %v477 = vunpack.c.l.bf16 %v413
  %v478 = vunpack.c.l.bf16 %v414
  %v479 = vunpack.c.l.bf16 %v415
  %v480 = vunpack.c.l.bf16 %v416
  %v481 = vunpack.c.l.bf16 %v417
  %v482 = vunpack.c.l.bf16 %v418
  %v483 = vunpack.c.l.bf16 %v419
  %v484 = vunpack.c.l.bf16 %v420
  %v485 = vunpack.c.l.bf16 %v421
  %v486 = vunpack.c.l.bf16 %v422
  %v487 = vunpack.c.l.bf16 %v423
  %v488 = vunpack.c.l.bf16 %v424
  %v489 = vunpack.c.l.bf16 %v425
  %v490 = vunpack.c.l.bf16 %v426
  %v491 = vunpack.c.l.bf16 %v427
  %v492 = vunpack.c.l.bf16 %v428
  %v493 = vunpack.c.l.bf16 %v429
  %v494 = vunpack.c.l.bf16 %v430
  %v495 = vunpack.c.l.bf16 %v431
  %v496 = vunpack.c.l.bf16 %v432
  %v497 = vunpack.c.l.bf16 %v433
  %v498 = vunpack.c.l.bf16 %v434
  %v499 = vunpack.c.l.bf16 %v435
  %v500 = vunpack.c.l.bf16 %v436
  %v501 = vunpack.c.l.bf16 %v437
  %v502 = vunpack.c.l.bf16 %v438
  %v503 = vunpack.c.l.bf16 %v439
  %v504 = vunpack.c.l.bf16 %v440
  %v505 = vunpack.c.l.bf16 %v441
  %v506 = vunpack.c.l.bf16 %v442
  %v507 = vunpack.c.l.bf16 %v443
  %v508 = vunpack.c.l.bf16 %v444
  %v509 = vunpack.c.l.bf16 %v445
  %v510 = vunpack.c.l.bf16 %v446
  %v511 = vunpack.c.l.bf16 %v447
  %v512 = vunpack.c.l.bf16 %v448
  %v513 = vunpack.c.l.bf16 %v449
  %v514 = vunpack.c.l.bf16 %v450
  %v515 = vunpack.c.l.bf16 %v451
  %v516 = vunpack.c.l.bf16 %v452
  %v517 = vunpack.c.l.bf16 %v453
  %v518 = vunpack.c.l.bf16 %v454
  %v519 = vunpack.c.l.bf16 %v455
  %v520 = vunpack.c.l.bf16 %v456
  %v521 = vunpack.c.l.bf16 %v457
  %v522 = vunpack.c.l.bf16 %v458
  %v523 = vunpack.c.l.bf16 %v459
  %v524 = vunpack.c.l.bf16 %v460
  %v525 = vunpack.c.l.bf16 %v461
  %v526 = vunpack.c.l.bf16 %v462
  %v527 = vlaneseq
  %v528 = vshrl.u32 %v527, 7
  %v529 = vsub.s32 0, %v528
  %v530 = vrot.slane %v398, %v529
  %v531 = vmul.f32 %v463, %v530
  %v532 = vmul.f32 %v464, %v530
  %v533 = vmul.f32 %v465, %v530
  %v534 = vmul.f32 %v466, %v530
  %v535 = vmul.f32 %v467, %v530
  %v536 = vmul.f32 %v468, %v530
  %v537 = vmul.f32 %v469, %v530
  %v538 = vmul.f32 %v470, %v530
  %v539 = vmul.f32 %v471, %v530
  %v540 = vmul.f32 %v472, %v530
  %v541 = vmul.f32 %v473, %v530
  %v542 = vmul.f32 %v474, %v530
  %v543 = vmul.f32 %v475, %v530
  %v544 = vmul.f32 %v476, %v530
  %v545 = vmul.f32 %v477, %v530
  %v546 = vmul.f32 %v478, %v530
  %v547 = vmul.f32 %v479, %v530
  %v548 = vmul.f32 %v480, %v530
  %v549 = vmul.f32 %v481, %v530
  %v550 = vmul.f32 %v482, %v530
  %v551 = vmul.f32 %v483, %v530
  %v552 = vmul.f32 %v484, %v530
  %v553 = vmul.f32 %v485, %v530
  %v554 = vmul.f32 %v486, %v530
  %v555 = vmul.f32 %v487, %v530
  %v556 = vmul.f32 %v488, %v530
  %v557 = vmul.f32 %v489, %v530
  %v558 = vmul.f32 %v490, %v530
  %v559 = vmul.f32 %v491, %v530
  %v560 = vmul.f32 %v492, %v530
  %v561 = vmul.f32 %v493, %v530
  %v562 = vmul.f32 %v494, %v530
  %v563 = vmul.f32 %v495, %v530
  %v564 = vmul.f32 %v496, %v530
  %v565 = vmul.f32 %v497, %v530
  %v566 = vmul.f32 %v498, %v530
  %v567 = vmul.f32 %v499, %v530
  %v568 = vmul.f32 %v500, %v530
  %v569 = vmul.f32 %v501, %v530
  %v570 = vmul.f32 %v502, %v530
  %v571 = vmul.f32 %v503, %v530
  %v572 = vmul.f32 %v504, %v530
  %v573 = vmul.f32 %v505, %v530
  %v574 = vmul.f32 %v506, %v530
  %v575 = vmul.f32 %v507, %v530
  %v576 = vmul.f32 %v508, %v530
  %v577 = vmul.f32 %v509, %v530
  %v578 = vmul.f32 %v510, %v530
  %v579 = vmul.f32 %v511, %v530
  %v580 = vmul.f32 %v512, %v530
  %v581 = vmul.f32 %v513, %v530
  %v582 = vmul.f32 %v514, %v530
  %v583 = vmul.f32 %v515, %v530
  %v584 = vmul.f32 %v516, %v530
  %v585 = vmul.f32 %v517, %v530
  %v586 = vmul.f32 %v518, %v530
  %v587 = vmul.f32 %v519, %v530
  %v588 = vmul.f32 %v520, %v530
  %v589 = vmul.f32 %v521, %v530
  %v590 = vmul.f32 %v522, %v530
  %v591 = vmul.f32 %v523, %v530
  %v592 = vmul.f32 %v524, %v530
  %v593 = vmul.f32 %v525, %v530
  %v594 = vmul.f32 %v526, %v530
  %v611 = vunpack.c.l.b16 %v382
  %v612 = vunpack.c.l.b16 %v383
  %v613 = vunpack.c.l.b16 %v384
  %v614 = vunpack.c.l.b16 %v385
  %v615 = vunpack.c.l.b16 %v386
  %v616 = vunpack.c.l.b16 %v387
  %v617 = vunpack.c.l.b16 %v388
  %v618 = vunpack.c.l.b16 %v389
  %v619 = vunpack.c.l.b16 %v390
  %v620 = vunpack.c.l.b16 %v391
  %v621 = vunpack.c.l.b16 %v392
  %v622 = vunpack.c.l.b16 %v393
  %v623 = vunpack.c.l.b16 %v394
  %v624 = vunpack.c.l.b16 %v395
  %v625 = vunpack.c.l.b16 %v396
  %v626 = vunpack.c.l.b16 %v397
  %v627 = vpack.c.b16 %v612, %v611
  %v628 = vpack.c.b16 %v614, %v613
  %v629 = vpack.c.b16 %v616, %v615
  %v630 = vpack.c.b16 %v618, %v617
  %v631 = vpack.c.b16 %v620, %v619
  %v632 = vpack.c.b16 %v622, %v621
  %v633 = vpack.c.b16 %v624, %v623
  %v634 = vpack.c.b16 %v626, %v625
  %643 = vmatprep.subr.bf16.mxu0 0
  %644 = vmatpush1.bf16.msra.mxu0 %v627
  %645 = vmatprep.subr.bf16.mxu0 0
  %646 = vmatpush1.bf16.msra.mxu0 %v628
  %647 = vmatprep.subr.bf16.mxu0 0
  %648 = vmatpush1.bf16.msra.mxu0 %v629
  %649 = vmatprep.subr.bf16.mxu0 0
  %650 = vmatpush1.bf16.msra.mxu0 %v630
  %651 = vmatprep.subr.bf16.mxu0 0
  %652 = vmatpush1.bf16.msra.mxu0 %v631
  %653 = vmatprep.subr.bf16.mxu0 0
  %654 = vmatpush1.bf16.msra.mxu0 %v632
  %655 = vmatprep.subr.bf16.mxu0 0
  %656 = vmatpush1.bf16.msra.mxu0 %v633
  %657 = vmatprep.subr.bf16.mxu0 0
  %658 = vmatpush1.bf16.msra.mxu0 %v634
  %659 = vmatprep.subr.bf16.mxu0 0
  %660 = vmatpush1.bf16.msra.mxu0 0
  %661 = vmatprep.subr.bf16.mxu0 0
  %662 = vmatpush1.bf16.msra.mxu0 0
  %663 = vmatprep.subr.bf16.mxu0 0
  %664 = vmatpush1.bf16.msra.mxu0 0
  %665 = vmatprep.subr.bf16.mxu0 0
  %666 = vmatpush1.bf16.msra.mxu0 0
  %667 = vmatprep.subr.bf16.mxu0 0
  %668 = vmatpush1.bf16.msra.mxu0 0
  %669 = vmatprep.subr.bf16.mxu0 0
  %670 = vmatpush1.bf16.msra.mxu0 0
  %671 = vmatprep.subr.bf16.mxu0 0
  %672 = vmatpush1.bf16.msra.mxu0 0
  %673 = vmatprep.subr.bf16.mxu0 0
  %674 = vmatpush1.bf16.msra.mxu0 0
  %675 = vmatprep.mubr.bf16.mxu0 0
  %676 = vmatmul.mubr.bf16.gmra.mrb[0].mxu0 %v350
  %v677 = vpop.f32.mrb[0].mxu0
  %v678 = vadd.f32 %v531, %v677
  %v679 = vpop.f32.mrb[0].mxu0
  %v680 = vpop.f32.mrb[0].mxu0
  %v681 = vadd.f32 %v532, %v680
  %v682 = vpop.f32.mrb[0].mxu0
  %683 = vmatprep.mubr.bf16.mxu0 0
  %684 = vmatmul.mubr.bf16.gmra.mrb[0].mxu0 %v351
  %v685 = vpop.f32.mrb[0].mxu0
  %v686 = vadd.f32 %v533, %v685
  %v687 = vpop.f32.mrb[0].mxu0
  %v688 = vpop.f32.mrb[0].mxu0
  %v689 = vadd.f32 %v534, %v688
  %v690 = vpop.f32.mrb[0].mxu0
  %691 = vmatprep.mubr.bf16.mxu0 0
  %692 = vmatmul.mubr.bf16.gmra.mrb[0].mxu0 %v352
  %v693 = vpop.f32.mrb[0].mxu0
  %v694 = vadd.f32 %v535, %v693
  %v695 = vpop.f32.mrb[0].mxu0
  %v696 = vpop.f32.mrb[0].mxu0
  %v697 = vadd.f32 %v536, %v696
  %v698 = vpop.f32.mrb[0].mxu0
  %699 = vmatprep.mubr.bf16.mxu0 0
  %700 = vmatmul.mubr.bf16.gmra.mrb[0].mxu0 %v353
  %v701 = vpop.f32.mrb[0].mxu0
  %v702 = vadd.f32 %v537, %v701
  %v703 = vpop.f32.mrb[0].mxu0
  %v704 = vpop.f32.mrb[0].mxu0
  %v705 = vadd.f32 %v538, %v704
  %v706 = vpop.f32.mrb[0].mxu0
  %707 = vmatprep.mubr.bf16.mxu0 0
  %708 = vmatmul.mubr.bf16.gmra.mrb[0].mxu0 %v354
  %v709 = vpop.f32.mrb[0].mxu0
  %v710 = vadd.f32 %v539, %v709
  %v711 = vpop.f32.mrb[0].mxu0
  %v712 = vpop.f32.mrb[0].mxu0
  %v713 = vadd.f32 %v540, %v712
  %v714 = vpop.f32.mrb[0].mxu0
  %715 = vmatprep.mubr.bf16.mxu0 0
  %716 = vmatmul.mubr.bf16.gmra.mrb[0].mxu0 %v355
  %v717 = vpop.f32.mrb[0].mxu0
  %v718 = vadd.f32 %v541, %v717
  %v719 = vpop.f32.mrb[0].mxu0
  %v720 = vpop.f32.mrb[0].mxu0
  %v721 = vadd.f32 %v542, %v720
  %v722 = vpop.f32.mrb[0].mxu0
  %723 = vmatprep.mubr.bf16.mxu0 0
  %724 = vmatmul.mubr.bf16.gmra.mrb[0].mxu0 %v356
  %v725 = vpop.f32.mrb[0].mxu0
  %v726 = vadd.f32 %v543, %v725
  %v727 = vpop.f32.mrb[0].mxu0
  %v728 = vpop.f32.mrb[0].mxu0
  %v729 = vadd.f32 %v544, %v728
  %v730 = vpop.f32.mrb[0].mxu0
  %731 = vmatprep.mubr.bf16.mxu0 0
  %732 = vmatmul.mubr.bf16.gmra.mrb[0].mxu0 %v357
  %v733 = vpop.f32.mrb[0].mxu0
  %v734 = vadd.f32 %v545, %v733
  %v735 = vpop.f32.mrb[0].mxu0
  %v736 = vpop.f32.mrb[0].mxu0
  %v737 = vadd.f32 %v546, %v736
  %v738 = vpop.f32.mrb[0].mxu0
  %739 = vmatprep.mubr.bf16.mxu0 0
  %740 = vmatmul.mubr.bf16.gmra.mrb[0].mxu0 %v358
  %v741 = vpop.f32.mrb[0].mxu0
  %v742 = vadd.f32 %v547, %v741
  %v743 = vpop.f32.mrb[0].mxu0
  %v744 = vpop.f32.mrb[0].mxu0
  %v745 = vadd.f32 %v548, %v744
  %v746 = vpop.f32.mrb[0].mxu0
  %747 = vmatprep.mubr.bf16.mxu0 0
  %748 = vmatmul.mubr.bf16.gmra.mrb[0].mxu0 %v359
  %v749 = vpop.f32.mrb[0].mxu0
  %v750 = vadd.f32 %v549, %v749
  %v751 = vpop.f32.mrb[0].mxu0
  %v752 = vpop.f32.mrb[0].mxu0
  %v753 = vadd.f32 %v550, %v752
  %v754 = vpop.f32.mrb[0].mxu0
  %755 = vmatprep.mubr.bf16.mxu0 0
  %756 = vmatmul.mubr.bf16.gmra.mrb[0].mxu0 %v360
  %v757 = vpop.f32.mrb[0].mxu0
  %v758 = vadd.f32 %v551, %v757
  %v759 = vpop.f32.mrb[0].mxu0
  %v760 = vpop.f32.mrb[0].mxu0
  %v761 = vadd.f32 %v552, %v760
  %v762 = vpop.f32.mrb[0].mxu0
  %763 = vmatprep.mubr.bf16.mxu0 0
  %764 = vmatmul.mubr.bf16.gmra.mrb[0].mxu0 %v361
  %v765 = vpop.f32.mrb[0].mxu0
  %v766 = vadd.f32 %v553, %v765
  %v767 = vpop.f32.mrb[0].mxu0
  %v768 = vpop.f32.mrb[0].mxu0
  %v769 = vadd.f32 %v554, %v768
  %v770 = vpop.f32.mrb[0].mxu0
  %771 = vmatprep.mubr.bf16.mxu0 0
  %772 = vmatmul.mubr.bf16.gmra.mrb[0].mxu0 %v362
  %v773 = vpop.f32.mrb[0].mxu0
  %v774 = vadd.f32 %v555, %v773
  %v775 = vpop.f32.mrb[0].mxu0
  %v776 = vpop.f32.mrb[0].mxu0
  %v777 = vadd.f32 %v556, %v776
  %v778 = vpop.f32.mrb[0].mxu0
  %779 = vmatprep.mubr.bf16.mxu0 0
  %780 = vmatmul.mubr.bf16.gmra.mrb[0].mxu0 %v363
  %v781 = vpop.f32.mrb[0].mxu0
  %v782 = vadd.f32 %v557, %v781
  %v783 = vpop.f32.mrb[0].mxu0
  %v784 = vpop.f32.mrb[0].mxu0
  %v785 = vadd.f32 %v558, %v784
  %v786 = vpop.f32.mrb[0].mxu0
  %787 = vmatprep.mubr.bf16.mxu0 0
  %788 = vmatmul.mubr.bf16.gmra.mrb[0].mxu0 %v364
  %v789 = vpop.f32.mrb[0].mxu0
  %v790 = vadd.f32 %v559, %v789
  %v791 = vpop.f32.mrb[0].mxu0
  %v792 = vpop.f32.mrb[0].mxu0
  %v793 = vadd.f32 %v560, %v792
  %v794 = vpop.f32.mrb[0].mxu0
  %795 = vmatprep.mubr.bf16.mxu0 0
  %796 = vmatmul.mubr.bf16.gmra.mrb[0].mxu0 %v365
  %v797 = vpop.f32.mrb[0].mxu0
  %v798 = vadd.f32 %v561, %v797
  %v799 = vpop.f32.mrb[0].mxu0
  %v800 = vpop.f32.mrb[0].mxu0
  %v801 = vadd.f32 %v562, %v800
  %v802 = vpop.f32.mrb[0].mxu0
  %803 = vmatprep.mubr.bf16.mxu0 0
  %804 = vmatmul.mubr.bf16.gmra.mrb[0].mxu0 %v366
  %v805 = vpop.f32.mrb[0].mxu0
  %v806 = vadd.f32 %v563, %v805
  %v807 = vpop.f32.mrb[0].mxu0
  %v808 = vpop.f32.mrb[0].mxu0
  %v809 = vadd.f32 %v564, %v808
  %v810 = vpop.f32.mrb[0].mxu0
  %811 = vmatprep.mubr.bf16.mxu0 0
  %812 = vmatmul.mubr.bf16.gmra.mrb[0].mxu0 %v367
  %v813 = vpop.f32.mrb[0].mxu0
  %v814 = vadd.f32 %v565, %v813
  %v815 = vpop.f32.mrb[0].mxu0
  %v816 = vpop.f32.mrb[0].mxu0
  %v817 = vadd.f32 %v566, %v816
  %v818 = vpop.f32.mrb[0].mxu0
  %819 = vmatprep.mubr.bf16.mxu0 0
  %820 = vmatmul.mubr.bf16.gmra.mrb[0].mxu0 %v368
  %v821 = vpop.f32.mrb[0].mxu0
  %v822 = vadd.f32 %v567, %v821
  %v823 = vpop.f32.mrb[0].mxu0
  %v824 = vpop.f32.mrb[0].mxu0
  %v825 = vadd.f32 %v568, %v824
  %v826 = vpop.f32.mrb[0].mxu0
  %827 = vmatprep.mubr.bf16.mxu0 0
  %828 = vmatmul.mubr.bf16.gmra.mrb[0].mxu0 %v369
  %v829 = vpop.f32.mrb[0].mxu0
  %v830 = vadd.f32 %v569, %v829
  %v831 = vpop.f32.mrb[0].mxu0
  %v832 = vpop.f32.mrb[0].mxu0
  %v833 = vadd.f32 %v570, %v832
  %v834 = vpop.f32.mrb[0].mxu0
  %835 = vmatprep.mubr.bf16.mxu0 0
  %836 = vmatmul.mubr.bf16.gmra.mrb[0].mxu0 %v370
  %v837 = vpop.f32.mrb[0].mxu0
  %v838 = vadd.f32 %v571, %v837
  %v839 = vpop.f32.mrb[0].mxu0
  %v840 = vpop.f32.mrb[0].mxu0
  %v841 = vadd.f32 %v572, %v840
  %v842 = vpop.f32.mrb[0].mxu0
  %843 = vmatprep.mubr.bf16.mxu0 0
  %844 = vmatmul.mubr.bf16.gmra.mrb[0].mxu0 %v371
  %v845 = vpop.f32.mrb[0].mxu0
  %v846 = vadd.f32 %v573, %v845
  %v847 = vpop.f32.mrb[0].mxu0
  %v848 = vpop.f32.mrb[0].mxu0
  %v849 = vadd.f32 %v574, %v848
  %v850 = vpop.f32.mrb[0].mxu0
  %851 = vmatprep.mubr.bf16.mxu0 0
  %852 = vmatmul.mubr.bf16.gmra.mrb[0].mxu0 %v372
  %v853 = vpop.f32.mrb[0].mxu0
  %v854 = vadd.f32 %v575, %v853
  %v855 = vpop.f32.mrb[0].mxu0
  %v856 = vpop.f32.mrb[0].mxu0
  %v857 = vadd.f32 %v576, %v856
  %v858 = vpop.f32.mrb[0].mxu0
  %859 = vmatprep.mubr.bf16.mxu0 0
  %860 = vmatmul.mubr.bf16.gmra.mrb[0].mxu0 %v373
  %v861 = vpop.f32.mrb[0].mxu0
  %v862 = vadd.f32 %v577, %v861
  %v863 = vpop.f32.mrb[0].mxu0
  %v864 = vpop.f32.mrb[0].mxu0
  %v865 = vadd.f32 %v578, %v864
  %v866 = vpop.f32.mrb[0].mxu0
  %867 = vmatprep.mubr.bf16.mxu0 0
  %868 = vmatmul.mubr.bf16.gmra.mrb[0].mxu0 %v374
  %v869 = vpop.f32.mrb[0].mxu0
  %v870 = vadd.f32 %v579, %v869
  %v871 = vpop.f32.mrb[0].mxu0
  %v872 = vpop.f32.mrb[0].mxu0
  %v873 = vadd.f32 %v580, %v872
  %v874 = vpop.f32.mrb[0].mxu0
  %875 = vmatprep.mubr.bf16.mxu0 0
  %876 = vmatmul.mubr.bf16.gmra.mrb[0].mxu0 %v375
  %v877 = vpop.f32.mrb[0].mxu0
  %v878 = vadd.f32 %v581, %v877
  %v879 = vpop.f32.mrb[0].mxu0
  %v880 = vpop.f32.mrb[0].mxu0
  %v881 = vadd.f32 %v582, %v880
  %v882 = vpop.f32.mrb[0].mxu0
  %883 = vmatprep.mubr.bf16.mxu0 0
  %884 = vmatmul.mubr.bf16.gmra.mrb[0].mxu0 %v376
  %v885 = vpop.f32.mrb[0].mxu0
  %v886 = vadd.f32 %v583, %v885
  %v887 = vpop.f32.mrb[0].mxu0
  %v888 = vpop.f32.mrb[0].mxu0
  %v889 = vadd.f32 %v584, %v888
  %v890 = vpop.f32.mrb[0].mxu0
  %891 = vmatprep.mubr.bf16.mxu0 0
  %892 = vmatmul.mubr.bf16.gmra.mrb[0].mxu0 %v377
  %v893 = vpop.f32.mrb[0].mxu0
  %v894 = vadd.f32 %v585, %v893
  %v895 = vpop.f32.mrb[0].mxu0
  %v896 = vpop.f32.mrb[0].mxu0
  %v897 = vadd.f32 %v586, %v896
  %v898 = vpop.f32.mrb[0].mxu0
  %899 = vmatprep.mubr.bf16.mxu0 0
  %900 = vmatmul.mubr.bf16.gmra.mrb[0].mxu0 %v378
  %v901 = vpop.f32.mrb[0].mxu0
  %v902 = vadd.f32 %v587, %v901
  %v903 = vpop.f32.mrb[0].mxu0
  %v904 = vpop.f32.mrb[0].mxu0
  %v905 = vadd.f32 %v588, %v904
  %v906 = vpop.f32.mrb[0].mxu0
  %907 = vmatprep.mubr.bf16.mxu0 0
  %908 = vmatmul.mubr.bf16.gmra.mrb[0].mxu0 %v379
  %v909 = vpop.f32.mrb[0].mxu0
  %v910 = vadd.f32 %v589, %v909
  %v911 = vpop.f32.mrb[0].mxu0
  %v912 = vpop.f32.mrb[0].mxu0
  %v913 = vadd.f32 %v590, %v912
  %v914 = vpop.f32.mrb[0].mxu0
  %915 = vmatprep.mubr.bf16.mxu0 0
  %916 = vmatmul.mubr.bf16.gmra.mrb[0].mxu0 %v380
  %v917 = vpop.f32.mrb[0].mxu0
  %v918 = vadd.f32 %v591, %v917
  %v919 = vpop.f32.mrb[0].mxu0
  %v920 = vpop.f32.mrb[0].mxu0
  %v921 = vadd.f32 %v592, %v920
  %v922 = vpop.f32.mrb[0].mxu0
  %923 = vmatprep.mubr.bf16.mxu0 0
  %924 = vmatmul.mubr.bf16.gmra.mrb[0].mxu0 %v381
  %v925 = vpop.f32.mrb[0].mxu0
  %v926 = vadd.f32 %v593, %v925
  %v927 = vpop.f32.mrb[0].mxu0
  %v928 = vpop.f32.mrb[0].mxu0
  %v929 = vadd.f32 %v594, %v928
  %v930 = vpop.f32.mrb[0].mxu0
  %931 = vdwg.mxu0
  %v932 = vlaneseq
  %v933 = vshrl.u32 %v932, 7
  %v934 = vsub.s32 1, %v933
  %v935 = vrot.slane %v398, %v934
  %v936 = vadd.f32 %v678, %v935
  %v937 = vadd.f32 %v681, %v935
  %v938 = vadd.f32 %v686, %v935
  %v939 = vadd.f32 %v689, %v935
  %v940 = vadd.f32 %v694, %v935
  %v941 = vadd.f32 %v697, %v935
  %v942 = vadd.f32 %v702, %v935
  %v943 = vadd.f32 %v705, %v935
  %v944 = vadd.f32 %v710, %v935
  %v945 = vadd.f32 %v713, %v935
  %v946 = vadd.f32 %v718, %v935
  %v947 = vadd.f32 %v721, %v935
  %v948 = vadd.f32 %v726, %v935
  %v949 = vadd.f32 %v729, %v935
  %v950 = vadd.f32 %v734, %v935
  %v951 = vadd.f32 %v737, %v935
  %v952 = vadd.f32 %v742, %v935
  %v953 = vadd.f32 %v745, %v935
  %v954 = vadd.f32 %v750, %v935
  %v955 = vadd.f32 %v753, %v935
  %v956 = vadd.f32 %v758, %v935
  %v957 = vadd.f32 %v761, %v935
  %v958 = vadd.f32 %v766, %v935
  %v959 = vadd.f32 %v769, %v935
  %v960 = vadd.f32 %v774, %v935
  %v961 = vadd.f32 %v777, %v935
  %v962 = vadd.f32 %v782, %v935
  %v963 = vadd.f32 %v785, %v935
  %v964 = vadd.f32 %v790, %v935
  %v965 = vadd.f32 %v793, %v935
  %v966 = vadd.f32 %v798, %v935
  %v967 = vadd.f32 %v801, %v935
  %v968 = vadd.f32 %v806, %v935
  %v969 = vadd.f32 %v809, %v935
  %v970 = vadd.f32 %v814, %v935
  %v971 = vadd.f32 %v817, %v935
  %v972 = vadd.f32 %v822, %v935
  %v973 = vadd.f32 %v825, %v935
  %v974 = vadd.f32 %v830, %v935
  %v975 = vadd.f32 %v833, %v935
  %v976 = vadd.f32 %v838, %v935
  %v977 = vadd.f32 %v841, %v935
  %v978 = vadd.f32 %v846, %v935
  %v979 = vadd.f32 %v849, %v935
  %v980 = vadd.f32 %v854, %v935
  %v981 = vadd.f32 %v857, %v935
  %v982 = vadd.f32 %v862, %v935
  %v983 = vadd.f32 %v865, %v935
  %v984 = vadd.f32 %v870, %v935
  %v985 = vadd.f32 %v873, %v935
  %v986 = vadd.f32 %v878, %v935
  %v987 = vadd.f32 %v881, %v935
  %v988 = vadd.f32 %v886, %v935
  %v989 = vadd.f32 %v889, %v935
  %v990 = vadd.f32 %v894, %v935
  %v991 = vadd.f32 %v897, %v935
  %v992 = vadd.f32 %v902, %v935
  %v993 = vadd.f32 %v905, %v935
  %v994 = vadd.f32 %v910, %v935
  %v995 = vadd.f32 %v913, %v935
  %v996 = vadd.f32 %v918, %v935
  %v997 = vadd.f32 %v921, %v935
  %v998 = vadd.f32 %v926, %v935
  %v999 = vadd.f32 %v929, %v935
  %1000 = vst [vmem:[%s5] sm:$0xff] %v936
  %1001 = vst [vmem:[%s5 + $0x8] sm:$0xff] %v937
  %1002 = vst [vmem:[%s5 + $0x10] sm:$0xff] %v938
  %1003 = vst [vmem:[%s5 + $0x18] sm:$0xff] %v939
  %1004 = vst [vmem:[%s5 + $0x20] sm:$0xff] %v940
  %1005 = vst [vmem:[%s5 + $0x28] sm:$0xff] %v941
  %1006 = vst [vmem:[%s5 + $0x30] sm:$0xff] %v942
  %1007 = vst [vmem:[%s5 + $0x38] sm:$0xff] %v943
  %1008 = vst [vmem:[%s5 + $0x40] sm:$0xff] %v944
  %1009 = vst [vmem:[%s5 + $0x48] sm:$0xff] %v945
  %1010 = vst [vmem:[%s5 + $0x50] sm:$0xff] %v946
  %1011 = vst [vmem:[%s5 + $0x58] sm:$0xff] %v947
  %1012 = vst [vmem:[%s5 + $0x60] sm:$0xff] %v948
  %1013 = vst [vmem:[%s5 + $0x68] sm:$0xff] %v949
  %1014 = vst [vmem:[%s5 + $0x70] sm:$0xff] %v950
  %1015 = vst [vmem:[%s5 + $0x78] sm:$0xff] %v951
  %1016 = vst [vmem:[%s5 + $0x80] sm:$0xff] %v952
  %1017 = vst [vmem:[%s5 + $0x88] sm:$0xff] %v953
  %1018 = vst [vmem:[%s5 + $0x90] sm:$0xff] %v954
  %1019 = vst [vmem:[%s5 + $0x98] sm:$0xff] %v955
  %1020 = vst [vmem:[%s5 + $0xa0] sm:$0xff] %v956
  %1021 = vst [vmem:[%s5 + $0xa8] sm:$0xff] %v957
  %1022 = vst [vmem:[%s5 + $0xb0] sm:$0xff] %v958
  %1023 = vst [vmem:[%s5 + $0xb8] sm:$0xff] %v959
  %1024 = vst [vmem:[%s5 + $0xc0] sm:$0xff] %v960
  %1025 = vst [vmem:[%s5 + $0xc8] sm:$0xff] %v961
  %1026 = vst [vmem:[%s5 + $0xd0] sm:$0xff] %v962
  %1027 = vst [vmem:[%s5 + $0xd8] sm:$0xff] %v963
  %1028 = vst [vmem:[%s5 + $0xe0] sm:$0xff] %v964
  %1029 = vst [vmem:[%s5 + $0xe8] sm:$0xff] %v965
  %1030 = vst [vmem:[%s5 + $0xf0] sm:$0xff] %v966
  %1031 = vst [vmem:[%s5 + $0xf8] sm:$0xff] %v967
  %1032 = vst [vmem:[%s5 + $0x100] sm:$0xff] %v968
  %1033 = vst [vmem:[%s5 + $0x108] sm:$0xff] %v969
  %1034 = vst [vmem:[%s5 + $0x110] sm:$0xff] %v970
  %1035 = vst [vmem:[%s5 + $0x118] sm:$0xff] %v971
  %1036 = vst [vmem:[%s5 + $0x120] sm:$0xff] %v972
  %1037 = vst [vmem:[%s5 + $0x128] sm:$0xff] %v973
  %1038 = vst [vmem:[%s5 + $0x130] sm:$0xff] %v974
  %1039 = vst [vmem:[%s5 + $0x138] sm:$0xff] %v975
  %1040 = vst [vmem:[%s5 + $0x140] sm:$0xff] %v976
  %1041 = vst [vmem:[%s5 + $0x148] sm:$0xff] %v977
  %1042 = vst [vmem:[%s5 + $0x150] sm:$0xff] %v978
  %1043 = vst [vmem:[%s5 + $0x158] sm:$0xff] %v979
  %1044 = vst [vmem:[%s5 + $0x160] sm:$0xff] %v980
  %1045 = vst [vmem:[%s5 + $0x168] sm:$0xff] %v981
  %1046 = vst [vmem:[%s5 + $0x170] sm:$0xff] %v982
  %1047 = vst [vmem:[%s5 + $0x178] sm:$0xff] %v983
  %1048 = vst [vmem:[%s5 + $0x180] sm:$0xff] %v984
  %1049 = vst [vmem:[%s5 + $0x188] sm:$0xff] %v985
  %1050 = vst [vmem:[%s5 + $0x190] sm:$0xff] %v986
  %1051 = vst [vmem:[%s5 + $0x198] sm:$0xff] %v987
  %1052 = vst [vmem:[%s5 + $0x1a0] sm:$0xff] %v988
  %1053 = vst [vmem:[%s5 + $0x1a8] sm:$0xff] %v989
  %1054 = vst [vmem:[%s5 + $0x1b0] sm:$0xff] %v990
  %1055 = vst [vmem:[%s5 + $0x1b8] sm:$0xff] %v991
  %1056 = vst [vmem:[%s5 + $0x1c0] sm:$0xff] %v992
  %1057 = vst [vmem:[%s5 + $0x1c8] sm:$0xff] %v993
  %1058 = vst [vmem:[%s5 + $0x1d0] sm:$0xff] %v994
  %1059 = vst [vmem:[%s5 + $0x1d8] sm:$0xff] %v995
  %1060 = vst [vmem:[%s5 + $0x1e0] sm:$0xff] %v996
  %1061 = vst [vmem:[%s5 + $0x1e8] sm:$0xff] %v997
  %1062 = vst [vmem:[%s5 + $0x1f0] sm:$0xff] %v998
  %1063 = vst [vmem:[%s5 + $0x1f8] sm:$0xff] %v999
  // Predicated region
  $region22: #{_lambda_.7} parent=0 // pred_check
    _
  $region23: #{_lambda_.7} parent=0 // pred_check_branch
    %1065 = sbr.rel (0) target = $region25
  $region24: #{_lambda_.7} parent=0 // pred_region
    _
  $region25: #{_lambda_.7} parent=0 // pred_fallthru
    _
  // Predicated region
  $region26: #{_lambda_.7} parent=0 // pred_check
    _
  $region27: #{_lambda_.7} parent=0 // pred_check_branch
    %1067 = sbr.rel (0) target = $region29
  $region28: #{_lambda_.7} parent=0 // pred_region
    _
  $region29: #{_lambda_.7} parent=0 // pred_fallthru
    _

// kernel: _lambda_.5
$region0: #{_lambda_.5}
  #allocation0 [shape = 'u32[]', space=smem, size = 0x4, offset = 0x4, fixed_abs, tag = 'smem constant byte address 0x4 - core index']
  #allocation1 [shape = 'u32[144,128]{1,0:T(1,128)}', space=vmem, size = 0x12000, scoped, tag = 'internal scratch']
  %s0 = inlined_call_operand.vmem [shape: f32[512,128], index: 0, kind: input, shape index: {}]
  %s1 = inlined_call_operand.vmem [shape: f32[2,128], index: 1, kind: input, shape index: {}]
  %s2 = inlined_call_operand.vmem [shape: bf16[128,128], index: 2, kind: input, shape index: {}]
  %s3 = inlined_call_operand.vmem [shape: bf16[128,128], index: 3, kind: input, shape index: {}]
  %s4 = inlined_call_operand.vmem [shape: bf16[512,128], index: 4, kind: output, shape index: {0}]
  %s5 = inlined_call_operand.vmem [shape: bf16[512,128], index: 5, kind: output, shape index: {1}]
  %s6 = inlined_call_operand.vmem [shape: f32[1,1,128], index: 6, kind: output, shape index: {2}]
  %s7 = inlined_call_operand.vmem [shape: f32[1,1,128], index: 7, kind: output, shape index: {3}]
  %s8 = inlined_call_operand.vmem [shape: f32[1,1,128], index: 8, kind: output, shape index: {4}]
  %s9 = inlined_call_operand.vmem [shape: f32[1,1,128], index: 9, kind: output, shape index: {5}]
  %10 = xla_tuple %s4, %s5, %s6, %s7, %s8, %s9
  %s11 = sld [smem:[#allocation0]]
  $region66: #{_lambda_.5} parent=0
    _
  %s13 = ssub.s32 1, %s11
  %s14 = scalar_select 0, %s13, %s11
  // Predicated region
  $region2: #{_lambda_.5} parent=0 // pred_check
    _
  $region3: #{_lambda_.5} parent=0 // pred_check_branch
    %16 = sbr.rel (0) target = $region5
  $region4: #{_lambda_.5} parent=0 // pred_region
    _
  $region5: #{_lambda_.5} parent=0 // pred_fallthru
    _
  // Predicated region
  $region6: #{_lambda_.5} parent=0 // pred_check
    _
  $region7: #{_lambda_.5} parent=0 // pred_check_branch
    %18 = sbr.rel (0) target = $region9
  $region8: #{_lambda_.5} parent=0 // pred_region
    _
  $region9: #{_lambda_.5} parent=0 // pred_fallthru
    _
  // Predicated region
  $region10: #{_lambda_.5} parent=0 // pred_check
    _
  $region11: #{_lambda_.5} parent=0 // pred_check_branch
    %20 = sbr.rel (0) target = $region13
  $region12: #{_lambda_.5} parent=0 // pred_region
    _
  $region13: #{_lambda_.5} parent=0 // pred_fallthru
    _
  // Predicated region
  $region14: #{_lambda_.5} parent=0 // pred_check
    _
  $region15: #{_lambda_.5} parent=0 // pred_check_branch
    %22 = sbr.rel (0) target = $region17
  $region16: #{_lambda_.5} parent=0 // pred_region
    _
  $region17: #{_lambda_.5} parent=0 // pred_fallthru
    _
  %v24 = vld [vmem:[%s1] sm:$0x3]
  %v25 = vld [vmem:[%s0] sm:$0xff]
  %v26 = vld [vmem:[%s0 + $0x8] sm:$0xff]
  %v27 = vld [vmem:[%s0 + $0x10] sm:$0xff]
  %v28 = vld [vmem:[%s0 + $0x18] sm:$0xff]
  %v29 = vld [vmem:[%s0 + $0x20] sm:$0xff]
  %v30 = vld [vmem:[%s0 + $0x28] sm:$0xff]
  %v31 = vld [vmem:[%s0 + $0x30] sm:$0xff]
  %v32 = vld [vmem:[%s0 + $0x38] sm:$0xff]
  %v33 = vld [vmem:[%s0 + $0x40] sm:$0xff]
  %v34 = vld [vmem:[%s0 + $0x48] sm:$0xff]
  %v35 = vld [vmem:[%s0 + $0x50] sm:$0xff]
  %v36 = vld [vmem:[%s0 + $0x58] sm:$0xff]
  %v37 = vld [vmem:[%s0 + $0x60] sm:$0xff]
  %v38 = vld [vmem:[%s0 + $0x68] sm:$0xff]
  %v39 = vld [vmem:[%s0 + $0x70] sm:$0xff]
  %v40 = vld [vmem:[%s0 + $0x78] sm:$0xff]
  %v41 = vld [vmem:[%s0 + $0x80] sm:$0xff]
  %v42 = vld [vmem:[%s0 + $0x88] sm:$0xff]
  %v43 = vld [vmem:[%s0 + $0x90] sm:$0xff]
  %v44 = vld [vmem:[%s0 + $0x98] sm:$0xff]
  %v45 = vld [vmem:[%s0 + $0xa0] sm:$0xff]
  %v46 = vld [vmem:[%s0 + $0xa8] sm:$0xff]
  %v47 = vld [vmem:[%s0 + $0xb0] sm:$0xff]
  %v48 = vld [vmem:[%s0 + $0xb8] sm:$0xff]
  %v49 = vld [vmem:[%s0 + $0xc0] sm:$0xff]
  %v50 = vld [vmem:[%s0 + $0xc8] sm:$0xff]
  %v51 = vld [vmem:[%s0 + $0xd0] sm:$0xff]
  %v52 = vld [vmem:[%s0 + $0xd8] sm:$0xff]
  %v53 = vld [vmem:[%s0 + $0xe0] sm:$0xff]
  %v54 = vld [vmem:[%s0 + $0xe8] sm:$0xff]
  %v55 = vld [vmem:[%s0 + $0xf0] sm:$0xff]
  %v56 = vld [vmem:[%s0 + $0xf8] sm:$0xff]
  %v57 = vld [vmem:[%s0 + $0x100] sm:$0xff]
  %v58 = vld [vmem:[%s0 + $0x108] sm:$0xff]
  %v59 = vld [vmem:[%s0 + $0x110] sm:$0xff]
  %v60 = vld [vmem:[%s0 + $0x118] sm:$0xff]
  %v61 = vld [vmem:[%s0 + $0x120] sm:$0xff]
  %v62 = vld [vmem:[%s0 + $0x128] sm:$0xff]
  %v63 = vld [vmem:[%s0 + $0x130] sm:$0xff]
  %v64 = vld [vmem:[%s0 + $0x138] sm:$0xff]
  %v65 = vld [vmem:[%s0 + $0x140] sm:$0xff]
  %v66 = vld [vmem:[%s0 + $0x148] sm:$0xff]
  %v67 = vld [vmem:[%s0 + $0x150] sm:$0xff]
  %v68 = vld [vmem:[%s0 + $0x158] sm:$0xff]
  %v69 = vld [vmem:[%s0 + $0x160] sm:$0xff]
  %v70 = vld [vmem:[%s0 + $0x168] sm:$0xff]
  %v71 = vld [vmem:[%s0 + $0x170] sm:$0xff]
  %v72 = vld [vmem:[%s0 + $0x178] sm:$0xff]
  %v73 = vld [vmem:[%s0 + $0x180] sm:$0xff]
  %v74 = vld [vmem:[%s0 + $0x188] sm:$0xff]
  %v75 = vld [vmem:[%s0 + $0x190] sm:$0xff]
  %v76 = vld [vmem:[%s0 + $0x198] sm:$0xff]
  %v77 = vld [vmem:[%s0 + $0x1a0] sm:$0xff]
  %v78 = vld [vmem:[%s0 + $0x1a8] sm:$0xff]
  %v79 = vld [vmem:[%s0 + $0x1b0] sm:$0xff]
  %v80 = vld [vmem:[%s0 + $0x1b8] sm:$0xff]
  %v81 = vld [vmem:[%s0 + $0x1c0] sm:$0xff]
  %v82 = vld [vmem:[%s0 + $0x1c8] sm:$0xff]
  %v83 = vld [vmem:[%s0 + $0x1d0] sm:$0xff]
  %v84 = vld [vmem:[%s0 + $0x1d8] sm:$0xff]
  %v85 = vld [vmem:[%s0 + $0x1e0] sm:$0xff]
  %v86 = vld [vmem:[%s0 + $0x1e8] sm:$0xff]
  %v87 = vld [vmem:[%s0 + $0x1f0] sm:$0xff]
  %v88 = vld [vmem:[%s0 + $0x1f8] sm:$0xff]
  %v89 = vlaneseq
  %v90 = vshrl.u32 %v89, 7
  %v91 = vsub.s32 0, %v90
  %v92 = vrot.slane %v24, %v91
  %v93 = vmul.f32 %v25, %v92
  %v94 = vmul.f32 %v26, %v92
  %v95 = vmul.f32 %v27, %v92
  %v96 = vmul.f32 %v28, %v92
  %v97 = vmul.f32 %v29, %v92
  %v98 = vmul.f32 %v30, %v92
  %v99 = vmul.f32 %v31, %v92
  %v100 = vmul.f32 %v32, %v92
  %v101 = vmul.f32 %v33, %v92
  %v102 = vmul.f32 %v34, %v92
  %v103 = vmul.f32 %v35, %v92
  %v104 = vmul.f32 %v36, %v92
  %v105 = vmul.f32 %v37, %v92
  %v106 = vmul.f32 %v38, %v92
  %v107 = vmul.f32 %v39, %v92
  %v108 = vmul.f32 %v40, %v92
  %v109 = vmul.f32 %v41, %v92
  %v110 = vmul.f32 %v42, %v92
  %v111 = vmul.f32 %v43, %v92
  %v112 = vmul.f32 %v44, %v92
  %v113 = vmul.f32 %v45, %v92
  %v114 = vmul.f32 %v46, %v92
  %v115 = vmul.f32 %v47, %v92
  %v116 = vmul.f32 %v48, %v92
  %v117 = vmul.f32 %v49, %v92
  %v118 = vmul.f32 %v50, %v92
  %v119 = vmul.f32 %v51, %v92
  %v120 = vmul.f32 %v52, %v92
  %v121 = vmul.f32 %v53, %v92
  %v122 = vmul.f32 %v54, %v92
  %v123 = vmul.f32 %v55, %v92
  %v124 = vmul.f32 %v56, %v92
  %v125 = vmul.f32 %v57, %v92
  %v126 = vmul.f32 %v58, %v92
  %v127 = vmul.f32 %v59, %v92
  %v128 = vmul.f32 %v60, %v92
  %v129 = vmul.f32 %v61, %v92
  %v130 = vmul.f32 %v62, %v92
  %v131 = vmul.f32 %v63, %v92
  %v132 = vmul.f32 %v64, %v92
  %v133 = vmul.f32 %v65, %v92
  %v134 = vmul.f32 %v66, %v92
  %v135 = vmul.f32 %v67, %v92
  %v136 = vmul.f32 %v68, %v92
  %v137 = vmul.f32 %v69, %v92
  %v138 = vmul.f32 %v70, %v92
  %v139 = vmul.f32 %v71, %v92
  %v140 = vmul.f32 %v72, %v92
  %v141 = vmul.f32 %v73, %v92
  %v142 = vmul.f32 %v74, %v92
  %v143 = vmul.f32 %v75, %v92
  %v144 = vmul.f32 %v76, %v92
  %v145 = vmul.f32 %v77, %v92
  %v146 = vmul.f32 %v78, %v92
  %v147 = vmul.f32 %v79, %v92
  %v148 = vmul.f32 %v80, %v92
  %v149 = vmul.f32 %v81, %v92
  %v150 = vmul.f32 %v82, %v92
  %v151 = vmul.f32 %v83, %v92
  %v152 = vmul.f32 %v84, %v92
  %v153 = vmul.f32 %v85, %v92
  %v154 = vmul.f32 %v86, %v92
  %v155 = vmul.f32 %v87, %v92
  %v156 = vmul.f32 %v88, %v92
  %v157 = vlaneseq
  %v158 = vshrl.u32 %v157, 7
  %v159 = vsub.s32 1, %v158
  %v160 = vrot.slane %v24, %v159
  %v161 = vadd.f32 %v93, %v160
  %v162 = vadd.f32 %v94, %v160
  %v163 = vadd.f32 %v95, %v160
  %v164 = vadd.f32 %v96, %v160
  %v165 = vadd.f32 %v97, %v160
  %v166 = vadd.f32 %v98, %v160
  %v167 = vadd.f32 %v99, %v160
  %v168 = vadd.f32 %v100, %v160
  %v169 = vadd.f32 %v101, %v160
  %v170 = vadd.f32 %v102, %v160
  %v171 = vadd.f32 %v103, %v160
  %v172 = vadd.f32 %v104, %v160
  %v173 = vadd.f32 %v105, %v160
  %v174 = vadd.f32 %v106, %v160
  %v175 = vadd.f32 %v107, %v160
  %v176 = vadd.f32 %v108, %v160
  %v177 = vadd.f32 %v109, %v160
  %v178 = vadd.f32 %v110, %v160
  %v179 = vadd.f32 %v111, %v160
  %v180 = vadd.f32 %v112, %v160
  %v181 = vadd.f32 %v113, %v160
  %v182 = vadd.f32 %v114, %v160
  %v183 = vadd.f32 %v115, %v160
  %v184 = vadd.f32 %v116, %v160
  %v185 = vadd.f32 %v117, %v160
  %v186 = vadd.f32 %v118, %v160
  %v187 = vadd.f32 %v119, %v160
  %v188 = vadd.f32 %v120, %v160
  %v189 = vadd.f32 %v121, %v160
  %v190 = vadd.f32 %v122, %v160
  %v191 = vadd.f32 %v123, %v160
  %v192 = vadd.f32 %v124, %v160
  %v193 = vadd.f32 %v125, %v160
  %v194 = vadd.f32 %v126, %v160
  %v195 = vadd.f32 %v127, %v160
  %v196 = vadd.f32 %v128, %v160
  %v197 = vadd.f32 %v129, %v160
  %v198 = vadd.f32 %v130, %v160
  %v199 = vadd.f32 %v131, %v160
  %v200 = vadd.f32 %v132, %v160
  %v201 = vadd.f32 %v133, %v160
  %v202 = vadd.f32 %v134, %v160
  %v203 = vadd.f32 %v135, %v160
  %v204 = vadd.f32 %v136, %v160
  %v205 = vadd.f32 %v137, %v160
  %v206 = vadd.f32 %v138, %v160
  %v207 = vadd.f32 %v139, %v160
  %v208 = vadd.f32 %v140, %v160
  %v209 = vadd.f32 %v141, %v160
  %v210 = vadd.f32 %v142, %v160
  %v211 = vadd.f32 %v143, %v160
  %v212 = vadd.f32 %v144, %v160
  %v213 = vadd.f32 %v145, %v160
  %v214 = vadd.f32 %v146, %v160
  %v215 = vadd.f32 %v147, %v160
  %v216 = vadd.f32 %v148, %v160
  %v217 = vadd.f32 %v149, %v160
  %v218 = vadd.f32 %v150, %v160
  %v219 = vadd.f32 %v151, %v160
  %v220 = vadd.f32 %v152, %v160
  %v221 = vadd.f32 %v153, %v160
  %v222 = vadd.f32 %v154, %v160
  %v223 = vadd.f32 %v155, %v160
  %v224 = vadd.f32 %v156, %v160
  %v225 = vmax.f32 %v161, 0.0
  %v226 = vmax.f32 %v162, 0.0
  %v227 = vmax.f32 %v163, 0.0
  %v228 = vmax.f32 %v164, 0.0
  %v229 = vmax.f32 %v165, 0.0
  %v230 = vmax.f32 %v166, 0.0
  %v231 = vmax.f32 %v167, 0.0
  %v232 = vmax.f32 %v168, 0.0
  %v233 = vmax.f32 %v169, 0.0
  %v234 = vmax.f32 %v170, 0.0
  %v235 = vmax.f32 %v171, 0.0
  %v236 = vmax.f32 %v172, 0.0
  %v237 = vmax.f32 %v173, 0.0
  %v238 = vmax.f32 %v174, 0.0
  %v239 = vmax.f32 %v175, 0.0
  %v240 = vmax.f32 %v176, 0.0
  %v241 = vmax.f32 %v177, 0.0
  %v242 = vmax.f32 %v178, 0.0
  %v243 = vmax.f32 %v179, 0.0
  %v244 = vmax.f32 %v180, 0.0
  %v245 = vmax.f32 %v181, 0.0
  %v246 = vmax.f32 %v182, 0.0
  %v247 = vmax.f32 %v183, 0.0
  %v248 = vmax.f32 %v184, 0.0
  %v249 = vmax.f32 %v185, 0.0
  %v250 = vmax.f32 %v186, 0.0
  %v251 = vmax.f32 %v187, 0.0
  %v252 = vmax.f32 %v188, 0.0
  %v253 = vmax.f32 %v189, 0.0
  %v254 = vmax.f32 %v190, 0.0
  %v255 = vmax.f32 %v191, 0.0
  %v256 = vmax.f32 %v192, 0.0
  %v257 = vmax.f32 %v193, 0.0
  %v258 = vmax.f32 %v194, 0.0
  %v259 = vmax.f32 %v195, 0.0
  %v260 = vmax.f32 %v196, 0.0
  %v261 = vmax.f32 %v197, 0.0
  %v262 = vmax.f32 %v198, 0.0
  %v263 = vmax.f32 %v199, 0.0
  %v264 = vmax.f32 %v200, 0.0
  %v265 = vmax.f32 %v201, 0.0
  %v266 = vmax.f32 %v202, 0.0
  %v267 = vmax.f32 %v203, 0.0
  %v268 = vmax.f32 %v204, 0.0
  %v269 = vmax.f32 %v205, 0.0
  %v270 = vmax.f32 %v206, 0.0
  %v271 = vmax.f32 %v207, 0.0
  %v272 = vmax.f32 %v208, 0.0
  %v273 = vmax.f32 %v209, 0.0
  %v274 = vmax.f32 %v210, 0.0
  %v275 = vmax.f32 %v211, 0.0
  %v276 = vmax.f32 %v212, 0.0
  %v277 = vmax.f32 %v213, 0.0
  %v278 = vmax.f32 %v214, 0.0
  %v279 = vmax.f32 %v215, 0.0
  %v280 = vmax.f32 %v216, 0.0
  %v281 = vmax.f32 %v217, 0.0
  %v282 = vmax.f32 %v218, 0.0
  %v283 = vmax.f32 %v219, 0.0
  %v284 = vmax.f32 %v220, 0.0
  %v285 = vmax.f32 %v221, 0.0
  %v286 = vmax.f32 %v222, 0.0
  %v287 = vmax.f32 %v223, 0.0
  %v288 = vmax.f32 %v224, 0.0
  %v289 = vpack.c.bf16 %v226, %v225
  %v290 = vpack.c.bf16 %v228, %v227
  %v291 = vpack.c.bf16 %v230, %v229
  %v292 = vpack.c.bf16 %v232, %v231
  %v293 = vpack.c.bf16 %v234, %v233
  %v294 = vpack.c.bf16 %v236, %v235
  %v295 = vpack.c.bf16 %v238, %v237
  %v296 = vpack.c.bf16 %v240, %v239
  %v297 = vpack.c.bf16 %v242, %v241
  %v298 = vpack.c.bf16 %v244, %v243
  %v299 = vpack.c.bf16 %v246, %v245
  %v300 = vpack.c.bf16 %v248, %v247
  %v301 = vpack.c.bf16 %v250, %v249
  %v302 = vpack.c.bf16 %v252, %v251
  %v303 = vpack.c.bf16 %v254, %v253
  %v304 = vpack.c.bf16 %v256, %v255
  %v305 = vpack.c.bf16 %v258, %v257
  %v306 = vpack.c.bf16 %v260, %v259
  %v307 = vpack.c.bf16 %v262, %v261
  %v308 = vpack.c.bf16 %v264, %v263
  %v309 = vpack.c.bf16 %v266, %v265
  %v310 = vpack.c.bf16 %v268, %v267
  %v311 = vpack.c.bf16 %v270, %v269
  %v312 = vpack.c.bf16 %v272, %v271
  %v313 = vpack.c.bf16 %v274, %v273
  %v314 = vpack.c.bf16 %v276, %v275
  %v315 = vpack.c.bf16 %v278, %v277
  %v316 = vpack.c.bf16 %v280, %v279
  %v317 = vpack.c.bf16 %v282, %v281
  %v318 = vpack.c.bf16 %v284, %v283
  %v319 = vpack.c.bf16 %v286, %v285
  %v320 = vpack.c.bf16 %v288, %v287
  %v321 = vld [vmem:[%s2] sm:$0xf]
  %v322 = vld [vmem:[%s2 + $0x4] sm:$0xf]
  %v323 = vld [vmem:[%s2 + $0x8] sm:$0xf]
  %v324 = vld [vmem:[%s2 + $0xc] sm:$0xf]
  %v325 = vld [vmem:[%s2 + $0x10] sm:$0xf]
  %v326 = vld [vmem:[%s2 + $0x14] sm:$0xf]
  %v327 = vld [vmem:[%s2 + $0x18] sm:$0xf]
  %v328 = vld [vmem:[%s2 + $0x1c] sm:$0xf]
  %v329 = vld [vmem:[%s2 + $0x20] sm:$0xf]
  %v330 = vld [vmem:[%s2 + $0x24] sm:$0xf]
  %v331 = vld [vmem:[%s2 + $0x28] sm:$0xf]
  %v332 = vld [vmem:[%s2 + $0x2c] sm:$0xf]
  %v333 = vld [vmem:[%s2 + $0x30] sm:$0xf]
  %v334 = vld [vmem:[%s2 + $0x34] sm:$0xf]
  %v335 = vld [vmem:[%s2 + $0x38] sm:$0xf]
  %v336 = vld [vmem:[%s2 + $0x3c] sm:$0xf]
  %v353 = vunpack.c.l.b16 %v321
  %v354 = vunpack.c.l.b16 %v322
  %v355 = vunpack.c.l.b16 %v323
  %v356 = vunpack.c.l.b16 %v324
  %v357 = vunpack.c.l.b16 %v325
  %v358 = vunpack.c.l.b16 %v326
  %v359 = vunpack.c.l.b16 %v327
  %v360 = vunpack.c.l.b16 %v328
  %v361 = vunpack.c.l.b16 %v329
  %v362 = vunpack.c.l.b16 %v330
  %v363 = vunpack.c.l.b16 %v331
  %v364 = vunpack.c.l.b16 %v332
  %v365 = vunpack.c.l.b16 %v333
  %v366 = vunpack.c.l.b16 %v334
  %v367 = vunpack.c.l.b16 %v335
  %v368 = vunpack.c.l.b16 %v336
  %v369 = vpack.c.b16 %v354, %v353
  %v370 = vpack.c.b16 %v356, %v355
  %v371 = vpack.c.b16 %v358, %v357
  %v372 = vpack.c.b16 %v360, %v359
  %v373 = vpack.c.b16 %v362, %v361
  %v374 = vpack.c.b16 %v364, %v363
  %v375 = vpack.c.b16 %v366, %v365
  %v376 = vpack.c.b16 %v368, %v367
  %385 = vmatprep.subr.bf16.mxu0 0
  %386 = vmatpush1.bf16.msra.mxu0 %v369
  %387 = vmatprep.subr.bf16.mxu0 0
  %388 = vmatpush1.bf16.msra.mxu0 %v370
  %389 = vmatprep.subr.bf16.mxu0 0
  %390 = vmatpush1.bf16.msra.mxu0 %v371
  %391 = vmatprep.subr.bf16.mxu0 0
  %392 = vmatpush1.bf16.msra.mxu0 %v372
  %393 = vmatprep.subr.bf16.mxu0 0
  %394 = vmatpush1.bf16.msra.mxu0 %v373
  %395 = vmatprep.subr.bf16.mxu0 0
  %396 = vmatpush1.bf16.msra.mxu0 %v374
  %397 = vmatprep.subr.bf16.mxu0 0
  %398 = vmatpush1.bf16.msra.mxu0 %v375
  %399 = vmatprep.subr.bf16.mxu0 0
  %400 = vmatpush1.bf16.msra.mxu0 %v376
  %401 = vmatprep.subr.bf16.mxu0 0
  %402 = vmatpush1.bf16.msra.mxu0 0
  %403 = vmatprep.subr.bf16.mxu0 0
  %404 = vmatpush1.bf16.msra.mxu0 0
  %405 = vmatprep.subr.bf16.mxu0 0
  %406 = vmatpush1.bf16.msra.mxu0 0
  %407 = vmatprep.subr.bf16.mxu0 0
  %408 = vmatpush1.bf16.msra.mxu0 0
  %409 = vmatprep.subr.bf16.mxu0 0
  %410 = vmatpush1.bf16.msra.mxu0 0
  %411 = vmatprep.subr.bf16.mxu0 0
  %412 = vmatpush1.bf16.msra.mxu0 0
  %413 = vmatprep.subr.bf16.mxu0 0
  %414 = vmatpush1.bf16.msra.mxu0 0
  %415 = vmatprep.subr.bf16.mxu0 0
  %416 = vmatpush1.bf16.msra.mxu0 0
  %417 = vmatprep.mubr.bf16.mxu0 0
  %418 = vmatmul.mubr.bf16.gmra.mrb[0].mxu0 %v289
  %v419 = vpop.f32.mrb[0].mxu0
  %v420 = vadd.f32 0.0, %v419
  %v421 = vpop.f32.mrb[0].mxu0
  %v422 = vpop.f32.mrb[0].mxu0
  %v423 = vadd.f32 0.0, %v422
  %v424 = vpop.f32.mrb[0].mxu0
  %425 = vmatprep.mubr.bf16.mxu0 0
  %426 = vmatmul.mubr.bf16.gmra.mrb[0].mxu0 %v290
  %v427 = vpop.f32.mrb[0].mxu0
  %v428 = vadd.f32 0.0, %v427
  %v429 = vpop.f32.mrb[0].mxu0
  %v430 = vpop.f32.mrb[0].mxu0
  %v431 = vadd.f32 0.0, %v430
  %v432 = vpop.f32.mrb[0].mxu0
  %433 = vmatprep.mubr.bf16.mxu0 0
  %434 = vmatmul.mubr.bf16.gmra.mrb[0].mxu0 %v291
  %v435 = vpop.f32.mrb[0].mxu0
  %v436 = vadd.f32 0.0, %v435
  %v437 = vpop.f32.mrb[0].mxu0
  %v438 = vpop.f32.mrb[0].mxu0
  %v439 = vadd.f32 0.0, %v438
  %v440 = vpop.f32.mrb[0].mxu0
  %441 = vmatprep.mubr.bf16.mxu0 0
  %442 = vmatmul.mubr.bf16.gmra.mrb[0].mxu0 %v292
  %v443 = vpop.f32.mrb[0].mxu0
  %v444 = vadd.f32 0.0, %v443
  %v445 = vpop.f32.mrb[0].mxu0
  %v446 = vpop.f32.mrb[0].mxu0
  %v447 = vadd.f32 0.0, %v446
  %v448 = vpop.f32.mrb[0].mxu0
  %449 = vmatprep.mubr.bf16.mxu0 0
  %450 = vmatmul.mubr.bf16.gmra.mrb[0].mxu0 %v293
  %v451 = vpop.f32.mrb[0].mxu0
  %v452 = vadd.f32 0.0, %v451
  %v453 = vpop.f32.mrb[0].mxu0
  %v454 = vpop.f32.mrb[0].mxu0
  %v455 = vadd.f32 0.0, %v454
  %v456 = vpop.f32.mrb[0].mxu0
  %457 = vmatprep.mubr.bf16.mxu0 0
  %458 = vmatmul.mubr.bf16.gmra.mrb[0].mxu0 %v294
  %v459 = vpop.f32.mrb[0].mxu0
  %v460 = vadd.f32 0.0, %v459
  %v461 = vpop.f32.mrb[0].mxu0
  %v462 = vpop.f32.mrb[0].mxu0
  %v463 = vadd.f32 0.0, %v462
  %v464 = vpop.f32.mrb[0].mxu0
  %465 = vmatprep.mubr.bf16.mxu0 0
  %466 = vmatmul.mubr.bf16.gmra.mrb[0].mxu0 %v295
  %v467 = vpop.f32.mrb[0].mxu0
  %v468 = vadd.f32 0.0, %v467
  %v469 = vpop.f32.mrb[0].mxu0
  %v470 = vpop.f32.mrb[0].mxu0
  %v471 = vadd.f32 0.0, %v470
  %v472 = vpop.f32.mrb[0].mxu0
  %473 = vmatprep.mubr.bf16.mxu0 0
  %474 = vmatmul.mubr.bf16.gmra.mrb[0].mxu0 %v296
  %v475 = vpop.f32.mrb[0].mxu0
  %v476 = vadd.f32 0.0, %v475
  %v477 = vpop.f32.mrb[0].mxu0
  %v478 = vpop.f32.mrb[0].mxu0
  %v479 = vadd.f32 0.0, %v478
  %v480 = vpop.f32.mrb[0].mxu0
  %481 = vmatprep.mubr.bf16.mxu0 0
  %482 = vmatmul.mubr.bf16.gmra.mrb[0].mxu0 %v297
  %v483 = vpop.f32.mrb[0].mxu0
  %v484 = vadd.f32 0.0, %v483
  %v485 = vpop.f32.mrb[0].mxu0
  %v486 = vpop.f32.mrb[0].mxu0
  %v487 = vadd.f32 0.0, %v486
  %v488 = vpop.f32.mrb[0].mxu0
  %489 = vmatprep.mubr.bf16.mxu0 0
  %490 = vmatmul.mubr.bf16.gmra.mrb[0].mxu0 %v298
  %v491 = vpop.f32.mrb[0].mxu0
  %v492 = vadd.f32 0.0, %v491
  %v493 = vpop.f32.mrb[0].mxu0
  %v494 = vpop.f32.mrb[0].mxu0
  %v495 = vadd.f32 0.0, %v494
  %v496 = vpop.f32.mrb[0].mxu0
  %497 = vmatprep.mubr.bf16.mxu0 0
  %498 = vmatmul.mubr.bf16.gmra.mrb[0].mxu0 %v299
  %v499 = vpop.f32.mrb[0].mxu0
  %v500 = vadd.f32 0.0, %v499
  %v501 = vpop.f32.mrb[0].mxu0
  %v502 = vpop.f32.mrb[0].mxu0
  %v503 = vadd.f32 0.0, %v502
  %v504 = vpop.f32.mrb[0].mxu0
  %505 = vmatprep.mubr.bf16.mxu0 0
  %506 = vmatmul.mubr.bf16.gmra.mrb[0].mxu0 %v300
  %v507 = vpop.f32.mrb[0].mxu0
  %v508 = vadd.f32 0.0, %v507
  %v509 = vpop.f32.mrb[0].mxu0
  %v510 = vpop.f32.mrb[0].mxu0
  %v511 = vadd.f32 0.0, %v510
  %v512 = vpop.f32.mrb[0].mxu0
  %513 = vmatprep.mubr.bf16.mxu0 0
  %514 = vmatmul.mubr.bf16.gmra.mrb[0].mxu0 %v301
  %v515 = vpop.f32.mrb[0].mxu0
  %v516 = vadd.f32 0.0, %v515
  %v517 = vpop.f32.mrb[0].mxu0
  %v518 = vpop.f32.mrb[0].mxu0
  %v519 = vadd.f32 0.0, %v518
  %v520 = vpop.f32.mrb[0].mxu0
  %521 = vmatprep.mubr.bf16.mxu0 0
  %522 = vmatmul.mubr.bf16.gmra.mrb[0].mxu0 %v302
  %v523 = vpop.f32.mrb[0].mxu0
  %v524 = vadd.f32 0.0, %v523
  %v525 = vpop.f32.mrb[0].mxu0
  %v526 = vpop.f32.mrb[0].mxu0
  %v527 = vadd.f32 0.0, %v526
  %v528 = vpop.f32.mrb[0].mxu0
  %529 = vmatprep.mubr.bf16.mxu0 0
  %530 = vmatmul.mubr.bf16.gmra.mrb[0].mxu0 %v303
  %v531 = vpop.f32.mrb[0].mxu0
  %v532 = vadd.f32 0.0, %v531
  %v533 = vpop.f32.mrb[0].mxu0
  %v534 = vpop.f32.mrb[0].mxu0
  %v535 = vadd.f32 0.0, %v534
  %v536 = vpop.f32.mrb[0].mxu0
  %537 = vmatprep.mubr.bf16.mxu0 0
  %538 = vmatmul.mubr.bf16.gmra.mrb[0].mxu0 %v304
  %v539 = vpop.f32.mrb[0].mxu0
  %v540 = vadd.f32 0.0, %v539
  %v541 = vpop.f32.mrb[0].mxu0
  %v542 = vpop.f32.mrb[0].mxu0
  %v543 = vadd.f32 0.0, %v542
  %v544 = vpop.f32.mrb[0].mxu0
  %545 = vmatprep.mubr.bf16.mxu0 0
  %546 = vmatmul.mubr.bf16.gmra.mrb[0].mxu0 %v305
  %v547 = vpop.f32.mrb[0].mxu0
  %v548 = vadd.f32 0.0, %v547
  %v549 = vpop.f32.mrb[0].mxu0
  %v550 = vpop.f32.mrb[0].mxu0
  %v551 = vadd.f32 0.0, %v550
  %v552 = vpop.f32.mrb[0].mxu0
  %553 = vmatprep.mubr.bf16.mxu0 0
  %554 = vmatmul.mubr.bf16.gmra.mrb[0].mxu0 %v306
  %v555 = vpop.f32.mrb[0].mxu0
  %v556 = vadd.f32 0.0, %v555
  %v557 = vpop.f32.mrb[0].mxu0
  %v558 = vpop.f32.mrb[0].mxu0
  %v559 = vadd.f32 0.0, %v558
  %v560 = vpop.f32.mrb[0].mxu0
  %561 = vmatprep.mubr.bf16.mxu0 0
  %562 = vmatmul.mubr.bf16.gmra.mrb[0].mxu0 %v307
  %v563 = vpop.f32.mrb[0].mxu0
  %v564 = vadd.f32 0.0, %v563
  %v565 = vpop.f32.mrb[0].mxu0
  %v566 = vpop.f32.mrb[0].mxu0
  %v567 = vadd.f32 0.0, %v566
  %v568 = vpop.f32.mrb[0].mxu0
  %569 = vmatprep.mubr.bf16.mxu0 0
  %570 = vmatmul.mubr.bf16.gmra.mrb[0].mxu0 %v308
  %v571 = vpop.f32.mrb[0].mxu0
  %v572 = vadd.f32 0.0, %v571
  %v573 = vpop.f32.mrb[0].mxu0
  %v574 = vpop.f32.mrb[0].mxu0
  %v575 = vadd.f32 0.0, %v574
  %v576 = vpop.f32.mrb[0].mxu0
  %577 = vmatprep.mubr.bf16.mxu0 0
  %578 = vmatmul.mubr.bf16.gmra.mrb[0].mxu0 %v309
  %v579 = vpop.f32.mrb[0].mxu0
  %v580 = vadd.f32 0.0, %v579
  %v581 = vpop.f32.mrb[0].mxu0
  %v582 = vpop.f32.mrb[0].mxu0
  %v583 = vadd.f32 0.0, %v582
  %v584 = vpop.f32.mrb[0].mxu0
  %585 = vmatprep.mubr.bf16.mxu0 0
  %586 = vmatmul.mubr.bf16.gmra.mrb[0].mxu0 %v310
  %v587 = vpop.f32.mrb[0].mxu0
  %v588 = vadd.f32 0.0, %v587
  %v589 = vpop.f32.mrb[0].mxu0
  %v590 = vpop.f32.mrb[0].mxu0
  %v591 = vadd.f32 0.0, %v590
  %v592 = vpop.f32.mrb[0].mxu0
  %593 = vmatprep.mubr.bf16.mxu0 0
  %594 = vmatmul.mubr.bf16.gmra.mrb[0].mxu0 %v311
  %v595 = vpop.f32.mrb[0].mxu0
  %v596 = vadd.f32 0.0, %v595
  %v597 = vpop.f32.mrb[0].mxu0
  %v598 = vpop.f32.mrb[0].mxu0
  %v599 = vadd.f32 0.0, %v598
  %v600 = vpop.f32.mrb[0].mxu0
  %601 = vmatprep.mubr.bf16.mxu0 0
  %602 = vmatmul.mubr.bf16.gmra.mrb[0].mxu0 %v312
  %v603 = vpop.f32.mrb[0].mxu0
  %v604 = vadd.f32 0.0, %v603
  %v605 = vpop.f32.mrb[0].mxu0
  %v606 = vpop.f32.mrb[0].mxu0
  %v607 = vadd.f32 0.0, %v606
  %v608 = vpop.f32.mrb[0].mxu0
  %609 = vmatprep.mubr.bf16.mxu0 0
  %610 = vmatmul.mubr.bf16.gmra.mrb[0].mxu0 %v313
  %v611 = vpop.f32.mrb[0].mxu0
  %v612 = vadd.f32 0.0, %v611
  %v613 = vpop.f32.mrb[0].mxu0
  %v614 = vpop.f32.mrb[0].mxu0
  %v615 = vadd.f32 0.0, %v614
  %v616 = vpop.f32.mrb[0].mxu0
  %617 = vmatprep.mubr.bf16.mxu0 0
  %618 = vmatmul.mubr.bf16.gmra.mrb[0].mxu0 %v314
  %v619 = vpop.f32.mrb[0].mxu0
  %v620 = vadd.f32 0.0, %v619
  %v621 = vpop.f32.mrb[0].mxu0
  %v622 = vpop.f32.mrb[0].mxu0
  %v623 = vadd.f32 0.0, %v622
  %v624 = vpop.f32.mrb[0].mxu0
  %625 = vmatprep.mubr.bf16.mxu0 0
  %626 = vmatmul.mubr.bf16.gmra.mrb[0].mxu0 %v315
  %v627 = vpop.f32.mrb[0].mxu0
  %v628 = vadd.f32 0.0, %v627
  %v629 = vpop.f32.mrb[0].mxu0
  %v630 = vpop.f32.mrb[0].mxu0
  %v631 = vadd.f32 0.0, %v630
  %v632 = vpop.f32.mrb[0].mxu0
  %633 = vmatprep.mubr.bf16.mxu0 0
  %634 = vmatmul.mubr.bf16.gmra.mrb[0].mxu0 %v316
  %v635 = vpop.f32.mrb[0].mxu0
  %v636 = vadd.f32 0.0, %v635
  %v637 = vpop.f32.mrb[0].mxu0
  %v638 = vpop.f32.mrb[0].mxu0
  %v639 = vadd.f32 0.0, %v638
  %v640 = vpop.f32.mrb[0].mxu0
  %641 = vmatprep.mubr.bf16.mxu0 0
  %642 = vmatmul.mubr.bf16.gmra.mrb[0].mxu0 %v317
  %v643 = vpop.f32.mrb[0].mxu0
  %v644 = vadd.f32 0.0, %v643
  %v645 = vpop.f32.mrb[0].mxu0
  %v646 = vpop.f32.mrb[0].mxu0
  %v647 = vadd.f32 0.0, %v646
  %v648 = vpop.f32.mrb[0].mxu0
  %649 = vmatprep.mubr.bf16.mxu0 0
  %650 = vmatmul.mubr.bf16.gmra.mrb[0].mxu0 %v318
  %v651 = vpop.f32.mrb[0].mxu0
  %v652 = vadd.f32 0.0, %v651
  %v653 = vpop.f32.mrb[0].mxu0
  %v654 = vpop.f32.mrb[0].mxu0
  %v655 = vadd.f32 0.0, %v654
  %v656 = vpop.f32.mrb[0].mxu0
  %657 = vmatprep.mubr.bf16.mxu0 0
  %658 = vmatmul.mubr.bf16.gmra.mrb[0].mxu0 %v319
  %v659 = vpop.f32.mrb[0].mxu0
  %v660 = vadd.f32 0.0, %v659
  %v661 = vpop.f32.mrb[0].mxu0
  %v662 = vpop.f32.mrb[0].mxu0
  %v663 = vadd.f32 0.0, %v662
  %v664 = vpop.f32.mrb[0].mxu0
  %665 = vmatprep.mubr.bf16.mxu0 0
  %666 = vmatmul.mubr.bf16.gmra.mrb[0].mxu0 %v320
  %v667 = vpop.f32.mrb[0].mxu0
  %v668 = vadd.f32 0.0, %v667
  %v669 = vpop.f32.mrb[0].mxu0
  %v670 = vpop.f32.mrb[0].mxu0
  %v671 = vadd.f32 0.0, %v670
  %v672 = vpop.f32.mrb[0].mxu0
  %673 = vdwg.mxu0
  %v674 = vld [vmem:[%s3] sm:$0xf]
  %v675 = vld [vmem:[%s3 + $0x4] sm:$0xf]
  %v676 = vld [vmem:[%s3 + $0x8] sm:$0xf]
  %v677 = vld [vmem:[%s3 + $0xc] sm:$0xf]
  %v678 = vld [vmem:[%s3 + $0x10] sm:$0xf]
  %v679 = vld [vmem:[%s3 + $0x14] sm:$0xf]
  %v680 = vld [vmem:[%s3 + $0x18] sm:$0xf]
  %v681 = vld [vmem:[%s3 + $0x1c] sm:$0xf]
  %v682 = vld [vmem:[%s3 + $0x20] sm:$0xf]
  %v683 = vld [vmem:[%s3 + $0x24] sm:$0xf]
  %v684 = vld [vmem:[%s3 + $0x28] sm:$0xf]
  %v685 = vld [vmem:[%s3 + $0x2c] sm:$0xf]
  %v686 = vld [vmem:[%s3 + $0x30] sm:$0xf]
  %v687 = vld [vmem:[%s3 + $0x34] sm:$0xf]
  %v688 = vld [vmem:[%s3 + $0x38] sm:$0xf]
  %v689 = vld [vmem:[%s3 + $0x3c] sm:$0xf]
  %v706 = vunpack.c.l.b16 %v674
  %v707 = vunpack.c.l.b16 %v675
  %v708 = vunpack.c.l.b16 %v676
  %v709 = vunpack.c.l.b16 %v677
  %v710 = vunpack.c.l.b16 %v678
  %v711 = vunpack.c.l.b16 %v679
  %v712 = vunpack.c.l.b16 %v680
  %v713 = vunpack.c.l.b16 %v681
  %v714 = vunpack.c.l.b16 %v682
  %v715 = vunpack.c.l.b16 %v683
  %v716 = vunpack.c.l.b16 %v684
  %v717 = vunpack.c.l.b16 %v685
  %v718 = vunpack.c.l.b16 %v686
  %v719 = vunpack.c.l.b16 %v687
  %v720 = vunpack.c.l.b16 %v688
  %v721 = vunpack.c.l.b16 %v689
  %v722 = vpack.c.b16 %v707, %v706
  %v723 = vpack.c.b16 %v709, %v708
  %v724 = vpack.c.b16 %v711, %v710
  %v725 = vpack.c.b16 %v713, %v712
  %v726 = vpack.c.b16 %v715, %v714
  %v727 = vpack.c.b16 %v717, %v716
  %v728 = vpack.c.b16 %v719, %v718
  %v729 = vpack.c.b16 %v721, %v720
  %738 = vmatprep.subr.bf16.mxu0 0
  %739 = vmatpush1.bf16.msra.mxu0 %v722
  %740 = vmatprep.subr.bf16.mxu0 0
  %741 = vmatpush1.bf16.msra.mxu0 %v723
  %742 = vmatprep.subr.bf16.mxu0 0
  %743 = vmatpush1.bf16.msra.mxu0 %v724
  %744 = vmatprep.subr.bf16.mxu0 0
  %745 = vmatpush1.bf16.msra.mxu0 %v725
  %746 = vmatprep.subr.bf16.mxu0 0
  %747 = vmatpush1.bf16.msra.mxu0 %v726
  %748 = vmatprep.subr.bf16.mxu0 0
  %749 = vmatpush1.bf16.msra.mxu0 %v727
  %750 = vmatprep.subr.bf16.mxu0 0
  %751 = vmatpush1.bf16.msra.mxu0 %v728
  %752 = vmatprep.subr.bf16.mxu0 0
  %753 = vmatpush1.bf16.msra.mxu0 %v729
  %754 = vmatprep.subr.bf16.mxu0 0
  %755 = vmatpush1.bf16.msra.mxu0 0
  %756 = vmatprep.subr.bf16.mxu0 0
  %757 = vmatpush1.bf16.msra.mxu0 0
  %758 = vmatprep.subr.bf16.mxu0 0
  %759 = vmatpush1.bf16.msra.mxu0 0
  %760 = vmatprep.subr.bf16.mxu0 0
  %761 = vmatpush1.bf16.msra.mxu0 0
  %762 = vmatprep.subr.bf16.mxu0 0
  %763 = vmatpush1.bf16.msra.mxu0 0
  %764 = vmatprep.subr.bf16.mxu0 0
  %765 = vmatpush1.bf16.msra.mxu0 0
  %766 = vmatprep.subr.bf16.mxu0 0
  %767 = vmatpush1.bf16.msra.mxu0 0
  %768 = vmatprep.subr.bf16.mxu0 0
  %769 = vmatpush1.bf16.msra.mxu0 0
  %770 = vmatprep.mubr.bf16.mxu0 0
  %771 = vmatmul.mubr.bf16.gmra.mrb[0].mxu0 %v289
  %v772 = vpop.f32.mrb[0].mxu0
  %v773 = vadd.f32 0.0, %v772
  %v774 = vpop.f32.mrb[0].mxu0
  %v775 = vpop.f32.mrb[0].mxu0
  %v776 = vadd.f32 0.0, %v775
  %v777 = vpop.f32.mrb[0].mxu0
  %778 = vmatprep.mubr.bf16.mxu0 0
  %779 = vmatmul.mubr.bf16.gmra.mrb[0].mxu0 %v290
  %v780 = vpop.f32.mrb[0].mxu0
  %v781 = vadd.f32 0.0, %v780
  %v782 = vpop.f32.mrb[0].mxu0
  %v783 = vpop.f32.mrb[0].mxu0
  %v784 = vadd.f32 0.0, %v783
  %v785 = vpop.f32.mrb[0].mxu0
  %786 = vmatprep.mubr.bf16.mxu0 0
  %787 = vmatmul.mubr.bf16.gmra.mrb[0].mxu0 %v291
  %v788 = vpop.f32.mrb[0].mxu0
  %v789 = vadd.f32 0.0, %v788
  %v790 = vpop.f32.mrb[0].mxu0
  %v791 = vpop.f32.mrb[0].mxu0
  %v792 = vadd.f32 0.0, %v791
  %v793 = vpop.f32.mrb[0].mxu0
  %794 = vmatprep.mubr.bf16.mxu0 0
  %795 = vmatmul.mubr.bf16.gmra.mrb[0].mxu0 %v292
  %v796 = vpop.f32.mrb[0].mxu0
  %v797 = vadd.f32 0.0, %v796
  %v798 = vpop.f32.mrb[0].mxu0
  %v799 = vpop.f32.mrb[0].mxu0
  %v800 = vadd.f32 0.0, %v799
  %v801 = vpop.f32.mrb[0].mxu0
  %802 = vmatprep.mubr.bf16.mxu0 0
  %803 = vmatmul.mubr.bf16.gmra.mrb[0].mxu0 %v293
  %v804 = vpop.f32.mrb[0].mxu0
  %v805 = vadd.f32 0.0, %v804
  %v806 = vpop.f32.mrb[0].mxu0
  %v807 = vpop.f32.mrb[0].mxu0
  %v808 = vadd.f32 0.0, %v807
  %v809 = vpop.f32.mrb[0].mxu0
  %810 = vmatprep.mubr.bf16.mxu0 0
  %811 = vmatmul.mubr.bf16.gmra.mrb[0].mxu0 %v294
  %v812 = vpop.f32.mrb[0].mxu0
  %v813 = vadd.f32 0.0, %v812
  %v814 = vpop.f32.mrb[0].mxu0
  %v815 = vpop.f32.mrb[0].mxu0
  %v816 = vadd.f32 0.0, %v815
  %v817 = vpop.f32.mrb[0].mxu0
  %818 = vmatprep.mubr.bf16.mxu0 0
  %819 = vmatmul.mubr.bf16.gmra.mrb[0].mxu0 %v295
  %v820 = vpop.f32.mrb[0].mxu0
  %v821 = vadd.f32 0.0, %v820
  %v822 = vpop.f32.mrb[0].mxu0
  %v823 = vpop.f32.mrb[0].mxu0
  %v824 = vadd.f32 0.0, %v823
  %v825 = vpop.f32.mrb[0].mxu0
  %826 = vmatprep.mubr.bf16.mxu0 0
  %827 = vmatmul.mubr.bf16.gmra.mrb[0].mxu0 %v296
  %v828 = vpop.f32.mrb[0].mxu0
  %v829 = vadd.f32 0.0, %v828
  %v830 = vpop.f32.mrb[0].mxu0
  %v831 = vpop.f32.mrb[0].mxu0
  %v832 = vadd.f32 0.0, %v831
  %v833 = vpop.f32.mrb[0].mxu0
  %834 = vmatprep.mubr.bf16.mxu0 0
  %835 = vmatmul.mubr.bf16.gmra.mrb[0].mxu0 %v297
  %v836 = vpop.f32.mrb[0].mxu0
  %v837 = vadd.f32 0.0, %v836
  %v838 = vpop.f32.mrb[0].mxu0
  %v839 = vpop.f32.mrb[0].mxu0
  %v840 = vadd.f32 0.0, %v839
  %v841 = vpop.f32.mrb[0].mxu0
  %842 = vmatprep.mubr.bf16.mxu0 0
  %843 = vmatmul.mubr.bf16.gmra.mrb[0].mxu0 %v298
  %v844 = vpop.f32.mrb[0].mxu0
  %v845 = vadd.f32 0.0, %v844
  %v846 = vpop.f32.mrb[0].mxu0
  %v847 = vpop.f32.mrb[0].mxu0
  %v848 = vadd.f32 0.0, %v847
  %v849 = vpop.f32.mrb[0].mxu0
  %850 = vmatprep.mubr.bf16.mxu0 0
  %851 = vmatmul.mubr.bf16.gmra.mrb[0].mxu0 %v299
  %v852 = vpop.f32.mrb[0].mxu0
  %v853 = vadd.f32 0.0, %v852
  %v854 = vpop.f32.mrb[0].mxu0
  %v855 = vpop.f32.mrb[0].mxu0
  %v856 = vadd.f32 0.0, %v855
  %v857 = vpop.f32.mrb[0].mxu0
  %858 = vmatprep.mubr.bf16.mxu0 0
  %859 = vmatmul.mubr.bf16.gmra.mrb[0].mxu0 %v300
  %v860 = vpop.f32.mrb[0].mxu0
  %v861 = vadd.f32 0.0, %v860
  %v862 = vpop.f32.mrb[0].mxu0
  %v863 = vpop.f32.mrb[0].mxu0
  %v864 = vadd.f32 0.0, %v863
  %v865 = vpop.f32.mrb[0].mxu0
  %866 = vmatprep.mubr.bf16.mxu0 0
  %867 = vmatmul.mubr.bf16.gmra.mrb[0].mxu0 %v301
  %v868 = vpop.f32.mrb[0].mxu0
  %v869 = vadd.f32 0.0, %v868
  %v870 = vpop.f32.mrb[0].mxu0
  %v871 = vpop.f32.mrb[0].mxu0
  %v872 = vadd.f32 0.0, %v871
  %v873 = vpop.f32.mrb[0].mxu0
  %874 = vmatprep.mubr.bf16.mxu0 0
  %875 = vmatmul.mubr.bf16.gmra.mrb[0].mxu0 %v302
  %v876 = vpop.f32.mrb[0].mxu0
  %v877 = vadd.f32 0.0, %v876
  %v878 = vpop.f32.mrb[0].mxu0
  %v879 = vpop.f32.mrb[0].mxu0
  %v880 = vadd.f32 0.0, %v879
  %v881 = vpop.f32.mrb[0].mxu0
  %882 = vmatprep.mubr.bf16.mxu0 0
  %883 = vmatmul.mubr.bf16.gmra.mrb[0].mxu0 %v303
  %v884 = vpop.f32.mrb[0].mxu0
  %v885 = vadd.f32 0.0, %v884
  %v886 = vpop.f32.mrb[0].mxu0
  %v887 = vpop.f32.mrb[0].mxu0
  %v888 = vadd.f32 0.0, %v887
  %v889 = vpop.f32.mrb[0].mxu0
  %890 = vmatprep.mubr.bf16.mxu0 0
  %891 = vmatmul.mubr.bf16.gmra.mrb[0].mxu0 %v304
  %v892 = vpop.f32.mrb[0].mxu0
  %v893 = vadd.f32 0.0, %v892
  %v894 = vpop.f32.mrb[0].mxu0
  %v895 = vpop.f32.mrb[0].mxu0
  %v896 = vadd.f32 0.0, %v895
  %v897 = vpop.f32.mrb[0].mxu0
  %898 = vmatprep.mubr.bf16.mxu0 0
  %899 = vmatmul.mubr.bf16.gmra.mrb[0].mxu0 %v305
  %v900 = vpop.f32.mrb[0].mxu0
  %v901 = vadd.f32 0.0, %v900
  %v902 = vpop.f32.mrb[0].mxu0
  %v903 = vpop.f32.mrb[0].mxu0
  %v904 = vadd.f32 0.0, %v903
  %v905 = vpop.f32.mrb[0].mxu0
  %906 = vmatprep.mubr.bf16.mxu0 0
  %907 = vmatmul.mubr.bf16.gmra.mrb[0].mxu0 %v306
  %v908 = vpop.f32.mrb[0].mxu0
  %v909 = vadd.f32 0.0, %v908
  %v910 = vpop.f32.mrb[0].mxu0
  %v911 = vpop.f32.mrb[0].mxu0
  %v912 = vadd.f32 0.0, %v911
  %v913 = vpop.f32.mrb[0].mxu0
  %914 = vmatprep.mubr.bf16.mxu0 0
  %915 = vmatmul.mubr.bf16.gmra.mrb[0].mxu0 %v307
  %v916 = vpop.f32.mrb[0].mxu0
  %v917 = vadd.f32 0.0, %v916
  %v918 = vpop.f32.mrb[0].mxu0
  %v919 = vpop.f32.mrb[0].mxu0
  %v920 = vadd.f32 0.0, %v919
  %v921 = vpop.f32.mrb[0].mxu0
  %922 = vmatprep.mubr.bf16.mxu0 0
  %923 = vmatmul.mubr.bf16.gmra.mrb[0].mxu0 %v308
  %v924 = vpop.f32.mrb[0].mxu0
  %v925 = vadd.f32 0.0, %v924
  %v926 = vpop.f32.mrb[0].mxu0
  %v927 = vpop.f32.mrb[0].mxu0
  %v928 = vadd.f32 0.0, %v927
  %v929 = vpop.f32.mrb[0].mxu0
  %930 = vmatprep.mubr.bf16.mxu0 0
  %931 = vmatmul.mubr.bf16.gmra.mrb[0].mxu0 %v309
  %v932 = vpop.f32.mrb[0].mxu0
  %v933 = vadd.f32 0.0, %v932
  %v934 = vpop.f32.mrb[0].mxu0
  %v935 = vpop.f32.mrb[0].mxu0
  %v936 = vadd.f32 0.0, %v935
  %v937 = vpop.f32.mrb[0].mxu0
  %938 = vmatprep.mubr.bf16.mxu0 0
  %939 = vmatmul.mubr.bf16.gmra.mrb[0].mxu0 %v310
  %v940 = vpop.f32.mrb[0].mxu0
  %v941 = vadd.f32 0.0, %v940
  %v942 = vpop.f32.mrb[0].mxu0
  %v943 = vpop.f32.mrb[0].mxu0
  %v944 = vadd.f32 0.0, %v943
  %v945 = vpop.f32.mrb[0].mxu0
  %946 = vmatprep.mubr.bf16.mxu0 0
  %947 = vmatmul.mubr.bf16.gmra.mrb[0].mxu0 %v311
  %v948 = vpop.f32.mrb[0].mxu0
  %v949 = vadd.f32 0.0, %v948
  %v950 = vpop.f32.mrb[0].mxu0
  %v951 = vpop.f32.mrb[0].mxu0
  %v952 = vadd.f32 0.0, %v951
  %v953 = vpop.f32.mrb[0].mxu0
  %954 = vmatprep.mubr.bf16.mxu0 0
  %955 = vmatmul.mubr.bf16.gmra.mrb[0].mxu0 %v312
  %v956 = vpop.f32.mrb[0].mxu0
  %v957 = vadd.f32 0.0, %v956
  %v958 = vpop.f32.mrb[0].mxu0
  %v959 = vpop.f32.mrb[0].mxu0
  %v960 = vadd.f32 0.0, %v959
  %v961 = vpop.f32.mrb[0].mxu0
  %962 = vmatprep.mubr.bf16.mxu0 0
  %963 = vmatmul.mubr.bf16.gmra.mrb[0].mxu0 %v313
  %v964 = vpop.f32.mrb[0].mxu0
  %v965 = vadd.f32 0.0, %v964
  %v966 = vpop.f32.mrb[0].mxu0
  %v967 = vpop.f32.mrb[0].mxu0
  %v968 = vadd.f32 0.0, %v967
  %v969 = vpop.f32.mrb[0].mxu0
  %970 = vmatprep.mubr.bf16.mxu0 0
  %971 = vmatmul.mubr.bf16.gmra.mrb[0].mxu0 %v314
  %v972 = vpop.f32.mrb[0].mxu0
  %v973 = vadd.f32 0.0, %v972
  %v974 = vpop.f32.mrb[0].mxu0
  %v975 = vpop.f32.mrb[0].mxu0
  %v976 = vadd.f32 0.0, %v975
  %v977 = vpop.f32.mrb[0].mxu0
  %978 = vmatprep.mubr.bf16.mxu0 0
  %979 = vmatmul.mubr.bf16.gmra.mrb[0].mxu0 %v315
  %v980 = vpop.f32.mrb[0].mxu0
  %v981 = vadd.f32 0.0, %v980
  %v982 = vpop.f32.mrb[0].mxu0
  %v983 = vpop.f32.mrb[0].mxu0
  %v984 = vadd.f32 0.0, %v983
  %v985 = vpop.f32.mrb[0].mxu0
  %986 = vmatprep.mubr.bf16.mxu0 0
  %987 = vmatmul.mubr.bf16.gmra.mrb[0].mxu0 %v316
  %v988 = vpop.f32.mrb[0].mxu0
  %v989 = vadd.f32 0.0, %v988
  %v990 = vpop.f32.mrb[0].mxu0
  %v991 = vpop.f32.mrb[0].mxu0
  %v992 = vadd.f32 0.0, %v991
  %v993 = vpop.f32.mrb[0].mxu0
  %994 = vmatprep.mubr.bf16.mxu0 0
  %995 = vmatmul.mubr.bf16.gmra.mrb[0].mxu0 %v317
  %v996 = vpop.f32.mrb[0].mxu0
  %v997 = vadd.f32 0.0, %v996
  %v998 = vpop.f32.mrb[0].mxu0
  %v999 = vpop.f32.mrb[0].mxu0
  %v1000 = vadd.f32 0.0, %v999
  %v1001 = vpop.f32.mrb[0].mxu0
  %1002 = vmatprep.mubr.bf16.mxu0 0
  %1003 = vmatmul.mubr.bf16.gmra.mrb[0].mxu0 %v318
  %v1004 = vpop.f32.mrb[0].mxu0
  %v1005 = vadd.f32 0.0, %v1004
  %v1006 = vpop.f32.mrb[0].mxu0
  %v1007 = vpop.f32.mrb[0].mxu0
  %v1008 = vadd.f32 0.0, %v1007
  %v1009 = vpop.f32.mrb[0].mxu0
  %1010 = vmatprep.mubr.bf16.mxu0 0
  %1011 = vmatmul.mubr.bf16.gmra.mrb[0].mxu0 %v319
  %v1012 = vpop.f32.mrb[0].mxu0
  %v1013 = vadd.f32 0.0, %v1012
  %v1014 = vpop.f32.mrb[0].mxu0
  %v1015 = vpop.f32.mrb[0].mxu0
  %v1016 = vadd.f32 0.0, %v1015
  %v1017 = vpop.f32.mrb[0].mxu0
  %1018 = vmatprep.mubr.bf16.mxu0 0
  %1019 = vmatmul.mubr.bf16.gmra.mrb[0].mxu0 %v320
  %v1020 = vpop.f32.mrb[0].mxu0
  %v1021 = vadd.f32 0.0, %v1020
  %v1022 = vpop.f32.mrb[0].mxu0
  %v1023 = vpop.f32.mrb[0].mxu0
  %v1024 = vadd.f32 0.0, %v1023
  %v1025 = vpop.f32.mrb[0].mxu0
  %1026 = vdwg.mxu0
  %v1027 = vpack.c.bf16 %v423, %v420
  %v1028 = vpack.c.bf16 %v431, %v428
  %v1029 = vpack.c.bf16 %v439, %v436
  %v1030 = vpack.c.bf16 %v447, %v444
  %v1031 = vpack.c.bf16 %v455, %v452
  %v1032 = vpack.c.bf16 %v463, %v460
  %v1033 = vpack.c.bf16 %v471, %v468
  %v1034 = vpack.c.bf16 %v479, %v476
  %v1035 = vpack.c.bf16 %v487, %v484
  %v1036 = vpack.c.bf16 %v495, %v492
  %v1037 = vpack.c.bf16 %v503, %v500
  %v1038 = vpack.c.bf16 %v511, %v508
  %v1039 = vpack.c.bf16 %v519, %v516
  %v1040 = vpack.c.bf16 %v527, %v524
  %v1041 = vpack.c.bf16 %v535, %v532
  %v1042 = vpack.c.bf16 %v543, %v540
  %v1043 = vpack.c.bf16 %v551, %v548
  %v1044 = vpack.c.bf16 %v559, %v556
  %v1045 = vpack.c.bf16 %v567, %v564
  %v1046 = vpack.c.bf16 %v575, %v572
  %v1047 = vpack.c.bf16 %v583, %v580
  %v1048 = vpack.c.bf16 %v591, %v588
  %v1049 = vpack.c.bf16 %v599, %v596
  %v1050 = vpack.c.bf16 %v607, %v604
  %v1051 = vpack.c.bf16 %v615, %v612
  %v1052 = vpack.c.bf16 %v623, %v620
  %v1053 = vpack.c.bf16 %v631, %v628
  %v1054 = vpack.c.bf16 %v639, %v636
  %v1055 = vpack.c.bf16 %v647, %v644
  %v1056 = vpack.c.bf16 %v655, %v652
  %v1057 = vpack.c.bf16 %v663, %v660
  %v1058 = vpack.c.bf16 %v671, %v668
  %v1091 = vunpack.c.l.b16 %v1027
  %v1092 = vunpack.c.h.b16 %v1027
  %v1093 = vunpack.c.l.b16 %v1028
  %v1094 = vunpack.c.h.b16 %v1028
  %v1095 = vunpack.c.l.b16 %v1029
  %v1096 = vunpack.c.h.b16 %v1029
  %v1097 = vunpack.c.l.b16 %v1030
  %v1098 = vunpack.c.h.b16 %v1030
  %v1099 = vunpack.c.l.b16 %v1031
  %v1100 = vunpack.c.h.b16 %v1031
  %v1101 = vunpack.c.l.b16 %v1032
  %v1102 = vunpack.c.h.b16 %v1032
  %v1103 = vunpack.c.l.b16 %v1033
  %v1104 = vunpack.c.h.b16 %v1033
  %v1105 = vunpack.c.l.b16 %v1034
  %v1106 = vunpack.c.h.b16 %v1034
  %v1107 = vunpack.c.l.b16 %v1035
  %v1108 = vunpack.c.h.b16 %v1035
  %v1109 = vunpack.c.l.b16 %v1036
  %v1110 = vunpack.c.h.b16 %v1036
  %v1111 = vunpack.c.l.b16 %v1037
  %v1112 = vunpack.c.h.b16 %v1037
  %v1113 = vunpack.c.l.b16 %v1038
  %v1114 = vunpack.c.h.b16 %v1038
  %v1115 = vunpack.c.l.b16 %v1039
  %v1116 = vunpack.c.h.b16 %v1039
  %v1117 = vunpack.c.l.b16 %v1040
  %v1118 = vunpack.c.h.b16 %v1040
  %v1119 = vunpack.c.l.b16 %v1041
  %v1120 = vunpack.c.h.b16 %v1041
  %v1121 = vunpack.c.l.b16 %v1042
  %v1122 = vunpack.c.h.b16 %v1042
  %v1123 = vunpack.c.l.b16 %v1043
  %v1124 = vunpack.c.h.b16 %v1043
  %v1125 = vunpack.c.l.b16 %v1044
  %v1126 = vunpack.c.h.b16 %v1044
  %v1127 = vunpack.c.l.b16 %v1045
  %v1128 = vunpack.c.h.b16 %v1045
  %v1129 = vunpack.c.l.b16 %v1046
  %v1130 = vunpack.c.h.b16 %v1046
  %v1131 = vunpack.c.l.b16 %v1047
  %v1132 = vunpack.c.h.b16 %v1047
  %v1133 = vunpack.c.l.b16 %v1048
  %v1134 = vunpack.c.h.b16 %v1048
  %v1135 = vunpack.c.l.b16 %v1049
  %v1136 = vunpack.c.h.b16 %v1049
  %v1137 = vunpack.c.l.b16 %v1050
  %v1138 = vunpack.c.h.b16 %v1050
  %v1139 = vunpack.c.l.b16 %v1051
  %v1140 = vunpack.c.h.b16 %v1051
  %v1141 = vunpack.c.l.b16 %v1052
  %v1142 = vunpack.c.h.b16 %v1052
  %v1143 = vunpack.c.l.b16 %v1053
  %v1144 = vunpack.c.h.b16 %v1053
  %v1145 = vunpack.c.l.b16 %v1054
  %v1146 = vunpack.c.h.b16 %v1054
  %v1147 = vunpack.c.l.b16 %v1055
  %v1148 = vunpack.c.h.b16 %v1055
  %v1149 = vunpack.c.l.b16 %v1056
  %v1150 = vunpack.c.h.b16 %v1056
  %v1151 = vunpack.c.l.b16 %v1057
  %v1152 = vunpack.c.h.b16 %v1057
  %v1153 = vunpack.c.l.b16 %v1058
  %v1154 = vunpack.c.h.b16 %v1058
  %v1155 = vpack.c.b16 %v1091, %v1091
  %v1156 = vpack.c.b16 %v1092, %v1092
  %v1157 = vpack.c.b16 %v1093, %v1093
  %v1158 = vpack.c.b16 %v1094, %v1094
  %v1159 = vpack.c.b16 %v1095, %v1095
  %v1160 = vpack.c.b16 %v1096, %v1096
  %v1161 = vpack.c.b16 %v1097, %v1097
  %v1162 = vpack.c.b16 %v1098, %v1098
  %v1163 = vpack.c.b16 %v1099, %v1099
  %v1164 = vpack.c.b16 %v1100, %v1100
  %v1165 = vpack.c.b16 %v1101, %v1101
  %v1166 = vpack.c.b16 %v1102, %v1102
  %v1167 = vpack.c.b16 %v1103, %v1103
  %v1168 = vpack.c.b16 %v1104, %v1104
  %v1169 = vpack.c.b16 %v1105, %v1105
  %v1170 = vpack.c.b16 %v1106, %v1106
  %v1171 = vpack.c.b16 %v1107, %v1107
  %v1172 = vpack.c.b16 %v1108, %v1108
  %v1173 = vpack.c.b16 %v1109, %v1109
  %v1174 = vpack.c.b16 %v1110, %v1110
  %v1175 = vpack.c.b16 %v1111, %v1111
  %v1176 = vpack.c.b16 %v1112, %v1112
  %v1177 = vpack.c.b16 %v1113, %v1113
  %v1178 = vpack.c.b16 %v1114, %v1114
  %v1179 = vpack.c.b16 %v1115, %v1115
  %v1180 = vpack.c.b16 %v1116, %v1116
  %v1181 = vpack.c.b16 %v1117, %v1117
  %v1182 = vpack.c.b16 %v1118, %v1118
  %v1183 = vpack.c.b16 %v1119, %v1119
  %v1184 = vpack.c.b16 %v1120, %v1120
  %v1185 = vpack.c.b16 %v1121, %v1121
  %v1186 = vpack.c.b16 %v1122, %v1122
  %v1187 = vpack.c.b16 %v1123, %v1123
  %v1188 = vpack.c.b16 %v1124, %v1124
  %v1189 = vpack.c.b16 %v1125, %v1125
  %v1190 = vpack.c.b16 %v1126, %v1126
  %v1191 = vpack.c.b16 %v1127, %v1127
  %v1192 = vpack.c.b16 %v1128, %v1128
  %v1193 = vpack.c.b16 %v1129, %v1129
  %v1194 = vpack.c.b16 %v1130, %v1130
  %v1195 = vpack.c.b16 %v1131, %v1131
  %v1196 = vpack.c.b16 %v1132, %v1132
  %v1197 = vpack.c.b16 %v1133, %v1133
  %v1198 = vpack.c.b16 %v1134, %v1134
  %v1199 = vpack.c.b16 %v1135, %v1135
  %v1200 = vpack.c.b16 %v1136, %v1136
  %v1201 = vpack.c.b16 %v1137, %v1137
  %v1202 = vpack.c.b16 %v1138, %v1138
  %v1203 = vpack.c.b16 %v1139, %v1139
  %v1204 = vpack.c.b16 %v1140, %v1140
  %v1205 = vpack.c.b16 %v1141, %v1141
  %v1206 = vpack.c.b16 %v1142, %v1142
  %v1207 = vpack.c.b16 %v1143, %v1143
  %v1208 = vpack.c.b16 %v1144, %v1144
  %v1209 = vpack.c.b16 %v1145, %v1145
  %v1210 = vpack.c.b16 %v1146, %v1146
  %v1211 = vpack.c.b16 %v1147, %v1147
  %v1212 = vpack.c.b16 %v1148, %v1148
  %v1213 = vpack.c.b16 %v1149, %v1149
  %v1214 = vpack.c.b16 %v1150, %v1150
  %v1215 = vpack.c.b16 %v1151, %v1151
  %v1216 = vpack.c.b16 %v1152, %v1152
  %v1217 = vpack.c.b16 %v1153, %v1153
  %v1218 = vpack.c.b16 %v1154, %v1154
  %1283 = vst [vmem:[%s4] sm:$0xf] %v1155
  %1284 = vst [vmem:[%s4 + $0x4] sm:$0xf] %v1156
  %1285 = vst [vmem:[%s4 + $0x8] sm:$0xf] %v1157
  %1286 = vst [vmem:[%s4 + $0xc] sm:$0xf] %v1158
  %1287 = vst [vmem:[%s4 + $0x10] sm:$0xf] %v1159
  %1288 = vst [vmem:[%s4 + $0x14] sm:$0xf] %v1160
  %1289 = vst [vmem:[%s4 + $0x18] sm:$0xf] %v1161
  %1290 = vst [vmem:[%s4 + $0x1c] sm:$0xf] %v1162
  %1291 = vst [vmem:[%s4 + $0x20] sm:$0xf] %v1163
  %1292 = vst [vmem:[%s4 + $0x24] sm:$0xf] %v1164
  %1293 = vst [vmem:[%s4 + $0x28] sm:$0xf] %v1165
  %1294 = vst [vmem:[%s4 + $0x2c] sm:$0xf] %v1166
  %1295 = vst [vmem:[%s4 + $0x30] sm:$0xf] %v1167
  %1296 = vst [vmem:[%s4 + $0x34] sm:$0xf] %v1168
  %1297 = vst [vmem:[%s4 + $0x38] sm:$0xf] %v1169
  %1298 = vst [vmem:[%s4 + $0x3c] sm:$0xf] %v1170
  %1299 = vst [vmem:[%s4 + $0x40] sm:$0xf] %v1171
  %1300 = vst [vmem:[%s4 + $0x44] sm:$0xf] %v1172
  %1301 = vst [vmem:[%s4 + $0x48] sm:$0xf] %v1173
  %1302 = vst [vmem:[%s4 + $0x4c] sm:$0xf] %v1174
  %1303 = vst [vmem:[%s4 + $0x50] sm:$0xf] %v1175
  %1304 = vst [vmem:[%s4 + $0x54] sm:$0xf] %v1176
  %1305 = vst [vmem:[%s4 + $0x58] sm:$0xf] %v1177
  %1306 = vst [vmem:[%s4 + $0x5c] sm:$0xf] %v1178
  %1307 = vst [vmem:[%s4 + $0x60] sm:$0xf] %v1179
  %1308 = vst [vmem:[%s4 + $0x64] sm:$0xf] %v1180
  %1309 = vst [vmem:[%s4 + $0x68] sm:$0xf] %v1181
  %1310 = vst [vmem:[%s4 + $0x6c] sm:$0xf] %v1182
  %1311 = vst [vmem:[%s4 + $0x70] sm:$0xf] %v1183
  %1312 = vst [vmem:[%s4 + $0x74] sm:$0xf] %v1184
  %1313 = vst [vmem:[%s4 + $0x78] sm:$0xf] %v1185
  %1314 = vst [vmem:[%s4 + $0x7c] sm:$0xf] %v1186
  %1315 = vst [vmem:[%s4 + $0x80] sm:$0xf] %v1187
  %1316 = vst [vmem:[%s4 + $0x84] sm:$0xf] %v1188
  %1317 = vst [vmem:[%s4 + $0x88] sm:$0xf] %v1189
  %1318 = vst [vmem:[%s4 + $0x8c] sm:$0xf] %v1190
  %1319 = vst [vmem:[%s4 + $0x90] sm:$0xf] %v1191
  %1320 = vst [vmem:[%s4 + $0x94] sm:$0xf] %v1192
  %1321 = vst [vmem:[%s4 + $0x98] sm:$0xf] %v1193
  %1322 = vst [vmem:[%s4 + $0x9c] sm:$0xf] %v1194
  %1323 = vst [vmem:[%s4 + $0xa0] sm:$0xf] %v1195
  %1324 = vst [vmem:[%s4 + $0xa4] sm:$0xf] %v1196
  %1325 = vst [vmem:[%s4 + $0xa8] sm:$0xf] %v1197
  %1326 = vst [vmem:[%s4 + $0xac] sm:$0xf] %v1198
  %1327 = vst [vmem:[%s4 + $0xb0] sm:$0xf] %v1199
  %1328 = vst [vmem:[%s4 + $0xb4] sm:$0xf] %v1200
  %1329 = vst [vmem:[%s4 + $0xb8] sm:$0xf] %v1201
  %1330 = vst [vmem:[%s4 + $0xbc] sm:$0xf] %v1202
  %1331 = vst [vmem:[%s4 + $0xc0] sm:$0xf] %v1203
  %1332 = vst [vmem:[%s4 + $0xc4] sm:$0xf] %v1204
  %1333 = vst [vmem:[%s4 + $0xc8] sm:$0xf] %v1205
  %1334 = vst [vmem:[%s4 + $0xcc] sm:$0xf] %v1206
  %1335 = vst [vmem:[%s4 + $0xd0] sm:$0xf] %v1207
  %1336 = vst [vmem:[%s4 + $0xd4] sm:$0xf] %v1208
  %1337 = vst [vmem:[%s4 + $0xd8] sm:$0xf] %v1209
  %1338 = vst [vmem:[%s4 + $0xdc] sm:$0xf] %v1210
  %1339 = vst [vmem:[%s4 + $0xe0] sm:$0xf] %v1211
  %1340 = vst [vmem:[%s4 + $0xe4] sm:$0xf] %v1212
  %1341 = vst [vmem:[%s4 + $0xe8] sm:$0xf] %v1213
  %1342 = vst [vmem:[%s4 + $0xec] sm:$0xf] %v1214
  %1343 = vst [vmem:[%s4 + $0xf0] sm:$0xf] %v1215
  %1344 = vst [vmem:[%s4 + $0xf4] sm:$0xf] %v1216
  %1345 = vst [vmem:[%s4 + $0xf8] sm:$0xf] %v1217
  %1346 = vst [vmem:[%s4 + $0xfc] sm:$0xf] %v1218
  %v1347 = vpack.c.bf16 %v776, %v773
  %v1348 = vpack.c.bf16 %v784, %v781
  %v1349 = vpack.c.bf16 %v792, %v789
  %v1350 = vpack.c.bf16 %v800, %v797
  %v1351 = vpack.c.bf16 %v808, %v805
  %v1352 = vpack.c.bf16 %v816, %v813
  %v1353 = vpack.c.bf16 %v824, %v821
  %v1354 = vpack.c.bf16 %v832, %v829
  %v1355 = vpack.c.bf16 %v840, %v837
  %v1356 = vpack.c.bf16 %v848, %v845
  %v1357 = vpack.c.bf16 %v856, %v853
  %v1358 = vpack.c.bf16 %v864, %v861
  %v1359 = vpack.c.bf16 %v872, %v869
  %v1360 = vpack.c.bf16 %v880, %v877
  %v1361 = vpack.c.bf16 %v888, %v885
  %v1362 = vpack.c.bf16 %v896, %v893
  %v1363 = vpack.c.bf16 %v904, %v901
  %v1364 = vpack.c.bf16 %v912, %v909
  %v1365 = vpack.c.bf16 %v920, %v917
  %v1366 = vpack.c.bf16 %v928, %v925
  %v1367 = vpack.c.bf16 %v936, %v933
  %v1368 = vpack.c.bf16 %v944, %v941
  %v1369 = vpack.c.bf16 %v952, %v949
  %v1370 = vpack.c.bf16 %v960, %v957
  %v1371 = vpack.c.bf16 %v968, %v965
  %v1372 = vpack.c.bf16 %v976, %v973
  %v1373 = vpack.c.bf16 %v984, %v981
  %v1374 = vpack.c.bf16 %v992, %v989
  %v1375 = vpack.c.bf16 %v1000, %v997
  %v1376 = vpack.c.bf16 %v1008, %v1005
  %v1377 = vpack.c.bf16 %v1016, %v1013
  %v1378 = vpack.c.bf16 %v1024, %v1021
  %v1411 = vunpack.c.l.b16 %v1347
  %v1412 = vunpack.c.h.b16 %v1347
  %v1413 = vunpack.c.l.b16 %v1348
  %v1414 = vunpack.c.h.b16 %v1348
  %v1415 = vunpack.c.l.b16 %v1349
  %v1416 = vunpack.c.h.b16 %v1349
  %v1417 = vunpack.c.l.b16 %v1350
  %v1418 = vunpack.c.h.b16 %v1350
  %v1419 = vunpack.c.l.b16 %v1351
  %v1420 = vunpack.c.h.b16 %v1351
  %v1421 = vunpack.c.l.b16 %v1352
  %v1422 = vunpack.c.h.b16 %v1352
  %v1423 = vunpack.c.l.b16 %v1353
  %v1424 = vunpack.c.h.b16 %v1353
  %v1425 = vunpack.c.l.b16 %v1354
  %v1426 = vunpack.c.h.b16 %v1354
  %v1427 = vunpack.c.l.b16 %v1355
  %v1428 = vunpack.c.h.b16 %v1355
  %v1429 = vunpack.c.l.b16 %v1356
  %v1430 = vunpack.c.h.b16 %v1356
  %v1431 = vunpack.c.l.b16 %v1357
  %v1432 = vunpack.c.h.b16 %v1357
  %v1433 = vunpack.c.l.b16 %v1358
  %v1434 = vunpack.c.h.b16 %v1358
  %v1435 = vunpack.c.l.b16 %v1359
  %v1436 = vunpack.c.h.b16 %v1359
  %v1437 = vunpack.c.l.b16 %v1360
  %v1438 = vunpack.c.h.b16 %v1360
  %v1439 = vunpack.c.l.b16 %v1361
  %v1440 = vunpack.c.h.b16 %v1361
  %v1441 = vunpack.c.l.b16 %v1362
  %v1442 = vunpack.c.h.b16 %v1362
  %v1443 = vunpack.c.l.b16 %v1363
  %v1444 = vunpack.c.h.b16 %v1363
  %v1445 = vunpack.c.l.b16 %v1364
  %v1446 = vunpack.c.h.b16 %v1364
  %v1447 = vunpack.c.l.b16 %v1365
  %v1448 = vunpack.c.h.b16 %v1365
  %v1449 = vunpack.c.l.b16 %v1366
  %v1450 = vunpack.c.h.b16 %v1366
  %v1451 = vunpack.c.l.b16 %v1367
  %v1452 = vunpack.c.h.b16 %v1367
  %v1453 = vunpack.c.l.b16 %v1368
  %v1454 = vunpack.c.h.b16 %v1368
  %v1455 = vunpack.c.l.b16 %v1369
  %v1456 = vunpack.c.h.b16 %v1369
  %v1457 = vunpack.c.l.b16 %v1370
  %v1458 = vunpack.c.h.b16 %v1370
  %v1459 = vunpack.c.l.b16 %v1371
  %v1460 = vunpack.c.h.b16 %v1371
  %v1461 = vunpack.c.l.b16 %v1372
  %v1462 = vunpack.c.h.b16 %v1372
  %v1463 = vunpack.c.l.b16 %v1373
  %v1464 = vunpack.c.h.b16 %v1373
  %v1465 = vunpack.c.l.b16 %v1374
  %v1466 = vunpack.c.h.b16 %v1374
  %v1467 = vunpack.c.l.b16 %v1375
  %v1468 = vunpack.c.h.b16 %v1375
  %v1469 = vunpack.c.l.b16 %v1376
  %v1470 = vunpack.c.h.b16 %v1376
  %v1471 = vunpack.c.l.b16 %v1377
  %v1472 = vunpack.c.h.b16 %v1377
  %v1473 = vunpack.c.l.b16 %v1378
  %v1474 = vunpack.c.h.b16 %v1378
  %v1475 = vpack.c.b16 %v1411, %v1411
  %v1476 = vpack.c.b16 %v1412, %v1412
  %v1477 = vpack.c.b16 %v1413, %v1413
  %v1478 = vpack.c.b16 %v1414, %v1414
  %v1479 = vpack.c.b16 %v1415, %v1415
  %v1480 = vpack.c.b16 %v1416, %v1416
  %v1481 = vpack.c.b16 %v1417, %v1417
  %v1482 = vpack.c.b16 %v1418, %v1418
  %v1483 = vpack.c.b16 %v1419, %v1419
  %v1484 = vpack.c.b16 %v1420, %v1420
  %v1485 = vpack.c.b16 %v1421, %v1421
  %v1486 = vpack.c.b16 %v1422, %v1422
  %v1487 = vpack.c.b16 %v1423, %v1423
  %v1488 = vpack.c.b16 %v1424, %v1424
  %v1489 = vpack.c.b16 %v1425, %v1425
  %v1490 = vpack.c.b16 %v1426, %v1426
  %v1491 = vpack.c.b16 %v1427, %v1427
  %v1492 = vpack.c.b16 %v1428, %v1428
  %v1493 = vpack.c.b16 %v1429, %v1429
  %v1494 = vpack.c.b16 %v1430, %v1430
  %v1495 = vpack.c.b16 %v1431, %v1431
  %v1496 = vpack.c.b16 %v1432, %v1432
  %v1497 = vpack.c.b16 %v1433, %v1433
  %v1498 = vpack.c.b16 %v1434, %v1434
  %v1499 = vpack.c.b16 %v1435, %v1435
  %v1500 = vpack.c.b16 %v1436, %v1436
  %v1501 = vpack.c.b16 %v1437, %v1437
  %v1502 = vpack.c.b16 %v1438, %v1438
  %v1503 = vpack.c.b16 %v1439, %v1439
  %v1504 = vpack.c.b16 %v1440, %v1440
  %v1505 = vpack.c.b16 %v1441, %v1441
  %v1506 = vpack.c.b16 %v1442, %v1442
  %v1507 = vpack.c.b16 %v1443, %v1443
  %v1508 = vpack.c.b16 %v1444, %v1444
  %v1509 = vpack.c.b16 %v1445, %v1445
  %v1510 = vpack.c.b16 %v1446, %v1446
  %v1511 = vpack.c.b16 %v1447, %v1447
  %v1512 = vpack.c.b16 %v1448, %v1448
  %v1513 = vpack.c.b16 %v1449, %v1449
  %v1514 = vpack.c.b16 %v1450, %v1450
  %v1515 = vpack.c.b16 %v1451, %v1451
  %v1516 = vpack.c.b16 %v1452, %v1452
  %v1517 = vpack.c.b16 %v1453, %v1453
  %v1518 = vpack.c.b16 %v1454, %v1454
  %v1519 = vpack.c.b16 %v1455, %v1455
  %v1520 = vpack.c.b16 %v1456, %v1456
  %v1521 = vpack.c.b16 %v1457, %v1457
  %v1522 = vpack.c.b16 %v1458, %v1458
  %v1523 = vpack.c.b16 %v1459, %v1459
  %v1524 = vpack.c.b16 %v1460, %v1460
  %v1525 = vpack.c.b16 %v1461, %v1461
  %v1526 = vpack.c.b16 %v1462, %v1462
  %v1527 = vpack.c.b16 %v1463, %v1463
  %v1528 = vpack.c.b16 %v1464, %v1464
  %v1529 = vpack.c.b16 %v1465, %v1465
  %v1530 = vpack.c.b16 %v1466, %v1466
  %v1531 = vpack.c.b16 %v1467, %v1467
  %v1532 = vpack.c.b16 %v1468, %v1468
  %v1533 = vpack.c.b16 %v1469, %v1469
  %v1534 = vpack.c.b16 %v1470, %v1470
  %v1535 = vpack.c.b16 %v1471, %v1471
  %v1536 = vpack.c.b16 %v1472, %v1472
  %v1537 = vpack.c.b16 %v1473, %v1473
  %v1538 = vpack.c.b16 %v1474, %v1474
  %1603 = vst [vmem:[%s5] sm:$0xf] %v1475
  %1604 = vst [vmem:[%s5 + $0x4] sm:$0xf] %v1476
  %1605 = vst [vmem:[%s5 + $0x8] sm:$0xf] %v1477
  %1606 = vst [vmem:[%s5 + $0xc] sm:$0xf] %v1478
  %1607 = vst [vmem:[%s5 + $0x10] sm:$0xf] %v1479
  %1608 = vst [vmem:[%s5 + $0x14] sm:$0xf] %v1480
  %1609 = vst [vmem:[%s5 + $0x18] sm:$0xf] %v1481
  %1610 = vst [vmem:[%s5 + $0x1c] sm:$0xf] %v1482
  %1611 = vst [vmem:[%s5 + $0x20] sm:$0xf] %v1483
  %1612 = vst [vmem:[%s5 + $0x24] sm:$0xf] %v1484
  %1613 = vst [vmem:[%s5 + $0x28] sm:$0xf] %v1485
  %1614 = vst [vmem:[%s5 + $0x2c] sm:$0xf] %v1486
  %1615 = vst [vmem:[%s5 + $0x30] sm:$0xf] %v1487
  %1616 = vst [vmem:[%s5 + $0x34] sm:$0xf] %v1488
  %1617 = vst [vmem:[%s5 + $0x38] sm:$0xf] %v1489
  %1618 = vst [vmem:[%s5 + $0x3c] sm:$0xf] %v1490
  %1619 = vst [vmem:[%s5 + $0x40] sm:$0xf] %v1491
  %1620 = vst [vmem:[%s5 + $0x44] sm:$0xf] %v1492
  %1621 = vst [vmem:[%s5 + $0x48] sm:$0xf] %v1493
  %1622 = vst [vmem:[%s5 + $0x4c] sm:$0xf] %v1494
  %1623 = vst [vmem:[%s5 + $0x50] sm:$0xf] %v1495
  %1624 = vst [vmem:[%s5 + $0x54] sm:$0xf] %v1496
  %1625 = vst [vmem:[%s5 + $0x58] sm:$0xf] %v1497
  %1626 = vst [vmem:[%s5 + $0x5c] sm:$0xf] %v1498
  %1627 = vst [vmem:[%s5 + $0x60] sm:$0xf] %v1499
  %1628 = vst [vmem:[%s5 + $0x64] sm:$0xf] %v1500
  %1629 = vst [vmem:[%s5 + $0x68] sm:$0xf] %v1501
  %1630 = vst [vmem:[%s5 + $0x6c] sm:$0xf] %v1502
  %1631 = vst [vmem:[%s5 + $0x70] sm:$0xf] %v1503
  %1632 = vst [vmem:[%s5 + $0x74] sm:$0xf] %v1504
  %1633 = vst [vmem:[%s5 + $0x78] sm:$0xf] %v1505
  %1634 = vst [vmem:[%s5 + $0x7c] sm:$0xf] %v1506
  %1635 = vst [vmem:[%s5 + $0x80] sm:$0xf] %v1507
  %1636 = vst [vmem:[%s5 + $0x84] sm:$0xf] %v1508
  %1637 = vst [vmem:[%s5 + $0x88] sm:$0xf] %v1509
  %1638 = vst [vmem:[%s5 + $0x8c] sm:$0xf] %v1510
  %1639 = vst [vmem:[%s5 + $0x90] sm:$0xf] %v1511
  %1640 = vst [vmem:[%s5 + $0x94] sm:$0xf] %v1512
  %1641 = vst [vmem:[%s5 + $0x98] sm:$0xf] %v1513
  %1642 = vst [vmem:[%s5 + $0x9c] sm:$0xf] %v1514
  %1643 = vst [vmem:[%s5 + $0xa0] sm:$0xf] %v1515
  %1644 = vst [vmem:[%s5 + $0xa4] sm:$0xf] %v1516
  %1645 = vst [vmem:[%s5 + $0xa8] sm:$0xf] %v1517
  %1646 = vst [vmem:[%s5 + $0xac] sm:$0xf] %v1518
  %1647 = vst [vmem:[%s5 + $0xb0] sm:$0xf] %v1519
  %1648 = vst [vmem:[%s5 + $0xb4] sm:$0xf] %v1520
  %1649 = vst [vmem:[%s5 + $0xb8] sm:$0xf] %v1521
  %1650 = vst [vmem:[%s5 + $0xbc] sm:$0xf] %v1522
  %1651 = vst [vmem:[%s5 + $0xc0] sm:$0xf] %v1523
  %1652 = vst [vmem:[%s5 + $0xc4] sm:$0xf] %v1524
  %1653 = vst [vmem:[%s5 + $0xc8] sm:$0xf] %v1525
  %1654 = vst [vmem:[%s5 + $0xcc] sm:$0xf] %v1526
  %1655 = vst [vmem:[%s5 + $0xd0] sm:$0xf] %v1527
  %1656 = vst [vmem:[%s5 + $0xd4] sm:$0xf] %v1528
  %1657 = vst [vmem:[%s5 + $0xd8] sm:$0xf] %v1529
  %1658 = vst [vmem:[%s5 + $0xdc] sm:$0xf] %v1530
  %1659 = vst [vmem:[%s5 + $0xe0] sm:$0xf] %v1531
  %1660 = vst [vmem:[%s5 + $0xe4] sm:$0xf] %v1532
  %1661 = vst [vmem:[%s5 + $0xe8] sm:$0xf] %v1533
  %1662 = vst [vmem:[%s5 + $0xec] sm:$0xf] %v1534
  %1663 = vst [vmem:[%s5 + $0xf0] sm:$0xf] %v1535
  %1664 = vst [vmem:[%s5 + $0xf4] sm:$0xf] %v1536
  %1665 = vst [vmem:[%s5 + $0xf8] sm:$0xf] %v1537
  %1666 = vst [vmem:[%s5 + $0xfc] sm:$0xf] %v1538
  %v1667 = vadd.f32 %v420, %v423
  %v1668 = vadd.f32 %v1667, %v428
  %v1669 = vadd.f32 %v1668, %v431
  %v1670 = vadd.f32 %v1669, %v436
  %v1671 = vadd.f32 %v1670, %v439
  %v1672 = vadd.f32 %v1671, %v444
  %v1673 = vadd.f32 %v1672, %v447
  %v1674 = vadd.f32 %v1673, %v452
  %v1675 = vadd.f32 %v1674, %v455
  %v1676 = vadd.f32 %v1675, %v460
  %v1677 = vadd.f32 %v1676, %v463
  %v1678 = vadd.f32 %v1677, %v468
  %v1679 = vadd.f32 %v1678, %v471
  %v1680 = vadd.f32 %v1679, %v476
  %v1681 = vadd.f32 %v1680, %v479
  %v1682 = vadd.f32 %v1681, %v484
  %v1683 = vadd.f32 %v1682, %v487
  %v1684 = vadd.f32 %v1683, %v492
  %v1685 = vadd.f32 %v1684, %v495
  %v1686 = vadd.f32 %v1685, %v500
  %v1687 = vadd.f32 %v1686, %v503
  %v1688 = vadd.f32 %v1687, %v508
  %v1689 = vadd.f32 %v1688, %v511
  %v1690 = vadd.f32 %v1689, %v516
  %v1691 = vadd.f32 %v1690, %v519
  %v1692 = vadd.f32 %v1691, %v524
  %v1693 = vadd.f32 %v1692, %v527
  %v1694 = vadd.f32 %v1693, %v532
  %v1695 = vadd.f32 %v1694, %v535
  %v1696 = vadd.f32 %v1695, %v540
  %v1697 = vadd.f32 %v1696, %v543
  %v1698 = vadd.f32 %v1697, %v548
  %v1699 = vadd.f32 %v1698, %v551
  %v1700 = vadd.f32 %v1699, %v556
  %v1701 = vadd.f32 %v1700, %v559
  %v1702 = vadd.f32 %v1701, %v564
  %v1703 = vadd.f32 %v1702, %v567
  %v1704 = vadd.f32 %v1703, %v572
  %v1705 = vadd.f32 %v1704, %v575
  %v1706 = vadd.f32 %v1705, %v580
  %v1707 = vadd.f32 %v1706, %v583
  %v1708 = vadd.f32 %v1707, %v588
  %v1709 = vadd.f32 %v1708, %v591
  %v1710 = vadd.f32 %v1709, %v596
  %v1711 = vadd.f32 %v1710, %v599
  %v1712 = vadd.f32 %v1711, %v604
  %v1713 = vadd.f32 %v1712, %v607
  %v1714 = vadd.f32 %v1713, %v612
  %v1715 = vadd.f32 %v1714, %v615
  %v1716 = vadd.f32 %v1715, %v620
  %v1717 = vadd.f32 %v1716, %v623
  %v1718 = vadd.f32 %v1717, %v628
  %v1719 = vadd.f32 %v1718, %v631
  %v1720 = vadd.f32 %v1719, %v636
  %v1721 = vadd.f32 %v1720, %v639
  %v1722 = vadd.f32 %v1721, %v644
  %v1723 = vadd.f32 %v1722, %v647
  %v1724 = vadd.f32 %v1723, %v652
  %v1725 = vadd.f32 %v1724, %v655
  %v1726 = vadd.f32 %v1725, %v660
  %v1727 = vadd.f32 %v1726, %v663
  %v1728 = vadd.f32 %v1727, %v668
  %v1729 = vadd.f32 %v1728, %v671
  %v1730 = vrot.slane %v1729, 4
  %v1731 = vadd.f32 %v1729, %v1730
  %v1732 = vrot.slane %v1731, 2
  %v1733 = vadd.f32 %v1731, %v1732
  %v1734 = vrot.slane %v1733, 1
  %v1735 = vadd.f32 %v1733, %v1734
  %1736 = vst [vmem:[%s6] sm:$0x1] %v1735
  %v1737 = vmul.f32 %v420, %v420
  %v1738 = vmul.f32 %v423, %v423
  %v1739 = vmul.f32 %v428, %v428
  %v1740 = vmul.f32 %v431, %v431
  %v1741 = vmul.f32 %v436, %v436
  %v1742 = vmul.f32 %v439, %v439
  %v1743 = vmul.f32 %v444, %v444
  %v1744 = vmul.f32 %v447, %v447
  %v1745 = vmul.f32 %v452, %v452
  %v1746 = vmul.f32 %v455, %v455
  %v1747 = vmul.f32 %v460, %v460
  %v1748 = vmul.f32 %v463, %v463
  %v1749 = vmul.f32 %v468, %v468
  %v1750 = vmul.f32 %v471, %v471
  %v1751 = vmul.f32 %v476, %v476
  %v1752 = vmul.f32 %v479, %v479
  %v1753 = vmul.f32 %v484, %v484
  %v1754 = vmul.f32 %v487, %v487
  %v1755 = vmul.f32 %v492, %v492
  %v1756 = vmul.f32 %v495, %v495
  %v1757 = vmul.f32 %v500, %v500
  %v1758 = vmul.f32 %v503, %v503
  %v1759 = vmul.f32 %v508, %v508
  %v1760 = vmul.f32 %v511, %v511
  %v1761 = vmul.f32 %v516, %v516
  %v1762 = vmul.f32 %v519, %v519
  %v1763 = vmul.f32 %v524, %v524
  %v1764 = vmul.f32 %v527, %v527
  %v1765 = vmul.f32 %v532, %v532
  %v1766 = vmul.f32 %v535, %v535
  %v1767 = vmul.f32 %v540, %v540
  %v1768 = vmul.f32 %v543, %v543
  %v1769 = vmul.f32 %v548, %v548
  %v1770 = vmul.f32 %v551, %v551
  %v1771 = vmul.f32 %v556, %v556
  %v1772 = vmul.f32 %v559, %v559
  %v1773 = vmul.f32 %v564, %v564
  %v1774 = vmul.f32 %v567, %v567
  %v1775 = vmul.f32 %v572, %v572
  %v1776 = vmul.f32 %v575, %v575
  %v1777 = vmul.f32 %v580, %v580
  %v1778 = vmul.f32 %v583, %v583
  %v1779 = vmul.f32 %v588, %v588
  %v1780 = vmul.f32 %v591, %v591
  %v1781 = vmul.f32 %v596, %v596
  %v1782 = vmul.f32 %v599, %v599
  %v1783 = vmul.f32 %v604, %v604
  %v1784 = vmul.f32 %v607, %v607
  %v1785 = vmul.f32 %v612, %v612
  %v1786 = vmul.f32 %v615, %v615
  %v1787 = vmul.f32 %v620, %v620
  %v1788 = vmul.f32 %v623, %v623
  %v1789 = vmul.f32 %v628, %v628
  %v1790 = vmul.f32 %v631, %v631
  %v1791 = vmul.f32 %v636, %v636
  %v1792 = vmul.f32 %v639, %v639
  %v1793 = vmul.f32 %v644, %v644
  %v1794 = vmul.f32 %v647, %v647
  %v1795 = vmul.f32 %v652, %v652
  %v1796 = vmul.f32 %v655, %v655
  %v1797 = vmul.f32 %v660, %v660
  %v1798 = vmul.f32 %v663, %v663
  %v1799 = vmul.f32 %v668, %v668
  %v1800 = vmul.f32 %v671, %v671
  %v1801 = vadd.f32 %v1737, %v1738
  %v1802 = vadd.f32 %v1801, %v1739
  %v1803 = vadd.f32 %v1802, %v1740
  %v1804 = vadd.f32 %v1803, %v1741
  %v1805 = vadd.f32 %v1804, %v1742
  %v1806 = vadd.f32 %v1805, %v1743
  %v1807 = vadd.f32 %v1806, %v1744
  %v1808 = vadd.f32 %v1807, %v1745
  %v1809 = vadd.f32 %v1808, %v1746
  %v1810 = vadd.f32 %v1809, %v1747
  %v1811 = vadd.f32 %v1810, %v1748
  %v1812 = vadd.f32 %v1811, %v1749
  %v1813 = vadd.f32 %v1812, %v1750
  %v1814 = vadd.f32 %v1813, %v1751
  %v1815 = vadd.f32 %v1814, %v1752
  %v1816 = vadd.f32 %v1815, %v1753
  %v1817 = vadd.f32 %v1816, %v1754
  %v1818 = vadd.f32 %v1817, %v1755
  %v1819 = vadd.f32 %v1818, %v1756
  %v1820 = vadd.f32 %v1819, %v1757
  %v1821 = vadd.f32 %v1820, %v1758
  %v1822 = vadd.f32 %v1821, %v1759
  %v1823 = vadd.f32 %v1822, %v1760
  %v1824 = vadd.f32 %v1823, %v1761
  %v1825 = vadd.f32 %v1824, %v1762
  %v1826 = vadd.f32 %v1825, %v1763
  %v1827 = vadd.f32 %v1826, %v1764
  %v1828 = vadd.f32 %v1827, %v1765
  %v1829 = vadd.f32 %v1828, %v1766
  %v1830 = vadd.f32 %v1829, %v1767
  %v1831 = vadd.f32 %v1830, %v1768
  %v1832 = vadd.f32 %v1831, %v1769
  %v1833 = vadd.f32 %v1832, %v1770
  %v1834 = vadd.f32 %v1833, %v1771
  %v1835 = vadd.f32 %v1834, %v1772
  %v1836 = vadd.f32 %v1835, %v1773
  %v1837 = vadd.f32 %v1836, %v1774
  %v1838 = vadd.f32 %v1837, %v1775
  %v1839 = vadd.f32 %v1838, %v1776
  %v1840 = vadd.f32 %v1839, %v1777
  %v1841 = vadd.f32 %v1840, %v1778
  %v1842 = vadd.f32 %v1841, %v1779
  %v1843 = vadd.f32 %v1842, %v1780
  %v1844 = vadd.f32 %v1843, %v1781
  %v1845 = vadd.f32 %v1844, %v1782
  %v1846 = vadd.f32 %v1845, %v1783
  %v1847 = vadd.f32 %v1846, %v1784
  %v1848 = vadd.f32 %v1847, %v1785
  %v1849 = vadd.f32 %v1848, %v1786
  %v1850 = vadd.f32 %v1849, %v1787
  %v1851 = vadd.f32 %v1850, %v1788
  %v1852 = vadd.f32 %v1851, %v1789
  %v1853 = vadd.f32 %v1852, %v1790
  %v1854 = vadd.f32 %v1853, %v1791
  %v1855 = vadd.f32 %v1854, %v1792
  %v1856 = vadd.f32 %v1855, %v1793
  %v1857 = vadd.f32 %v1856, %v1794
  %v1858 = vadd.f32 %v1857, %v1795
  %v1859 = vadd.f32 %v1858, %v1796
  %v1860 = vadd.f32 %v1859, %v1797
  %v1861 = vadd.f32 %v1860, %v1798
  %v1862 = vadd.f32 %v1861, %v1799
  %v1863 = vadd.f32 %v1862, %v1800
  %v1864 = vrot.slane %v1863, 4
  %v1865 = vadd.f32 %v1863, %v1864
  %v1866 = vrot.slane %v1865, 2
  %v1867 = vadd.f32 %v1865, %v1866
  %v1868 = vrot.slane %v1867, 1
  %v1869 = vadd.f32 %v1867, %v1868
  %1870 = vst [vmem:[%s7] sm:$0x1] %v1869
  %v1871 = vadd.f32 %v773, %v776
  %v1872 = vadd.f32 %v1871, %v781
  %v1873 = vadd.f32 %v1872, %v784
  %v1874 = vadd.f32 %v1873, %v789
  %v1875 = vadd.f32 %v1874, %v792
  %v1876 = vadd.f32 %v1875, %v797
  %v1877 = vadd.f32 %v1876, %v800
  %v1878 = vadd.f32 %v1877, %v805
  %v1879 = vadd.f32 %v1878, %v808
  %v1880 = vadd.f32 %v1879, %v813
  %v1881 = vadd.f32 %v1880, %v816
  %v1882 = vadd.f32 %v1881, %v821
  %v1883 = vadd.f32 %v1882, %v824
  %v1884 = vadd.f32 %v1883, %v829
  %v1885 = vadd.f32 %v1884, %v832
  %v1886 = vadd.f32 %v1885, %v837
  %v1887 = vadd.f32 %v1886, %v840
  %v1888 = vadd.f32 %v1887, %v845
  %v1889 = vadd.f32 %v1888, %v848
  %v1890 = vadd.f32 %v1889, %v853
  %v1891 = vadd.f32 %v1890, %v856
  %v1892 = vadd.f32 %v1891, %v861
  %v1893 = vadd.f32 %v1892, %v864
  %v1894 = vadd.f32 %v1893, %v869
  %v1895 = vadd.f32 %v1894, %v872
  %v1896 = vadd.f32 %v1895, %v877
  %v1897 = vadd.f32 %v1896, %v880
  %v1898 = vadd.f32 %v1897, %v885
  %v1899 = vadd.f32 %v1898, %v888
  %v1900 = vadd.f32 %v1899, %v893
  %v1901 = vadd.f32 %v1900, %v896
  %v1902 = vadd.f32 %v1901, %v901
  %v1903 = vadd.f32 %v1902, %v904
  %v1904 = vadd.f32 %v1903, %v909
  %v1905 = vadd.f32 %v1904, %v912
  %v1906 = vadd.f32 %v1905, %v917
  %v1907 = vadd.f32 %v1906, %v920
  %v1908 = vadd.f32 %v1907, %v925
  %v1909 = vadd.f32 %v1908, %v928
  %v1910 = vadd.f32 %v1909, %v933
  %v1911 = vadd.f32 %v1910, %v936
  %v1912 = vadd.f32 %v1911, %v941
  %v1913 = vadd.f32 %v1912, %v944
  %v1914 = vadd.f32 %v1913, %v949
  %v1915 = vadd.f32 %v1914, %v952
  %v1916 = vadd.f32 %v1915, %v957
  %v1917 = vadd.f32 %v1916, %v960
  %v1918 = vadd.f32 %v1917, %v965
  %v1919 = vadd.f32 %v1918, %v968
  %v1920 = vadd.f32 %v1919, %v973
  %v1921 = vadd.f32 %v1920, %v976
  %v1922 = vadd.f32 %v1921, %v981
  %v1923 = vadd.f32 %v1922, %v984
  %v1924 = vadd.f32 %v1923, %v989
  %v1925 = vadd.f32 %v1924, %v992
  %v1926 = vadd.f32 %v1925, %v997
  %v1927 = vadd.f32 %v1926, %v1000
  %v1928 = vadd.f32 %v1927, %v1005
  %v1929 = vadd.f32 %v1928, %v1008
  %v1930 = vadd.f32 %v1929, %v1013
  %v1931 = vadd.f32 %v1930, %v1016
  %v1932 = vadd.f32 %v1931, %v1021
  %v1933 = vadd.f32 %v1932, %v1024
  %v1934 = vrot.slane %v1933, 4
  %v1935 = vadd.f32 %v1933, %v1934
  %v1936 = vrot.slane %v1935, 2
  %v1937 = vadd.f32 %v1935, %v1936
  %v1938 = vrot.slane %v1937, 1
  %v1939 = vadd.f32 %v1937, %v1938
  %1940 = vst [vmem:[%s8] sm:$0x1] %v1939
  %v1941 = vmul.f32 %v773, %v773
  %v1942 = vmul.f32 %v776, %v776
  %v1943 = vmul.f32 %v781, %v781
  %v1944 = vmul.f32 %v784, %v784
  %v1945 = vmul.f32 %v789, %v789
  %v1946 = vmul.f32 %v792, %v792
  %v1947 = vmul.f32 %v797, %v797
  %v1948 = vmul.f32 %v800, %v800
  %v1949 = vmul.f32 %v805, %v805
  %v1950 = vmul.f32 %v808, %v808
  %v1951 = vmul.f32 %v813, %v813
  %v1952 = vmul.f32 %v816, %v816
  %v1953 = vmul.f32 %v821, %v821
  %v1954 = vmul.f32 %v824, %v824
  %v1955 = vmul.f32 %v829, %v829
  %v1956 = vmul.f32 %v832, %v832
  %v1957 = vmul.f32 %v837, %v837
  %v1958 = vmul.f32 %v840, %v840
  %v1959 = vmul.f32 %v845, %v845
  %v1960 = vmul.f32 %v848, %v848
  %v1961 = vmul.f32 %v853, %v853
  %v1962 = vmul.f32 %v856, %v856
  %v1963 = vmul.f32 %v861, %v861
  %v1964 = vmul.f32 %v864, %v864
  %v1965 = vmul.f32 %v869, %v869
  %v1966 = vmul.f32 %v872, %v872
  %v1967 = vmul.f32 %v877, %v877
  %v1968 = vmul.f32 %v880, %v880
  %v1969 = vmul.f32 %v885, %v885
  %v1970 = vmul.f32 %v888, %v888
  %v1971 = vmul.f32 %v893, %v893
  %v1972 = vmul.f32 %v896, %v896
  %v1973 = vmul.f32 %v901, %v901
  %v1974 = vmul.f32 %v904, %v904
  %v1975 = vmul.f32 %v909, %v909
  %v1976 = vmul.f32 %v912, %v912
  %v1977 = vmul.f32 %v917, %v917
  %v1978 = vmul.f32 %v920, %v920
  %v1979 = vmul.f32 %v925, %v925
  %v1980 = vmul.f32 %v928, %v928
  %v1981 = vmul.f32 %v933, %v933
  %v1982 = vmul.f32 %v936, %v936
  %v1983 = vmul.f32 %v941, %v941
  %v1984 = vmul.f32 %v944, %v944
  %v1985 = vmul.f32 %v949, %v949
  %v1986 = vmul.f32 %v952, %v952
  %v1987 = vmul.f32 %v957, %v957
  %v1988 = vmul.f32 %v960, %v960
  %v1989 = vmul.f32 %v965, %v965
  %v1990 = vmul.f32 %v968, %v968
  %v1991 = vmul.f32 %v973, %v973
  %v1992 = vmul.f32 %v976, %v976
  %v1993 = vmul.f32 %v981, %v981
  %v1994 = vmul.f32 %v984, %v984
  %v1995 = vmul.f32 %v989, %v989
  %v1996 = vmul.f32 %v992, %v992
  %v1997 = vmul.f32 %v997, %v997
  %v1998 = vmul.f32 %v1000, %v1000
  %v1999 = vmul.f32 %v1005, %v1005
  %v2000 = vmul.f32 %v1008, %v1008
  %v2001 = vmul.f32 %v1013, %v1013
  %v2002 = vmul.f32 %v1016, %v1016
  %v2003 = vmul.f32 %v1021, %v1021
  %v2004 = vmul.f32 %v1024, %v1024
  %v2005 = vadd.f32 %v1941, %v1942
  %v2006 = vadd.f32 %v2005, %v1943
  %v2007 = vadd.f32 %v2006, %v1944
  %v2008 = vadd.f32 %v2007, %v1945
  %v2009 = vadd.f32 %v2008, %v1946
  %v2010 = vadd.f32 %v2009, %v1947
  %v2011 = vadd.f32 %v2010, %v1948
  %v2012 = vadd.f32 %v2011, %v1949
  %v2013 = vadd.f32 %v2012, %v1950
  %v2014 = vadd.f32 %v2013, %v1951
  %v2015 = vadd.f32 %v2014, %v1952
  %v2016 = vadd.f32 %v2015, %v1953
  %v2017 = vadd.f32 %v2016, %v1954
  %v2018 = vadd.f32 %v2017, %v1955
  %v2019 = vadd.f32 %v2018, %v1956
  %v2020 = vadd.f32 %v2019, %v1957
  %v2021 = vadd.f32 %v2020, %v1958
  %v2022 = vadd.f32 %v2021, %v1959
  %v2023 = vadd.f32 %v2022, %v1960
  %v2024 = vadd.f32 %v2023, %v1961
  %v2025 = vadd.f32 %v2024, %v1962
  %v2026 = vadd.f32 %v2025, %v1963
  %v2027 = vadd.f32 %v2026, %v1964
  %v2028 = vadd.f32 %v2027, %v1965
  %v2029 = vadd.f32 %v2028, %v1966
  %v2030 = vadd.f32 %v2029, %v1967
  %v2031 = vadd.f32 %v2030, %v1968
  %v2032 = vadd.f32 %v2031, %v1969
  %v2033 = vadd.f32 %v2032, %v1970
  %v2034 = vadd.f32 %v2033, %v1971
  %v2035 = vadd.f32 %v2034, %v1972
  %v2036 = vadd.f32 %v2035, %v1973
  %v2037 = vadd.f32 %v2036, %v1974
  %v2038 = vadd.f32 %v2037, %v1975
  %v2039 = vadd.f32 %v2038, %v1976
  %v2040 = vadd.f32 %v2039, %v1977
  %v2041 = vadd.f32 %v2040, %v1978
  %v2042 = vadd.f32 %v2041, %v1979
  %v2043 = vadd.f32 %v2042, %v1980
  %v2044 = vadd.f32 %v2043, %v1981
  %v2045 = vadd.f32 %v2044, %v1982
  %v2046 = vadd.f32 %v2045, %v1983
  %v2047 = vadd.f32 %v2046, %v1984
  %v2048 = vadd.f32 %v2047, %v1985
  %v2049 = vadd.f32 %v2048, %v1986
  %v2050 = vadd.f32 %v2049, %v1987
  %v2051 = vadd.f32 %v2050, %v1988
  %v2052 = vadd.f32 %v2051, %v1989
  %v2053 = vadd.f32 %v2052, %v1990
  %v2054 = vadd.f32 %v2053, %v1991
  %v2055 = vadd.f32 %v2054, %v1992
  %v2056 = vadd.f32 %v2055, %v1993
  %v2057 = vadd.f32 %v2056, %v1994
  %v2058 = vadd.f32 %v2057, %v1995
  %v2059 = vadd.f32 %v2058, %v1996
  %v2060 = vadd.f32 %v2059, %v1997
  %v2061 = vadd.f32 %v2060, %v1998
  %v2062 = vadd.f32 %v2061, %v1999
  %v2063 = vadd.f32 %v2062, %v2000
  %v2064 = vadd.f32 %v2063, %v2001
  %v2065 = vadd.f32 %v2064, %v2002
  %v2066 = vadd.f32 %v2065, %v2003
  %v2067 = vadd.f32 %v2066, %v2004
  %v2068 = vrot.slane %v2067, 4
  %v2069 = vadd.f32 %v2067, %v2068
  %v2070 = vrot.slane %v2069, 2
  %v2071 = vadd.f32 %v2069, %v2070
  %v2072 = vrot.slane %v2071, 1
  %v2073 = vadd.f32 %v2071, %v2072
  %2074 = vst [vmem:[%s9] sm:$0x1] %v2073
  // Predicated region
  $region18: #{_lambda_.5} parent=0 // pred_check
    _
  $region19: #{_lambda_.5} parent=0 // pred_check_branch
    %2076 = sbr.rel (0) target = $region21
  $region20: #{_lambda_.5} parent=0 // pred_region
    _
  $region21: #{_lambda_.5} parent=0 // pred_fallthru
    _
  // Predicated region
  $region22: #{_lambda_.5} parent=0 // pred_check
    _
  $region23: #{_lambda_.5} parent=0 // pred_check_branch
    %2078 = sbr.rel (0) target = $region25
  $region24: #{_lambda_.5} parent=0 // pred_region
    _
  $region25: #{_lambda_.5} parent=0 // pred_fallthru
    _
  // Predicated region
  $region26: #{_lambda_.5} parent=0 // pred_check
    _
  $region27: #{_lambda_.5} parent=0 // pred_check_branch
    %2080 = sbr.rel (0) target = $region29
  $region28: #{_lambda_.5} parent=0 // pred_region
    _
  $region29: #{_lambda_.5} parent=0 // pred_fallthru
    _
  // Predicated region
  $region30: #{_lambda_.5} parent=0 // pred_check
    _
  $region31: #{_lambda_.5} parent=0 // pred_check_branch
    %2082 = sbr.rel (0) target = $region33
  $region32: #{_lambda_.5} parent=0 // pred_region
    _
  $region33: #{_lambda_.5} parent=0 // pred_fallthru
    _
  // Predicated region
  $region34: #{_lambda_.5} parent=0 // pred_check
    _
  $region35: #{_lambda_.5} parent=0 // pred_check_branch
    %2084 = sbr.rel (0) target = $region37
  $region36: #{_lambda_.5} parent=0 // pred_region
    _
  $region37: #{_lambda_.5} parent=0 // pred_fallthru
    _
  // Predicated region
  $region38: #{_lambda_.5} parent=0 // pred_check
    _
  $region39: #{_lambda_.5} parent=0 // pred_check_branch
    %2086 = sbr.rel (0) target = $region41
  $region40: #{_lambda_.5} parent=0 // pred_region
    _
  $region41: #{_lambda_.5} parent=0 // pred_fallthru
    _
  // Predicated region
  $region42: #{_lambda_.5} parent=0 // pred_check
    _
  $region43: #{_lambda_.5} parent=0 // pred_check_branch
    %2088 = sbr.rel (0) target = $region45
  $region44: #{_lambda_.5} parent=0 // pred_region
    _
  $region45: #{_lambda_.5} parent=0 // pred_fallthru
    _
  // Predicated region
  $region46: #{_lambda_.5} parent=0 // pred_check
    _
  $region47: #{_lambda_.5} parent=0 // pred_check_branch
    %2090 = sbr.rel (0) target = $region49
  $region48: #{_lambda_.5} parent=0 // pred_region
    _
  $region49: #{_lambda_.5} parent=0 // pred_fallthru
    _
  // Predicated region
  $region50: #{_lambda_.5} parent=0 // pred_check
    _
  $region51: #{_lambda_.5} parent=0 // pred_check_branch
    %2092 = sbr.rel (0) target = $region53
  $region52: #{_lambda_.5} parent=0 // pred_region
    _
  $region53: #{_lambda_.5} parent=0 // pred_fallthru
    _
  // Predicated region
  $region54: #{_lambda_.5} parent=0 // pred_check
    _
  $region55: #{_lambda_.5} parent=0 // pred_check_branch
    %2094 = sbr.rel (0) target = $region57
  $region56: #{_lambda_.5} parent=0 // pred_region
    _
  $region57: #{_lambda_.5} parent=0 // pred_fallthru
    _
  // Predicated region
  $region58: #{_lambda_.5} parent=0 // pred_check
    _
  $region59: #{_lambda_.5} parent=0 // pred_check_branch
    %2096 = sbr.rel (0) target = $region61
  $region60: #{_lambda_.5} parent=0 // pred_region
    _
  $region61: #{_lambda_.5} parent=0 // pred_fallthru
    _
  // Predicated region
  $region62: #{_lambda_.5} parent=0 // pred_check
    _
  $region63: #{_lambda_.5} parent=0 // pred_check_branch
    %2098 = sbr.rel (0) target = $region65
  $region64: #{_lambda_.5} parent=0 // pred_region
    _
  $region65: #{_lambda_.5} parent=0 // pred_fallthru
    _

// kernel: _lambda_.6
$region0: #{_lambda_.6}
  #allocation0 [shape = 'u32[]', space=smem, size = 0x4, offset = 0x4, fixed_abs, tag = 'smem constant byte address 0x4 - core index']
  #allocation1 [shape = 'u32[144,128]{1,0:T(1,128)}', space=vmem, size = 0x12000, scoped, tag = 'internal scratch']
  #allocation2 [shape = 'f32[18,24,128]{2,1,0:T(8,128)}', space=vmem, size = 0x36000, scoped, tag = 'scratch operand']
  %s0 = inlined_call_operand.vmem [shape: bf16[512,128], index: 0, kind: input, shape index: {}]
  %s1 = inlined_call_operand.vmem [shape: f32[2,128], index: 1, kind: input, shape index: {}]
  %s2 = inlined_call_operand.vmem [shape: bf16[3,384,128], index: 2, kind: input, shape index: {}]
  %s3 = inlined_call_operand.vmem [shape: bf16[512,128], index: 3, kind: output, shape index: {0}]
  %s4 = inlined_call_operand.vmem [shape: f32[2,1,128], index: 4, kind: output, shape index: {1}]
  %s5 = inlined_call_operand.vmem [shape: f32[2,1,128], index: 5, kind: output, shape index: {2}]
  %6 = xla_tuple %s3, %s4, %s5
  %s7 = sld [smem:[#allocation0]]
  $region65: #{_lambda_.6} parent=0
    _
  %s9 = ssub.s32 1, %s7
  %s10 = scalar_select 0, %s9, %s7
  loop: start=0, step=1, limit=4
  $region2: #{_lambda_.6} parent=0 // loop_pre_header
    _
  $region3: #{_lambda_.6} parent=0 // loop_header
    %s12 = sphi 0, %s16
    %p13 = scmp.ge.s32.totalorder %s12, 4
    %s22 = sphi 0, %s24
    %s25 = sphi 0, %s22
    %s26 = sphi 0, %s25
    %s42 = sphi 0, %s26
    %s46 = sphi 0, %s46
    %s48 = sphi 0, %s46
    %s49 = sphi 0, %s48
    %s63 = sphi 0, %s49
    %s67 = sphi 0, %s67
    %s69 = sphi 0, %s67
    %s70 = sphi 0, %s69
    %s84 = sphi 0, %s70
    %s90 = sphi 0, %s92
    %s93 = sphi 0, %s90
    %s94 = sphi 0, %s93
    %s110 = sphi 0, %s94
    %s116 = sphi 0, %s118
    %s119 = sphi 0, %s116
    %s120 = sphi 0, %s119
    %s136 = sphi 0, %s120
    %s142 = sphi 0, %s144
    %s145 = sphi 0, %s142
    %s146 = sphi 0, %s145
    %s162 = sphi 0, %s146
  $region4: #{_lambda_.6} parent=0 // loop_header_branch
    %15 = sbr.rel (%p13) target = $region8
  $region5: #{_lambda_.6} parent=0 // loop_body
    %s17 = ssub.s32 %s12, 1
    %s18 = ssub.s32 %s12, 2
    %s19 = sadd.s32 %s12, 1
    %s20 = ssub.s32 %s12, %s19
    %p21 = scmp.eq.s32.totalorder %s20, 0
    %s23 = sadd.s32 %s22, 1
    %s24 = scalar_select %p21, %s22, %s23
    %p27 = pneg %p21
    %p28 = scmp.eq.s32.totalorder %s12, 1
    %p29 = por %p27, %p28
    %p30 = scmp.ne.s32.totalorder %s22, %s25
    %p31 = scmp.eq.s32.totalorder %s12, 0
    %p32 = por %p30, %p31
    %p33 = scmp.ne.s32.totalorder %s22, %s25
    %p34 = scmp.eq.s32.totalorder %s17, 1
    %p35 = por %p33, %p34
    %p36 = scmp.ne.s32.totalorder %s25, %s26
    %p37 = scmp.eq.s32.totalorder %s17, 0
    %p38 = por %p36, %p37
    %p39 = scmp.ne.s32.totalorder %s25, %s26
    %p40 = scmp.eq.s32.totalorder %s18, 1
    %p41 = por %p39, %p40
    %p43 = scmp.ne.s32.totalorder %s26, %s42
    %p44 = scmp.eq.s32.totalorder %s18, 0
    %p45 = por %p43, %p44
    %s47 = sadd.s32 %s46, 1
    %p50 = scmp.eq.s32.totalorder %s12, 1
    %p51 = scmp.ne.s32.totalorder %s46, %s48
    %p52 = scmp.eq.s32.totalorder %s12, 0
    %p53 = por %p51, %p52
    %p54 = scmp.ne.s32.totalorder %s46, %s48
    %p55 = scmp.eq.s32.totalorder %s17, 1
    %p56 = por %p54, %p55
    %p57 = scmp.ne.s32.totalorder %s48, %s49
    %p58 = scmp.eq.s32.totalorder %s17, 0
    %p59 = por %p57, %p58
    %p60 = scmp.ne.s32.totalorder %s48, %s49
    %p61 = scmp.eq.s32.totalorder %s18, 1
    %p62 = por %p60, %p61
    %p64 = scmp.ne.s32.totalorder %s49, %s63
    %p65 = scmp.eq.s32.totalorder %s18, 0
    %p66 = por %p64, %p65
    %s68 = sadd.s32 %s67, 1
    %p71 = scmp.eq.s32.totalorder %s12, 1
    %p72 = scmp.ne.s32.totalorder %s67, %s69
    %p73 = scmp.eq.s32.totalorder %s12, 0
    %p74 = por %p72, %p73
    %p75 = scmp.ne.s32.totalorder %s67, %s69
    %p76 = scmp.eq.s32.totalorder %s17, 1
    %p77 = por %p75, %p76
    %p78 = scmp.ne.s32.totalorder %s69, %s70
    %p79 = scmp.eq.s32.totalorder %s17, 0
    %p80 = por %p78, %p79
    %p81 = scmp.ne.s32.totalorder %s69, %s70
    %p82 = scmp.eq.s32.totalorder %s18, 1
    %p83 = por %p81, %p82
    %p85 = scmp.ne.s32.totalorder %s70, %s84
    %p86 = scmp.eq.s32.totalorder %s18, 0
    %p87 = por %p85, %p86
    %s88 = ssub.s32 %s12, %s19
    %p89 = scmp.eq.s32.totalorder %s88, 0
    %s91 = sadd.s32 %s90, 1
    %s92 = scalar_select %p89, %s90, %s91
    %p95 = pneg %p89
    %p96 = scmp.eq.s32.totalorder %s12, 1
    %p97 = por %p95, %p96
    %p98 = scmp.ne.s32.totalorder %s90, %s93
    %p99 = scmp.eq.s32.totalorder %s12, 0
    %p100 = por %p98, %p99
    %p101 = scmp.ne.s32.totalorder %s90, %s93
    %p102 = scmp.eq.s32.totalorder %s17, 1
    %p103 = por %p101, %p102
    %p104 = scmp.ne.s32.totalorder %s93, %s94
    %p105 = scmp.eq.s32.totalorder %s17, 0
    %p106 = por %p104, %p105
    %p107 = scmp.ne.s32.totalorder %s93, %s94
    %p108 = scmp.eq.s32.totalorder %s18, 1
    %p109 = por %p107, %p108
    %p111 = scmp.ne.s32.totalorder %s94, %s110
    %p112 = scmp.eq.s32.totalorder %s18, 0
    %p113 = por %p111, %p112
    %s114 = ssub.s32 %s12, %s19
    %p115 = scmp.eq.s32.totalorder %s114, 0
    %s117 = sadd.s32 %s116, 1
    %s118 = scalar_select %p115, %s116, %s117
    %p121 = pneg %p115
    %p122 = scmp.eq.s32.totalorder %s12, 1
    %p123 = por %p121, %p122
    %p124 = scmp.ne.s32.totalorder %s116, %s119
    %p125 = scmp.eq.s32.totalorder %s12, 0
    %p126 = por %p124, %p125
    %p127 = scmp.ne.s32.totalorder %s116, %s119
    %p128 = scmp.eq.s32.totalorder %s17, 1
    %p129 = por %p127, %p128
    %p130 = scmp.ne.s32.totalorder %s119, %s120
    %p131 = scmp.eq.s32.totalorder %s17, 0
    %p132 = por %p130, %p131
    %p133 = scmp.ne.s32.totalorder %s119, %s120
    %p134 = scmp.eq.s32.totalorder %s18, 1
    %p135 = por %p133, %p134
    %p137 = scmp.ne.s32.totalorder %s120, %s136
    %p138 = scmp.eq.s32.totalorder %s18, 0
    %p139 = por %p137, %p138
    %s140 = ssub.s32 %s12, %s19
    %p141 = scmp.eq.s32.totalorder %s140, 0
    %s143 = sadd.s32 %s142, 1
    %s144 = scalar_select %p141, %s142, %s143
    %p147 = pneg %p141
    %p148 = scmp.eq.s32.totalorder %s12, 1
    %p149 = por %p147, %p148
    %p150 = scmp.ne.s32.totalorder %s142, %s145
    %p151 = scmp.eq.s32.totalorder %s12, 0
    %p152 = por %p150, %p151
    %p153 = scmp.ne.s32.totalorder %s142, %s145
    %p154 = scmp.eq.s32.totalorder %s17, 1
    %p155 = por %p153, %p154
    %p156 = scmp.ne.s32.totalorder %s145, %s146
    %p157 = scmp.eq.s32.totalorder %s17, 0
    %p158 = por %p156, %p157
    %p159 = scmp.ne.s32.totalorder %s145, %s146
    %p160 = scmp.eq.s32.totalorder %s18, 1
    %p161 = por %p159, %p160
    %p163 = scmp.ne.s32.totalorder %s146, %s162
    %p164 = scmp.eq.s32.totalorder %s18, 0
    %p165 = por %p163, %p164
    %p166 = scmp.le.s32.totalorder 1, %s12
    %p167 = scmp.lt.s32.totalorder %s12, 3
    %p168 = pnand %p166, %p167
    %p169 = pneg %p168
    // Predicated region
    $region9: #{_lambda_.6} parent=5 // pred_check
      _
    $region10: #{_lambda_.6} parent=5 // pred_check_branch
      %171 = sbr.rel (%p168) target = $region12
    $region11: #{_lambda_.6} parent=5 // pred_region
      %s172 = ssub.s32 %s12, 1
      // Predicated region
      $region13: #{_lambda_.6} parent=11 // pred_check
        %p173 = pneg %p59
      $region14: #{_lambda_.6} parent=11 // pred_check_branch
        %175 = sbr.rel (%p173) target = $region16
      $region15: #{_lambda_.6} parent=11 // pred_region
        _
      $region16: #{_lambda_.6} parent=11 // pred_fallthru
        _
      // Predicated region
      $region17: #{_lambda_.6} parent=11 // pred_check
        %p176 = pneg %p80
      $region18: #{_lambda_.6} parent=11 // pred_check_branch
        %178 = sbr.rel (%p176) target = $region20
      $region19: #{_lambda_.6} parent=11 // pred_region
        _
      $region20: #{_lambda_.6} parent=11 // pred_fallthru
        _
    $region12: #{_lambda_.6} parent=5 // pred_fallthru
      _
    %p179 = scmp.lt.s32.totalorder %s12, 2
    // Predicated region
    $region21: #{_lambda_.6} parent=5 // pred_check
      %p180 = pneg %p179
    $region22: #{_lambda_.6} parent=5 // pred_check_branch
      %182 = sbr.rel (%p180) target = $region24
    $region23: #{_lambda_.6} parent=5 // pred_region
      // Predicated region
      $region25: #{_lambda_.6} parent=23 // pred_check
        %p183 = pneg %p32
      $region26: #{_lambda_.6} parent=23 // pred_check_branch
        %185 = sbr.rel (%p183) target = $region28
      $region27: #{_lambda_.6} parent=23 // pred_region
        %s186 = smul.u32 32, %s12
        %p187 = scmp.lt.s32.totalorder %s186, 63
        %s188 = scalar_select %p187, %s186, 63
        %s189 = smul.addr %s188, 4
        %s190 = scalar_lea.vmem %s0, %s189
        %s191 = smul.u32 32, %s12
      $region28: #{_lambda_.6} parent=23 // pred_fallthru
        _
    $region24: #{_lambda_.6} parent=5 // pred_fallthru
      _
    %p192 = scmp.le.s32.totalorder 1, %s12
    %p193 = scmp.lt.s32.totalorder %s12, 3
    %p194 = pnand %p192, %p193
    %p195 = pneg %p194
    // Predicated region
    $region29: #{_lambda_.6} parent=5 // pred_check
      _
    $region30: #{_lambda_.6} parent=5 // pred_check_branch
      %197 = sbr.rel (%p194) target = $region32
    $region31: #{_lambda_.6} parent=5 // pred_region
      %s198 = ssub.s32 %s12, 1
      %s199 = smul.u32 32, %s17
      %p200 = scmp.lt.s32.totalorder %s199, 63
      %s201 = scalar_select %p200, %s199, 63
      %s202 = smul.addr %s201, 4
      %s203 = scalar_lea.vmem %s0, %s202
      %p204 = pneg %p38
      %p205 = pneg %p35
      %p206 = pneg %p59
      %p207 = pneg %p56
      %p208 = pneg %p80
      %p209 = pneg %p77
      %p210 = pneg %p106
      %p211 = pneg %p103
      %s212 = smul.u32 32, %s17
      %p213 = scmp.lt.s32.totalorder %s212, 63
      %s214 = scalar_select %p213, %s212, 63
      %s215 = smul.addr %s214, 4
      %s216 = scalar_lea.vmem %s3, %s215
      %p217 = pneg %p132
      %p218 = pneg %p129
      %p219 = scmp.lt.s32.totalorder %s17, 1
      %s220 = scalar_select %p219, %s17, 1
      %s221 = scalar_lea.vmem %s4, %s220
      %p222 = pneg %p158
      %p223 = pneg %p155
      %p224 = scmp.lt.s32.totalorder %s17, 1
      %s225 = scalar_select %p224, %s17, 1
      %s226 = scalar_lea.vmem %s5, %s225
      %s227 = smul.u32 32, %s17
      %p228 = scmp.lt.s32.totalorder %s227, 63
      %s229 = scalar_select %p228, %s227, 63
      %s230 = smul.addr %s229, 4
      %s231 = scalar_lea.vmem %s0, %s230
      %s232 = smul.u32 32, %s17
      %s233 = smul.u32 32, %s17
      %p234 = scmp.lt.s32.totalorder %s233, 63
      %s235 = scalar_select %p234, %s233, 63
      %s236 = smul.addr %s235, 4
      %s237 = scalar_lea.vmem %s3, %s236
      %s238 = smul.u32 32, %s17
      %p239 = scmp.lt.s32.totalorder %s17, 1
      %s240 = scalar_select %p239, %s17, 1
      %s241 = scalar_lea.vmem %s4, %s240
      %p242 = scmp.lt.s32.totalorder %s17, 1
      %s243 = scalar_select %p242, %s17, 1
      %s244 = scalar_lea.vmem %s5, %s243
      %p246 = scmp.eq.s32.totalorder %s17, 0
      // Predicated region
      $region33: #{_lambda_.6} parent=31 // pred_check
        %p247 = pneg %p246
      $region34: #{_lambda_.6} parent=31 // pred_check_branch
        %249 = sbr.rel (%p247) target = $region36
      $region35: #{_lambda_.6} parent=31 // pred_region
        %250 = vst [vmem:[#allocation2] sm:$0xff] 0.0
        %251 = vst [vmem:[#allocation2 + $0x8] sm:$0xff] 0.0
        %252 = vst [vmem:[#allocation2 + $0x10] sm:$0xff] 0.0
        %253 = vst [vmem:[#allocation2 + $0x18] sm:$0xff] 0.0
        %254 = vst [vmem:[#allocation2 + $0x20] sm:$0xff] 0.0
        %255 = vst [vmem:[#allocation2 + $0x28] sm:$0xff] 0.0
        %256 = vst [vmem:[#allocation2 + $0x30] sm:$0xff] 0.0
        %257 = vst [vmem:[#allocation2 + $0x38] sm:$0xff] 0.0
        %258 = vst [vmem:[#allocation2 + $0x40] sm:$0xff] 0.0
        %259 = vst [vmem:[#allocation2 + $0x48] sm:$0xff] 0.0
        %260 = vst [vmem:[#allocation2 + $0x50] sm:$0xff] 0.0
        %261 = vst [vmem:[#allocation2 + $0x58] sm:$0xff] 0.0
        %262 = vst [vmem:[#allocation2 + $0x60] sm:$0xff] 0.0
        %263 = vst [vmem:[#allocation2 + $0x68] sm:$0xff] 0.0
        %264 = vst [vmem:[#allocation2 + $0x70] sm:$0xff] 0.0
        %265 = vst [vmem:[#allocation2 + $0x78] sm:$0xff] 0.0
        %266 = vst [vmem:[#allocation2 + $0x80] sm:$0xff] 0.0
        %267 = vst [vmem:[#allocation2 + $0x88] sm:$0xff] 0.0
        %268 = vst [vmem:[#allocation2 + $0x90] sm:$0xff] 0.0
        %269 = vst [vmem:[#allocation2 + $0x98] sm:$0xff] 0.0
        %270 = vst [vmem:[#allocation2 + $0xa0] sm:$0xff] 0.0
        %271 = vst [vmem:[#allocation2 + $0xa8] sm:$0xff] 0.0
        %272 = vst [vmem:[#allocation2 + $0xb0] sm:$0xff] 0.0
        %273 = vst [vmem:[#allocation2 + $0xb8] sm:$0xff] 0.0
        %274 = vst [vmem:[#allocation2 + $0xc0] sm:$0xff] 0.0
        %275 = vst [vmem:[#allocation2 + $0xc8] sm:$0xff] 0.0
        %276 = vst [vmem:[#allocation2 + $0xd0] sm:$0xff] 0.0
        %277 = vst [vmem:[#allocation2 + $0xd8] sm:$0xff] 0.0
        %278 = vst [vmem:[#allocation2 + $0xe0] sm:$0xff] 0.0
        %279 = vst [vmem:[#allocation2 + $0xe8] sm:$0xff] 0.0
        %280 = vst [vmem:[#allocation2 + $0xf0] sm:$0xff] 0.0
        %281 = vst [vmem:[#allocation2 + $0xf8] sm:$0xff] 0.0
        %282 = vst [vmem:[#allocation2 + $0x100] sm:$0xff] 0.0
        %283 = vst [vmem:[#allocation2 + $0x108] sm:$0xff] 0.0
        %284 = vst [vmem:[#allocation2 + $0x110] sm:$0xff] 0.0
        %285 = vst [vmem:[#allocation2 + $0x118] sm:$0xff] 0.0
        %286 = vst [vmem:[#allocation2 + $0x120] sm:$0xff] 0.0
        %287 = vst [vmem:[#allocation2 + $0x128] sm:$0xff] 0.0
        %288 = vst [vmem:[#allocation2 + $0x130] sm:$0xff] 0.0
        %289 = vst [vmem:[#allocation2 + $0x138] sm:$0xff] 0.0
        %290 = vst [vmem:[#allocation2 + $0x140] sm:$0xff] 0.0
        %291 = vst [vmem:[#allocation2 + $0x148] sm:$0xff] 0.0
        %292 = vst [vmem:[#allocation2 + $0x150] sm:$0xff] 0.0
        %293 = vst [vmem:[#allocation2 + $0x158] sm:$0xff] 0.0
        %294 = vst [vmem:[#allocation2 + $0x160] sm:$0xff] 0.0
        %295 = vst [vmem:[#allocation2 + $0x168] sm:$0xff] 0.0
        %296 = vst [vmem:[#allocation2 + $0x170] sm:$0xff] 0.0
        %297 = vst [vmem:[#allocation2 + $0x178] sm:$0xff] 0.0
        %298 = vst [vmem:[#allocation2 + $0x180] sm:$0xff] 0.0
        %299 = vst [vmem:[#allocation2 + $0x188] sm:$0xff] 0.0
        %300 = vst [vmem:[#allocation2 + $0x190] sm:$0xff] 0.0
        %301 = vst [vmem:[#allocation2 + $0x198] sm:$0xff] 0.0
        %302 = vst [vmem:[#allocation2 + $0x1a0] sm:$0xff] 0.0
        %303 = vst [vmem:[#allocation2 + $0x1a8] sm:$0xff] 0.0
      $region36: #{_lambda_.6} parent=31 // pred_fallthru
        _
      %v304 = vld [vmem:[%s1] sm:$0x3]
      %v305 = vld [vmem:[%s231] sm:$0xf]
      %v306 = vld [vmem:[%s231 + $0x4] sm:$0xf]
      %v307 = vld [vmem:[%s231 + $0x8] sm:$0xf]
      %v308 = vld [vmem:[%s231 + $0xc] sm:$0xf]
      %v309 = vld [vmem:[%s231 + $0x10] sm:$0xf]
      %v310 = vld [vmem:[%s231 + $0x14] sm:$0xf]
      %v311 = vld [vmem:[%s231 + $0x18] sm:$0xf]
      %v312 = vld [vmem:[%s231 + $0x1c] sm:$0xf]
      %v313 = vld [vmem:[%s231 + $0x20] sm:$0xf]
      %v314 = vld [vmem:[%s231 + $0x24] sm:$0xf]
      %v315 = vld [vmem:[%s231 + $0x28] sm:$0xf]
      %v316 = vld [vmem:[%s231 + $0x2c] sm:$0xf]
      %v317 = vld [vmem:[%s231 + $0x30] sm:$0xf]
      %v318 = vld [vmem:[%s231 + $0x34] sm:$0xf]
      %v319 = vld [vmem:[%s231 + $0x38] sm:$0xf]
      %v320 = vld [vmem:[%s231 + $0x3c] sm:$0xf]
      %v321 = vld [vmem:[%s231 + $0x40] sm:$0xf]
      %v322 = vld [vmem:[%s231 + $0x44] sm:$0xf]
      %v323 = vld [vmem:[%s231 + $0x48] sm:$0xf]
      %v324 = vld [vmem:[%s231 + $0x4c] sm:$0xf]
      %v325 = vld [vmem:[%s231 + $0x50] sm:$0xf]
      %v326 = vld [vmem:[%s231 + $0x54] sm:$0xf]
      %v327 = vld [vmem:[%s231 + $0x58] sm:$0xf]
      %v328 = vld [vmem:[%s231 + $0x5c] sm:$0xf]
      %v329 = vld [vmem:[%s231 + $0x60] sm:$0xf]
      %v330 = vld [vmem:[%s231 + $0x64] sm:$0xf]
      %v331 = vld [vmem:[%s231 + $0x68] sm:$0xf]
      %v332 = vld [vmem:[%s231 + $0x6c] sm:$0xf]
      %v333 = vld [vmem:[%s231 + $0x70] sm:$0xf]
      %v334 = vld [vmem:[%s231 + $0x74] sm:$0xf]
      %v335 = vld [vmem:[%s231 + $0x78] sm:$0xf]
      %v336 = vld [vmem:[%s231 + $0x7c] sm:$0xf]
      %v337 = vunpack.c.l.bf16 %v305
      %v338 = vunpack.c.l.bf16 %v306
      %v339 = vunpack.c.l.bf16 %v307
      %v340 = vunpack.c.l.bf16 %v308
      %v341 = vunpack.c.l.bf16 %v309
      %v342 = vunpack.c.l.bf16 %v310
      %v343 = vunpack.c.l.bf16 %v311
      %v344 = vunpack.c.l.bf16 %v312
      %v345 = vunpack.c.l.bf16 %v313
      %v346 = vunpack.c.l.bf16 %v314
      %v347 = vunpack.c.l.bf16 %v315
      %v348 = vunpack.c.l.bf16 %v316
      %v349 = vunpack.c.l.bf16 %v317
      %v350 = vunpack.c.l.bf16 %v318
      %v351 = vunpack.c.l.bf16 %v319
      %v352 = vunpack.c.l.bf16 %v320
      %v353 = vunpack.c.l.bf16 %v321
      %v354 = vunpack.c.l.bf16 %v322
      %v355 = vunpack.c.l.bf16 %v323
      %v356 = vunpack.c.l.bf16 %v324
      %v357 = vunpack.c.l.bf16 %v325
      %v358 = vunpack.c.l.bf16 %v326
      %v359 = vunpack.c.l.bf16 %v327
      %v360 = vunpack.c.l.bf16 %v328
      %v361 = vunpack.c.l.bf16 %v329
      %v362 = vunpack.c.l.bf16 %v330
      %v363 = vunpack.c.l.bf16 %v331
      %v364 = vunpack.c.l.bf16 %v332
      %v365 = vunpack.c.l.bf16 %v333
      %v366 = vunpack.c.l.bf16 %v334
      %v367 = vunpack.c.l.bf16 %v335
      %v368 = vunpack.c.l.bf16 %v336
      %v369 = vlaneseq
      %v370 = vshrl.u32 %v369, 7
      %v371 = vsub.s32 0, %v370
      %v372 = vrot.slane %v304, %v371
      %v373 = vmul.f32 %v337, %v372
      %v374 = vmul.f32 %v338, %v372
      %v375 = vmul.f32 %v339, %v372
      %v376 = vmul.f32 %v340, %v372
      %v377 = vmul.f32 %v341, %v372
      %v378 = vmul.f32 %v342, %v372
      %v379 = vmul.f32 %v343, %v372
      %v380 = vmul.f32 %v344, %v372
      %v381 = vmul.f32 %v345, %v372
      %v382 = vmul.f32 %v346, %v372
      %v383 = vmul.f32 %v347, %v372
      %v384 = vmul.f32 %v348, %v372
      %v385 = vmul.f32 %v349, %v372
      %v386 = vmul.f32 %v350, %v372
      %v387 = vmul.f32 %v351, %v372
      %v388 = vmul.f32 %v352, %v372
      %v389 = vmul.f32 %v353, %v372
      %v390 = vmul.f32 %v354, %v372
      %v391 = vmul.f32 %v355, %v372
      %v392 = vmul.f32 %v356, %v372
      %v393 = vmul.f32 %v357, %v372
      %v394 = vmul.f32 %v358, %v372
      %v395 = vmul.f32 %v359, %v372
      %v396 = vmul.f32 %v360, %v372
      %v397 = vmul.f32 %v361, %v372
      %v398 = vmul.f32 %v362, %v372
      %v399 = vmul.f32 %v363, %v372
      %v400 = vmul.f32 %v364, %v372
      %v401 = vmul.f32 %v365, %v372
      %v402 = vmul.f32 %v366, %v372
      %v403 = vmul.f32 %v367, %v372
      %v404 = vmul.f32 %v368, %v372
      %v405 = vlaneseq
      %v406 = vshrl.u32 %v405, 7
      %v407 = vsub.s32 1, %v406
      %v408 = vrot.slane %v304, %v407
      %v409 = vadd.f32 %v373, %v408
      %v410 = vadd.f32 %v374, %v408
      %v411 = vadd.f32 %v375, %v408
      %v412 = vadd.f32 %v376, %v408
      %v413 = vadd.f32 %v377, %v408
      %v414 = vadd.f32 %v378, %v408
      %v415 = vadd.f32 %v379, %v408
      %v416 = vadd.f32 %v380, %v408
      %v417 = vadd.f32 %v381, %v408
      %v418 = vadd.f32 %v382, %v408
      %v419 = vadd.f32 %v383, %v408
      %v420 = vadd.f32 %v384, %v408
      %v421 = vadd.f32 %v385, %v408
      %v422 = vadd.f32 %v386, %v408
      %v423 = vadd.f32 %v387, %v408
      %v424 = vadd.f32 %v388, %v408
      %v425 = vadd.f32 %v389, %v408
      %v426 = vadd.f32 %v390, %v408
      %v427 = vadd.f32 %v391, %v408
      %v428 = vadd.f32 %v392, %v408
      %v429 = vadd.f32 %v393, %v408
      %v430 = vadd.f32 %v394, %v408
      %v431 = vadd.f32 %v395, %v408
      %v432 = vadd.f32 %v396, %v408
      %v433 = vadd.f32 %v397, %v408
      %v434 = vadd.f32 %v398, %v408
      %v435 = vadd.f32 %v399, %v408
      %v436 = vadd.f32 %v400, %v408
      %v437 = vadd.f32 %v401, %v408
      %v438 = vadd.f32 %v402, %v408
      %v439 = vadd.f32 %v403, %v408
      %v440 = vadd.f32 %v404, %v408
      %v441 = vmax.f32 %v409, 0.0
      %v442 = vmax.f32 %v410, 0.0
      %v443 = vmax.f32 %v411, 0.0
      %v444 = vmax.f32 %v412, 0.0
      %v445 = vmax.f32 %v413, 0.0
      %v446 = vmax.f32 %v414, 0.0
      %v447 = vmax.f32 %v415, 0.0
      %v448 = vmax.f32 %v416, 0.0
      %v449 = vmax.f32 %v417, 0.0
      %v450 = vmax.f32 %v418, 0.0
      %v451 = vmax.f32 %v419, 0.0
      %v452 = vmax.f32 %v420, 0.0
      %v453 = vmax.f32 %v421, 0.0
      %v454 = vmax.f32 %v422, 0.0
      %v455 = vmax.f32 %v423, 0.0
      %v456 = vmax.f32 %v424, 0.0
      %v457 = vmax.f32 %v425, 0.0
      %v458 = vmax.f32 %v426, 0.0
      %v459 = vmax.f32 %v427, 0.0
      %v460 = vmax.f32 %v428, 0.0
      %v461 = vmax.f32 %v429, 0.0
      %v462 = vmax.f32 %v430, 0.0
      %v463 = vmax.f32 %v431, 0.0
      %v464 = vmax.f32 %v432, 0.0
      %v465 = vmax.f32 %v433, 0.0
      %v466 = vmax.f32 %v434, 0.0
      %v467 = vmax.f32 %v435, 0.0
      %v468 = vmax.f32 %v436, 0.0
      %v469 = vmax.f32 %v437, 0.0
      %v470 = vmax.f32 %v438, 0.0
      %v471 = vmax.f32 %v439, 0.0
      %v472 = vmax.f32 %v440, 0.0
      %s473 = scalar_lea.vmem [#allocation2], 24
      %474 = vst [vmem:[%s473 + $0x1] sm:$0xff] %v441
      %475 = vst [vmem:[%s473 + $0x9] sm:$0xff] %v442
      %476 = vst [vmem:[%s473 + $0x19] sm:$0xff] %v443
      %477 = vst [vmem:[%s473 + $0x21] sm:$0xff] %v444
      %478 = vst [vmem:[%s473 + $0x31] sm:$0xff] %v445
      %479 = vst [vmem:[%s473 + $0x39] sm:$0xff] %v446
      %480 = vst [vmem:[%s473 + $0x49] sm:$0xff] %v447
      %481 = vst [vmem:[%s473 + $0x51] sm:$0xff] %v448
      %482 = vst [vmem:[%s473 + $0x61] sm:$0xff] %v449
      %483 = vst [vmem:[%s473 + $0x69] sm:$0xff] %v450
      %484 = vst [vmem:[%s473 + $0x79] sm:$0xff] %v451
      %485 = vst [vmem:[%s473 + $0x81] sm:$0xff] %v452
      %486 = vst [vmem:[%s473 + $0x91] sm:$0xff] %v453
      %487 = vst [vmem:[%s473 + $0x99] sm:$0xff] %v454
      %488 = vst [vmem:[%s473 + $0xa9] sm:$0xff] %v455
      %489 = vst [vmem:[%s473 + $0xb1] sm:$0xff] %v456
      %490 = vst [vmem:[%s473 + $0xc1] sm:$0xff] %v457
      %491 = vst [vmem:[%s473 + $0xc9] sm:$0xff] %v458
      %492 = vst [vmem:[%s473 + $0xd9] sm:$0xff] %v459
      %493 = vst [vmem:[%s473 + $0xe1] sm:$0xff] %v460
      %494 = vst [vmem:[%s473 + $0xf1] sm:$0xff] %v461
      %495 = vst [vmem:[%s473 + $0xf9] sm:$0xff] %v462
      %496 = vst [vmem:[%s473 + $0x109] sm:$0xff] %v463
      %497 = vst [vmem:[%s473 + $0x111] sm:$0xff] %v464
      %498 = vst [vmem:[%s473 + $0x121] sm:$0xff] %v465
      %499 = vst [vmem:[%s473 + $0x129] sm:$0xff] %v466
      %500 = vst [vmem:[%s473 + $0x139] sm:$0xff] %v467
      %501 = vst [vmem:[%s473 + $0x141] sm:$0xff] %v468
      %502 = vst [vmem:[%s473 + $0x151] sm:$0xff] %v469
      %503 = vst [vmem:[%s473 + $0x159] sm:$0xff] %v470
      %504 = vst [vmem:[%s473 + $0x169] sm:$0xff] %v471
      %505 = vst [vmem:[%s473 + $0x171] sm:$0xff] %v472
      %v506 = vld [vmem:[#allocation2] sm:$0xff]
      %v507 = vld [vmem:[#allocation2 + $0x8] sm:$0xff]
      %v508 = vld [vmem:[#allocation2 + $0x10] sm:$0xff]
      %v509 = vld [vmem:[#allocation2 + $0x18] sm:$0xff]
      %v510 = vld [vmem:[#allocation2 + $0x20] sm:$0xff]
      %v511 = vld [vmem:[#allocation2 + $0x28] sm:$0xff]
      %v512 = vld [vmem:[#allocation2 + $0x30] sm:$0xff]
      %v513 = vld [vmem:[#allocation2 + $0x38] sm:$0xff]
      %v514 = vld [vmem:[#allocation2 + $0x40] sm:$0xff]
      %v515 = vld [vmem:[#allocation2 + $0x48] sm:$0xff]
      %v516 = vld [vmem:[#allocation2 + $0x50] sm:$0xff]
      %v517 = vld [vmem:[#allocation2 + $0x58] sm:$0xff]
      %v518 = vld [vmem:[#allocation2 + $0x60] sm:$0xff]
      %v519 = vld [vmem:[#allocation2 + $0x68] sm:$0xff]
      %v520 = vld [vmem:[#allocation2 + $0x70] sm:$0xff]
      %v521 = vld [vmem:[#allocation2 + $0x78] sm:$0xff]
      %v522 = vld [vmem:[#allocation2 + $0x80] sm:$0xff]
      %v523 = vld [vmem:[#allocation2 + $0x88] sm:$0xff]
      %v524 = vld [vmem:[#allocation2 + $0x90] sm:$0xff]
      %v525 = vld [vmem:[#allocation2 + $0x98] sm:$0xff]
      %v526 = vld [vmem:[#allocation2 + $0xa0] sm:$0xff]
      %v527 = vld [vmem:[#allocation2 + $0xa8] sm:$0xff]
      %v528 = vld [vmem:[#allocation2 + $0xb0] sm:$0xff]
      %v529 = vld [vmem:[#allocation2 + $0xb8] sm:$0xff]
      %v530 = vld [vmem:[#allocation2 + $0xc0] sm:$0xff]
      %v531 = vld [vmem:[#allocation2 + $0xc8] sm:$0xff]
      %v532 = vld [vmem:[#allocation2 + $0xd0] sm:$0xff]
      %v533 = vld [vmem:[#allocation2 + $0xd8] sm:$0xff]
      %v534 = vld [vmem:[#allocation2 + $0xe0] sm:$0xff]
      %v535 = vld [vmem:[#allocation2 + $0xe8] sm:$0xff]
      %v536 = vld [vmem:[#allocation2 + $0xf0] sm:$0xff]
      %v537 = vld [vmem:[#allocation2 + $0xf8] sm:$0xff]
      %v538 = vld [vmem:[#allocation2 + $0x100] sm:$0xff]
      %v539 = vld [vmem:[#allocation2 + $0x108] sm:$0xff]
      %v540 = vld [vmem:[#allocation2 + $0x110] sm:$0xff]
      %v541 = vld [vmem:[#allocation2 + $0x118] sm:$0xff]
      %v542 = vld [vmem:[#allocation2 + $0x120] sm:$0xff]
      %v543 = vld [vmem:[#allocation2 + $0x128] sm:$0xff]
      %v544 = vld [vmem:[#allocation2 + $0x130] sm:$0xff]
      %v545 = vld [vmem:[#allocation2 + $0x138] sm:$0xff]
      %v546 = vld [vmem:[#allocation2 + $0x140] sm:$0xff]
      %v547 = vld [vmem:[#allocation2 + $0x148] sm:$0xff]
      %v548 = vld [vmem:[#allocation2 + $0x150] sm:$0xff]
      %v549 = vld [vmem:[#allocation2 + $0x158] sm:$0xff]
      %v550 = vld [vmem:[#allocation2 + $0x160] sm:$0xff]
      %v551 = vld [vmem:[#allocation2 + $0x168] sm:$0xff]
      %v552 = vld [vmem:[#allocation2 + $0x170] sm:$0xff]
      %v553 = vld [vmem:[#allocation2 + $0x178] sm:$0xff]
      %vm602 = vcmask 1046528
      %v603 = vrot.slane %v506, 1
      %v604 = vrot.slane %v507, 1
      %v605 = vsel %vm602, %v603, %v604
      %v606 = vrot.slane %v508, 1
      %v607 = vsel %vm602, %v604, %v606
      %v608 = vrot.slane %v509, 1
      %v609 = vrot.slane %v510, 1
      %v610 = vsel %vm602, %v608, %v609
      %v611 = vrot.slane %v511, 1
      %v612 = vsel %vm602, %v609, %v611
      %v613 = vrot.slane %v512, 1
      %v614 = vrot.slane %v513, 1
      %v615 = vsel %vm602, %v613, %v614
      %v616 = vrot.slane %v514, 1
      %v617 = vsel %vm602, %v614, %v616
      %v618 = vrot.slane %v515, 1
      %v619 = vrot.slane %v516, 1
      %v620 = vsel %vm602, %v618, %v619
      %v621 = vrot.slane %v517, 1
      %v622 = vsel %vm602, %v619, %v621
      %v623 = vrot.slane %v518, 1
      %v624 = vrot.slane %v519, 1
      %v625 = vsel %vm602, %v623, %v624
      %v626 = vrot.slane %v520, 1
      %v627 = vsel %vm602, %v624, %v626
      %v628 = vrot.slane %v521, 1
      %v629 = vrot.slane %v522, 1
      %v630 = vsel %vm602, %v628, %v629
      %v631 = vrot.slane %v523, 1
      %v632 = vsel %vm602, %v629, %v631
      %v633 = vrot.slane %v524, 1
      %v634 = vrot.slane %v525, 1
      %v635 = vsel %vm602, %v633, %v634
      %v636 = vrot.slane %v526, 1
      %v637 = vsel %vm602, %v634, %v636
      %v638 = vrot.slane %v527, 1
      %v639 = vrot.slane %v528, 1
      %v640 = vsel %vm602, %v638, %v639
      %v641 = vrot.slane %v529, 1
      %v642 = vsel %vm602, %v639, %v641
      %v643 = vrot.slane %v530, 1
      %v644 = vrot.slane %v531, 1
      %v645 = vsel %vm602, %v643, %v644
      %v646 = vrot.slane %v532, 1
      %v647 = vsel %vm602, %v644, %v646
      %v648 = vrot.slane %v533, 1
      %v649 = vrot.slane %v534, 1
      %v650 = vsel %vm602, %v648, %v649
      %v651 = vrot.slane %v535, 1
      %v652 = vsel %vm602, %v649, %v651
      %v653 = vrot.slane %v536, 1
      %v654 = vrot.slane %v537, 1
      %v655 = vsel %vm602, %v653, %v654
      %v656 = vrot.slane %v538, 1
      %v657 = vsel %vm602, %v654, %v656
      %v658 = vrot.slane %v539, 1
      %v659 = vrot.slane %v540, 1
      %v660 = vsel %vm602, %v658, %v659
      %v661 = vrot.slane %v541, 1
      %v662 = vsel %vm602, %v659, %v661
      %v663 = vrot.slane %v542, 1
      %v664 = vrot.slane %v543, 1
      %v665 = vsel %vm602, %v663, %v664
      %v666 = vrot.slane %v544, 1
      %v667 = vsel %vm602, %v664, %v666
      %v668 = vrot.slane %v545, 1
      %v669 = vrot.slane %v546, 1
      %v670 = vsel %vm602, %v668, %v669
      %v671 = vrot.slane %v547, 1
      %v672 = vsel %vm602, %v669, %v671
      %v673 = vrot.slane %v548, 1
      %v674 = vrot.slane %v549, 1
      %v675 = vsel %vm602, %v673, %v674
      %v676 = vrot.slane %v550, 1
      %v677 = vsel %vm602, %v674, %v676
      %v678 = vrot.slane %v551, 1
      %v679 = vrot.slane %v552, 1
      %v680 = vsel %vm602, %v678, %v679
      %v681 = vrot.slane %v553, 1
      %v682 = vsel %vm602, %v679, %v681
      %vm715 = vcmask 1045504
      %v716 = vrot.slane %v506, 2
      %v717 = vrot.slane %v507, 2
      %v718 = vsel %vm715, %v716, %v717
      %v719 = vrot.slane %v508, 2
      %v720 = vsel %vm715, %v717, %v719
      %v721 = vrot.slane %v509, 2
      %v722 = vrot.slane %v510, 2
      %v723 = vsel %vm715, %v721, %v722
      %v724 = vrot.slane %v511, 2
      %v725 = vsel %vm715, %v722, %v724
      %v726 = vrot.slane %v512, 2
      %v727 = vrot.slane %v513, 2
      %v728 = vsel %vm715, %v726, %v727
      %v729 = vrot.slane %v514, 2
      %v730 = vsel %vm715, %v727, %v729
      %v731 = vrot.slane %v515, 2
      %v732 = vrot.slane %v516, 2
      %v733 = vsel %vm715, %v731, %v732
      %v734 = vrot.slane %v517, 2
      %v735 = vsel %vm715, %v732, %v734
      %v736 = vrot.slane %v518, 2
      %v737 = vrot.slane %v519, 2
      %v738 = vsel %vm715, %v736, %v737
      %v739 = vrot.slane %v520, 2
      %v740 = vsel %vm715, %v737, %v739
      %v741 = vrot.slane %v521, 2
      %v742 = vrot.slane %v522, 2
      %v743 = vsel %vm715, %v741, %v742
      %v744 = vrot.slane %v523, 2
      %v745 = vsel %vm715, %v742, %v744
      %v746 = vrot.slane %v524, 2
      %v747 = vrot.slane %v525, 2
      %v748 = vsel %vm715, %v746, %v747
      %v749 = vrot.slane %v526, 2
      %v750 = vsel %vm715, %v747, %v749
      %v751 = vrot.slane %v527, 2
      %v752 = vrot.slane %v528, 2
      %v753 = vsel %vm715, %v751, %v752
      %v754 = vrot.slane %v529, 2
      %v755 = vsel %vm715, %v752, %v754
      %v756 = vrot.slane %v530, 2
      %v757 = vrot.slane %v531, 2
      %v758 = vsel %vm715, %v756, %v757
      %v759 = vrot.slane %v532, 2
      %v760 = vsel %vm715, %v757, %v759
      %v761 = vrot.slane %v533, 2
      %v762 = vrot.slane %v534, 2
      %v763 = vsel %vm715, %v761, %v762
      %v764 = vrot.slane %v535, 2
      %v765 = vsel %vm715, %v762, %v764
      %v766 = vrot.slane %v536, 2
      %v767 = vrot.slane %v537, 2
      %v768 = vsel %vm715, %v766, %v767
      %v769 = vrot.slane %v538, 2
      %v770 = vsel %vm715, %v767, %v769
      %v771 = vrot.slane %v539, 2
      %v772 = vrot.slane %v540, 2
      %v773 = vsel %vm715, %v771, %v772
      %v774 = vrot.slane %v541, 2
      %v775 = vsel %vm715, %v772, %v774
      %v776 = vrot.slane %v542, 2
      %v777 = vrot.slane %v543, 2
      %v778 = vsel %vm715, %v776, %v777
      %v779 = vrot.slane %v544, 2
      %v780 = vsel %vm715, %v777, %v779
      %v781 = vrot.slane %v545, 2
      %v782 = vrot.slane %v546, 2
      %v783 = vsel %vm715, %v781, %v782
      %v784 = vrot.slane %v547, 2
      %v785 = vsel %vm715, %v782, %v784
      %v786 = vrot.slane %v548, 2
      %v787 = vrot.slane %v549, 2
      %v788 = vsel %vm715, %v786, %v787
      %v789 = vrot.slane %v550, 2
      %v790 = vsel %vm715, %v787, %v789
      %v791 = vrot.slane %v551, 2
      %v792 = vrot.slane %v552, 2
      %v793 = vsel %vm715, %v791, %v792
      %v794 = vrot.slane %v553, 2
      %v795 = vsel %vm715, %v792, %v794
      %v828 = vpack.c.bf16 %v507, %v506
      %v829 = vpack.c.bf16 %v607, %v605
      %v830 = vpack.c.bf16 %v720, %v718
      %v831 = vpack.c.bf16 %v510, %v509
      %v832 = vpack.c.bf16 %v612, %v610
      %v833 = vpack.c.bf16 %v725, %v723
      %v834 = vpack.c.bf16 %v513, %v512
      %v835 = vpack.c.bf16 %v617, %v615
      %v836 = vpack.c.bf16 %v730, %v728
      %v837 = vpack.c.bf16 %v516, %v515
      %v838 = vpack.c.bf16 %v622, %v620
      %v839 = vpack.c.bf16 %v735, %v733
      %v840 = vpack.c.bf16 %v519, %v518
      %v841 = vpack.c.bf16 %v627, %v625
      %v842 = vpack.c.bf16 %v740, %v738
      %v843 = vpack.c.bf16 %v522, %v521
      %v844 = vpack.c.bf16 %v632, %v630
      %v845 = vpack.c.bf16 %v745, %v743
      %v846 = vpack.c.bf16 %v525, %v524
      %v847 = vpack.c.bf16 %v637, %v635
      %v848 = vpack.c.bf16 %v750, %v748
      %v849 = vpack.c.bf16 %v528, %v527
      %v850 = vpack.c.bf16 %v642, %v640
      %v851 = vpack.c.bf16 %v755, %v753
      %v852 = vpack.c.bf16 %v531, %v530
      %v853 = vpack.c.bf16 %v647, %v645
      %v854 = vpack.c.bf16 %v760, %v758
      %v855 = vpack.c.bf16 %v534, %v533
      %v856 = vpack.c.bf16 %v652, %v650
      %v857 = vpack.c.bf16 %v765, %v763
      %v858 = vpack.c.bf16 %v537, %v536
      %v859 = vpack.c.bf16 %v657, %v655
      %v860 = vpack.c.bf16 %v770, %v768
      %v861 = vpack.c.bf16 %v540, %v539
      %v862 = vpack.c.bf16 %v662, %v660
      %v863 = vpack.c.bf16 %v775, %v773
      %v864 = vpack.c.bf16 %v543, %v542
      %v865 = vpack.c.bf16 %v667, %v665
      %v866 = vpack.c.bf16 %v780, %v778
      %v867 = vpack.c.bf16 %v546, %v545
      %v868 = vpack.c.bf16 %v672, %v670
      %v869 = vpack.c.bf16 %v785, %v783
      %v870 = vpack.c.bf16 %v549, %v548
      %v871 = vpack.c.bf16 %v677, %v675
      %v872 = vpack.c.bf16 %v790, %v788
      %v873 = vpack.c.bf16 %v552, %v551
      %v874 = vpack.c.bf16 %v682, %v680
      %v875 = vpack.c.bf16 %v795, %v793
      %v876 = vld [vmem:[%s2] sm:$0xf]
      %v877 = vld [vmem:[%s2 + $0x4] sm:$0xf]
      %v878 = vld [vmem:[%s2 + $0x8] sm:$0xf]
      %v879 = vld [vmem:[%s2 + $0xc] sm:$0xf]
      %v880 = vld [vmem:[%s2 + $0x10] sm:$0xf]
      %v881 = vld [vmem:[%s2 + $0x14] sm:$0xf]
      %v882 = vld [vmem:[%s2 + $0x18] sm:$0xf]
      %v883 = vld [vmem:[%s2 + $0x1c] sm:$0xf]
      %v884 = vld [vmem:[%s2 + $0x20] sm:$0xf]
      %v885 = vld [vmem:[%s2 + $0x24] sm:$0xf]
      %v886 = vld [vmem:[%s2 + $0x28] sm:$0xf]
      %v887 = vld [vmem:[%s2 + $0x2c] sm:$0xf]
      %v888 = vld [vmem:[%s2 + $0x30] sm:$0xf]
      %v889 = vld [vmem:[%s2 + $0x34] sm:$0xf]
      %v890 = vld [vmem:[%s2 + $0x38] sm:$0xf]
      %v891 = vld [vmem:[%s2 + $0x3c] sm:$0xf]
      %v892 = vld [vmem:[%s2 + $0x40] sm:$0xf]
      %v893 = vld [vmem:[%s2 + $0x44] sm:$0xf]
      %v894 = vld [vmem:[%s2 + $0x48] sm:$0xf]
      %v895 = vld [vmem:[%s2 + $0x4c] sm:$0xf]
      %v896 = vld [vmem:[%s2 + $0x50] sm:$0xf]
      %v897 = vld [vmem:[%s2 + $0x54] sm:$0xf]
      %v898 = vld [vmem:[%s2 + $0x58] sm:$0xf]
      %v899 = vld [vmem:[%s2 + $0x5c] sm:$0xf]
      %v900 = vld [vmem:[%s2 + $0x60] sm:$0xf]
      %v901 = vld [vmem:[%s2 + $0x64] sm:$0xf]
      %v902 = vld [vmem:[%s2 + $0x68] sm:$0xf]
      %v903 = vld [vmem:[%s2 + $0x6c] sm:$0xf]
      %v904 = vld [vmem:[%s2 + $0x70] sm:$0xf]
      %v905 = vld [vmem:[%s2 + $0x74] sm:$0xf]
      %v906 = vld [vmem:[%s2 + $0x78] sm:$0xf]
      %v907 = vld [vmem:[%s2 + $0x7c] sm:$0xf]
      %v908 = vld [vmem:[%s2 + $0x80] sm:$0xf]
      %v909 = vld [vmem:[%s2 + $0x84] sm:$0xf]
      %v910 = vld [vmem:[%s2 + $0x88] sm:$0xf]
      %v911 = vld [vmem:[%s2 + $0x8c] sm:$0xf]
      %v912 = vld [vmem:[%s2 + $0x90] sm:$0xf]
      %v913 = vld [vmem:[%s2 + $0x94] sm:$0xf]
      %v914 = vld [vmem:[%s2 + $0x98] sm:$0xf]
      %v915 = vld [vmem:[%s2 + $0x9c] sm:$0xf]
      %v916 = vld [vmem:[%s2 + $0xa0] sm:$0xf]
      %v917 = vld [vmem:[%s2 + $0xa4] sm:$0xf]
      %v918 = vld [vmem:[%s2 + $0xa8] sm:$0xf]
      %v919 = vld [vmem:[%s2 + $0xac] sm:$0xf]
      %v920 = vld [vmem:[%s2 + $0xb0] sm:$0xf]
      %v921 = vld [vmem:[%s2 + $0xb4] sm:$0xf]
      %v922 = vld [vmem:[%s2 + $0xb8] sm:$0xf]
      %v923 = vld [vmem:[%s2 + $0xbc] sm:$0xf]
      %v924 = vld [vmem:[%s473] sm:$0xff]
      %v925 = vld [vmem:[%s473 + $0x8] sm:$0xff]
      %v926 = vld [vmem:[%s473 + $0x10] sm:$0xff]
      %v927 = vld [vmem:[%s473 + $0x18] sm:$0xff]
      %v928 = vld [vmem:[%s473 + $0x20] sm:$0xff]
      %v929 = vld [vmem:[%s473 + $0x28] sm:$0xff]
      %v930 = vld [vmem:[%s473 + $0x30] sm:$0xff]
      %v931 = vld [vmem:[%s473 + $0x38] sm:$0xff]
      %v932 = vld [vmem:[%s473 + $0x40] sm:$0xff]
      %v933 = vld [vmem:[%s473 + $0x48] sm:$0xff]
      %v934 = vld [vmem:[%s473 + $0x50] sm:$0xff]
      %v935 = vld [vmem:[%s473 + $0x58] sm:$0xff]
      %v936 = vld [vmem:[%s473 + $0x60] sm:$0xff]
      %v937 = vld [vmem:[%s473 + $0x68] sm:$0xff]
      %v938 = vld [vmem:[%s473 + $0x70] sm:$0xff]
      %v939 = vld [vmem:[%s473 + $0x78] sm:$0xff]
      %v940 = vld [vmem:[%s473 + $0x80] sm:$0xff]
      %v941 = vld [vmem:[%s473 + $0x88] sm:$0xff]
      %v942 = vld [vmem:[%s473 + $0x90] sm:$0xff]
      %v943 = vld [vmem:[%s473 + $0x98] sm:$0xff]
      %v944 = vld [vmem:[%s473 + $0xa0] sm:$0xff]
      %v945 = vld [vmem:[%s473 + $0xa8] sm:$0xff]
      %v946 = vld [vmem:[%s473 + $0xb0] sm:$0xff]
      %v947 = vld [vmem:[%s473 + $0xb8] sm:$0xff]
      %v948 = vld [vmem:[%s473 + $0xc0] sm:$0xff]
      %v949 = vld [vmem:[%s473 + $0xc8] sm:$0xff]
      %v950 = vld [vmem:[%s473 + $0xd0] sm:$0xff]
      %v951 = vld [vmem:[%s473 + $0xd8] sm:$0xff]
      %v952 = vld [vmem:[%s473 + $0xe0] sm:$0xff]
      %v953 = vld [vmem:[%s473 + $0xe8] sm:$0xff]
      %v954 = vld [vmem:[%s473 + $0xf0] sm:$0xff]
      %v955 = vld [vmem:[%s473 + $0xf8] sm:$0xff]
      %v956 = vld [vmem:[%s473 + $0x100] sm:$0xff]
      %v957 = vld [vmem:[%s473 + $0x108] sm:$0xff]
      %v958 = vld [vmem:[%s473 + $0x110] sm:$0xff]
      %v959 = vld [vmem:[%s473 + $0x118] sm:$0xff]
      %v960 = vld [vmem:[%s473 + $0x120] sm:$0xff]
      %v961 = vld [vmem:[%s473 + $0x128] sm:$0xff]
      %v962 = vld [vmem:[%s473 + $0x130] sm:$0xff]
      %v963 = vld [vmem:[%s473 + $0x138] sm:$0xff]
      %v964 = vld [vmem:[%s473 + $0x140] sm:$0xff]
      %v965 = vld [vmem:[%s473 + $0x148] sm:$0xff]
      %v966 = vld [vmem:[%s473 + $0x150] sm:$0xff]
      %v967 = vld [vmem:[%s473 + $0x158] sm:$0xff]
      %v968 = vld [vmem:[%s473 + $0x160] sm:$0xff]
      %v969 = vld [vmem:[%s473 + $0x168] sm:$0xff]
      %v970 = vld [vmem:[%s473 + $0x170] sm:$0xff]
      %v971 = vld [vmem:[%s473 + $0x178] sm:$0xff]
      %v1020 = vrot.slane %v924, 1
      %v1021 = vrot.slane %v925, 1
      %v1022 = vsel %vm602, %v1020, %v1021
      %v1023 = vrot.slane %v926, 1
      %v1024 = vsel %vm602, %v1021, %v1023
      %v1025 = vrot.slane %v927, 1
      %v1026 = vrot.slane %v928, 1
      %v1027 = vsel %vm602, %v1025, %v1026
      %v1028 = vrot.slane %v929, 1
      %v1029 = vsel %vm602, %v1026, %v1028
      %v1030 = vrot.slane %v930, 1
      %v1031 = vrot.slane %v931, 1
      %v1032 = vsel %vm602, %v1030, %v1031
      %v1033 = vrot.slane %v932, 1
      %v1034 = vsel %vm602, %v1031, %v1033
      %v1035 = vrot.slane %v933, 1
      %v1036 = vrot.slane %v934, 1
      %v1037 = vsel %vm602, %v1035, %v1036
      %v1038 = vrot.slane %v935, 1
      %v1039 = vsel %vm602, %v1036, %v1038
      %v1040 = vrot.slane %v936, 1
      %v1041 = vrot.slane %v937, 1
      %v1042 = vsel %vm602, %v1040, %v1041
      %v1043 = vrot.slane %v938, 1
      %v1044 = vsel %vm602, %v1041, %v1043
      %v1045 = vrot.slane %v939, 1
      %v1046 = vrot.slane %v940, 1
      %v1047 = vsel %vm602, %v1045, %v1046
      %v1048 = vrot.slane %v941, 1
      %v1049 = vsel %vm602, %v1046, %v1048
      %v1050 = vrot.slane %v942, 1
      %v1051 = vrot.slane %v943, 1
      %v1052 = vsel %vm602, %v1050, %v1051
      %v1053 = vrot.slane %v944, 1
      %v1054 = vsel %vm602, %v1051, %v1053
      %v1055 = vrot.slane %v945, 1
      %v1056 = vrot.slane %v946, 1
      %v1057 = vsel %vm602, %v1055, %v1056
      %v1058 = vrot.slane %v947, 1
      %v1059 = vsel %vm602, %v1056, %v1058
      %v1060 = vrot.slane %v948, 1
      %v1061 = vrot.slane %v949, 1
      %v1062 = vsel %vm602, %v1060, %v1061
      %v1063 = vrot.slane %v950, 1
      %v1064 = vsel %vm602, %v1061, %v1063
      %v1065 = vrot.slane %v951, 1
      %v1066 = vrot.slane %v952, 1
      %v1067 = vsel %vm602, %v1065, %v1066
      %v1068 = vrot.slane %v953, 1
      %v1069 = vsel %vm602, %v1066, %v1068
      %v1070 = vrot.slane %v954, 1
      %v1071 = vrot.slane %v955, 1
      %v1072 = vsel %vm602, %v1070, %v1071
      %v1073 = vrot.slane %v956, 1
      %v1074 = vsel %vm602, %v1071, %v1073
      %v1075 = vrot.slane %v957, 1
      %v1076 = vrot.slane %v958, 1
      %v1077 = vsel %vm602, %v1075, %v1076
      %v1078 = vrot.slane %v959, 1
      %v1079 = vsel %vm602, %v1076, %v1078
      %v1080 = vrot.slane %v960, 1
      %v1081 = vrot.slane %v961, 1
      %v1082 = vsel %vm602, %v1080, %v1081
      %v1083 = vrot.slane %v962, 1
      %v1084 = vsel %vm602, %v1081, %v1083
      %v1085 = vrot.slane %v963, 1
      %v1086 = vrot.slane %v964, 1
      %v1087 = vsel %vm602, %v1085, %v1086
      %v1088 = vrot.slane %v965, 1
      %v1089 = vsel %vm602, %v1086, %v1088
      %v1090 = vrot.slane %v966, 1
      %v1091 = vrot.slane %v967, 1
      %v1092 = vsel %vm602, %v1090, %v1091
      %v1093 = vrot.slane %v968, 1
      %v1094 = vsel %vm602, %v1091, %v1093
      %v1095 = vrot.slane %v969, 1
      %v1096 = vrot.slane %v970, 1
      %v1097 = vsel %vm602, %v1095, %v1096
      %v1098 = vrot.slane %v971, 1
      %v1099 = vsel %vm602, %v1096, %v1098
      %v1132 = vrot.slane %v924, 2
      %v1133 = vrot.slane %v925, 2
      %v1134 = vsel %vm715, %v1132, %v1133
      %v1135 = vrot.slane %v926, 2
      %v1136 = vsel %vm715, %v1133, %v1135
      %v1137 = vrot.slane %v927, 2
      %v1138 = vrot.slane %v928, 2
      %v1139 = vsel %vm715, %v1137, %v1138
      %v1140 = vrot.slane %v929, 2
      %v1141 = vsel %vm715, %v1138, %v1140
      %v1142 = vrot.slane %v930, 2
      %v1143 = vrot.slane %v931, 2
      %v1144 = vsel %vm715, %v1142, %v1143
      %v1145 = vrot.slane %v932, 2
      %v1146 = vsel %vm715, %v1143, %v1145
      %v1147 = vrot.slane %v933, 2
      %v1148 = vrot.slane %v934, 2
      %v1149 = vsel %vm715, %v1147, %v1148
      %v1150 = vrot.slane %v935, 2
      %v1151 = vsel %vm715, %v1148, %v1150
      %v1152 = vrot.slane %v936, 2
      %v1153 = vrot.slane %v937, 2
      %v1154 = vsel %vm715, %v1152, %v1153
      %v1155 = vrot.slane %v938, 2
      %v1156 = vsel %vm715, %v1153, %v1155
      %v1157 = vrot.slane %v939, 2
      %v1158 = vrot.slane %v940, 2
      %v1159 = vsel %vm715, %v1157, %v1158
      %v1160 = vrot.slane %v941, 2
      %v1161 = vsel %vm715, %v1158, %v1160
      %v1162 = vrot.slane %v942, 2
      %v1163 = vrot.slane %v943, 2
      %v1164 = vsel %vm715, %v1162, %v1163
      %v1165 = vrot.slane %v944, 2
      %v1166 = vsel %vm715, %v1163, %v1165
      %v1167 = vrot.slane %v945, 2
      %v1168 = vrot.slane %v946, 2
      %v1169 = vsel %vm715, %v1167, %v1168
      %v1170 = vrot.slane %v947, 2
      %v1171 = vsel %vm715, %v1168, %v1170
      %v1172 = vrot.slane %v948, 2
      %v1173 = vrot.slane %v949, 2
      %v1174 = vsel %vm715, %v1172, %v1173
      %v1175 = vrot.slane %v950, 2
      %v1176 = vsel %vm715, %v1173, %v1175
      %v1177 = vrot.slane %v951, 2
      %v1178 = vrot.slane %v952, 2
      %v1179 = vsel %vm715, %v1177, %v1178
      %v1180 = vrot.slane %v953, 2
      %v1181 = vsel %vm715, %v1178, %v1180
      %v1182 = vrot.slane %v954, 2
      %v1183 = vrot.slane %v955, 2
      %v1184 = vsel %vm715, %v1182, %v1183
      %v1185 = vrot.slane %v956, 2
      %v1186 = vsel %vm715, %v1183, %v1185
      %v1187 = vrot.slane %v957, 2
      %v1188 = vrot.slane %v958, 2
      %v1189 = vsel %vm715, %v1187, %v1188
      %v1190 = vrot.slane %v959, 2
      %v1191 = vsel %vm715, %v1188, %v1190
      %v1192 = vrot.slane %v960, 2
      %v1193 = vrot.slane %v961, 2
      %v1194 = vsel %vm715, %v1192, %v1193
      %v1195 = vrot.slane %v962, 2
      %v1196 = vsel %vm715, %v1193, %v1195
      %v1197 = vrot.slane %v963, 2
      %v1198 = vrot.slane %v964, 2
      %v1199 = vsel %vm715, %v1197, %v1198
      %v1200 = vrot.slane %v965, 2
      %v1201 = vsel %vm715, %v1198, %v1200
      %v1202 = vrot.slane %v966, 2
      %v1203 = vrot.slane %v967, 2
      %v1204 = vsel %vm715, %v1202, %v1203
      %v1205 = vrot.slane %v968, 2
      %v1206 = vsel %vm715, %v1203, %v1205
      %v1207 = vrot.slane %v969, 2
      %v1208 = vrot.slane %v970, 2
      %v1209 = vsel %vm715, %v1207, %v1208
      %v1210 = vrot.slane %v971, 2
      %v1211 = vsel %vm715, %v1208, %v1210
      %v1244 = vpack.c.bf16 %v925, %v924
      %v1245 = vpack.c.bf16 %v1024, %v1022
      %v1246 = vpack.c.bf16 %v1136, %v1134
      %v1247 = vpack.c.bf16 %v928, %v927
      %v1248 = vpack.c.bf16 %v1029, %v1027
      %v1249 = vpack.c.bf16 %v1141, %v1139
      %v1250 = vpack.c.bf16 %v931, %v930
      %v1251 = vpack.c.bf16 %v1034, %v1032
      %v1252 = vpack.c.bf16 %v1146, %v1144
      %v1253 = vpack.c.bf16 %v934, %v933
      %v1254 = vpack.c.bf16 %v1039, %v1037
      %v1255 = vpack.c.bf16 %v1151, %v1149
      %v1256 = vpack.c.bf16 %v937, %v936
      %v1257 = vpack.c.bf16 %v1044, %v1042
      %v1258 = vpack.c.bf16 %v1156, %v1154
      %v1259 = vpack.c.bf16 %v940, %v939
      %v1260 = vpack.c.bf16 %v1049, %v1047
      %v1261 = vpack.c.bf16 %v1161, %v1159
      %v1262 = vpack.c.bf16 %v943, %v942
      %v1263 = vpack.c.bf16 %v1054, %v1052
      %v1264 = vpack.c.bf16 %v1166, %v1164
      %v1265 = vpack.c.bf16 %v946, %v945
      %v1266 = vpack.c.bf16 %v1059, %v1057
      %v1267 = vpack.c.bf16 %v1171, %v1169
      %v1268 = vpack.c.bf16 %v949, %v948
      %v1269 = vpack.c.bf16 %v1064, %v1062
      %v1270 = vpack.c.bf16 %v1176, %v1174
      %v1271 = vpack.c.bf16 %v952, %v951
      %v1272 = vpack.c.bf16 %v1069, %v1067
      %v1273 = vpack.c.bf16 %v1181, %v1179
      %v1274 = vpack.c.bf16 %v955, %v954
      %v1275 = vpack.c.bf16 %v1074, %v1072
      %v1276 = vpack.c.bf16 %v1186, %v1184
      %v1277 = vpack.c.bf16 %v958, %v957
      %v1278 = vpack.c.bf16 %v1079, %v1077
      %v1279 = vpack.c.bf16 %v1191, %v1189
      %v1280 = vpack.c.bf16 %v961, %v960
      %v1281 = vpack.c.bf16 %v1084, %v1082
      %v1282 = vpack.c.bf16 %v1196, %v1194
      %v1283 = vpack.c.bf16 %v964, %v963
      %v1284 = vpack.c.bf16 %v1089, %v1087
      %v1285 = vpack.c.bf16 %v1201, %v1199
      %v1286 = vpack.c.bf16 %v967, %v966
      %v1287 = vpack.c.bf16 %v1094, %v1092
      %v1288 = vpack.c.bf16 %v1206, %v1204
      %v1289 = vpack.c.bf16 %v970, %v969
      %v1290 = vpack.c.bf16 %v1099, %v1097
      %v1291 = vpack.c.bf16 %v1211, %v1209
      %s1292 = scalar_lea.vmem %s2, 192
      %v1293 = vld [vmem:[%s1292] sm:$0xf]
      %v1294 = vld [vmem:[%s1292 + $0x4] sm:$0xf]
      %v1295 = vld [vmem:[%s1292 + $0x8] sm:$0xf]
      %v1296 = vld [vmem:[%s1292 + $0xc] sm:$0xf]
      %v1297 = vld [vmem:[%s1292 + $0x10] sm:$0xf]
      %v1298 = vld [vmem:[%s1292 + $0x14] sm:$0xf]
      %v1299 = vld [vmem:[%s1292 + $0x18] sm:$0xf]
      %v1300 = vld [vmem:[%s1292 + $0x1c] sm:$0xf]
      %v1301 = vld [vmem:[%s1292 + $0x20] sm:$0xf]
      %v1302 = vld [vmem:[%s1292 + $0x24] sm:$0xf]
      %v1303 = vld [vmem:[%s1292 + $0x28] sm:$0xf]
      %v1304 = vld [vmem:[%s1292 + $0x2c] sm:$0xf]
      %v1305 = vld [vmem:[%s1292 + $0x30] sm:$0xf]
      %v1306 = vld [vmem:[%s1292 + $0x34] sm:$0xf]
      %v1307 = vld [vmem:[%s1292 + $0x38] sm:$0xf]
      %v1308 = vld [vmem:[%s1292 + $0x3c] sm:$0xf]
      %v1309 = vld [vmem:[%s1292 + $0x40] sm:$0xf]
      %v1310 = vld [vmem:[%s1292 + $0x44] sm:$0xf]
      %v1311 = vld [vmem:[%s1292 + $0x48] sm:$0xf]
      %v1312 = vld [vmem:[%s1292 + $0x4c] sm:$0xf]
      %v1313 = vld [vmem:[%s1292 + $0x50] sm:$0xf]
      %v1314 = vld [vmem:[%s1292 + $0x54] sm:$0xf]
      %v1315 = vld [vmem:[%s1292 + $0x58] sm:$0xf]
      %v1316 = vld [vmem:[%s1292 + $0x5c] sm:$0xf]
      %v1317 = vld [vmem:[%s1292 + $0x60] sm:$0xf]
      %v1318 = vld [vmem:[%s1292 + $0x64] sm:$0xf]
      %v1319 = vld [vmem:[%s1292 + $0x68] sm:$0xf]
      %v1320 = vld [vmem:[%s1292 + $0x6c] sm:$0xf]
      %v1321 = vld [vmem:[%s1292 + $0x70] sm:$0xf]
      %v1322 = vld [vmem:[%s1292 + $0x74] sm:$0xf]
      %v1323 = vld [vmem:[%s1292 + $0x78] sm:$0xf]
      %v1324 = vld [vmem:[%s1292 + $0x7c] sm:$0xf]
      %v1325 = vld [vmem:[%s1292 + $0x80] sm:$0xf]
      %v1326 = vld [vmem:[%s1292 + $0x84] sm:$0xf]
      %v1327 = vld [vmem:[%s1292 + $0x88] sm:$0xf]
      %v1328 = vld [vmem:[%s1292 + $0x8c] sm:$0xf]
      %v1329 = vld [vmem:[%s1292 + $0x90] sm:$0xf]
      %v1330 = vld [vmem:[%s1292 + $0x94] sm:$0xf]
      %v1331 = vld [vmem:[%s1292 + $0x98] sm:$0xf]
      %v1332 = vld [vmem:[%s1292 + $0x9c] sm:$0xf]
      %v1333 = vld [vmem:[%s1292 + $0xa0] sm:$0xf]
      %v1334 = vld [vmem:[%s1292 + $0xa4] sm:$0xf]
      %v1335 = vld [vmem:[%s1292 + $0xa8] sm:$0xf]
      %v1336 = vld [vmem:[%s1292 + $0xac] sm:$0xf]
      %v1337 = vld [vmem:[%s1292 + $0xb0] sm:$0xf]
      %v1338 = vld [vmem:[%s1292 + $0xb4] sm:$0xf]
      %v1339 = vld [vmem:[%s1292 + $0xb8] sm:$0xf]
      %v1340 = vld [vmem:[%s1292 + $0xbc] sm:$0xf]
      %v1389 = vunpack.c.l.b16 %v1293
      %v1390 = vunpack.c.l.b16 %v1294
      %v1391 = vunpack.c.l.b16 %v1295
      %v1392 = vunpack.c.l.b16 %v1296
      %v1393 = vunpack.c.l.b16 %v1297
      %v1394 = vunpack.c.l.b16 %v1298
      %v1395 = vunpack.c.l.b16 %v1299
      %v1396 = vunpack.c.l.b16 %v1300
      %v1397 = vunpack.c.l.b16 %v1301
      %v1398 = vunpack.c.l.b16 %v1302
      %v1399 = vunpack.c.l.b16 %v1303
      %v1400 = vunpack.c.l.b16 %v1304
      %v1401 = vunpack.c.l.b16 %v1305
      %v1402 = vunpack.c.l.b16 %v1306
      %v1403 = vunpack.c.l.b16 %v1307
      %v1404 = vunpack.c.l.b16 %v1308
      %v1405 = vunpack.c.l.b16 %v1309
      %v1406 = vunpack.c.l.b16 %v1310
      %v1407 = vunpack.c.l.b16 %v1311
      %v1408 = vunpack.c.l.b16 %v1312
      %v1409 = vunpack.c.l.b16 %v1313
      %v1410 = vunpack.c.l.b16 %v1314
      %v1411 = vunpack.c.l.b16 %v1315
      %v1412 = vunpack.c.l.b16 %v1316
      %v1413 = vunpack.c.l.b16 %v1317
      %v1414 = vunpack.c.l.b16 %v1318
      %v1415 = vunpack.c.l.b16 %v1319
      %v1416 = vunpack.c.l.b16 %v1320
      %v1417 = vunpack.c.l.b16 %v1321
      %v1418 = vunpack.c.l.b16 %v1322
      %v1419 = vunpack.c.l.b16 %v1323
      %v1420 = vunpack.c.l.b16 %v1324
      %v1421 = vunpack.c.l.b16 %v1325
      %v1422 = vunpack.c.l.b16 %v1326
      %v1423 = vunpack.c.l.b16 %v1327
      %v1424 = vunpack.c.l.b16 %v1328
      %v1425 = vunpack.c.l.b16 %v1329
      %v1426 = vunpack.c.l.b16 %v1330
      %v1427 = vunpack.c.l.b16 %v1331
      %v1428 = vunpack.c.l.b16 %v1332
      %v1429 = vunpack.c.l.b16 %v1333
      %v1430 = vunpack.c.l.b16 %v1334
      %v1431 = vunpack.c.l.b16 %v1335
      %v1432 = vunpack.c.l.b16 %v1336
      %v1433 = vunpack.c.l.b16 %v1337
      %v1434 = vunpack.c.l.b16 %v1338
      %v1435 = vunpack.c.l.b16 %v1339
      %v1436 = vunpack.c.l.b16 %v1340
      %v1437 = vpack.c.b16 %v1390, %v1389
      %v1438 = vpack.c.b16 %v1392, %v1391
      %v1439 = vpack.c.b16 %v1394, %v1393
      %v1440 = vpack.c.b16 %v1396, %v1395
      %v1441 = vpack.c.b16 %v1398, %v1397
      %v1442 = vpack.c.b16 %v1400, %v1399
      %v1443 = vpack.c.b16 %v1402, %v1401
      %v1444 = vpack.c.b16 %v1404, %v1403
      %v1445 = vpack.c.b16 %v1406, %v1405
      %v1446 = vpack.c.b16 %v1408, %v1407
      %v1447 = vpack.c.b16 %v1410, %v1409
      %v1448 = vpack.c.b16 %v1412, %v1411
      %v1449 = vpack.c.b16 %v1414, %v1413
      %v1450 = vpack.c.b16 %v1416, %v1415
      %v1451 = vpack.c.b16 %v1418, %v1417
      %v1452 = vpack.c.b16 %v1420, %v1419
      %v1453 = vpack.c.b16 %v1422, %v1421
      %v1454 = vpack.c.b16 %v1424, %v1423
      %v1455 = vpack.c.b16 %v1426, %v1425
      %v1456 = vpack.c.b16 %v1428, %v1427
      %v1457 = vpack.c.b16 %v1430, %v1429
      %v1458 = vpack.c.b16 %v1432, %v1431
      %v1459 = vpack.c.b16 %v1434, %v1433
      %v1460 = vpack.c.b16 %v1436, %v1435
      %1485 = vmatprep.subr.bf16.mxu0 0
      %1486 = vmatpush1.bf16.msra.mxu0 %v1437
      %1487 = vmatprep.subr.bf16.mxu0 0
      %1488 = vmatpush1.bf16.msra.mxu0 %v1438
      %1489 = vmatprep.subr.bf16.mxu0 0
      %1490 = vmatpush1.bf16.msra.mxu0 %v1439
      %1491 = vmatprep.subr.bf16.mxu0 0
      %1492 = vmatpush1.bf16.msra.mxu0 %v1440
      %1493 = vmatprep.subr.bf16.mxu0 0
      %1494 = vmatpush1.bf16.msra.mxu0 %v1441
      %1495 = vmatprep.subr.bf16.mxu0 0
      %1496 = vmatpush1.bf16.msra.mxu0 %v1442
      %1497 = vmatprep.subr.bf16.mxu0 0
      %1498 = vmatpush1.bf16.msra.mxu0 %v1443
      %1499 = vmatprep.subr.bf16.mxu0 0
      %1500 = vmatpush1.bf16.msra.mxu0 %v1444
      %1501 = vmatprep.subr.bf16.mxu0 0
      %1502 = vmatpush1.bf16.msra.mxu0 %v1445
      %1503 = vmatprep.subr.bf16.mxu0 0
      %1504 = vmatpush1.bf16.msra.mxu0 %v1446
      %1505 = vmatprep.subr.bf16.mxu0 0
      %1506 = vmatpush1.bf16.msra.mxu0 %v1447
      %1507 = vmatprep.subr.bf16.mxu0 0
      %1508 = vmatpush1.bf16.msra.mxu0 %v1448
      %1509 = vmatprep.subr.bf16.mxu0 0
      %1510 = vmatpush1.bf16.msra.mxu0 %v1449
      %1511 = vmatprep.subr.bf16.mxu0 0
      %1512 = vmatpush1.bf16.msra.mxu0 %v1450
      %1513 = vmatprep.subr.bf16.mxu0 0
      %1514 = vmatpush1.bf16.msra.mxu0 %v1451
      %1515 = vmatprep.subr.bf16.mxu0 0
      %1516 = vmatpush1.bf16.msra.mxu0 %v1452
      %1517 = vmatprep.mubr.bf16.mxu0 %v1245
      %1518 = vmatmul.mubr.bf16.gmra.mrb[0].mxu0 %v1244
      %v1519 = vpop.f32.mrb[0].mxu0
      %v1520 = vadd.f32 0.0, %v1519
      %v1521 = vpop.f32.mrb[0].mxu0
      %v1522 = vpop.f32.mrb[0].mxu0
      %v1523 = vadd.f32 0.0, %v1522
      %v1524 = vpop.f32.mrb[0].mxu0
      %1525 = vmatprep.mubr.bf16.mxu0 %v1248
      %1526 = vmatmul.mubr.bf16.gmra.mrb[0].mxu0 %v1247
      %v1527 = vpop.f32.mrb[0].mxu0
      %v1528 = vadd.f32 0.0, %v1527
      %v1529 = vpop.f32.mrb[0].mxu0
      %v1530 = vpop.f32.mrb[0].mxu0
      %v1531 = vadd.f32 0.0, %v1530
      %v1532 = vpop.f32.mrb[0].mxu0
      %1533 = vmatprep.mubr.bf16.mxu0 %v1251
      %1534 = vmatmul.mubr.bf16.gmra.mrb[0].mxu0 %v1250
      %v1535 = vpop.f32.mrb[0].mxu0
      %v1536 = vadd.f32 0.0, %v1535
      %v1537 = vpop.f32.mrb[0].mxu0
      %v1538 = vpop.f32.mrb[0].mxu0
      %v1539 = vadd.f32 0.0, %v1538
      %v1540 = vpop.f32.mrb[0].mxu0
      %1541 = vmatprep.mubr.bf16.mxu0 %v1254
      %1542 = vmatmul.mubr.bf16.gmra.mrb[0].mxu0 %v1253
      %v1543 = vpop.f32.mrb[0].mxu0
      %v1544 = vadd.f32 0.0, %v1543
      %v1545 = vpop.f32.mrb[0].mxu0
      %v1546 = vpop.f32.mrb[0].mxu0
      %v1547 = vadd.f32 0.0, %v1546
      %v1548 = vpop.f32.mrb[0].mxu0
      %1549 = vmatprep.mubr.bf16.mxu0 %v1257
      %1550 = vmatmul.mubr.bf16.gmra.mrb[0].mxu0 %v1256
      %v1551 = vpop.f32.mrb[0].mxu0
      %v1552 = vadd.f32 0.0, %v1551
      %v1553 = vpop.f32.mrb[0].mxu0
      %v1554 = vpop.f32.mrb[0].mxu0
      %v1555 = vadd.f32 0.0, %v1554
      %v1556 = vpop.f32.mrb[0].mxu0
      %1557 = vmatprep.mubr.bf16.mxu0 %v1260
      %1558 = vmatmul.mubr.bf16.gmra.mrb[0].mxu0 %v1259
      %v1559 = vpop.f32.mrb[0].mxu0
      %v1560 = vadd.f32 0.0, %v1559
      %v1561 = vpop.f32.mrb[0].mxu0
      %v1562 = vpop.f32.mrb[0].mxu0
      %v1563 = vadd.f32 0.0, %v1562
      %v1564 = vpop.f32.mrb[0].mxu0
      %1565 = vmatprep.mubr.bf16.mxu0 %v1263
      %1566 = vmatmul.mubr.bf16.gmra.mrb[0].mxu0 %v1262
      %v1567 = vpop.f32.mrb[0].mxu0
      %v1568 = vadd.f32 0.0, %v1567
      %v1569 = vpop.f32.mrb[0].mxu0
      %v1570 = vpop.f32.mrb[0].mxu0
      %v1571 = vadd.f32 0.0, %v1570
      %v1572 = vpop.f32.mrb[0].mxu0
      %1573 = vmatprep.mubr.bf16.mxu0 %v1266
      %1574 = vmatmul.mubr.bf16.gmra.mrb[0].mxu0 %v1265
      %v1575 = vpop.f32.mrb[0].mxu0
      %v1576 = vadd.f32 0.0, %v1575
      %v1577 = vpop.f32.mrb[0].mxu0
      %v1578 = vpop.f32.mrb[0].mxu0
      %v1579 = vadd.f32 0.0, %v1578
      %v1580 = vpop.f32.mrb[0].mxu0
      %1581 = vmatprep.mubr.bf16.mxu0 %v1269
      %1582 = vmatmul.mubr.bf16.gmra.mrb[0].mxu0 %v1268
      %v1583 = vpop.f32.mrb[0].mxu0
      %v1584 = vadd.f32 0.0, %v1583
      %v1585 = vpop.f32.mrb[0].mxu0
      %v1586 = vpop.f32.mrb[0].mxu0
      %v1587 = vadd.f32 0.0, %v1586
      %v1588 = vpop.f32.mrb[0].mxu0
      %1589 = vmatprep.mubr.bf16.mxu0 %v1272
      %1590 = vmatmul.mubr.bf16.gmra.mrb[0].mxu0 %v1271
      %v1591 = vpop.f32.mrb[0].mxu0
      %v1592 = vadd.f32 0.0, %v1591
      %v1593 = vpop.f32.mrb[0].mxu0
      %v1594 = vpop.f32.mrb[0].mxu0
      %v1595 = vadd.f32 0.0, %v1594
      %v1596 = vpop.f32.mrb[0].mxu0
      %1597 = vmatprep.mubr.bf16.mxu0 %v1275
      %1598 = vmatmul.mubr.bf16.gmra.mrb[0].mxu0 %v1274
      %v1599 = vpop.f32.mrb[0].mxu0
      %v1600 = vadd.f32 0.0, %v1599
      %v1601 = vpop.f32.mrb[0].mxu0
      %v1602 = vpop.f32.mrb[0].mxu0
      %v1603 = vadd.f32 0.0, %v1602
      %v1604 = vpop.f32.mrb[0].mxu0
      %1605 = vmatprep.mubr.bf16.mxu0 %v1278
      %1606 = vmatmul.mubr.bf16.gmra.mrb[0].mxu0 %v1277
      %v1607 = vpop.f32.mrb[0].mxu0
      %v1608 = vadd.f32 0.0, %v1607
      %v1609 = vpop.f32.mrb[0].mxu0
      %v1610 = vpop.f32.mrb[0].mxu0
      %v1611 = vadd.f32 0.0, %v1610
      %v1612 = vpop.f32.mrb[0].mxu0
      %1613 = vmatprep.mubr.bf16.mxu0 %v1281
      %1614 = vmatmul.mubr.bf16.gmra.mrb[0].mxu0 %v1280
      %v1615 = vpop.f32.mrb[0].mxu0
      %v1616 = vadd.f32 0.0, %v1615
      %v1617 = vpop.f32.mrb[0].mxu0
      %v1618 = vpop.f32.mrb[0].mxu0
      %v1619 = vadd.f32 0.0, %v1618
      %v1620 = vpop.f32.mrb[0].mxu0
      %1621 = vmatprep.mubr.bf16.mxu0 %v1284
      %1622 = vmatmul.mubr.bf16.gmra.mrb[0].mxu0 %v1283
      %v1623 = vpop.f32.mrb[0].mxu0
      %v1624 = vadd.f32 0.0, %v1623
      %v1625 = vpop.f32.mrb[0].mxu0
      %v1626 = vpop.f32.mrb[0].mxu0
      %v1627 = vadd.f32 0.0, %v1626
      %v1628 = vpop.f32.mrb[0].mxu0
      %1629 = vmatprep.mubr.bf16.mxu0 %v1287
      %1630 = vmatmul.mubr.bf16.gmra.mrb[0].mxu0 %v1286
      %v1631 = vpop.f32.mrb[0].mxu0
      %v1632 = vadd.f32 0.0, %v1631
      %v1633 = vpop.f32.mrb[0].mxu0
      %v1634 = vpop.f32.mrb[0].mxu0
      %v1635 = vadd.f32 0.0, %v1634
      %v1636 = vpop.f32.mrb[0].mxu0
      %1637 = vmatprep.mubr.bf16.mxu0 %v1290
      %1638 = vmatmul.mubr.bf16.gmra.mrb[0].mxu0 %v1289
      %v1639 = vpop.f32.mrb[0].mxu0
      %v1640 = vadd.f32 0.0, %v1639
      %v1641 = vpop.f32.mrb[0].mxu0
      %v1642 = vpop.f32.mrb[0].mxu0
      %v1643 = vadd.f32 0.0, %v1642
      %v1644 = vpop.f32.mrb[0].mxu0
      %1645 = vdwg.mxu0
      %1646 = vmatprep.subr.bf16.mxu0 0
      %1647 = vmatpush1.bf16.msra.mxu0 %v1453
      %1648 = vmatprep.subr.bf16.mxu0 0
      %1649 = vmatpush1.bf16.msra.mxu0 %v1454
      %1650 = vmatprep.subr.bf16.mxu0 0
      %1651 = vmatpush1.bf16.msra.mxu0 %v1455
      %1652 = vmatprep.subr.bf16.mxu0 0
      %1653 = vmatpush1.bf16.msra.mxu0 %v1456
      %1654 = vmatprep.subr.bf16.mxu0 0
      %1655 = vmatpush1.bf16.msra.mxu0 %v1457
      %1656 = vmatprep.subr.bf16.mxu0 0
      %1657 = vmatpush1.bf16.msra.mxu0 %v1458
      %1658 = vmatprep.subr.bf16.mxu0 0
      %1659 = vmatpush1.bf16.msra.mxu0 %v1459
      %1660 = vmatprep.subr.bf16.mxu0 0
      %1661 = vmatpush1.bf16.msra.mxu0 %v1460
      %1662 = vmatprep.subr.bf16.mxu0 0
      %1663 = vmatpush1.bf16.msra.mxu0 0
      %1664 = vmatprep.subr.bf16.mxu0 0
      %1665 = vmatpush1.bf16.msra.mxu0 0
      %1666 = vmatprep.subr.bf16.mxu0 0
      %1667 = vmatpush1.bf16.msra.mxu0 0
      %1668 = vmatprep.subr.bf16.mxu0 0
      %1669 = vmatpush1.bf16.msra.mxu0 0
      %1670 = vmatprep.subr.bf16.mxu0 0
      %1671 = vmatpush1.bf16.msra.mxu0 0
      %1672 = vmatprep.subr.bf16.mxu0 0
      %1673 = vmatpush1.bf16.msra.mxu0 0
      %1674 = vmatprep.subr.bf16.mxu0 0
      %1675 = vmatpush1.bf16.msra.mxu0 0
      %1676 = vmatprep.subr.bf16.mxu0 0
      %1677 = vmatpush1.bf16.msra.mxu0 0
      %1678 = vmatprep.mubr.bf16.mxu0 0
      %1679 = vmatmul.mubr.bf16.gmra.mrb[0].mxu0 %v1246
      %v1680 = vpop.f32.mrb[0].mxu0
      %v1681 = vadd.f32 %v1520, %v1680
      %v1682 = vpop.f32.mrb[0].mxu0
      %v1683 = vpop.f32.mrb[0].mxu0
      %v1684 = vadd.f32 %v1523, %v1683
      %v1685 = vpop.f32.mrb[0].mxu0
      %1686 = vmatprep.mubr.bf16.mxu0 0
      %1687 = vmatmul.mubr.bf16.gmra.mrb[0].mxu0 %v1249
      %v1688 = vpop.f32.mrb[0].mxu0
      %v1689 = vadd.f32 %v1528, %v1688
      %v1690 = vpop.f32.mrb[0].mxu0
      %v1691 = vpop.f32.mrb[0].mxu0
      %v1692 = vadd.f32 %v1531, %v1691
      %v1693 = vpop.f32.mrb[0].mxu0
      %1694 = vmatprep.mubr.bf16.mxu0 0
      %1695 = vmatmul.mubr.bf16.gmra.mrb[0].mxu0 %v1252
      %v1696 = vpop.f32.mrb[0].mxu0
      %v1697 = vadd.f32 %v1536, %v1696
      %v1698 = vpop.f32.mrb[0].mxu0
      %v1699 = vpop.f32.mrb[0].mxu0
      %v1700 = vadd.f32 %v1539, %v1699
      %v1701 = vpop.f32.mrb[0].mxu0
      %1702 = vmatprep.mubr.bf16.mxu0 0
      %1703 = vmatmul.mubr.bf16.gmra.mrb[0].mxu0 %v1255
      %v1704 = vpop.f32.mrb[0].mxu0
      %v1705 = vadd.f32 %v1544, %v1704
      %v1706 = vpop.f32.mrb[0].mxu0
      %v1707 = vpop.f32.mrb[0].mxu0
      %v1708 = vadd.f32 %v1547, %v1707
      %v1709 = vpop.f32.mrb[0].mxu0
      %1710 = vmatprep.mubr.bf16.mxu0 0
      %1711 = vmatmul.mubr.bf16.gmra.mrb[0].mxu0 %v1258
      %v1712 = vpop.f32.mrb[0].mxu0
      %v1713 = vadd.f32 %v1552, %v1712
      %v1714 = vpop.f32.mrb[0].mxu0
      %v1715 = vpop.f32.mrb[0].mxu0
      %v1716 = vadd.f32 %v1555, %v1715
      %v1717 = vpop.f32.mrb[0].mxu0
      %1718 = vmatprep.mubr.bf16.mxu0 0
      %1719 = vmatmul.mubr.bf16.gmra.mrb[0].mxu0 %v1261
      %v1720 = vpop.f32.mrb[0].mxu0
      %v1721 = vadd.f32 %v1560, %v1720
      %v1722 = vpop.f32.mrb[0].mxu0
      %v1723 = vpop.f32.mrb[0].mxu0
      %v1724 = vadd.f32 %v1563, %v1723
      %v1725 = vpop.f32.mrb[0].mxu0
      %1726 = vmatprep.mubr.bf16.mxu0 0
      %1727 = vmatmul.mubr.bf16.gmra.mrb[0].mxu0 %v1264
      %v1728 = vpop.f32.mrb[0].mxu0
      %v1729 = vadd.f32 %v1568, %v1728
      %v1730 = vpop.f32.mrb[0].mxu0
      %v1731 = vpop.f32.mrb[0].mxu0
      %v1732 = vadd.f32 %v1571, %v1731
      %v1733 = vpop.f32.mrb[0].mxu0
      %1734 = vmatprep.mubr.bf16.mxu0 0
      %1735 = vmatmul.mubr.bf16.gmra.mrb[0].mxu0 %v1267
      %v1736 = vpop.f32.mrb[0].mxu0
      %v1737 = vadd.f32 %v1576, %v1736
      %v1738 = vpop.f32.mrb[0].mxu0
      %v1739 = vpop.f32.mrb[0].mxu0
      %v1740 = vadd.f32 %v1579, %v1739
      %v1741 = vpop.f32.mrb[0].mxu0
      %1742 = vmatprep.mubr.bf16.mxu0 0
      %1743 = vmatmul.mubr.bf16.gmra.mrb[0].mxu0 %v1270
      %v1744 = vpop.f32.mrb[0].mxu0
      %v1745 = vadd.f32 %v1584, %v1744
      %v1746 = vpop.f32.mrb[0].mxu0
      %v1747 = vpop.f32.mrb[0].mxu0
      %v1748 = vadd.f32 %v1587, %v1747
      %v1749 = vpop.f32.mrb[0].mxu0
      %1750 = vmatprep.mubr.bf16.mxu0 0
      %1751 = vmatmul.mubr.bf16.gmra.mrb[0].mxu0 %v1273
      %v1752 = vpop.f32.mrb[0].mxu0
      %v1753 = vadd.f32 %v1592, %v1752
      %v1754 = vpop.f32.mrb[0].mxu0
      %v1755 = vpop.f32.mrb[0].mxu0
      %v1756 = vadd.f32 %v1595, %v1755
      %v1757 = vpop.f32.mrb[0].mxu0
      %1758 = vmatprep.mubr.bf16.mxu0 0
      %1759 = vmatmul.mubr.bf16.gmra.mrb[0].mxu0 %v1276
      %v1760 = vpop.f32.mrb[0].mxu0
      %v1761 = vadd.f32 %v1600, %v1760
      %v1762 = vpop.f32.mrb[0].mxu0
      %v1763 = vpop.f32.mrb[0].mxu0
      %v1764 = vadd.f32 %v1603, %v1763
      %v1765 = vpop.f32.mrb[0].mxu0
      %1766 = vmatprep.mubr.bf16.mxu0 0
      %1767 = vmatmul.mubr.bf16.gmra.mrb[0].mxu0 %v1279
      %v1768 = vpop.f32.mrb[0].mxu0
      %v1769 = vadd.f32 %v1608, %v1768
      %v1770 = vpop.f32.mrb[0].mxu0
      %v1771 = vpop.f32.mrb[0].mxu0
      %v1772 = vadd.f32 %v1611, %v1771
      %v1773 = vpop.f32.mrb[0].mxu0
      %1774 = vmatprep.mubr.bf16.mxu0 0
      %1775 = vmatmul.mubr.bf16.gmra.mrb[0].mxu0 %v1282
      %v1776 = vpop.f32.mrb[0].mxu0
      %v1777 = vadd.f32 %v1616, %v1776
      %v1778 = vpop.f32.mrb[0].mxu0
      %v1779 = vpop.f32.mrb[0].mxu0
      %v1780 = vadd.f32 %v1619, %v1779
      %v1781 = vpop.f32.mrb[0].mxu0
      %1782 = vmatprep.mubr.bf16.mxu0 0
      %1783 = vmatmul.mubr.bf16.gmra.mrb[0].mxu0 %v1285
      %v1784 = vpop.f32.mrb[0].mxu0
      %v1785 = vadd.f32 %v1624, %v1784
      %v1786 = vpop.f32.mrb[0].mxu0
      %v1787 = vpop.f32.mrb[0].mxu0
      %v1788 = vadd.f32 %v1627, %v1787
      %v1789 = vpop.f32.mrb[0].mxu0
      %1790 = vmatprep.mubr.bf16.mxu0 0
      %1791 = vmatmul.mubr.bf16.gmra.mrb[0].mxu0 %v1288
      %v1792 = vpop.f32.mrb[0].mxu0
      %v1793 = vadd.f32 %v1632, %v1792
      %v1794 = vpop.f32.mrb[0].mxu0
      %v1795 = vpop.f32.mrb[0].mxu0
      %v1796 = vadd.f32 %v1635, %v1795
      %v1797 = vpop.f32.mrb[0].mxu0
      %1798 = vmatprep.mubr.bf16.mxu0 0
      %1799 = vmatmul.mubr.bf16.gmra.mrb[0].mxu0 %v1291
      %v1800 = vpop.f32.mrb[0].mxu0
      %v1801 = vadd.f32 %v1640, %v1800
      %v1802 = vpop.f32.mrb[0].mxu0
      %v1803 = vpop.f32.mrb[0].mxu0
      %v1804 = vadd.f32 %v1643, %v1803
      %v1805 = vpop.f32.mrb[0].mxu0
      %1806 = vdwg.mxu0
      %v1855 = vunpack.c.l.b16 %v876
      %v1856 = vunpack.c.l.b16 %v877
      %v1857 = vunpack.c.l.b16 %v878
      %v1858 = vunpack.c.l.b16 %v879
      %v1859 = vunpack.c.l.b16 %v880
      %v1860 = vunpack.c.l.b16 %v881
      %v1861 = vunpack.c.l.b16 %v882
      %v1862 = vunpack.c.l.b16 %v883
      %v1863 = vunpack.c.l.b16 %v884
      %v1864 = vunpack.c.l.b16 %v885
      %v1865 = vunpack.c.l.b16 %v886
      %v1866 = vunpack.c.l.b16 %v887
      %v1867 = vunpack.c.l.b16 %v888
      %v1868 = vunpack.c.l.b16 %v889
      %v1869 = vunpack.c.l.b16 %v890
      %v1870 = vunpack.c.l.b16 %v891
      %v1871 = vunpack.c.l.b16 %v892
      %v1872 = vunpack.c.l.b16 %v893
      %v1873 = vunpack.c.l.b16 %v894
      %v1874 = vunpack.c.l.b16 %v895
      %v1875 = vunpack.c.l.b16 %v896
      %v1876 = vunpack.c.l.b16 %v897
      %v1877 = vunpack.c.l.b16 %v898
      %v1878 = vunpack.c.l.b16 %v899
      %v1879 = vunpack.c.l.b16 %v900
      %v1880 = vunpack.c.l.b16 %v901
      %v1881 = vunpack.c.l.b16 %v902
      %v1882 = vunpack.c.l.b16 %v903
      %v1883 = vunpack.c.l.b16 %v904
      %v1884 = vunpack.c.l.b16 %v905
      %v1885 = vunpack.c.l.b16 %v906
      %v1886 = vunpack.c.l.b16 %v907
      %v1887 = vunpack.c.l.b16 %v908
      %v1888 = vunpack.c.l.b16 %v909
      %v1889 = vunpack.c.l.b16 %v910
      %v1890 = vunpack.c.l.b16 %v911
      %v1891 = vunpack.c.l.b16 %v912
      %v1892 = vunpack.c.l.b16 %v913
      %v1893 = vunpack.c.l.b16 %v914
      %v1894 = vunpack.c.l.b16 %v915
      %v1895 = vunpack.c.l.b16 %v916
      %v1896 = vunpack.c.l.b16 %v917
      %v1897 = vunpack.c.l.b16 %v918
      %v1898 = vunpack.c.l.b16 %v919
      %v1899 = vunpack.c.l.b16 %v920
      %v1900 = vunpack.c.l.b16 %v921
      %v1901 = vunpack.c.l.b16 %v922
      %v1902 = vunpack.c.l.b16 %v923
      %v1903 = vpack.c.b16 %v1856, %v1855
      %v1904 = vpack.c.b16 %v1858, %v1857
      %v1905 = vpack.c.b16 %v1860, %v1859
      %v1906 = vpack.c.b16 %v1862, %v1861
      %v1907 = vpack.c.b16 %v1864, %v1863
      %v1908 = vpack.c.b16 %v1866, %v1865
      %v1909 = vpack.c.b16 %v1868, %v1867
      %v1910 = vpack.c.b16 %v1870, %v1869
      %v1911 = vpack.c.b16 %v1872, %v1871
      %v1912 = vpack.c.b16 %v1874, %v1873
      %v1913 = vpack.c.b16 %v1876, %v1875
      %v1914 = vpack.c.b16 %v1878, %v1877
      %v1915 = vpack.c.b16 %v1880, %v1879
      %v1916 = vpack.c.b16 %v1882, %v1881
      %v1917 = vpack.c.b16 %v1884, %v1883
      %v1918 = vpack.c.b16 %v1886, %v1885
      %v1919 = vpack.c.b16 %v1888, %v1887
      %v1920 = vpack.c.b16 %v1890, %v1889
      %v1921 = vpack.c.b16 %v1892, %v1891
      %v1922 = vpack.c.b16 %v1894, %v1893
      %v1923 = vpack.c.b16 %v1896, %v1895
      %v1924 = vpack.c.b16 %v1898, %v1897
      %v1925 = vpack.c.b16 %v1900, %v1899
      %v1926 = vpack.c.b16 %v1902, %v1901
      %1951 = vmatprep.subr.bf16.mxu0 0
      %1952 = vmatpush1.bf16.msra.mxu0 %v1903
      %1953 = vmatprep.subr.bf16.mxu0 0
      %1954 = vmatpush1.bf16.msra.mxu0 %v1904
      %1955 = vmatprep.subr.bf16.mxu0 0
      %1956 = vmatpush1.bf16.msra.mxu0 %v1905
      %1957 = vmatprep.subr.bf16.mxu0 0
      %1958 = vmatpush1.bf16.msra.mxu0 %v1906
      %1959 = vmatprep.subr.bf16.mxu0 0
      %1960 = vmatpush1.bf16.msra.mxu0 %v1907
      %1961 = vmatprep.subr.bf16.mxu0 0
      %1962 = vmatpush1.bf16.msra.mxu0 %v1908
      %1963 = vmatprep.subr.bf16.mxu0 0
      %1964 = vmatpush1.bf16.msra.mxu0 %v1909
      %1965 = vmatprep.subr.bf16.mxu0 0
      %1966 = vmatpush1.bf16.msra.mxu0 %v1910
      %1967 = vmatprep.subr.bf16.mxu0 0
      %1968 = vmatpush1.bf16.msra.mxu0 %v1911
      %1969 = vmatprep.subr.bf16.mxu0 0
      %1970 = vmatpush1.bf16.msra.mxu0 %v1912
      %1971 = vmatprep.subr.bf16.mxu0 0
      %1972 = vmatpush1.bf16.msra.mxu0 %v1913
      %1973 = vmatprep.subr.bf16.mxu0 0
      %1974 = vmatpush1.bf16.msra.mxu0 %v1914
      %1975 = vmatprep.subr.bf16.mxu0 0
      %1976 = vmatpush1.bf16.msra.mxu0 %v1915
      %1977 = vmatprep.subr.bf16.mxu0 0
      %1978 = vmatpush1.bf16.msra.mxu0 %v1916
      %1979 = vmatprep.subr.bf16.mxu0 0
      %1980 = vmatpush1.bf16.msra.mxu0 %v1917
      %1981 = vmatprep.subr.bf16.mxu0 0
      %1982 = vmatpush1.bf16.msra.mxu0 %v1918
      %1983 = vmatprep.mubr.bf16.mxu0 %v829
      %1984 = vmatmul.mubr.bf16.gmra.mrb[0].mxu0 %v828
      %v1985 = vpop.f32.mrb[0].mxu0
      %v1986 = vadd.f32 %v1681, %v1985
      %v1987 = vpop.f32.mrb[0].mxu0
      %v1988 = vpop.f32.mrb[0].mxu0
      %v1989 = vadd.f32 %v1684, %v1988
      %v1990 = vpop.f32.mrb[0].mxu0
      %1991 = vmatprep.mubr.bf16.mxu0 %v832
      %1992 = vmatmul.mubr.bf16.gmra.mrb[0].mxu0 %v831
      %v1993 = vpop.f32.mrb[0].mxu0
      %v1994 = vadd.f32 %v1689, %v1993
      %v1995 = vpop.f32.mrb[0].mxu0
      %v1996 = vpop.f32.mrb[0].mxu0
      %v1997 = vadd.f32 %v1692, %v1996
      %v1998 = vpop.f32.mrb[0].mxu0
      %1999 = vmatprep.mubr.bf16.mxu0 %v835
      %2000 = vmatmul.mubr.bf16.gmra.mrb[0].mxu0 %v834
      %v2001 = vpop.f32.mrb[0].mxu0
      %v2002 = vadd.f32 %v1697, %v2001
      %v2003 = vpop.f32.mrb[0].mxu0
      %v2004 = vpop.f32.mrb[0].mxu0
      %v2005 = vadd.f32 %v1700, %v2004
      %v2006 = vpop.f32.mrb[0].mxu0
      %2007 = vmatprep.mubr.bf16.mxu0 %v838
      %2008 = vmatmul.mubr.bf16.gmra.mrb[0].mxu0 %v837
      %v2009 = vpop.f32.mrb[0].mxu0
      %v2010 = vadd.f32 %v1705, %v2009
      %v2011 = vpop.f32.mrb[0].mxu0
      %v2012 = vpop.f32.mrb[0].mxu0
      %v2013 = vadd.f32 %v1708, %v2012
      %v2014 = vpop.f32.mrb[0].mxu0
      %2015 = vmatprep.mubr.bf16.mxu0 %v841
      %2016 = vmatmul.mubr.bf16.gmra.mrb[0].mxu0 %v840
      %v2017 = vpop.f32.mrb[0].mxu0
      %v2018 = vadd.f32 %v1713, %v2017
      %v2019 = vpop.f32.mrb[0].mxu0
      %v2020 = vpop.f32.mrb[0].mxu0
      %v2021 = vadd.f32 %v1716, %v2020
      %v2022 = vpop.f32.mrb[0].mxu0
      %2023 = vmatprep.mubr.bf16.mxu0 %v844
      %2024 = vmatmul.mubr.bf16.gmra.mrb[0].mxu0 %v843
      %v2025 = vpop.f32.mrb[0].mxu0
      %v2026 = vadd.f32 %v1721, %v2025
      %v2027 = vpop.f32.mrb[0].mxu0
      %v2028 = vpop.f32.mrb[0].mxu0
      %v2029 = vadd.f32 %v1724, %v2028
      %v2030 = vpop.f32.mrb[0].mxu0
      %2031 = vmatprep.mubr.bf16.mxu0 %v847
      %2032 = vmatmul.mubr.bf16.gmra.mrb[0].mxu0 %v846
      %v2033 = vpop.f32.mrb[0].mxu0
      %v2034 = vadd.f32 %v1729, %v2033
      %v2035 = vpop.f32.mrb[0].mxu0
      %v2036 = vpop.f32.mrb[0].mxu0
      %v2037 = vadd.f32 %v1732, %v2036
      %v2038 = vpop.f32.mrb[0].mxu0
      %2039 = vmatprep.mubr.bf16.mxu0 %v850
      %2040 = vmatmul.mubr.bf16.gmra.mrb[0].mxu0 %v849
      %v2041 = vpop.f32.mrb[0].mxu0
      %v2042 = vadd.f32 %v1737, %v2041
      %v2043 = vpop.f32.mrb[0].mxu0
      %v2044 = vpop.f32.mrb[0].mxu0
      %v2045 = vadd.f32 %v1740, %v2044
      %v2046 = vpop.f32.mrb[0].mxu0
      %2047 = vmatprep.mubr.bf16.mxu0 %v853
      %2048 = vmatmul.mubr.bf16.gmra.mrb[0].mxu0 %v852
      %v2049 = vpop.f32.mrb[0].mxu0
      %v2050 = vadd.f32 %v1745, %v2049
      %v2051 = vpop.f32.mrb[0].mxu0
      %v2052 = vpop.f32.mrb[0].mxu0
      %v2053 = vadd.f32 %v1748, %v2052
      %v2054 = vpop.f32.mrb[0].mxu0
      %2055 = vmatprep.mubr.bf16.mxu0 %v856
      %2056 = vmatmul.mubr.bf16.gmra.mrb[0].mxu0 %v855
      %v2057 = vpop.f32.mrb[0].mxu0
      %v2058 = vadd.f32 %v1753, %v2057
      %v2059 = vpop.f32.mrb[0].mxu0
      %v2060 = vpop.f32.mrb[0].mxu0
      %v2061 = vadd.f32 %v1756, %v2060
      %v2062 = vpop.f32.mrb[0].mxu0
      %2063 = vmatprep.mubr.bf16.mxu0 %v859
      %2064 = vmatmul.mubr.bf16.gmra.mrb[0].mxu0 %v858
      %v2065 = vpop.f32.mrb[0].mxu0
      %v2066 = vadd.f32 %v1761, %v2065
      %v2067 = vpop.f32.mrb[0].mxu0
      %v2068 = vpop.f32.mrb[0].mxu0
      %v2069 = vadd.f32 %v1764, %v2068
      %v2070 = vpop.f32.mrb[0].mxu0
      %2071 = vmatprep.mubr.bf16.mxu0 %v862
      %2072 = vmatmul.mubr.bf16.gmra.mrb[0].mxu0 %v861
      %v2073 = vpop.f32.mrb[0].mxu0
      %v2074 = vadd.f32 %v1769, %v2073
      %v2075 = vpop.f32.mrb[0].mxu0
      %v2076 = vpop.f32.mrb[0].mxu0
      %v2077 = vadd.f32 %v1772, %v2076
      %v2078 = vpop.f32.mrb[0].mxu0
      %2079 = vmatprep.mubr.bf16.mxu0 %v865
      %2080 = vmatmul.mubr.bf16.gmra.mrb[0].mxu0 %v864
      %v2081 = vpop.f32.mrb[0].mxu0
      %v2082 = vadd.f32 %v1777, %v2081
      %v2083 = vpop.f32.mrb[0].mxu0
      %v2084 = vpop.f32.mrb[0].mxu0
      %v2085 = vadd.f32 %v1780, %v2084
      %v2086 = vpop.f32.mrb[0].mxu0
      %2087 = vmatprep.mubr.bf16.mxu0 %v868
      %2088 = vmatmul.mubr.bf16.gmra.mrb[0].mxu0 %v867
      %v2089 = vpop.f32.mrb[0].mxu0
      %v2090 = vadd.f32 %v1785, %v2089
      %v2091 = vpop.f32.mrb[0].mxu0
      %v2092 = vpop.f32.mrb[0].mxu0
      %v2093 = vadd.f32 %v1788, %v2092
      %v2094 = vpop.f32.mrb[0].mxu0
      %2095 = vmatprep.mubr.bf16.mxu0 %v871
      %2096 = vmatmul.mubr.bf16.gmra.mrb[0].mxu0 %v870
      %v2097 = vpop.f32.mrb[0].mxu0
      %v2098 = vadd.f32 %v1793, %v2097
      %v2099 = vpop.f32.mrb[0].mxu0
      %v2100 = vpop.f32.mrb[0].mxu0
      %v2101 = vadd.f32 %v1796, %v2100
      %v2102 = vpop.f32.mrb[0].mxu0
      %2103 = vmatprep.mubr.bf16.mxu0 %v874
      %2104 = vmatmul.mubr.bf16.gmra.mrb[0].mxu0 %v873
      %v2105 = vpop.f32.mrb[0].mxu0
      %v2106 = vadd.f32 %v1801, %v2105
      %v2107 = vpop.f32.mrb[0].mxu0
      %v2108 = vpop.f32.mrb[0].mxu0
      %v2109 = vadd.f32 %v1804, %v2108
      %v2110 = vpop.f32.mrb[0].mxu0
      %2111 = vdwg.mxu0
      %2112 = vmatprep.subr.bf16.mxu0 0
      %2113 = vmatpush1.bf16.msra.mxu0 %v1919
      %2114 = vmatprep.subr.bf16.mxu0 0
      %2115 = vmatpush1.bf16.msra.mxu0 %v1920
      %2116 = vmatprep.subr.bf16.mxu0 0
      %2117 = vmatpush1.bf16.msra.mxu0 %v1921
      %2118 = vmatprep.subr.bf16.mxu0 0
      %2119 = vmatpush1.bf16.msra.mxu0 %v1922
      %2120 = vmatprep.subr.bf16.mxu0 0
      %2121 = vmatpush1.bf16.msra.mxu0 %v1923
      %2122 = vmatprep.subr.bf16.mxu0 0
      %2123 = vmatpush1.bf16.msra.mxu0 %v1924
      %2124 = vmatprep.subr.bf16.mxu0 0
      %2125 = vmatpush1.bf16.msra.mxu0 %v1925
      %2126 = vmatprep.subr.bf16.mxu0 0
      %2127 = vmatpush1.bf16.msra.mxu0 %v1926
      %2128 = vmatprep.subr.bf16.mxu0 0
      %2129 = vmatpush1.bf16.msra.mxu0 0
      %2130 = vmatprep.subr.bf16.mxu0 0
      %2131 = vmatpush1.bf16.msra.mxu0 0
      %2132 = vmatprep.subr.bf16.mxu0 0
      %2133 = vmatpush1.bf16.msra.mxu0 0
      %2134 = vmatprep.subr.bf16.mxu0 0
      %2135 = vmatpush1.bf16.msra.mxu0 0
      %2136 = vmatprep.subr.bf16.mxu0 0
      %2137 = vmatpush1.bf16.msra.mxu0 0
      %2138 = vmatprep.subr.bf16.mxu0 0
      %2139 = vmatpush1.bf16.msra.mxu0 0
      %2140 = vmatprep.subr.bf16.mxu0 0
      %2141 = vmatpush1.bf16.msra.mxu0 0
      %2142 = vmatprep.subr.bf16.mxu0 0
      %2143 = vmatpush1.bf16.msra.mxu0 0
      %2144 = vmatprep.mubr.bf16.mxu0 0
      %2145 = vmatmul.mubr.bf16.gmra.mrb[0].mxu0 %v830
      %v2146 = vpop.f32.mrb[0].mxu0
      %v2147 = vadd.f32 %v1986, %v2146
      %v2148 = vpop.f32.mrb[0].mxu0
      %v2149 = vpop.f32.mrb[0].mxu0
      %v2150 = vadd.f32 %v1989, %v2149
      %v2151 = vpop.f32.mrb[0].mxu0
      %2152 = vmatprep.mubr.bf16.mxu0 0
      %2153 = vmatmul.mubr.bf16.gmra.mrb[0].mxu0 %v833
      %v2154 = vpop.f32.mrb[0].mxu0
      %v2155 = vadd.f32 %v1994, %v2154
      %v2156 = vpop.f32.mrb[0].mxu0
      %v2157 = vpop.f32.mrb[0].mxu0
      %v2158 = vadd.f32 %v1997, %v2157
      %v2159 = vpop.f32.mrb[0].mxu0
      %2160 = vmatprep.mubr.bf16.mxu0 0
      %2161 = vmatmul.mubr.bf16.gmra.mrb[0].mxu0 %v836
      %v2162 = vpop.f32.mrb[0].mxu0
      %v2163 = vadd.f32 %v2002, %v2162
      %v2164 = vpop.f32.mrb[0].mxu0
      %v2165 = vpop.f32.mrb[0].mxu0
      %v2166 = vadd.f32 %v2005, %v2165
      %v2167 = vpop.f32.mrb[0].mxu0
      %2168 = vmatprep.mubr.bf16.mxu0 0
      %2169 = vmatmul.mubr.bf16.gmra.mrb[0].mxu0 %v839
      %v2170 = vpop.f32.mrb[0].mxu0
      %v2171 = vadd.f32 %v2010, %v2170
      %v2172 = vpop.f32.mrb[0].mxu0
      %v2173 = vpop.f32.mrb[0].mxu0
      %v2174 = vadd.f32 %v2013, %v2173
      %v2175 = vpop.f32.mrb[0].mxu0
      %2176 = vmatprep.mubr.bf16.mxu0 0
      %2177 = vmatmul.mubr.bf16.gmra.mrb[0].mxu0 %v842
      %v2178 = vpop.f32.mrb[0].mxu0
      %v2179 = vadd.f32 %v2018, %v2178
      %v2180 = vpop.f32.mrb[0].mxu0
      %v2181 = vpop.f32.mrb[0].mxu0
      %v2182 = vadd.f32 %v2021, %v2181
      %v2183 = vpop.f32.mrb[0].mxu0
      %2184 = vmatprep.mubr.bf16.mxu0 0
      %2185 = vmatmul.mubr.bf16.gmra.mrb[0].mxu0 %v845
      %v2186 = vpop.f32.mrb[0].mxu0
      %v2187 = vadd.f32 %v2026, %v2186
      %v2188 = vpop.f32.mrb[0].mxu0
      %v2189 = vpop.f32.mrb[0].mxu0
      %v2190 = vadd.f32 %v2029, %v2189
      %v2191 = vpop.f32.mrb[0].mxu0
      %2192 = vmatprep.mubr.bf16.mxu0 0
      %2193 = vmatmul.mubr.bf16.gmra.mrb[0].mxu0 %v848
      %v2194 = vpop.f32.mrb[0].mxu0
      %v2195 = vadd.f32 %v2034, %v2194
      %v2196 = vpop.f32.mrb[0].mxu0
      %v2197 = vpop.f32.mrb[0].mxu0
      %v2198 = vadd.f32 %v2037, %v2197
      %v2199 = vpop.f32.mrb[0].mxu0
      %2200 = vmatprep.mubr.bf16.mxu0 0
      %2201 = vmatmul.mubr.bf16.gmra.mrb[0].mxu0 %v851
      %v2202 = vpop.f32.mrb[0].mxu0
      %v2203 = vadd.f32 %v2042, %v2202
      %v2204 = vpop.f32.mrb[0].mxu0
      %v2205 = vpop.f32.mrb[0].mxu0
      %v2206 = vadd.f32 %v2045, %v2205
      %v2207 = vpop.f32.mrb[0].mxu0
      %2208 = vmatprep.mubr.bf16.mxu0 0
      %2209 = vmatmul.mubr.bf16.gmra.mrb[0].mxu0 %v854
      %v2210 = vpop.f32.mrb[0].mxu0
      %v2211 = vadd.f32 %v2050, %v2210
      %v2212 = vpop.f32.mrb[0].mxu0
      %v2213 = vpop.f32.mrb[0].mxu0
      %v2214 = vadd.f32 %v2053, %v2213
      %v2215 = vpop.f32.mrb[0].mxu0
      %2216 = vmatprep.mubr.bf16.mxu0 0
      %2217 = vmatmul.mubr.bf16.gmra.mrb[0].mxu0 %v857
      %v2218 = vpop.f32.mrb[0].mxu0
      %v2219 = vadd.f32 %v2058, %v2218
      %v2220 = vpop.f32.mrb[0].mxu0
      %v2221 = vpop.f32.mrb[0].mxu0
      %v2222 = vadd.f32 %v2061, %v2221
      %v2223 = vpop.f32.mrb[0].mxu0
      %2224 = vmatprep.mubr.bf16.mxu0 0
      %2225 = vmatmul.mubr.bf16.gmra.mrb[0].mxu0 %v860
      %v2226 = vpop.f32.mrb[0].mxu0
      %v2227 = vadd.f32 %v2066, %v2226
      %v2228 = vpop.f32.mrb[0].mxu0
      %v2229 = vpop.f32.mrb[0].mxu0
      %v2230 = vadd.f32 %v2069, %v2229
      %v2231 = vpop.f32.mrb[0].mxu0
      %2232 = vmatprep.mubr.bf16.mxu0 0
      %2233 = vmatmul.mubr.bf16.gmra.mrb[0].mxu0 %v863
      %v2234 = vpop.f32.mrb[0].mxu0
      %v2235 = vadd.f32 %v2074, %v2234
      %v2236 = vpop.f32.mrb[0].mxu0
      %v2237 = vpop.f32.mrb[0].mxu0
      %v2238 = vadd.f32 %v2077, %v2237
      %v2239 = vpop.f32.mrb[0].mxu0
      %2240 = vmatprep.mubr.bf16.mxu0 0
      %2241 = vmatmul.mubr.bf16.gmra.mrb[0].mxu0 %v866
      %v2242 = vpop.f32.mrb[0].mxu0
      %v2243 = vadd.f32 %v2082, %v2242
      %v2244 = vpop.f32.mrb[0].mxu0
      %v2245 = vpop.f32.mrb[0].mxu0
      %v2246 = vadd.f32 %v2085, %v2245
      %v2247 = vpop.f32.mrb[0].mxu0
      %2248 = vmatprep.mubr.bf16.mxu0 0
      %2249 = vmatmul.mubr.bf16.gmra.mrb[0].mxu0 %v869
      %v2250 = vpop.f32.mrb[0].mxu0
      %v2251 = vadd.f32 %v2090, %v2250
      %v2252 = vpop.f32.mrb[0].mxu0
      %v2253 = vpop.f32.mrb[0].mxu0
      %v2254 = vadd.f32 %v2093, %v2253
      %v2255 = vpop.f32.mrb[0].mxu0
      %2256 = vmatprep.mubr.bf16.mxu0 0
      %2257 = vmatmul.mubr.bf16.gmra.mrb[0].mxu0 %v872
      %v2258 = vpop.f32.mrb[0].mxu0
      %v2259 = vadd.f32 %v2098, %v2258
      %v2260 = vpop.f32.mrb[0].mxu0
      %v2261 = vpop.f32.mrb[0].mxu0
      %v2262 = vadd.f32 %v2101, %v2261
      %v2263 = vpop.f32.mrb[0].mxu0
      %2264 = vmatprep.mubr.bf16.mxu0 0
      %2265 = vmatmul.mubr.bf16.gmra.mrb[0].mxu0 %v875
      %v2266 = vpop.f32.mrb[0].mxu0
      %v2267 = vadd.f32 %v2106, %v2266
      %v2268 = vpop.f32.mrb[0].mxu0
      %v2269 = vpop.f32.mrb[0].mxu0
      %v2270 = vadd.f32 %v2109, %v2269
      %v2271 = vpop.f32.mrb[0].mxu0
      %2272 = vdwg.mxu0
      %s2273 = scalar_lea.vmem [#allocation2], 48
      %v2274 = vld [vmem:[%s2273] sm:$0xff]
      %v2275 = vld [vmem:[%s2273 + $0x8] sm:$0xff]
      %v2276 = vld [vmem:[%s2273 + $0x10] sm:$0xff]
      %v2277 = vld [vmem:[%s2273 + $0x18] sm:$0xff]
      %v2278 = vld [vmem:[%s2273 + $0x20] sm:$0xff]
      %v2279 = vld [vmem:[%s2273 + $0x28] sm:$0xff]
      %v2280 = vld [vmem:[%s2273 + $0x30] sm:$0xff]
      %v2281 = vld [vmem:[%s2273 + $0x38] sm:$0xff]
      %v2282 = vld [vmem:[%s2273 + $0x40] sm:$0xff]
      %v2283 = vld [vmem:[%s2273 + $0x48] sm:$0xff]
      %v2284 = vld [vmem:[%s2273 + $0x50] sm:$0xff]
      %v2285 = vld [vmem:[%s2273 + $0x58] sm:$0xff]
      %v2286 = vld [vmem:[%s2273 + $0x60] sm:$0xff]
      %v2287 = vld [vmem:[%s2273 + $0x68] sm:$0xff]
      %v2288 = vld [vmem:[%s2273 + $0x70] sm:$0xff]
      %v2289 = vld [vmem:[%s2273 + $0x78] sm:$0xff]
      %v2290 = vld [vmem:[%s2273 + $0x80] sm:$0xff]
      %v2291 = vld [vmem:[%s2273 + $0x88] sm:$0xff]
      %v2292 = vld [vmem:[%s2273 + $0x90] sm:$0xff]
      %v2293 = vld [vmem:[%s2273 + $0x98] sm:$0xff]
      %v2294 = vld [vmem:[%s2273 + $0xa0] sm:$0xff]
      %v2295 = vld [vmem:[%s2273 + $0xa8] sm:$0xff]
      %v2296 = vld [vmem:[%s2273 + $0xb0] sm:$0xff]
      %v2297 = vld [vmem:[%s2273 + $0xb8] sm:$0xff]
      %v2298 = vld [vmem:[%s2273 + $0xc0] sm:$0xff]
      %v2299 = vld [vmem:[%s2273 + $0xc8] sm:$0xff]
      %v2300 = vld [vmem:[%s2273 + $0xd0] sm:$0xff]
      %v2301 = vld [vmem:[%s2273 + $0xd8] sm:$0xff]
      %v2302 = vld [vmem:[%s2273 + $0xe0] sm:$0xff]
      %v2303 = vld [vmem:[%s2273 + $0xe8] sm:$0xff]
      %v2304 = vld [vmem:[%s2273 + $0xf0] sm:$0xff]
      %v2305 = vld [vmem:[%s2273 + $0xf8] sm:$0xff]
      %v2306 = vld [vmem:[%s2273 + $0x100] sm:$0xff]
      %v2307 = vld [vmem:[%s2273 + $0x108] sm:$0xff]
      %v2308 = vld [vmem:[%s2273 + $0x110] sm:$0xff]
      %v2309 = vld [vmem:[%s2273 + $0x118] sm:$0xff]
      %v2310 = vld [vmem:[%s2273 + $0x120] sm:$0xff]
      %v2311 = vld [vmem:[%s2273 + $0x128] sm:$0xff]
      %v2312 = vld [vmem:[%s2273 + $0x130] sm:$0xff]
      %v2313 = vld [vmem:[%s2273 + $0x138] sm:$0xff]
      %v2314 = vld [vmem:[%s2273 + $0x140] sm:$0xff]
      %v2315 = vld [vmem:[%s2273 + $0x148] sm:$0xff]
      %v2316 = vld [vmem:[%s2273 + $0x150] sm:$0xff]
      %v2317 = vld [vmem:[%s2273 + $0x158] sm:$0xff]
      %v2318 = vld [vmem:[%s2273 + $0x160] sm:$0xff]
      %v2319 = vld [vmem:[%s2273 + $0x168] sm:$0xff]
      %v2320 = vld [vmem:[%s2273 + $0x170] sm:$0xff]
      %v2321 = vld [vmem:[%s2273 + $0x178] sm:$0xff]
      %v2370 = vrot.slane %v2274, 1
      %v2371 = vrot.slane %v2275, 1
      %v2372 = vsel %vm602, %v2370, %v2371
      %v2373 = vrot.slane %v2276, 1
      %v2374 = vsel %vm602, %v2371, %v2373
      %v2375 = vrot.slane %v2277, 1
      %v2376 = vrot.slane %v2278, 1
      %v2377 = vsel %vm602, %v2375, %v2376
      %v2378 = vrot.slane %v2279, 1
      %v2379 = vsel %vm602, %v2376, %v2378
      %v2380 = vrot.slane %v2280, 1
      %v2381 = vrot.slane %v2281, 1
      %v2382 = vsel %vm602, %v2380, %v2381
      %v2383 = vrot.slane %v2282, 1
      %v2384 = vsel %vm602, %v2381, %v2383
      %v2385 = vrot.slane %v2283, 1
      %v2386 = vrot.slane %v2284, 1
      %v2387 = vsel %vm602, %v2385, %v2386
      %v2388 = vrot.slane %v2285, 1
      %v2389 = vsel %vm602, %v2386, %v2388
      %v2390 = vrot.slane %v2286, 1
      %v2391 = vrot.slane %v2287, 1
      %v2392 = vsel %vm602, %v2390, %v2391
      %v2393 = vrot.slane %v2288, 1
      %v2394 = vsel %vm602, %v2391, %v2393
      %v2395 = vrot.slane %v2289, 1
      %v2396 = vrot.slane %v2290, 1
      %v2397 = vsel %vm602, %v2395, %v2396
      %v2398 = vrot.slane %v2291, 1
      %v2399 = vsel %vm602, %v2396, %v2398
      %v2400 = vrot.slane %v2292, 1
      %v2401 = vrot.slane %v2293, 1
      %v2402 = vsel %vm602, %v2400, %v2401
      %v2403 = vrot.slane %v2294, 1
      %v2404 = vsel %vm602, %v2401, %v2403
      %v2405 = vrot.slane %v2295, 1
      %v2406 = vrot.slane %v2296, 1
      %v2407 = vsel %vm602, %v2405, %v2406
      %v2408 = vrot.slane %v2297, 1
      %v2409 = vsel %vm602, %v2406, %v2408
      %v2410 = vrot.slane %v2298, 1
      %v2411 = vrot.slane %v2299, 1
      %v2412 = vsel %vm602, %v2410, %v2411
      %v2413 = vrot.slane %v2300, 1
      %v2414 = vsel %vm602, %v2411, %v2413
      %v2415 = vrot.slane %v2301, 1
      %v2416 = vrot.slane %v2302, 1
      %v2417 = vsel %vm602, %v2415, %v2416
      %v2418 = vrot.slane %v2303, 1
      %v2419 = vsel %vm602, %v2416, %v2418
      %v2420 = vrot.slane %v2304, 1
      %v2421 = vrot.slane %v2305, 1
      %v2422 = vsel %vm602, %v2420, %v2421
      %v2423 = vrot.slane %v2306, 1
      %v2424 = vsel %vm602, %v2421, %v2423
      %v2425 = vrot.slane %v2307, 1
      %v2426 = vrot.slane %v2308, 1
      %v2427 = vsel %vm602, %v2425, %v2426
      %v2428 = vrot.slane %v2309, 1
      %v2429 = vsel %vm602, %v2426, %v2428
      %v2430 = vrot.slane %v2310, 1
      %v2431 = vrot.slane %v2311, 1
      %v2432 = vsel %vm602, %v2430, %v2431
      %v2433 = vrot.slane %v2312, 1
      %v2434 = vsel %vm602, %v2431, %v2433
      %v2435 = vrot.slane %v2313, 1
      %v2436 = vrot.slane %v2314, 1
      %v2437 = vsel %vm602, %v2435, %v2436
      %v2438 = vrot.slane %v2315, 1
      %v2439 = vsel %vm602, %v2436, %v2438
      %v2440 = vrot.slane %v2316, 1
      %v2441 = vrot.slane %v2317, 1
      %v2442 = vsel %vm602, %v2440, %v2441
      %v2443 = vrot.slane %v2318, 1
      %v2444 = vsel %vm602, %v2441, %v2443
      %v2445 = vrot.slane %v2319, 1
      %v2446 = vrot.slane %v2320, 1
      %v2447 = vsel %vm602, %v2445, %v2446
      %v2448 = vrot.slane %v2321, 1
      %v2449 = vsel %vm602, %v2446, %v2448
      %v2482 = vrot.slane %v2274, 2
      %v2483 = vrot.slane %v2275, 2
      %v2484 = vsel %vm715, %v2482, %v2483
      %v2485 = vrot.slane %v2276, 2
      %v2486 = vsel %vm715, %v2483, %v2485
      %v2487 = vrot.slane %v2277, 2
      %v2488 = vrot.slane %v2278, 2
      %v2489 = vsel %vm715, %v2487, %v2488
      %v2490 = vrot.slane %v2279, 2
      %v2491 = vsel %vm715, %v2488, %v2490
      %v2492 = vrot.slane %v2280, 2
      %v2493 = vrot.slane %v2281, 2
      %v2494 = vsel %vm715, %v2492, %v2493
      %v2495 = vrot.slane %v2282, 2
      %v2496 = vsel %vm715, %v2493, %v2495
      %v2497 = vrot.slane %v2283, 2
      %v2498 = vrot.slane %v2284, 2
      %v2499 = vsel %vm715, %v2497, %v2498
      %v2500 = vrot.slane %v2285, 2
      %v2501 = vsel %vm715, %v2498, %v2500
      %v2502 = vrot.slane %v2286, 2
      %v2503 = vrot.slane %v2287, 2
      %v2504 = vsel %vm715, %v2502, %v2503
      %v2505 = vrot.slane %v2288, 2
      %v2506 = vsel %vm715, %v2503, %v2505
      %v2507 = vrot.slane %v2289, 2
      %v2508 = vrot.slane %v2290, 2
      %v2509 = vsel %vm715, %v2507, %v2508
      %v2510 = vrot.slane %v2291, 2
      %v2511 = vsel %vm715, %v2508, %v2510
      %v2512 = vrot.slane %v2292, 2
      %v2513 = vrot.slane %v2293, 2
      %v2514 = vsel %vm715, %v2512, %v2513
      %v2515 = vrot.slane %v2294, 2
      %v2516 = vsel %vm715, %v2513, %v2515
      %v2517 = vrot.slane %v2295, 2
      %v2518 = vrot.slane %v2296, 2
      %v2519 = vsel %vm715, %v2517, %v2518
      %v2520 = vrot.slane %v2297, 2
      %v2521 = vsel %vm715, %v2518, %v2520
      %v2522 = vrot.slane %v2298, 2
      %v2523 = vrot.slane %v2299, 2
      %v2524 = vsel %vm715, %v2522, %v2523
      %v2525 = vrot.slane %v2300, 2
      %v2526 = vsel %vm715, %v2523, %v2525
      %v2527 = vrot.slane %v2301, 2
      %v2528 = vrot.slane %v2302, 2
      %v2529 = vsel %vm715, %v2527, %v2528
      %v2530 = vrot.slane %v2303, 2
      %v2531 = vsel %vm715, %v2528, %v2530
      %v2532 = vrot.slane %v2304, 2
      %v2533 = vrot.slane %v2305, 2
      %v2534 = vsel %vm715, %v2532, %v2533
      %v2535 = vrot.slane %v2306, 2
      %v2536 = vsel %vm715, %v2533, %v2535
      %v2537 = vrot.slane %v2307, 2
      %v2538 = vrot.slane %v2308, 2
      %v2539 = vsel %vm715, %v2537, %v2538
      %v2540 = vrot.slane %v2309, 2
      %v2541 = vsel %vm715, %v2538, %v2540
      %v2542 = vrot.slane %v2310, 2
      %v2543 = vrot.slane %v2311, 2
      %v2544 = vsel %vm715, %v2542, %v2543
      %v2545 = vrot.slane %v2312, 2
      %v2546 = vsel %vm715, %v2543, %v2545
      %v2547 = vrot.slane %v2313, 2
      %v2548 = vrot.slane %v2314, 2
      %v2549 = vsel %vm715, %v2547, %v2548
      %v2550 = vrot.slane %v2315, 2
      %v2551 = vsel %vm715, %v2548, %v2550
      %v2552 = vrot.slane %v2316, 2
      %v2553 = vrot.slane %v2317, 2
      %v2554 = vsel %vm715, %v2552, %v2553
      %v2555 = vrot.slane %v2318, 2
      %v2556 = vsel %vm715, %v2553, %v2555
      %v2557 = vrot.slane %v2319, 2
      %v2558 = vrot.slane %v2320, 2
      %v2559 = vsel %vm715, %v2557, %v2558
      %v2560 = vrot.slane %v2321, 2
      %v2561 = vsel %vm715, %v2558, %v2560
      %v2594 = vpack.c.bf16 %v2275, %v2274
      %v2595 = vpack.c.bf16 %v2374, %v2372
      %v2596 = vpack.c.bf16 %v2486, %v2484
      %v2597 = vpack.c.bf16 %v2278, %v2277
      %v2598 = vpack.c.bf16 %v2379, %v2377
      %v2599 = vpack.c.bf16 %v2491, %v2489
      %v2600 = vpack.c.bf16 %v2281, %v2280
      %v2601 = vpack.c.bf16 %v2384, %v2382
      %v2602 = vpack.c.bf16 %v2496, %v2494
      %v2603 = vpack.c.bf16 %v2284, %v2283
      %v2604 = vpack.c.bf16 %v2389, %v2387
      %v2605 = vpack.c.bf16 %v2501, %v2499
      %v2606 = vpack.c.bf16 %v2287, %v2286
      %v2607 = vpack.c.bf16 %v2394, %v2392
      %v2608 = vpack.c.bf16 %v2506, %v2504
      %v2609 = vpack.c.bf16 %v2290, %v2289
      %v2610 = vpack.c.bf16 %v2399, %v2397
      %v2611 = vpack.c.bf16 %v2511, %v2509
      %v2612 = vpack.c.bf16 %v2293, %v2292
      %v2613 = vpack.c.bf16 %v2404, %v2402
      %v2614 = vpack.c.bf16 %v2516, %v2514
      %v2615 = vpack.c.bf16 %v2296, %v2295
      %v2616 = vpack.c.bf16 %v2409, %v2407
      %v2617 = vpack.c.bf16 %v2521, %v2519
      %v2618 = vpack.c.bf16 %v2299, %v2298
      %v2619 = vpack.c.bf16 %v2414, %v2412
      %v2620 = vpack.c.bf16 %v2526, %v2524
      %v2621 = vpack.c.bf16 %v2302, %v2301
      %v2622 = vpack.c.bf16 %v2419, %v2417
      %v2623 = vpack.c.bf16 %v2531, %v2529
      %v2624 = vpack.c.bf16 %v2305, %v2304
      %v2625 = vpack.c.bf16 %v2424, %v2422
      %v2626 = vpack.c.bf16 %v2536, %v2534
      %v2627 = vpack.c.bf16 %v2308, %v2307
      %v2628 = vpack.c.bf16 %v2429, %v2427
      %v2629 = vpack.c.bf16 %v2541, %v2539
      %v2630 = vpack.c.bf16 %v2311, %v2310
      %v2631 = vpack.c.bf16 %v2434, %v2432
      %v2632 = vpack.c.bf16 %v2546, %v2544
      %v2633 = vpack.c.bf16 %v2314, %v2313
      %v2634 = vpack.c.bf16 %v2439, %v2437
      %v2635 = vpack.c.bf16 %v2551, %v2549
      %v2636 = vpack.c.bf16 %v2317, %v2316
      %v2637 = vpack.c.bf16 %v2444, %v2442
      %v2638 = vpack.c.bf16 %v2556, %v2554
      %v2639 = vpack.c.bf16 %v2320, %v2319
      %v2640 = vpack.c.bf16 %v2449, %v2447
      %v2641 = vpack.c.bf16 %v2561, %v2559
      %s2642 = scalar_lea.vmem %s2, 384
      %v2643 = vld [vmem:[%s2642] sm:$0xf]
      %v2644 = vld [vmem:[%s2642 + $0x4] sm:$0xf]
      %v2645 = vld [vmem:[%s2642 + $0x8] sm:$0xf]
      %v2646 = vld [vmem:[%s2642 + $0xc] sm:$0xf]
      %v2647 = vld [vmem:[%s2642 + $0x10] sm:$0xf]
      %v2648 = vld [vmem:[%s2642 + $0x14] sm:$0xf]
      %v2649 = vld [vmem:[%s2642 + $0x18] sm:$0xf]
      %v2650 = vld [vmem:[%s2642 + $0x1c] sm:$0xf]
      %v2651 = vld [vmem:[%s2642 + $0x20] sm:$0xf]
      %v2652 = vld [vmem:[%s2642 + $0x24] sm:$0xf]
      %v2653 = vld [vmem:[%s2642 + $0x28] sm:$0xf]
      %v2654 = vld [vmem:[%s2642 + $0x2c] sm:$0xf]
      %v2655 = vld [vmem:[%s2642 + $0x30] sm:$0xf]
      %v2656 = vld [vmem:[%s2642 + $0x34] sm:$0xf]
      %v2657 = vld [vmem:[%s2642 + $0x38] sm:$0xf]
      %v2658 = vld [vmem:[%s2642 + $0x3c] sm:$0xf]
      %v2659 = vld [vmem:[%s2642 + $0x40] sm:$0xf]
      %v2660 = vld [vmem:[%s2642 + $0x44] sm:$0xf]
      %v2661 = vld [vmem:[%s2642 + $0x48] sm:$0xf]
      %v2662 = vld [vmem:[%s2642 + $0x4c] sm:$0xf]
      %v2663 = vld [vmem:[%s2642 + $0x50] sm:$0xf]
      %v2664 = vld [vmem:[%s2642 + $0x54] sm:$0xf]
      %v2665 = vld [vmem:[%s2642 + $0x58] sm:$0xf]
      %v2666 = vld [vmem:[%s2642 + $0x5c] sm:$0xf]
      %v2667 = vld [vmem:[%s2642 + $0x60] sm:$0xf]
      %v2668 = vld [vmem:[%s2642 + $0x64] sm:$0xf]
      %v2669 = vld [vmem:[%s2642 + $0x68] sm:$0xf]
      %v2670 = vld [vmem:[%s2642 + $0x6c] sm:$0xf]
      %v2671 = vld [vmem:[%s2642 + $0x70] sm:$0xf]
      %v2672 = vld [vmem:[%s2642 + $0x74] sm:$0xf]
      %v2673 = vld [vmem:[%s2642 + $0x78] sm:$0xf]
      %v2674 = vld [vmem:[%s2642 + $0x7c] sm:$0xf]
      %v2675 = vld [vmem:[%s2642 + $0x80] sm:$0xf]
      %v2676 = vld [vmem:[%s2642 + $0x84] sm:$0xf]
      %v2677 = vld [vmem:[%s2642 + $0x88] sm:$0xf]
      %v2678 = vld [vmem:[%s2642 + $0x8c] sm:$0xf]
      %v2679 = vld [vmem:[%s2642 + $0x90] sm:$0xf]
      %v2680 = vld [vmem:[%s2642 + $0x94] sm:$0xf]
      %v2681 = vld [vmem:[%s2642 + $0x98] sm:$0xf]
      %v2682 = vld [vmem:[%s2642 + $0x9c] sm:$0xf]
      %v2683 = vld [vmem:[%s2642 + $0xa0] sm:$0xf]
      %v2684 = vld [vmem:[%s2642 + $0xa4] sm:$0xf]
      %v2685 = vld [vmem:[%s2642 + $0xa8] sm:$0xf]
      %v2686 = vld [vmem:[%s2642 + $0xac] sm:$0xf]
      %v2687 = vld [vmem:[%s2642 + $0xb0] sm:$0xf]
      %v2688 = vld [vmem:[%s2642 + $0xb4] sm:$0xf]
      %v2689 = vld [vmem:[%s2642 + $0xb8] sm:$0xf]
      %v2690 = vld [vmem:[%s2642 + $0xbc] sm:$0xf]
      %v2739 = vunpack.c.l.b16 %v2643
      %v2740 = vunpack.c.l.b16 %v2644
      %v2741 = vunpack.c.l.b16 %v2645
      %v2742 = vunpack.c.l.b16 %v2646
      %v2743 = vunpack.c.l.b16 %v2647
      %v2744 = vunpack.c.l.b16 %v2648
      %v2745 = vunpack.c.l.b16 %v2649
      %v2746 = vunpack.c.l.b16 %v2650
      %v2747 = vunpack.c.l.b16 %v2651
      %v2748 = vunpack.c.l.b16 %v2652
      %v2749 = vunpack.c.l.b16 %v2653
      %v2750 = vunpack.c.l.b16 %v2654
      %v2751 = vunpack.c.l.b16 %v2655
      %v2752 = vunpack.c.l.b16 %v2656
      %v2753 = vunpack.c.l.b16 %v2657
      %v2754 = vunpack.c.l.b16 %v2658
      %v2755 = vunpack.c.l.b16 %v2659
      %v2756 = vunpack.c.l.b16 %v2660
      %v2757 = vunpack.c.l.b16 %v2661
      %v2758 = vunpack.c.l.b16 %v2662
      %v2759 = vunpack.c.l.b16 %v2663
      %v2760 = vunpack.c.l.b16 %v2664
      %v2761 = vunpack.c.l.b16 %v2665
      %v2762 = vunpack.c.l.b16 %v2666
      %v2763 = vunpack.c.l.b16 %v2667
      %v2764 = vunpack.c.l.b16 %v2668
      %v2765 = vunpack.c.l.b16 %v2669
      %v2766 = vunpack.c.l.b16 %v2670
      %v2767 = vunpack.c.l.b16 %v2671
      %v2768 = vunpack.c.l.b16 %v2672
      %v2769 = vunpack.c.l.b16 %v2673
      %v2770 = vunpack.c.l.b16 %v2674
      %v2771 = vunpack.c.l.b16 %v2675
      %v2772 = vunpack.c.l.b16 %v2676
      %v2773 = vunpack.c.l.b16 %v2677
      %v2774 = vunpack.c.l.b16 %v2678
      %v2775 = vunpack.c.l.b16 %v2679
      %v2776 = vunpack.c.l.b16 %v2680
      %v2777 = vunpack.c.l.b16 %v2681
      %v2778 = vunpack.c.l.b16 %v2682
      %v2779 = vunpack.c.l.b16 %v2683
      %v2780 = vunpack.c.l.b16 %v2684
      %v2781 = vunpack.c.l.b16 %v2685
      %v2782 = vunpack.c.l.b16 %v2686
      %v2783 = vunpack.c.l.b16 %v2687
      %v2784 = vunpack.c.l.b16 %v2688
      %v2785 = vunpack.c.l.b16 %v2689
      %v2786 = vunpack.c.l.b16 %v2690
      %v2787 = vpack.c.b16 %v2740, %v2739
      %v2788 = vpack.c.b16 %v2742, %v2741
      %v2789 = vpack.c.b16 %v2744, %v2743
      %v2790 = vpack.c.b16 %v2746, %v2745
      %v2791 = vpack.c.b16 %v2748, %v2747
      %v2792 = vpack.c.b16 %v2750, %v2749
      %v2793 = vpack.c.b16 %v2752, %v2751
      %v2794 = vpack.c.b16 %v2754, %v2753
      %v2795 = vpack.c.b16 %v2756, %v2755
      %v2796 = vpack.c.b16 %v2758, %v2757
      %v2797 = vpack.c.b16 %v2760, %v2759
      %v2798 = vpack.c.b16 %v2762, %v2761
      %v2799 = vpack.c.b16 %v2764, %v2763
      %v2800 = vpack.c.b16 %v2766, %v2765
      %v2801 = vpack.c.b16 %v2768, %v2767
      %v2802 = vpack.c.b16 %v2770, %v2769
      %v2803 = vpack.c.b16 %v2772, %v2771
      %v2804 = vpack.c.b16 %v2774, %v2773
      %v2805 = vpack.c.b16 %v2776, %v2775
      %v2806 = vpack.c.b16 %v2778, %v2777
      %v2807 = vpack.c.b16 %v2780, %v2779
      %v2808 = vpack.c.b16 %v2782, %v2781
      %v2809 = vpack.c.b16 %v2784, %v2783
      %v2810 = vpack.c.b16 %v2786, %v2785
      %2835 = vmatprep.subr.bf16.mxu0 0
      %2836 = vmatpush1.bf16.msra.mxu0 %v2787
      %2837 = vmatprep.subr.bf16.mxu0 0
      %2838 = vmatpush1.bf16.msra.mxu0 %v2788
      %2839 = vmatprep.subr.bf16.mxu0 0
      %2840 = vmatpush1.bf16.msra.mxu0 %v2789
      %2841 = vmatprep.subr.bf16.mxu0 0
      %2842 = vmatpush1.bf16.msra.mxu0 %v2790
      %2843 = vmatprep.subr.bf16.mxu0 0
      %2844 = vmatpush1.bf16.msra.mxu0 %v2791
      %2845 = vmatprep.subr.bf16.mxu0 0
      %2846 = vmatpush1.bf16.msra.mxu0 %v2792
      %2847 = vmatprep.subr.bf16.mxu0 0
      %2848 = vmatpush1.bf16.msra.mxu0 %v2793
      %2849 = vmatprep.subr.bf16.mxu0 0
      %2850 = vmatpush1.bf16.msra.mxu0 %v2794
      %2851 = vmatprep.subr.bf16.mxu0 0
      %2852 = vmatpush1.bf16.msra.mxu0 %v2795
      %2853 = vmatprep.subr.bf16.mxu0 0
      %2854 = vmatpush1.bf16.msra.mxu0 %v2796
      %2855 = vmatprep.subr.bf16.mxu0 0
      %2856 = vmatpush1.bf16.msra.mxu0 %v2797
      %2857 = vmatprep.subr.bf16.mxu0 0
      %2858 = vmatpush1.bf16.msra.mxu0 %v2798
      %2859 = vmatprep.subr.bf16.mxu0 0
      %2860 = vmatpush1.bf16.msra.mxu0 %v2799
      %2861 = vmatprep.subr.bf16.mxu0 0
      %2862 = vmatpush1.bf16.msra.mxu0 %v2800
      %2863 = vmatprep.subr.bf16.mxu0 0
      %2864 = vmatpush1.bf16.msra.mxu0 %v2801
      %2865 = vmatprep.subr.bf16.mxu0 0
      %2866 = vmatpush1.bf16.msra.mxu0 %v2802
      %2867 = vmatprep.mubr.bf16.mxu0 %v2595
      %2868 = vmatmul.mubr.bf16.gmra.mrb[0].mxu0 %v2594
      %v2869 = vpop.f32.mrb[0].mxu0
      %v2870 = vadd.f32 0.0, %v2869
      %v2871 = vpop.f32.mrb[0].mxu0
      %v2872 = vpop.f32.mrb[0].mxu0
      %v2873 = vadd.f32 0.0, %v2872
      %v2874 = vpop.f32.mrb[0].mxu0
      %2875 = vmatprep.mubr.bf16.mxu0 %v2598
      %2876 = vmatmul.mubr.bf16.gmra.mrb[0].mxu0 %v2597
      %v2877 = vpop.f32.mrb[0].mxu0
      %v2878 = vadd.f32 0.0, %v2877
      %v2879 = vpop.f32.mrb[0].mxu0
      %v2880 = vpop.f32.mrb[0].mxu0
      %v2881 = vadd.f32 0.0, %v2880
      %v2882 = vpop.f32.mrb[0].mxu0
      %2883 = vmatprep.mubr.bf16.mxu0 %v2601
      %2884 = vmatmul.mubr.bf16.gmra.mrb[0].mxu0 %v2600
      %v2885 = vpop.f32.mrb[0].mxu0
      %v2886 = vadd.f32 0.0, %v2885
      %v2887 = vpop.f32.mrb[0].mxu0
      %v2888 = vpop.f32.mrb[0].mxu0
      %v2889 = vadd.f32 0.0, %v2888
      %v2890 = vpop.f32.mrb[0].mxu0
      %2891 = vmatprep.mubr.bf16.mxu0 %v2604
      %2892 = vmatmul.mubr.bf16.gmra.mrb[0].mxu0 %v2603
      %v2893 = vpop.f32.mrb[0].mxu0
      %v2894 = vadd.f32 0.0, %v2893
      %v2895 = vpop.f32.mrb[0].mxu0
      %v2896 = vpop.f32.mrb[0].mxu0
      %v2897 = vadd.f32 0.0, %v2896
      %v2898 = vpop.f32.mrb[0].mxu0
      %2899 = vmatprep.mubr.bf16.mxu0 %v2607
      %2900 = vmatmul.mubr.bf16.gmra.mrb[0].mxu0 %v2606
      %v2901 = vpop.f32.mrb[0].mxu0
      %v2902 = vadd.f32 0.0, %v2901
      %v2903 = vpop.f32.mrb[0].mxu0
      %v2904 = vpop.f32.mrb[0].mxu0
      %v2905 = vadd.f32 0.0, %v2904
      %v2906 = vpop.f32.mrb[0].mxu0
      %2907 = vmatprep.mubr.bf16.mxu0 %v2610
      %2908 = vmatmul.mubr.bf16.gmra.mrb[0].mxu0 %v2609
      %v2909 = vpop.f32.mrb[0].mxu0
      %v2910 = vadd.f32 0.0, %v2909
      %v2911 = vpop.f32.mrb[0].mxu0
      %v2912 = vpop.f32.mrb[0].mxu0
      %v2913 = vadd.f32 0.0, %v2912
      %v2914 = vpop.f32.mrb[0].mxu0
      %2915 = vmatprep.mubr.bf16.mxu0 %v2613
      %2916 = vmatmul.mubr.bf16.gmra.mrb[0].mxu0 %v2612
      %v2917 = vpop.f32.mrb[0].mxu0
      %v2918 = vadd.f32 0.0, %v2917
      %v2919 = vpop.f32.mrb[0].mxu0
      %v2920 = vpop.f32.mrb[0].mxu0
      %v2921 = vadd.f32 0.0, %v2920
      %v2922 = vpop.f32.mrb[0].mxu0
      %2923 = vmatprep.mubr.bf16.mxu0 %v2616
      %2924 = vmatmul.mubr.bf16.gmra.mrb[0].mxu0 %v2615
      %v2925 = vpop.f32.mrb[0].mxu0
      %v2926 = vadd.f32 0.0, %v2925
      %v2927 = vpop.f32.mrb[0].mxu0
      %v2928 = vpop.f32.mrb[0].mxu0
      %v2929 = vadd.f32 0.0, %v2928
      %v2930 = vpop.f32.mrb[0].mxu0
      %2931 = vmatprep.mubr.bf16.mxu0 %v2619
      %2932 = vmatmul.mubr.bf16.gmra.mrb[0].mxu0 %v2618
      %v2933 = vpop.f32.mrb[0].mxu0
      %v2934 = vadd.f32 0.0, %v2933
      %v2935 = vpop.f32.mrb[0].mxu0
      %v2936 = vpop.f32.mrb[0].mxu0
      %v2937 = vadd.f32 0.0, %v2936
      %v2938 = vpop.f32.mrb[0].mxu0
      %2939 = vmatprep.mubr.bf16.mxu0 %v2622
      %2940 = vmatmul.mubr.bf16.gmra.mrb[0].mxu0 %v2621
      %v2941 = vpop.f32.mrb[0].mxu0
      %v2942 = vadd.f32 0.0, %v2941
      %v2943 = vpop.f32.mrb[0].mxu0
      %v2944 = vpop.f32.mrb[0].mxu0
      %v2945 = vadd.f32 0.0, %v2944
      %v2946 = vpop.f32.mrb[0].mxu0
      %2947 = vmatprep.mubr.bf16.mxu0 %v2625
      %2948 = vmatmul.mubr.bf16.gmra.mrb[0].mxu0 %v2624
      %v2949 = vpop.f32.mrb[0].mxu0
      %v2950 = vadd.f32 0.0, %v2949
      %v2951 = vpop.f32.mrb[0].mxu0
      %v2952 = vpop.f32.mrb[0].mxu0
      %v2953 = vadd.f32 0.0, %v2952
      %v2954 = vpop.f32.mrb[0].mxu0
      %2955 = vmatprep.mubr.bf16.mxu0 %v2628
      %2956 = vmatmul.mubr.bf16.gmra.mrb[0].mxu0 %v2627
      %v2957 = vpop.f32.mrb[0].mxu0
      %v2958 = vadd.f32 0.0, %v2957
      %v2959 = vpop.f32.mrb[0].mxu0
      %v2960 = vpop.f32.mrb[0].mxu0
      %v2961 = vadd.f32 0.0, %v2960
      %v2962 = vpop.f32.mrb[0].mxu0
      %2963 = vmatprep.mubr.bf16.mxu0 %v2631
      %2964 = vmatmul.mubr.bf16.gmra.mrb[0].mxu0 %v2630
      %v2965 = vpop.f32.mrb[0].mxu0
      %v2966 = vadd.f32 0.0, %v2965
      %v2967 = vpop.f32.mrb[0].mxu0
      %v2968 = vpop.f32.mrb[0].mxu0
      %v2969 = vadd.f32 0.0, %v2968
      %v2970 = vpop.f32.mrb[0].mxu0
      %2971 = vmatprep.mubr.bf16.mxu0 %v2634
      %2972 = vmatmul.mubr.bf16.gmra.mrb[0].mxu0 %v2633
      %v2973 = vpop.f32.mrb[0].mxu0
      %v2974 = vadd.f32 0.0, %v2973
      %v2975 = vpop.f32.mrb[0].mxu0
      %v2976 = vpop.f32.mrb[0].mxu0
      %v2977 = vadd.f32 0.0, %v2976
      %v2978 = vpop.f32.mrb[0].mxu0
      %2979 = vmatprep.mubr.bf16.mxu0 %v2637
      %2980 = vmatmul.mubr.bf16.gmra.mrb[0].mxu0 %v2636
      %v2981 = vpop.f32.mrb[0].mxu0
      %v2982 = vadd.f32 0.0, %v2981
      %v2983 = vpop.f32.mrb[0].mxu0
      %v2984 = vpop.f32.mrb[0].mxu0
      %v2985 = vadd.f32 0.0, %v2984
      %v2986 = vpop.f32.mrb[0].mxu0
      %2987 = vmatprep.mubr.bf16.mxu0 %v2640
      %2988 = vmatmul.mubr.bf16.gmra.mrb[0].mxu0 %v2639
      %v2989 = vpop.f32.mrb[0].mxu0
      %v2990 = vadd.f32 0.0, %v2989
      %v2991 = vpop.f32.mrb[0].mxu0
      %v2992 = vpop.f32.mrb[0].mxu0
      %v2993 = vadd.f32 0.0, %v2992
      %v2994 = vpop.f32.mrb[0].mxu0
      %2995 = vdwg.mxu0
      %2996 = vmatprep.subr.bf16.mxu0 0
      %2997 = vmatpush1.bf16.msra.mxu0 %v2803
      %2998 = vmatprep.subr.bf16.mxu0 0
      %2999 = vmatpush1.bf16.msra.mxu0 %v2804
      %3000 = vmatprep.subr.bf16.mxu0 0
      %3001 = vmatpush1.bf16.msra.mxu0 %v2805
      %3002 = vmatprep.subr.bf16.mxu0 0
      %3003 = vmatpush1.bf16.msra.mxu0 %v2806
      %3004 = vmatprep.subr.bf16.mxu0 0
      %3005 = vmatpush1.bf16.msra.mxu0 %v2807
      %3006 = vmatprep.subr.bf16.mxu0 0
      %3007 = vmatpush1.bf16.msra.mxu0 %v2808
      %3008 = vmatprep.subr.bf16.mxu0 0
      %3009 = vmatpush1.bf16.msra.mxu0 %v2809
      %3010 = vmatprep.subr.bf16.mxu0 0
      %3011 = vmatpush1.bf16.msra.mxu0 %v2810
      %3012 = vmatprep.subr.bf16.mxu0 0
      %3013 = vmatpush1.bf16.msra.mxu0 0
      %3014 = vmatprep.subr.bf16.mxu0 0
      %3015 = vmatpush1.bf16.msra.mxu0 0
      %3016 = vmatprep.subr.bf16.mxu0 0
      %3017 = vmatpush1.bf16.msra.mxu0 0
      %3018 = vmatprep.subr.bf16.mxu0 0
      %3019 = vmatpush1.bf16.msra.mxu0 0
      %3020 = vmatprep.subr.bf16.mxu0 0
      %3021 = vmatpush1.bf16.msra.mxu0 0
      %3022 = vmatprep.subr.bf16.mxu0 0
      %3023 = vmatpush1.bf16.msra.mxu0 0
      %3024 = vmatprep.subr.bf16.mxu0 0
      %3025 = vmatpush1.bf16.msra.mxu0 0
      %3026 = vmatprep.subr.bf16.mxu0 0
      %3027 = vmatpush1.bf16.msra.mxu0 0
      %3028 = vmatprep.mubr.bf16.mxu0 0
      %3029 = vmatmul.mubr.bf16.gmra.mrb[0].mxu0 %v2596
      %v3030 = vpop.f32.mrb[0].mxu0
      %v3031 = vadd.f32 %v2870, %v3030
      %v3032 = vpop.f32.mrb[0].mxu0
      %v3033 = vpop.f32.mrb[0].mxu0
      %v3034 = vadd.f32 %v2873, %v3033
      %v3035 = vpop.f32.mrb[0].mxu0
      %3036 = vmatprep.mubr.bf16.mxu0 0
      %3037 = vmatmul.mubr.bf16.gmra.mrb[0].mxu0 %v2599
      %v3038 = vpop.f32.mrb[0].mxu0
      %v3039 = vadd.f32 %v2878, %v3038
      %v3040 = vpop.f32.mrb[0].mxu0
      %v3041 = vpop.f32.mrb[0].mxu0
      %v3042 = vadd.f32 %v2881, %v3041
      %v3043 = vpop.f32.mrb[0].mxu0
      %3044 = vmatprep.mubr.bf16.mxu0 0
      %3045 = vmatmul.mubr.bf16.gmra.mrb[0].mxu0 %v2602
      %v3046 = vpop.f32.mrb[0].mxu0
      %v3047 = vadd.f32 %v2886, %v3046
      %v3048 = vpop.f32.mrb[0].mxu0
      %v3049 = vpop.f32.mrb[0].mxu0
      %v3050 = vadd.f32 %v2889, %v3049
      %v3051 = vpop.f32.mrb[0].mxu0
      %3052 = vmatprep.mubr.bf16.mxu0 0
      %3053 = vmatmul.mubr.bf16.gmra.mrb[0].mxu0 %v2605
      %v3054 = vpop.f32.mrb[0].mxu0
      %v3055 = vadd.f32 %v2894, %v3054
      %v3056 = vpop.f32.mrb[0].mxu0
      %v3057 = vpop.f32.mrb[0].mxu0
      %v3058 = vadd.f32 %v2897, %v3057
      %v3059 = vpop.f32.mrb[0].mxu0
      %3060 = vmatprep.mubr.bf16.mxu0 0
      %3061 = vmatmul.mubr.bf16.gmra.mrb[0].mxu0 %v2608
      %v3062 = vpop.f32.mrb[0].mxu0
      %v3063 = vadd.f32 %v2902, %v3062
      %v3064 = vpop.f32.mrb[0].mxu0
      %v3065 = vpop.f32.mrb[0].mxu0
      %v3066 = vadd.f32 %v2905, %v3065
      %v3067 = vpop.f32.mrb[0].mxu0
      %3068 = vmatprep.mubr.bf16.mxu0 0
      %3069 = vmatmul.mubr.bf16.gmra.mrb[0].mxu0 %v2611
      %v3070 = vpop.f32.mrb[0].mxu0
      %v3071 = vadd.f32 %v2910, %v3070
      %v3072 = vpop.f32.mrb[0].mxu0
      %v3073 = vpop.f32.mrb[0].mxu0
      %v3074 = vadd.f32 %v2913, %v3073
      %v3075 = vpop.f32.mrb[0].mxu0
      %3076 = vmatprep.mubr.bf16.mxu0 0
      %3077 = vmatmul.mubr.bf16.gmra.mrb[0].mxu0 %v2614
      %v3078 = vpop.f32.mrb[0].mxu0
      %v3079 = vadd.f32 %v2918, %v3078
      %v3080 = vpop.f32.mrb[0].mxu0
      %v3081 = vpop.f32.mrb[0].mxu0
      %v3082 = vadd.f32 %v2921, %v3081
      %v3083 = vpop.f32.mrb[0].mxu0
      %3084 = vmatprep.mubr.bf16.mxu0 0
      %3085 = vmatmul.mubr.bf16.gmra.mrb[0].mxu0 %v2617
      %v3086 = vpop.f32.mrb[0].mxu0
      %v3087 = vadd.f32 %v2926, %v3086
      %v3088 = vpop.f32.mrb[0].mxu0
      %v3089 = vpop.f32.mrb[0].mxu0
      %v3090 = vadd.f32 %v2929, %v3089
      %v3091 = vpop.f32.mrb[0].mxu0
      %3092 = vmatprep.mubr.bf16.mxu0 0
      %3093 = vmatmul.mubr.bf16.gmra.mrb[0].mxu0 %v2620
      %v3094 = vpop.f32.mrb[0].mxu0
      %v3095 = vadd.f32 %v2934, %v3094
      %v3096 = vpop.f32.mrb[0].mxu0
      %v3097 = vpop.f32.mrb[0].mxu0
      %v3098 = vadd.f32 %v2937, %v3097
      %v3099 = vpop.f32.mrb[0].mxu0
      %3100 = vmatprep.mubr.bf16.mxu0 0
      %3101 = vmatmul.mubr.bf16.gmra.mrb[0].mxu0 %v2623
      %v3102 = vpop.f32.mrb[0].mxu0
      %v3103 = vadd.f32 %v2942, %v3102
      %v3104 = vpop.f32.mrb[0].mxu0
      %v3105 = vpop.f32.mrb[0].mxu0
      %v3106 = vadd.f32 %v2945, %v3105
      %v3107 = vpop.f32.mrb[0].mxu0
      %3108 = vmatprep.mubr.bf16.mxu0 0
      %3109 = vmatmul.mubr.bf16.gmra.mrb[0].mxu0 %v2626
      %v3110 = vpop.f32.mrb[0].mxu0
      %v3111 = vadd.f32 %v2950, %v3110
      %v3112 = vpop.f32.mrb[0].mxu0
      %v3113 = vpop.f32.mrb[0].mxu0
      %v3114 = vadd.f32 %v2953, %v3113
      %v3115 = vpop.f32.mrb[0].mxu0
      %3116 = vmatprep.mubr.bf16.mxu0 0
      %3117 = vmatmul.mubr.bf16.gmra.mrb[0].mxu0 %v2629
      %v3118 = vpop.f32.mrb[0].mxu0
      %v3119 = vadd.f32 %v2958, %v3118
      %v3120 = vpop.f32.mrb[0].mxu0
      %v3121 = vpop.f32.mrb[0].mxu0
      %v3122 = vadd.f32 %v2961, %v3121
      %v3123 = vpop.f32.mrb[0].mxu0
      %3124 = vmatprep.mubr.bf16.mxu0 0
      %3125 = vmatmul.mubr.bf16.gmra.mrb[0].mxu0 %v2632
      %v3126 = vpop.f32.mrb[0].mxu0
      %v3127 = vadd.f32 %v2966, %v3126
      %v3128 = vpop.f32.mrb[0].mxu0
      %v3129 = vpop.f32.mrb[0].mxu0
      %v3130 = vadd.f32 %v2969, %v3129
      %v3131 = vpop.f32.mrb[0].mxu0
      %3132 = vmatprep.mubr.bf16.mxu0 0
      %3133 = vmatmul.mubr.bf16.gmra.mrb[0].mxu0 %v2635
      %v3134 = vpop.f32.mrb[0].mxu0
      %v3135 = vadd.f32 %v2974, %v3134
      %v3136 = vpop.f32.mrb[0].mxu0
      %v3137 = vpop.f32.mrb[0].mxu0
      %v3138 = vadd.f32 %v2977, %v3137
      %v3139 = vpop.f32.mrb[0].mxu0
      %3140 = vmatprep.mubr.bf16.mxu0 0
      %3141 = vmatmul.mubr.bf16.gmra.mrb[0].mxu0 %v2638
      %v3142 = vpop.f32.mrb[0].mxu0
      %v3143 = vadd.f32 %v2982, %v3142
      %v3144 = vpop.f32.mrb[0].mxu0
      %v3145 = vpop.f32.mrb[0].mxu0
      %v3146 = vadd.f32 %v2985, %v3145
      %v3147 = vpop.f32.mrb[0].mxu0
      %3148 = vmatprep.mubr.bf16.mxu0 0
      %3149 = vmatmul.mubr.bf16.gmra.mrb[0].mxu0 %v2641
      %v3150 = vpop.f32.mrb[0].mxu0
      %v3151 = vadd.f32 %v2990, %v3150
      %v3152 = vpop.f32.mrb[0].mxu0
      %v3153 = vpop.f32.mrb[0].mxu0
      %v3154 = vadd.f32 %v2993, %v3153
      %v3155 = vpop.f32.mrb[0].mxu0
      %3156 = vdwg.mxu0
      %v3157 = vadd.f32 %v2147, %v3031
      %v3158 = vadd.f32 %v2150, %v3034
      %v3159 = vadd.f32 %v2155, %v3039
      %v3160 = vadd.f32 %v2158, %v3042
      %v3161 = vadd.f32 %v2163, %v3047
      %v3162 = vadd.f32 %v2166, %v3050
      %v3163 = vadd.f32 %v2171, %v3055
      %v3164 = vadd.f32 %v2174, %v3058
      %v3165 = vadd.f32 %v2179, %v3063
      %v3166 = vadd.f32 %v2182, %v3066
      %v3167 = vadd.f32 %v2187, %v3071
      %v3168 = vadd.f32 %v2190, %v3074
      %v3169 = vadd.f32 %v2195, %v3079
      %v3170 = vadd.f32 %v2198, %v3082
      %v3171 = vadd.f32 %v2203, %v3087
      %v3172 = vadd.f32 %v2206, %v3090
      %v3173 = vadd.f32 %v2211, %v3095
      %v3174 = vadd.f32 %v2214, %v3098
      %v3175 = vadd.f32 %v2219, %v3103
      %v3176 = vadd.f32 %v2222, %v3106
      %v3177 = vadd.f32 %v2227, %v3111
      %v3178 = vadd.f32 %v2230, %v3114
      %v3179 = vadd.f32 %v2235, %v3119
      %v3180 = vadd.f32 %v2238, %v3122
      %v3181 = vadd.f32 %v2243, %v3127
      %v3182 = vadd.f32 %v2246, %v3130
      %v3183 = vadd.f32 %v2251, %v3135
      %v3184 = vadd.f32 %v2254, %v3138
      %v3185 = vadd.f32 %v2259, %v3143
      %v3186 = vadd.f32 %v2262, %v3146
      %v3187 = vadd.f32 %v2267, %v3151
      %v3188 = vadd.f32 %v2270, %v3154
      %v3189 = vpack.c.bf16 %v3158, %v3157
      %v3190 = vpack.c.bf16 %v3160, %v3159
      %v3191 = vpack.c.bf16 %v3162, %v3161
      %v3192 = vpack.c.bf16 %v3164, %v3163
      %v3193 = vpack.c.bf16 %v3166, %v3165
      %v3194 = vpack.c.bf16 %v3168, %v3167
      %v3195 = vpack.c.bf16 %v3170, %v3169
      %v3196 = vpack.c.bf16 %v3172, %v3171
      %v3197 = vpack.c.bf16 %v3174, %v3173
      %v3198 = vpack.c.bf16 %v3176, %v3175
      %v3199 = vpack.c.bf16 %v3178, %v3177
      %v3200 = vpack.c.bf16 %v3180, %v3179
      %v3201 = vpack.c.bf16 %v3182, %v3181
      %v3202 = vpack.c.bf16 %v3184, %v3183
      %v3203 = vpack.c.bf16 %v3186, %v3185
      %v3204 = vpack.c.bf16 %v3188, %v3187
      %v3221 = vunpack.c.l.b16 %v3189
      %v3222 = vunpack.c.h.b16 %v3189
      %v3223 = vunpack.c.l.b16 %v3190
      %v3224 = vunpack.c.h.b16 %v3190
      %v3225 = vunpack.c.l.b16 %v3191
      %v3226 = vunpack.c.h.b16 %v3191
      %v3227 = vunpack.c.l.b16 %v3192
      %v3228 = vunpack.c.h.b16 %v3192
      %v3229 = vunpack.c.l.b16 %v3193
      %v3230 = vunpack.c.h.b16 %v3193
      %v3231 = vunpack.c.l.b16 %v3194
      %v3232 = vunpack.c.h.b16 %v3194
      %v3233 = vunpack.c.l.b16 %v3195
      %v3234 = vunpack.c.h.b16 %v3195
      %v3235 = vunpack.c.l.b16 %v3196
      %v3236 = vunpack.c.h.b16 %v3196
      %v3237 = vunpack.c.l.b16 %v3197
      %v3238 = vunpack.c.h.b16 %v3197
      %v3239 = vunpack.c.l.b16 %v3198
      %v3240 = vunpack.c.h.b16 %v3198
      %v3241 = vunpack.c.l.b16 %v3199
      %v3242 = vunpack.c.h.b16 %v3199
      %v3243 = vunpack.c.l.b16 %v3200
      %v3244 = vunpack.c.h.b16 %v3200
      %v3245 = vunpack.c.l.b16 %v3201
      %v3246 = vunpack.c.h.b16 %v3201
      %v3247 = vunpack.c.l.b16 %v3202
      %v3248 = vunpack.c.h.b16 %v3202
      %v3249 = vunpack.c.l.b16 %v3203
      %v3250 = vunpack.c.h.b16 %v3203
      %v3251 = vunpack.c.l.b16 %v3204
      %v3252 = vunpack.c.h.b16 %v3204
      %v3253 = vpack.c.b16 %v3221, %v3221
      %v3254 = vpack.c.b16 %v3222, %v3222
      %v3255 = vpack.c.b16 %v3223, %v3223
      %v3256 = vpack.c.b16 %v3224, %v3224
      %v3257 = vpack.c.b16 %v3225, %v3225
      %v3258 = vpack.c.b16 %v3226, %v3226
      %v3259 = vpack.c.b16 %v3227, %v3227
      %v3260 = vpack.c.b16 %v3228, %v3228
      %v3261 = vpack.c.b16 %v3229, %v3229
      %v3262 = vpack.c.b16 %v3230, %v3230
      %v3263 = vpack.c.b16 %v3231, %v3231
      %v3264 = vpack.c.b16 %v3232, %v3232
      %v3265 = vpack.c.b16 %v3233, %v3233
      %v3266 = vpack.c.b16 %v3234, %v3234
      %v3267 = vpack.c.b16 %v3235, %v3235
      %v3268 = vpack.c.b16 %v3236, %v3236
      %v3269 = vpack.c.b16 %v3237, %v3237
      %v3270 = vpack.c.b16 %v3238, %v3238
      %v3271 = vpack.c.b16 %v3239, %v3239
      %v3272 = vpack.c.b16 %v3240, %v3240
      %v3273 = vpack.c.b16 %v3241, %v3241
      %v3274 = vpack.c.b16 %v3242, %v3242
      %v3275 = vpack.c.b16 %v3243, %v3243
      %v3276 = vpack.c.b16 %v3244, %v3244
      %v3277 = vpack.c.b16 %v3245, %v3245
      %v3278 = vpack.c.b16 %v3246, %v3246
      %v3279 = vpack.c.b16 %v3247, %v3247
      %v3280 = vpack.c.b16 %v3248, %v3248
      %v3281 = vpack.c.b16 %v3249, %v3249
      %v3282 = vpack.c.b16 %v3250, %v3250
      %v3283 = vpack.c.b16 %v3251, %v3251
      %v3284 = vpack.c.b16 %v3252, %v3252
      %3317 = vst [vmem:[%s237] sm:$0xf] %v3253
      %3318 = vst [vmem:[%s237 + $0x4] sm:$0xf] %v3254
      %3319 = vst [vmem:[%s237 + $0x8] sm:$0xf] %v3255
      %3320 = vst [vmem:[%s237 + $0xc] sm:$0xf] %v3256
      %3321 = vst [vmem:[%s237 + $0x10] sm:$0xf] %v3257
      %3322 = vst [vmem:[%s237 + $0x14] sm:$0xf] %v3258
      %3323 = vst [vmem:[%s237 + $0x18] sm:$0xf] %v3259
      %3324 = vst [vmem:[%s237 + $0x1c] sm:$0xf] %v3260
      %3325 = vst [vmem:[%s237 + $0x20] sm:$0xf] %v3261
      %3326 = vst [vmem:[%s237 + $0x24] sm:$0xf] %v3262
      %3327 = vst [vmem:[%s237 + $0x28] sm:$0xf] %v3263
      %3328 = vst [vmem:[%s237 + $0x2c] sm:$0xf] %v3264
      %3329 = vst [vmem:[%s237 + $0x30] sm:$0xf] %v3265
      %3330 = vst [vmem:[%s237 + $0x34] sm:$0xf] %v3266
      %3331 = vst [vmem:[%s237 + $0x38] sm:$0xf] %v3267
      %3332 = vst [vmem:[%s237 + $0x3c] sm:$0xf] %v3268
      %3333 = vst [vmem:[%s237 + $0x40] sm:$0xf] %v3269
      %3334 = vst [vmem:[%s237 + $0x44] sm:$0xf] %v3270
      %3335 = vst [vmem:[%s237 + $0x48] sm:$0xf] %v3271
      %3336 = vst [vmem:[%s237 + $0x4c] sm:$0xf] %v3272
      %3337 = vst [vmem:[%s237 + $0x50] sm:$0xf] %v3273
      %3338 = vst [vmem:[%s237 + $0x54] sm:$0xf] %v3274
      %3339 = vst [vmem:[%s237 + $0x58] sm:$0xf] %v3275
      %3340 = vst [vmem:[%s237 + $0x5c] sm:$0xf] %v3276
      %3341 = vst [vmem:[%s237 + $0x60] sm:$0xf] %v3277
      %3342 = vst [vmem:[%s237 + $0x64] sm:$0xf] %v3278
      %3343 = vst [vmem:[%s237 + $0x68] sm:$0xf] %v3279
      %3344 = vst [vmem:[%s237 + $0x6c] sm:$0xf] %v3280
      %3345 = vst [vmem:[%s237 + $0x70] sm:$0xf] %v3281
      %3346 = vst [vmem:[%s237 + $0x74] sm:$0xf] %v3282
      %3347 = vst [vmem:[%s237 + $0x78] sm:$0xf] %v3283
      %3348 = vst [vmem:[%s237 + $0x7c] sm:$0xf] %v3284
      %v3349 = vadd.f32 %v3157, %v3158
      %v3350 = vadd.f32 %v3349, %v3159
      %v3351 = vadd.f32 %v3350, %v3160
      %v3352 = vadd.f32 %v3351, %v3161
      %v3353 = vadd.f32 %v3352, %v3162
      %v3354 = vadd.f32 %v3353, %v3163
      %v3355 = vadd.f32 %v3354, %v3164
      %v3356 = vadd.f32 %v3355, %v3165
      %v3357 = vadd.f32 %v3356, %v3166
      %v3358 = vadd.f32 %v3357, %v3167
      %v3359 = vadd.f32 %v3358, %v3168
      %v3360 = vadd.f32 %v3359, %v3169
      %v3361 = vadd.f32 %v3360, %v3170
      %v3362 = vadd.f32 %v3361, %v3171
      %v3363 = vadd.f32 %v3362, %v3172
      %v3364 = vadd.f32 %v3363, %v3173
      %v3365 = vadd.f32 %v3364, %v3174
      %v3366 = vadd.f32 %v3365, %v3175
      %v3367 = vadd.f32 %v3366, %v3176
      %v3368 = vadd.f32 %v3367, %v3177
      %v3369 = vadd.f32 %v3368, %v3178
      %v3370 = vadd.f32 %v3369, %v3179
      %v3371 = vadd.f32 %v3370, %v3180
      %v3372 = vadd.f32 %v3371, %v3181
      %v3373 = vadd.f32 %v3372, %v3182
      %v3374 = vadd.f32 %v3373, %v3183
      %v3375 = vadd.f32 %v3374, %v3184
      %v3376 = vadd.f32 %v3375, %v3185
      %v3377 = vadd.f32 %v3376, %v3186
      %v3378 = vadd.f32 %v3377, %v3187
      %v3379 = vadd.f32 %v3378, %v3188
      %v3380 = vrot.slane %v3379, 4
      %v3381 = vadd.f32 %v3379, %v3380
      %v3382 = vrot.slane %v3381, 2
      %v3383 = vadd.f32 %v3381, %v3382
      %v3384 = vrot.slane %v3383, 1
      %v3385 = vadd.f32 %v3383, %v3384
      %3386 = vst [vmem:[%s241] sm:$0x1] %v3385
      %v3387 = vmul.f32 %v3157, %v3157
      %v3388 = vmul.f32 %v3158, %v3158
      %v3389 = vmul.f32 %v3159, %v3159
      %v3390 = vmul.f32 %v3160, %v3160
      %v3391 = vmul.f32 %v3161, %v3161
      %v3392 = vmul.f32 %v3162, %v3162
      %v3393 = vmul.f32 %v3163, %v3163
      %v3394 = vmul.f32 %v3164, %v3164
      %v3395 = vmul.f32 %v3165, %v3165
      %v3396 = vmul.f32 %v3166, %v3166
      %v3397 = vmul.f32 %v3167, %v3167
      %v3398 = vmul.f32 %v3168, %v3168
      %v3399 = vmul.f32 %v3169, %v3169
      %v3400 = vmul.f32 %v3170, %v3170
      %v3401 = vmul.f32 %v3171, %v3171
      %v3402 = vmul.f32 %v3172, %v3172
      %v3403 = vmul.f32 %v3173, %v3173
      %v3404 = vmul.f32 %v3174, %v3174
      %v3405 = vmul.f32 %v3175, %v3175
      %v3406 = vmul.f32 %v3176, %v3176
      %v3407 = vmul.f32 %v3177, %v3177
      %v3408 = vmul.f32 %v3178, %v3178
      %v3409 = vmul.f32 %v3179, %v3179
      %v3410 = vmul.f32 %v3180, %v3180
      %v3411 = vmul.f32 %v3181, %v3181
      %v3412 = vmul.f32 %v3182, %v3182
      %v3413 = vmul.f32 %v3183, %v3183
      %v3414 = vmul.f32 %v3184, %v3184
      %v3415 = vmul.f32 %v3185, %v3185
      %v3416 = vmul.f32 %v3186, %v3186
      %v3417 = vmul.f32 %v3187, %v3187
      %v3418 = vmul.f32 %v3188, %v3188
      %v3419 = vadd.f32 %v3387, %v3388
      %v3420 = vadd.f32 %v3419, %v3389
      %v3421 = vadd.f32 %v3420, %v3390
      %v3422 = vadd.f32 %v3421, %v3391
      %v3423 = vadd.f32 %v3422, %v3392
      %v3424 = vadd.f32 %v3423, %v3393
      %v3425 = vadd.f32 %v3424, %v3394
      %v3426 = vadd.f32 %v3425, %v3395
      %v3427 = vadd.f32 %v3426, %v3396
      %v3428 = vadd.f32 %v3427, %v3397
      %v3429 = vadd.f32 %v3428, %v3398
      %v3430 = vadd.f32 %v3429, %v3399
      %v3431 = vadd.f32 %v3430, %v3400
      %v3432 = vadd.f32 %v3431, %v3401
      %v3433 = vadd.f32 %v3432, %v3402
      %v3434 = vadd.f32 %v3433, %v3403
      %v3435 = vadd.f32 %v3434, %v3404
      %v3436 = vadd.f32 %v3435, %v3405
      %v3437 = vadd.f32 %v3436, %v3406
      %v3438 = vadd.f32 %v3437, %v3407
      %v3439 = vadd.f32 %v3438, %v3408
      %v3440 = vadd.f32 %v3439, %v3409
      %v3441 = vadd.f32 %v3440, %v3410
      %v3442 = vadd.f32 %v3441, %v3411
      %v3443 = vadd.f32 %v3442, %v3412
      %v3444 = vadd.f32 %v3443, %v3413
      %v3445 = vadd.f32 %v3444, %v3414
      %v3446 = vadd.f32 %v3445, %v3415
      %v3447 = vadd.f32 %v3446, %v3416
      %v3448 = vadd.f32 %v3447, %v3417
      %v3449 = vadd.f32 %v3448, %v3418
      %v3450 = vrot.slane %v3449, 4
      %v3451 = vadd.f32 %v3449, %v3450
      %v3452 = vrot.slane %v3451, 2
      %v3453 = vadd.f32 %v3451, %v3452
      %v3454 = vrot.slane %v3453, 1
      %v3455 = vadd.f32 %v3453, %v3454
      %3456 = vst [vmem:[%s244] sm:$0x1] %v3455
      %s3457 = smul.u32 32, %s17
      %p3458 = scmp.lt.s32.totalorder %s3457, 63
      %s3459 = scalar_select %p3458, %s3457, 63
      %s3460 = smul.addr %s3459, 4
      %s3461 = scalar_lea.vmem %s3, %s3460
      %p3462 = scmp.lt.s32.totalorder %s17, 1
      %s3463 = scalar_select %p3462, %s17, 1
      %s3464 = scalar_lea.vmem %s4, %s3463
      %p3465 = scmp.lt.s32.totalorder %s17, 1
      %s3466 = scalar_select %p3465, %s17, 1
      %s3467 = scalar_lea.vmem %s5, %s3466
      // Predicated region
      $region37: #{_lambda_.6} parent=31 // pred_check
        %p3468 = pneg %p103
      $region38: #{_lambda_.6} parent=31 // pred_check_branch
        %3470 = sbr.rel (%p3468) target = $region40
      $region39: #{_lambda_.6} parent=31 // pred_region
        %s3471 = smul.u32 32, %s17
      $region40: #{_lambda_.6} parent=31 // pred_fallthru
        _
      // Predicated region
      $region41: #{_lambda_.6} parent=31 // pred_check
        %p3472 = pneg %p129
      $region42: #{_lambda_.6} parent=31 // pred_check_branch
        %3474 = sbr.rel (%p3472) target = $region44
      $region43: #{_lambda_.6} parent=31 // pred_region
        _
      $region44: #{_lambda_.6} parent=31 // pred_fallthru
        _
      // Predicated region
      $region45: #{_lambda_.6} parent=31 // pred_check
        %p3475 = pneg %p155
      $region46: #{_lambda_.6} parent=31 // pred_check_branch
        %3477 = sbr.rel (%p3475) target = $region48
      $region47: #{_lambda_.6} parent=31 // pred_region
        _
      $region48: #{_lambda_.6} parent=31 // pred_fallthru
        _
    $region32: #{_lambda_.6} parent=5 // pred_fallthru
      _
    %p3478 = scmp.le.s32.totalorder 2, %s12
    // Predicated region
    $region49: #{_lambda_.6} parent=5 // pred_check
      %p3479 = pneg %p3478
    $region50: #{_lambda_.6} parent=5 // pred_check_branch
      %3481 = sbr.rel (%p3479) target = $region52
    $region51: #{_lambda_.6} parent=5 // pred_region
      %s3482 = ssub.s32 %s12, 2
      // Predicated region
      $region53: #{_lambda_.6} parent=51 // pred_check
        %p3483 = pneg %p109
      $region54: #{_lambda_.6} parent=51 // pred_check_branch
        %3485 = sbr.rel (%p3483) target = $region56
      $region55: #{_lambda_.6} parent=51 // pred_region
        %s3486 = smul.u32 32, %s18
        %p3487 = scmp.lt.s32.totalorder %s3486, 63
        %s3488 = scalar_select %p3487, %s3486, 63
        %s3489 = smul.addr %s3488, 4
        %s3490 = scalar_lea.vmem %s3, %s3489
      $region56: #{_lambda_.6} parent=51 // pred_fallthru
        _
      // Predicated region
      $region57: #{_lambda_.6} parent=51 // pred_check
        %p3491 = pneg %p135
      $region58: #{_lambda_.6} parent=51 // pred_check_branch
        %3493 = sbr.rel (%p3491) target = $region60
      $region59: #{_lambda_.6} parent=51 // pred_region
        %p3494 = scmp.lt.s32.totalorder %s18, 1
        %s3495 = scalar_select %p3494, %s18, 1
        %s3496 = scalar_lea.vmem %s4, %s3495
      $region60: #{_lambda_.6} parent=51 // pred_fallthru
        _
      // Predicated region
      $region61: #{_lambda_.6} parent=51 // pred_check
        %p3497 = pneg %p161
      $region62: #{_lambda_.6} parent=51 // pred_check_branch
        %3499 = sbr.rel (%p3497) target = $region64
      $region63: #{_lambda_.6} parent=51 // pred_region
        %p3500 = scmp.lt.s32.totalorder %s18, 1
        %s3501 = scalar_select %p3500, %s18, 1
        %s3502 = scalar_lea.vmem %s5, %s3501
      $region64: #{_lambda_.6} parent=51 // pred_fallthru
        _
    $region52: #{_lambda_.6} parent=5 // pred_fallthru
      _
  $region6: #{_lambda_.6} parent=0 // loop_footer
    %s16 = sadd.s32 1, %s12
  $region7: #{_lambda_.6} parent=0 // loop_footer_branch
    %11 = sbr.rel target = $region3
  $region8: #{_lambda_.6} parent=0 // loop_exit
    _

</llo_original>
